<compile_context>
chip_gen: v7x
topology: tpu7x:2x2x1
jax: 0.10.0
libtpu: 0.0.40
codegen_flags: <defaults>
</compile_context>

<pallas_src>
import functools

import jax
import jax.numpy as jnp
from jax.experimental import pallas as pl
from jax.experimental.pallas import tpu as pltpu

F32 = jnp.float32
BF16 = jnp.bfloat16
EPS = 1e-5


# ----------------------------------------------------------------------------
# Sizing helpers (per-generation VMEM budget)
# ----------------------------------------------------------------------------
@functools.lru_cache(maxsize=None)
def _vmem_limit():
    try:
        cap = int(pltpu.get_tpu_info().vmem_capacity_bytes)
    except Exception:
        cap = 64 * 1024 * 1024          # conservative default (v7x physical)
    return max(32 * 1024 * 1024, min(cap * 3 // 4, 112 * 1024 * 1024))


def _largest_divisor_leq(n, cap):
    cap = int(max(1, min(n, cap)))
    for d in range(cap, 0, -1):
        if n % d == 0:
            return d
    return 1


def _pick_row_tile(H, W, Cin, Cout, budget):
    """Largest th | H keeping per-step VMEM (2x in blocks, 2x out blocks,
    im2col patch, f32 accumulator, halo scratch, resident weights) < budget."""
    fixed = 2 * (9 * Cin * Cout * 2) + 4 * (W * Cin * 2) + 4096
    per_row = W * (28 * Cin + 12 * Cout) + (W + 2) * Cin * 2
    cap = max(1, (budget - fixed) // max(per_row, 1))
    return _largest_divisor_leq(H, cap)


def _pick_bn_rows(Rl, L, budget):
    """Largest multiple-of-8 divisor of Rl with double-buffered f32 blocks
    under `budget` (falls back to the full extent)."""
    cap = max(8, budget // (16 * L))
    if Rl <= cap:
        return Rl
    d = (cap // 8) * 8
    while d >= 8:
        if Rl % d == 0:
            return d
        d -= 8
    return Rl


# ----------------------------------------------------------------------------
# Fused 3x3 convolution:
#   optional input affine+ReLU (previous layer's BatchNorm, applied in VMEM)
#   -> im2col (K = 9*Cin) -> single MXU matmul
#   -> output tile + per-tile per-channel sum / sum^2 partials (BN statistics)
# ----------------------------------------------------------------------------
def _conv3x3_kernel(prev_ref, cur_ref, next_ref, w_ref, ss_ref,
                    o_ref, stats_ref, xpad_ref,
                    *, th, W, Cin, Cout, apply_affine):
    i = pl.program_id(1)
    n_row_tiles = pl.num_programs(1)

    if apply_affine:
        ssv = ss_ref[...]                              # (2, Cin) f32: BN1 scale/shift
        scale, shift = ssv[0:1, :], ssv[1:2, :]

    def prep(v):
        # Fused BatchNorm-apply + ReLU of the *input* tile (conv2 prologue).
        if apply_affine:
            v = jnp.maximum(v.astype(F32) * scale + shift, 0.0)
        return v.astype(BF16)

    body = prep(cur_ref[0])                            # (th, W, Cin)
    zrow = jnp.zeros((1, W, Cin), BF16)
    top = jnp.where(i > 0, prep(prev_ref[0]), zrow)    # (1, W, Cin)
    bot = jnp.where(i < n_row_tiles - 1, prep(next_ref[0]), zrow)

    # Assemble the zero-padded halo tile in VMEM.  Pad rows/cols are written
    # with literal zeros, so the fused affine/ReLU never leaks into padding.
    zcol = jnp.zeros((th + 2, 1, Cin), BF16)
    xpad_ref[:, 0:1, :] = zcol
    xpad_ref[:, W + 1:W + 2, :] = zcol
    xpad_ref[0:1, 1:W + 1, :] = top
    xpad_ref[th + 1:th + 2, 1:W + 1, :] = bot
    xpad_ref[1:th + 1, 1:W + 1, :] = body

    # im2col in VMEM: fold all 9 taps into the contraction dim so the MXU sees
    # K = 9*Cin in a single matmul (instead of nine K = Cin matmuls).
    pieces = [xpad_ref[kh:kh + th, kw:kw + W, :]
              for kh in range(3) for kw in range(3)]
    patch = jnp.concatenate(pieces, axis=-1).reshape(th * W, 9 * Cin)
    acc = jnp.dot(patch, w_ref[...], preferred_element_type=jnp.float32)

    o_ref[0] = acc.reshape(th, W, Cout).astype(o_ref.dtype)

    # Fused BN statistics: per-tile per-channel sum / sum-of-squares partials
    # (reduced pairwise outside) -> no extra HBM pass over the conv output.
    stats_ref[0, 0, 0:1, :] = jnp.sum(acc, axis=0, keepdims=True)
    stats_ref[0, 0, 1:2, :] = jnp.sum(acc * acc, axis=0, keepdims=True)


def conv3x3_bn_fused(x, w, in_scale_shift=None, out_dtype=F32, row_tile=None):
    """3x3 'same' conv (no bias) with:
       * optional fused input affine+ReLU (the previous BatchNorm),
       * fused per-channel sum / sum^2 statistics of the f32 conv output.
    x: (N, H, W, Cin) bf16, w: (3, 3, Cin, Cout).
    Returns (out (N,H,W,Cout) out_dtype, stats (2, Cout) f32)."""
    N, H, W, Cin = x.shape
    Cout = w.shape[-1]
    wf = w.astype(BF16).reshape(9 * Cin, Cout)         # tap-major; matches concat order

    apply_affine = in_scale_shift is not None
    ss = in_scale_shift if apply_affine else jnp.zeros((2, Cin), F32)

    budget = _vmem_limit() // 2
    th = row_tile if row_tile is not None else _pick_row_tile(H, W, Cin, Cout, budget)
    assert H % th == 0, (H, th)
    nH = H // th

    kernel = functools.partial(_conv3x3_kernel, th=th, W=W, Cin=Cin,
                               Cout=Cout, apply_affine=apply_affine)
    out, stats = pl.pallas_call(
        kernel,
        out_shape=(jax.ShapeDtypeStruct((N, H, W, Cout), out_dtype),
                   jax.ShapeDtypeStruct((N, nH, 2, Cout), F32)),
        grid=(N, nH),
        in_specs=[
            # Single halo row above / below the tile (clamped at the image
            # border, masked in-kernel) plus the tile body.  All three are
            # auto double-buffered by the BlockSpec pipeline -> DMA overlaps
            # compute with no manual copies and no jnp.pad HBM round trip.
            pl.BlockSpec((1, 1, W, Cin),
                         lambda n, i: (n, jnp.maximum(i * th - 1, 0), 0, 0)),
            pl.BlockSpec((1, th, W, Cin), lambda n, i: (n, i, 0, 0)),
            pl.BlockSpec((1, 1, W, Cin),
                         lambda n, i: (n, jnp.minimum((i + 1) * th, H - 1), 0, 0)),
            pl.BlockSpec((9 * Cin, Cout), lambda n, i: (0, 0)),   # resident weights
            pl.BlockSpec((2, Cin), lambda n, i: (0, 0)),          # BN1 scale/shift
        ],
        out_specs=(
            pl.BlockSpec((1, th, W, Cout), lambda n, i: (n, i, 0, 0)),
            pl.BlockSpec((1, 1, 2, Cout), lambda n, i: (n, i, 0, 0)),
        ),
        scratch_shapes=[pltpu.VMEM((th + 2, W + 2, Cin), BF16)],
        compiler_params=pltpu.CompilerParams(
            dimension_semantics=("parallel", "parallel"),
            vmem_limit_bytes=_vmem_limit()),
    )(x, x, x, wf, ss)

    return out, jnp.sum(stats, axis=(0, 1))


def _bn_scale_shift(stats_sum, gamma, beta, count):
    """Fused BN scale/shift from per-channel sum / sum^2 (training-mode stats)."""
    mean = stats_sum[0] / count
    var = stats_sum[1] / count - mean * mean            # biased var (PyTorch BN)
    scale = gamma * jax.lax.rsqrt(var + EPS)
    shift = beta - mean * scale
    return jnp.stack([scale, shift], axis=0).astype(F32)   # (2, C)


# ----------------------------------------------------------------------------
# Final BatchNorm-apply + ReLU (lane-dense when C < 128 divides 128)
# ----------------------------------------------------------------------------
def _bn_apply_kernel(x_ref, ss_ref, o_ref):
    y = x_ref[...] * ss_ref[0:1, :] + ss_ref[1:2, :]
    o_ref[...] = jnp.maximum(y, 0.0).astype(o_ref.dtype)


def batchnorm_apply_relu(x, scale_shift):
    """y = relu(x * scale + shift) over (N, H, W, C), tiled and lane-dense."""
    N, H, W, C = x.shape
    R = N * H * W
    if C < 128 and 128 % C == 0 and (R * C) % 128 == 0:
        L = 128
        x2 = x.reshape(R * C // L, L)
        ss2 = jnp.tile(scale_shift, (1, L // C))
    else:
        L = C
        x2 = x.reshape(R, C)
        ss2 = scale_shift
    Rl = x2.shape[0]
    tr = _pick_bn_rows(Rl, L, _vmem_limit() // 2)

    y = pl.pallas_call(
        _bn_apply_kernel,
        out_shape=jax.ShapeDtypeStruct((Rl, L), F32),
        grid=(Rl // tr,),
        in_specs=[pl.BlockSpec((tr, L), lambda i: (i, 0)),
                  pl.BlockSpec((2, L), lambda i: (0, 0))],
        out_specs=pl.BlockSpec((tr, L), lambda i: (i, 0)),
        compiler_params=pltpu.CompilerParams(
            dimension_semantics=("parallel",),
            vmem_limit_bytes=_vmem_limit()),
    )(x2, ss2)
    return y.reshape(N, H, W, C)


# ----------------------------------------------------------------------------
# DoubleConv forward (NCHW in / NCHW out, mirrors the PyTorch module)
# ----------------------------------------------------------------------------
def double_conv(x_nchw, params, row_tile=None):
    """Conv3x3 -> BN -> ReLU -> Conv3x3 -> BN -> ReLU.

    BatchNorm uses training-mode batch statistics (a fresh PyTorch module's
    forward); the conv biases are therefore exactly cancelled and omitted.
    # TODO(synk): BatchNorm running_mean/running_var side-effect updates are
    # not modelled (they do not affect the forward output in training mode)."""
    N, _, H, W = x_nchw.shape
    count = float(N * H * W)
    x = jnp.transpose(x_nchw, (0, 2, 3, 1)).astype(BF16)       # NHWC, MXU dtype

    # conv1: raw bf16 conv output + fused BN1 statistics.
    h1, st1 = conv3x3_bn_fused(x, params['w1'], None, out_dtype=BF16,
                               row_tile=row_tile)
    ss1 = _bn_scale_shift(st1, params['g1'], params['b1'], count)

    # conv2: BN1-apply + ReLU fused into its prologue; emits f32 output
    # + fused BN2 statistics.
    h2, st2 = conv3x3_bn_fused(h1, params['w2'], ss1, out_dtype=F32,
                               row_tile=row_tile)
    ss2 = _bn_scale_shift(st2, params['g2'], params['b2'], count)

    y = batchnorm_apply_relu(h2, ss2)
    return jnp.transpose(y, (0, 3, 1, 2))                       # NCHW


# ----------------------------------------------------------------------------
# Pure-JAX reference (mirrors the kernel's bf16 rounding of MXU inputs)
# ----------------------------------------------------------------------------
def reference_double_conv(x_nchw, params):
    x = jnp.transpose(x_nchw, (0, 2, 3, 1))

    def conv_ref(v, w):
        return jax.lax.conv_general_dilated(
            v.astype(BF16).astype(F32), w.astype(BF16).astype(F32),
            window_strides=(1, 1), padding=((1, 1), (1, 1)),
            dimension_numbers=('NHWC', 'HWIO', 'NHWC'),
            precision=jax.lax.Precision.HIGHEST)

    def stats(h):
        mean = jnp.mean(h, axis=(0, 1, 2))
        var = jnp.mean(h * h, axis=(0, 1, 2)) - mean * mean
        return mean, var

    h1 = conv_ref(x, params['w1'])
    m1, v1 = stats(h1)
    sc1 = params['g1'] * jax.lax.rsqrt(v1 + EPS)
    sh1 = params['b1'] - m1 * sc1
    # conv1 output is stored as bf16 before the (fused) BN apply in the kernel.
    a1 = jnp.maximum(h1.astype(BF16).astype(F32) * sc1 + sh1, 0.0)

    h2 = conv_ref(a1, params['w2'])
    m2, v2 = stats(h2)
    sc2 = params['g2'] * jax.lax.rsqrt(v2 + EPS)
    sh2 = params['b2'] - m2 * sc2
    out = jnp.maximum(h2 * sc2 + sh2, 0.0)
    return jnp.transpose(out, (0, 3, 1, 2))


# ----------------------------------------------------------------------------
if __name__ == "__main__":
    N, Cin, H, W = 2, 4, 16, 16
    Cout = 32                                              # mid_channels = out_channels

    key = jax.random.PRNGKey(0)
    kx, kw1, kw2, kg1, kb1, kg2, kb2 = jax.random.split(key, 7)
    x = jax.random.normal(kx, (N, Cin, H, W), F32)
    params = dict(
        w1=0.1 * jax.random.normal(kw1, (3, 3, Cin, Cout), F32),
        g1=1.0 + 0.1 * jax.random.normal(kg1, (Cout,), F32),
        b1=0.1 * jax.random.normal(kb1, (Cout,), F32),
        w2=0.1 * jax.random.normal(kw2, (3, 3, Cout, Cout), F32),
        g2=1.0 + 0.1 * jax.random.normal(kg2, (Cout,), F32),
        b2=0.1 * jax.random.normal(kb2, (Cout,), F32),
    )

    ref = reference_double_conv(x, params)

    out = jax.block_until_ready(jax.jit(double_conv)(x, params))
    assert out.shape == (N, Cout, H, W), out.shape
    assert bool(jnp.all(jnp.isfinite(out)))
    err = float(jnp.max(jnp.abs(out - ref)))
    assert err < 5e-2, f"max abs err vs reference: {err}"

    # Also exercise the multi-row-tile halo/masking path explicitly.
    out_tiled = jax.block_until_ready(
        jax.jit(functools.partial(double_conv, row_tile=4))(x, params))
    err_t = float(jnp.max(jnp.abs(out_tiled - ref)))
    assert err_t < 5e-2, f"max abs err (row_tile=4) vs reference: {err_t}"

    print("KERNEL_OK")
</pallas_src>

<mosaic_0001>
module attributes {stable_mosaic.version = 11 : i64} {
  func.func @_conv3x3_kernel(%arg0: i32, %arg1: i32, %arg2: memref<1x1x16x4xbf16, #tpu.memory_space<vmem>>, %arg3: memref<1x16x16x4xbf16, #tpu.memory_space<vmem>>, %arg4: memref<1x1x16x4xbf16, #tpu.memory_space<vmem>>, %arg5: memref<36x32xbf16, #tpu.memory_space<vmem>>, %arg6: memref<2x4xf32, #tpu.memory_space<vmem>>, %arg7: memref<1x16x16x32xbf16, #tpu.memory_space<vmem>>, %arg8: memref<1x1x2x32xf32, #tpu.memory_space<vmem>>, %arg9: memref<18x18x4xbf16, #tpu.memory_space<vmem>>) attributes {dimension_semantics = [#tpu.dimension_semantics<parallel>, #tpu.dimension_semantics<parallel>], iteration_bounds = array<i64: 2, 1>, scalar_prefetch = 0 : i64, scratch_operands = 1 : i64, tpu.core_type = #tpu.core_type<tc>, window_params = [{transform_indices = @transform_0, window_bounds = array<i64: 1, 1, 16, 4>}, {transform_indices = @transform_1, window_bounds = array<i64: 1, 16, 16, 4>}, {transform_indices = @transform_2, window_bounds = array<i64: 1, 1, 16, 4>}, {pipeline_mode = #tpu.pipeline_mode<synchronous>, transform_indices = @transform_3, window_bounds = array<i64: 36, 32>}, {pipeline_mode = #tpu.pipeline_mode<synchronous>, transform_indices = @transform_4, window_bounds = array<i64: 2, 4>}, {transform_indices = @transform_5, window_bounds = array<i64: 1, 16, 16, 32>}, {transform_indices = @transform_6, window_bounds = array<i64: 1, 1, 2, 32>}]} {
    %c0 = arith.constant 0 : index
    %c0_0 = arith.constant 0 : index
    %c0_1 = arith.constant 0 : index
    %c0_2 = arith.constant 0 : index
    %0 = vector.load %arg3[%c0, %c0_0, %c0_1, %c0_2] : memref<1x16x16x4xbf16, #tpu.memory_space<vmem>>, vector<1x16x16x4xbf16>
    %1 = vector.shape_cast %0 : vector<1x16x16x4xbf16> to vector<16x16x4xbf16>
    %cst = arith.constant 0.000000e+00 : bf16
    %2 = vector.broadcast %cst : bf16 to vector<1x16x4xbf16>
    %c0_i32 = arith.constant 0 : i32
    %3 = arith.cmpi sgt, %arg1, %c0_i32 : i32
    %c0_3 = arith.constant 0 : index
    %c0_4 = arith.constant 0 : index
    %c0_5 = arith.constant 0 : index
    %c0_6 = arith.constant 0 : index
    %4 = vector.load %arg2[%c0_3, %c0_4, %c0_5, %c0_6] : memref<1x1x16x4xbf16, #tpu.memory_space<vmem>>, vector<1x1x16x4xbf16>
    %5 = vector.shape_cast %4 : vector<1x1x16x4xbf16> to vector<1x16x4xbf16>
    %6 = arith.select %3, %5, %2 : vector<1x16x4xbf16>
    %c0_i32_7 = arith.constant 0 : i32
    %7 = arith.cmpi slt, %arg1, %c0_i32_7 : i32
    %c0_8 = arith.constant 0 : index
    %c0_9 = arith.constant 0 : index
    %c0_10 = arith.constant 0 : index
    %c0_11 = arith.constant 0 : index
    %8 = vector.load %arg4[%c0_8, %c0_9, %c0_10, %c0_11] : memref<1x1x16x4xbf16, #tpu.memory_space<vmem>>, vector<1x1x16x4xbf16>
    %9 = vector.shape_cast %8 : vector<1x1x16x4xbf16> to vector<1x16x4xbf16>
    %10 = arith.select %7, %9, %2 : vector<1x16x4xbf16>
    %cst_12 = arith.constant 0.000000e+00 : bf16
    %11 = vector.broadcast %cst_12 : bf16 to vector<18x1x4xbf16>
    %c0_13 = arith.constant 0 : index
    %c0_14 = arith.constant 0 : index
    %c0_15 = arith.constant 0 : index
    %12 = vector.load %arg9[%c0_13, %c0_14, %c0_15] : memref<18x18x4xbf16, #tpu.memory_space<vmem>>, vector<18x1x4xbf16>
    tpu.vector_store %arg9[%c0_13, %c0_14, %c0_15], %11 {strides = array<i32>} : memref<18x18x4xbf16, #tpu.memory_space<vmem>>, vector<18x1x4xbf16>,
    %c0_16 = arith.constant 0 : index
    %c17 = arith.constant 17 : index
    %c0_17 = arith.constant 0 : index
    %13 = vector.load %arg9[%c0_16, %c17, %c0_17] : memref<18x18x4xbf16, #tpu.memory_space<vmem>>, vector<18x1x4xbf16>
    tpu.vector_store %arg9[%c0_16, %c17, %c0_17], %11 {strides = array<i32>} : memref<18x18x4xbf16, #tpu.memory_space<vmem>>, vector<18x1x4xbf16>,
    %c0_18 = arith.constant 0 : index
    %c1 = arith.constant 1 : index
    %c0_19 = arith.constant 0 : index
    %14 = vector.load %arg9[%c0_18, %c1, %c0_19] : memref<18x18x4xbf16, #tpu.memory_space<vmem>>, vector<1x16x4xbf16>
    tpu.vector_store %arg9[%c0_18, %c1, %c0_19], %6 {strides = array<i32>} : memref<18x18x4xbf16, #tpu.memory_space<vmem>>, vector<1x16x4xbf16>,
    %c17_20 = arith.constant 17 : index
    %c1_21 = arith.constant 1 : index
    %c0_22 = arith.constant 0 : index
    %15 = vector.load %arg9[%c17_20, %c1_21, %c0_22] : memref<18x18x4xbf16, #tpu.memory_space<vmem>>, vector<1x16x4xbf16>
    tpu.vector_store %arg9[%c17_20, %c1_21, %c0_22], %10 {strides = array<i32>} : memref<18x18x4xbf16, #tpu.memory_space<vmem>>, vector<1x16x4xbf16>,
    %c1_23 = arith.constant 1 : index
    %c1_24 = arith.constant 1 : index
    %c0_25 = arith.constant 0 : index
    %16 = vector.load %arg9[%c1_23, %c1_24, %c0_25] : memref<18x18x4xbf16, #tpu.memory_space<vmem>>, vector<16x16x4xbf16>
    tpu.vector_store %arg9[%c1_23, %c1_24, %c0_25], %1 {strides = array<i32>} : memref<18x18x4xbf16, #tpu.memory_space<vmem>>, vector<16x16x4xbf16>,
    %c0_26 = arith.constant 0 : index
    %c0_27 = arith.constant 0 : index
    %c0_28 = arith.constant 0 : index
    %17 = vector.load %arg9[%c0_26, %c0_27, %c0_28] : memref<18x18x4xbf16, #tpu.memory_space<vmem>>, vector<16x16x4xbf16>
    %c0_29 = arith.constant 0 : index
    %c1_30 = arith.constant 1 : index
    %c0_31 = arith.constant 0 : index
    %18 = vector.load %arg9[%c0_29, %c1_30, %c0_31] : memref<18x18x4xbf16, #tpu.memory_space<vmem>>, vector<16x16x4xbf16>
    %c0_32 = arith.constant 0 : index
    %c2 = arith.constant 2 : index
    %c0_33 = arith.constant 0 : index
    %19 = vector.load %arg9[%c0_32, %c2, %c0_33] : memref<18x18x4xbf16, #tpu.memory_space<vmem>>, vector<16x16x4xbf16>
    %c1_34 = arith.constant 1 : index
    %c0_35 = arith.constant 0 : index
    %c0_36 = arith.constant 0 : index
    %20 = vector.load %arg9[%c1_34, %c0_35, %c0_36] : memref<18x18x4xbf16, #tpu.memory_space<vmem>>, vector<16x16x4xbf16>
    %c1_37 = arith.constant 1 : index
    %c1_38 = arith.constant 1 : index
    %c0_39 = arith.constant 0 : index
    %21 = vector.load %arg9[%c1_37, %c1_38, %c0_39] : memref<18x18x4xbf16, #tpu.memory_space<vmem>>, vector<16x16x4xbf16>
    %c1_40 = arith.constant 1 : index
    %c2_41 = arith.constant 2 : index
    %c0_42 = arith.constant 0 : index
    %22 = vector.load %arg9[%c1_40, %c2_41, %c0_42] : memref<18x18x4xbf16, #tpu.memory_space<vmem>>, vector<16x16x4xbf16>
    %c2_43 = arith.constant 2 : index
    %c0_44 = arith.constant 0 : index
    %c0_45 = arith.constant 0 : index
    %23 = vector.load %arg9[%c2_43, %c0_44, %c0_45] : memref<18x18x4xbf16, #tpu.memory_space<vmem>>, vector<16x16x4xbf16>
    %c2_46 = arith.constant 2 : index
    %c1_47 = arith.constant 1 : index
    %c0_48 = arith.constant 0 : index
    %24 = vector.load %arg9[%c2_46, %c1_47, %c0_48] : memref<18x18x4xbf16, #tpu.memory_space<vmem>>, vector<16x16x4xbf16>
    %c2_49 = arith.constant 2 : index
    %c2_50 = arith.constant 2 : index
    %c0_51 = arith.constant 0 : index
    %25 = vector.load %arg9[%c2_49, %c2_50, %c0_51] : memref<18x18x4xbf16, #tpu.memory_space<vmem>>, vector<16x16x4xbf16>
    %26 = tpu.concatenate %17, %18, %19, %20, %21, %22, %23, %24, %25 in 2 : vector<16x16x4xbf16>, vector<16x16x4xbf16>, vector<16x16x4xbf16>, vector<16x16x4xbf16>, vector<16x16x4xbf16>, vector<16x16x4xbf16>, vector<16x16x4xbf16>, vector<16x16x4xbf16>, vector<16x16x4xbf16> -> vector<16x16x36xbf16>
    %27 = vector.shape_cast %26 : vector<16x16x36xbf16> to vector<256x36xbf16>
    %c0_52 = arith.constant 0 : index
    %c0_53 = arith.constant 0 : index
    %28 = vector.load %arg5[%c0_52, %c0_53] : memref<36x32xbf16, #tpu.memory_space<vmem>>, vector<36x32xbf16>
    %cst_54 = arith.constant dense<0.000000e+00> : vector<256x32xf32>
    %29 = tpu.matmul %27, %28, %cst_54 {dimension_numbers = #tpu.dot_dimension_numbers<[1], [0], [0], [1], [0, 0, 1, 1], [], []>} : vector<256x36xbf16>, vector<36x32xbf16>, vector<256x32xf32> -> vector<256x32xf32>
    %30 = vector.shape_cast %29 : vector<256x32xf32> to vector<16x16x32xf32>
    %31 = arith.truncf %30 : vector<16x16x32xf32> to vector<16x16x32xbf16>
    %c0_55 = arith.constant 0 : index
    %c0_56 = arith.constant 0 : index
    %c0_57 = arith.constant 0 : index
    %c0_58 = arith.constant 0 : index
    %32 = vector.load %arg7[%c0_55, %c0_56, %c0_57, %c0_58] : memref<1x16x16x32xbf16, #tpu.memory_space<vmem>>, vector<1x16x16x32xbf16>
    %33 = vector.shape_cast %32 : vector<1x16x16x32xbf16> to vector<16x16x32xbf16>
    %34 = vector.shape_cast %31 : vector<16x16x32xbf16> to vector<1x16x16x32xbf16>
    tpu.vector_store %arg7[%c0_55, %c0_56, %c0_57, %c0_58], %34 {strides = array<i32>} : memref<1x16x16x32xbf16, #tpu.memory_space<vmem>>, vector<1x16x16x32xbf16>,
    %cst_59 = arith.constant dense<0.000000e+00> : vector<32xf32>
    %35 = vector.multi_reduction <add>, %29, %cst_59 [0] : vector<256x32xf32> to vector<32xf32>
    %36 = vector.shape_cast %35 : vector<32xf32> to vector<1x32xf32>
    %c0_60 = arith.constant 0 : index
    %c0_61 = arith.constant 0 : index
    %c0_62 = arith.constant 0 : index
    %c0_63 = arith.constant 0 : index
    %37 = vector.load %arg8[%c0_60, %c0_61, %c0_62, %c0_63] : memref<1x1x2x32xf32, #tpu.memory_space<vmem>>, vector<1x1x1x32xf32>
    %38 = vector.shape_cast %37 : vector<1x1x1x32xf32> to vector<1x32xf32>
    %39 = vector.shape_cast %36 : vector<1x32xf32> to vector<1x1x1x32xf32>
    tpu.vector_store %arg8[%c0_60, %c0_61, %c0_62, %c0_63], %39 {strides = array<i32>} : memref<1x1x2x32xf32, #tpu.memory_space<vmem>>, vector<1x1x1x32xf32>,
    %40 = arith.mulf %29, %29 : vector<256x32xf32>
    %cst_64 = arith.constant dense<0.000000e+00> : vector<32xf32>
    %41 = vector.multi_reduction <add>, %40, %cst_64 [0] : vector<256x32xf32> to vector<32xf32>
    %42 = vector.shape_cast %41 : vector<32xf32> to vector<1x32xf32>
    %c0_65 = arith.constant 0 : index
    %c0_66 = arith.constant 0 : index
    %c1_67 = arith.constant 1 : index
    %c0_68 = arith.constant 0 : index
    %43 = vector.load %arg8[%c0_65, %c0_66, %c1_67, %c0_68] : memref<1x1x2x32xf32, #tpu.memory_space<vmem>>, vector<1x1x1x32xf32>
    %44 = vector.shape_cast %43 : vector<1x1x1x32xf32> to vector<1x32xf32>
    %45 = vector.shape_cast %42 : vector<1x32xf32> to vector<1x1x1x32xf32>
    tpu.vector_store %arg8[%c0_65, %c0_66, %c1_67, %c0_68], %45 {strides = array<i32>} : memref<1x1x2x32xf32, #tpu.memory_space<vmem>>, vector<1x1x1x32xf32>,
    return
  }
  func.func @transform_0(%arg0: i32, %arg1: i32) -> (i32, i32, i32, i32) {
    %c16_i32 = arith.constant 16 : i32
    %0 = arith.muli %arg1, %c16_i32 : i32
    %c1_i32 = arith.constant 1 : i32
    %1 = arith.subi %0, %c1_i32 : i32
    %c0_i32 = arith.constant 0 : i32
    %2 = arith.maxsi %1, %c0_i32 : i32
    %c0_i32_0 = arith.constant 0 : i32
    %c0_i32_1 = arith.constant 0 : i32
    %c0_i32_2 = arith.constant 0 : i32
    return %arg0, %2, %c0_i32_0, %c0_i32_1 : i32, i32, i32, i32
  }
  func.func @transform_1(%arg0: i32, %arg1: i32) -> (i32, i32, i32, i32) {
    %c0_i32 = arith.constant 0 : i32
    %c0_i32_0 = arith.constant 0 : i32
    %c0_i32_1 = arith.constant 0 : i32
    return %arg0, %arg1, %c0_i32, %c0_i32_0 : i32, i32, i32, i32
  }
  func.func @transform_2(%arg0: i32, %arg1: i32) -> (i32, i32, i32, i32) {
    %c1_i32 = arith.constant 1 : i32
    %0 = arith.addi %arg1, %c1_i32 : i32
    %c16_i32 = arith.constant 16 : i32
    %1 = arith.muli %0, %c16_i32 : i32
    %c15_i32 = arith.constant 15 : i32
    %2 = arith.minsi %1, %c15_i32 : i32
    %c0_i32 = arith.constant 0 : i32
    %c0_i32_0 = arith.constant 0 : i32
    %c0_i32_1 = arith.constant 0 : i32
    return %arg0, %2, %c0_i32, %c0_i32_0 : i32, i32, i32, i32
  }
  func.func @transform_3(%arg0: i32, %arg1: i32) -> (i32, i32) {
    %c0_i32 = arith.constant 0 : i32
    %c0_i32_0 = arith.constant 0 : i32
    %c0_i32_1 = arith.constant 0 : i32
    return %c0_i32, %c0_i32_0 : i32, i32
  }
  func.func @transform_4(%arg0: i32, %arg1: i32) -> (i32, i32) {
    %c0_i32 = arith.constant 0 : i32
    %c0_i32_0 = arith.constant 0 : i32
    %c0_i32_1 = arith.constant 0 : i32
    return %c0_i32, %c0_i32_0 : i32, i32
  }
  func.func @transform_5(%arg0: i32, %arg1: i32) -> (i32, i32, i32, i32) {
    %c0_i32 = arith.constant 0 : i32
    %c0_i32_0 = arith.constant 0 : i32
    %c0_i32_1 = arith.constant 0 : i32
    return %arg0, %arg1, %c0_i32, %c0_i32_0 : i32, i32, i32, i32
  }
  func.func @transform_6(%arg0: i32, %arg1: i32) -> (i32, i32, i32, i32) {
    %c0_i32 = arith.constant 0 : i32
    %c0_i32_0 = arith.constant 0 : i32
    %c0_i32_1 = arith.constant 0 : i32
    return %arg0, %arg1, %c0_i32, %c0_i32_0 : i32, i32, i32, i32
  }
}

module attributes {stable_mosaic.version = 11 : i64} {
  func.func @_conv3x3_kernel(%arg0: i32, %arg1: i32, %arg2: memref<1x1x16x32xbf16, #tpu.memory_space<vmem>>, %arg3: memref<1x16x16x32xbf16, #tpu.memory_space<vmem>>, %arg4: memref<1x1x16x32xbf16, #tpu.memory_space<vmem>>, %arg5: memref<288x32xbf16, #tpu.memory_space<vmem>>, %arg6: memref<2x32xf32, #tpu.memory_space<vmem>>, %arg7: memref<1x16x16x32xf32, #tpu.memory_space<vmem>>, %arg8: memref<1x1x2x32xf32, #tpu.memory_space<vmem>>, %arg9: memref<18x18x32xbf16, #tpu.memory_space<vmem>>) attributes {dimension_semantics = [#tpu.dimension_semantics<parallel>, #tpu.dimension_semantics<parallel>], iteration_bounds = array<i64: 2, 1>, scalar_prefetch = 0 : i64, scratch_operands = 1 : i64, tpu.core_type = #tpu.core_type<tc>, window_params = [{transform_indices = @transform_0, window_bounds = array<i64: 1, 1, 16, 32>}, {transform_indices = @transform_1, window_bounds = array<i64: 1, 16, 16, 32>}, {transform_indices = @transform_2, window_bounds = array<i64: 1, 1, 16, 32>}, {pipeline_mode = #tpu.pipeline_mode<synchronous>, transform_indices = @transform_3, window_bounds = array<i64: 288, 32>}, {pipeline_mode = #tpu.pipeline_mode<synchronous>, transform_indices = @transform_4, window_bounds = array<i64: 2, 32>}, {transform_indices = @transform_5, window_bounds = array<i64: 1, 16, 16, 32>}, {transform_indices = @transform_6, window_bounds = array<i64: 1, 1, 2, 32>}]} {
    %c0 = arith.constant 0 : index
    %c0_0 = arith.constant 0 : index
    %0 = vector.load %arg6[%c0, %c0_0] : memref<2x32xf32, #tpu.memory_space<vmem>>, vector<2x32xf32>
    %1 = vector.extract_strided_slice %0 {offsets = [0, 0], sizes = [1, 32], strides = [1, 1]} : vector<2x32xf32> to vector<1x32xf32>
    %2 = vector.extract_strided_slice %0 {offsets = [1, 0], sizes = [1, 32], strides = [1, 1]} : vector<2x32xf32> to vector<1x32xf32>
    %c0_1 = arith.constant 0 : index
    %c0_2 = arith.constant 0 : index
    %c0_3 = arith.constant 0 : index
    %c0_4 = arith.constant 0 : index
    %3 = vector.load %arg3[%c0_1, %c0_2, %c0_3, %c0_4] : memref<1x16x16x32xbf16, #tpu.memory_space<vmem>>, vector<1x16x16x32xbf16>
    %4 = vector.shape_cast %3 : vector<1x16x16x32xbf16> to vector<16x16x32xbf16>
    %5 = arith.extf %4 : vector<16x16x32xbf16> to vector<16x16x32xf32>
    %6 = vector.shape_cast %1 : vector<1x32xf32> to vector<1x1x32xf32>
    %7 = vector.broadcast %6 : vector<1x1x32xf32> to vector<16x16x32xf32>
    %8 = arith.mulf %5, %7 : vector<16x16x32xf32>
    %9 = vector.shape_cast %2 : vector<1x32xf32> to vector<1x1x32xf32>
    %10 = vector.broadcast %9 : vector<1x1x32xf32> to vector<16x16x32xf32>
    %11 = arith.addf %8, %10 : vector<16x16x32xf32>
    %cst = arith.constant 0.000000e+00 : f32
    %12 = vector.broadcast %cst : f32 to vector<16x16x32xf32>
    %13 = arith.maximumf %11, %12 : vector<16x16x32xf32>
    %14 = arith.truncf %13 : vector<16x16x32xf32> to vector<16x16x32xbf16>
    %cst_5 = arith.constant 0.000000e+00 : bf16
    %15 = vector.broadcast %cst_5 : bf16 to vector<1x16x32xbf16>
    %c0_i32 = arith.constant 0 : i32
    %16 = arith.cmpi sgt, %arg1, %c0_i32 : i32
    %c0_6 = arith.constant 0 : index
    %c0_7 = arith.constant 0 : index
    %c0_8 = arith.constant 0 : index
    %c0_9 = arith.constant 0 : index
    %17 = vector.load %arg2[%c0_6, %c0_7, %c0_8, %c0_9] : memref<1x1x16x32xbf16, #tpu.memory_space<vmem>>, vector<1x1x16x32xbf16>
    %18 = vector.shape_cast %17 : vector<1x1x16x32xbf16> to vector<1x16x32xbf16>
    %19 = arith.extf %18 : vector<1x16x32xbf16> to vector<1x16x32xf32>
    %20 = vector.shape_cast %1 : vector<1x32xf32> to vector<1x1x32xf32>
    %21 = vector.broadcast %20 : vector<1x1x32xf32> to vector<1x16x32xf32>
    %22 = arith.mulf %19, %21 : vector<1x16x32xf32>
    %23 = vector.shape_cast %2 : vector<1x32xf32> to vector<1x1x32xf32>
    %24 = vector.broadcast %23 : vector<1x1x32xf32> to vector<1x16x32xf32>
    %25 = arith.addf %22, %24 : vector<1x16x32xf32>
    %cst_10 = arith.constant 0.000000e+00 : f32
    %26 = vector.broadcast %cst_10 : f32 to vector<1x16x32xf32>
    %27 = arith.maximumf %25, %26 : vector<1x16x32xf32>
    %28 = arith.truncf %27 : vector<1x16x32xf32> to vector<1x16x32xbf16>
    %29 = arith.select %16, %28, %15 : vector<1x16x32xbf16>
    %c0_i32_11 = arith.constant 0 : i32
    %30 = arith.cmpi slt, %arg1, %c0_i32_11 : i32
    %c0_12 = arith.constant 0 : index
    %c0_13 = arith.constant 0 : index
    %c0_14 = arith.constant 0 : index
    %c0_15 = arith.constant 0 : index
    %31 = vector.load %arg4[%c0_12, %c0_13, %c0_14, %c0_15] : memref<1x1x16x32xbf16, #tpu.memory_space<vmem>>, vector<1x1x16x32xbf16>
    %32 = vector.shape_cast %31 : vector<1x1x16x32xbf16> to vector<1x16x32xbf16>
    %33 = arith.extf %32 : vector<1x16x32xbf16> to vector<1x16x32xf32>
    %34 = vector.shape_cast %1 : vector<1x32xf32> to vector<1x1x32xf32>
    %35 = vector.broadcast %34 : vector<1x1x32xf32> to vector<1x16x32xf32>
    %36 = arith.mulf %33, %35 : vector<1x16x32xf32>
    %37 = vector.shape_cast %2 : vector<1x32xf32> to vector<1x1x32xf32>
    %38 = vector.broadcast %37 : vector<1x1x32xf32> to vector<1x16x32xf32>
    %39 = arith.addf %36, %38 : vector<1x16x32xf32>
    %cst_16 = arith.constant 0.000000e+00 : f32
    %40 = vector.broadcast %cst_16 : f32 to vector<1x16x32xf32>
    %41 = arith.maximumf %39, %40 : vector<1x16x32xf32>
    %42 = arith.truncf %41 : vector<1x16x32xf32> to vector<1x16x32xbf16>
    %43 = arith.select %30, %42, %15 : vector<1x16x32xbf16>
    %cst_17 = arith.constant 0.000000e+00 : bf16
    %44 = vector.broadcast %cst_17 : bf16 to vector<18x1x32xbf16>
    %c0_18 = arith.constant 0 : index
    %c0_19 = arith.constant 0 : index
    %c0_20 = arith.constant 0 : index
    %45 = vector.load %arg9[%c0_18, %c0_19, %c0_20] : memref<18x18x32xbf16, #tpu.memory_space<vmem>>, vector<18x1x32xbf16>
    tpu.vector_store %arg9[%c0_18, %c0_19, %c0_20], %44 {strides = array<i32>} : memref<18x18x32xbf16, #tpu.memory_space<vmem>>, vector<18x1x32xbf16>,
    %c0_21 = arith.constant 0 : index
    %c17 = arith.constant 17 : index
    %c0_22 = arith.constant 0 : index
    %46 = vector.load %arg9[%c0_21, %c17, %c0_22] : memref<18x18x32xbf16, #tpu.memory_space<vmem>>, vector<18x1x32xbf16>
    tpu.vector_store %arg9[%c0_21, %c17, %c0_22], %44 {strides = array<i32>} : memref<18x18x32xbf16, #tpu.memory_space<vmem>>, vector<18x1x32xbf16>,
    %c0_23 = arith.constant 0 : index
    %c1 = arith.constant 1 : index
    %c0_24 = arith.constant 0 : index
    %47 = vector.load %arg9[%c0_23, %c1, %c0_24] : memref<18x18x32xbf16, #tpu.memory_space<vmem>>, vector<1x16x32xbf16>
    tpu.vector_store %arg9[%c0_23, %c1, %c0_24], %29 {strides = array<i32>} : memref<18x18x32xbf16, #tpu.memory_space<vmem>>, vector<1x16x32xbf16>,
    %c17_25 = arith.constant 17 : index
    %c1_26 = arith.constant 1 : index
    %c0_27 = arith.constant 0 : index
    %48 = vector.load %arg9[%c17_25, %c1_26, %c0_27] : memref<18x18x32xbf16, #tpu.memory_space<vmem>>, vector<1x16x32xbf16>
    tpu.vector_store %arg9[%c17_25, %c1_26, %c0_27], %43 {strides = array<i32>} : memref<18x18x32xbf16, #tpu.memory_space<vmem>>, vector<1x16x32xbf16>,
    %c1_28 = arith.constant 1 : index
    %c1_29 = arith.constant 1 : index
    %c0_30 = arith.constant 0 : index
    %49 = vector.load %arg9[%c1_28, %c1_29, %c0_30] : memref<18x18x32xbf16, #tpu.memory_space<vmem>>, vector<16x16x32xbf16>
    tpu.vector_store %arg9[%c1_28, %c1_29, %c0_30], %14 {strides = array<i32>} : memref<18x18x32xbf16, #tpu.memory_space<vmem>>, vector<16x16x32xbf16>,
    %c0_31 = arith.constant 0 : index
    %c0_32 = arith.constant 0 : index
    %c0_33 = arith.constant 0 : index
    %50 = vector.load %arg9[%c0_31, %c0_32, %c0_33] : memref<18x18x32xbf16, #tpu.memory_space<vmem>>, vector<16x16x32xbf16>
    %c0_34 = arith.constant 0 : index
    %c1_35 = arith.constant 1 : index
    %c0_36 = arith.constant 0 : index
    %51 = vector.load %arg9[%c0_34, %c1_35, %c0_36] : memref<18x18x32xbf16, #tpu.memory_space<vmem>>, vector<16x16x32xbf16>
    %c0_37 = arith.constant 0 : index
    %c2 = arith.constant 2 : index
    %c0_38 = arith.constant 0 : index
    %52 = vector.load %arg9[%c0_37, %c2, %c0_38] : memref<18x18x32xbf16, #tpu.memory_space<vmem>>, vector<16x16x32xbf16>
    %c1_39 = arith.constant 1 : index
    %c0_40 = arith.constant 0 : index
    %c0_41 = arith.constant 0 : index
    %53 = vector.load %arg9[%c1_39, %c0_40, %c0_41] : memref<18x18x32xbf16, #tpu.memory_space<vmem>>, vector<16x16x32xbf16>
    %c1_42 = arith.constant 1 : index
    %c1_43 = arith.constant 1 : index
    %c0_44 = arith.constant 0 : index
    %54 = vector.load %arg9[%c1_42, %c1_43, %c0_44] : memref<18x18x32xbf16, #tpu.memory_space<vmem>>, vector<16x16x32xbf16>
    %c1_45 = arith.constant 1 : index
    %c2_46 = arith.constant 2 : index
    %c0_47 = arith.constant 0 : index
    %55 = vector.load %arg9[%c1_45, %c2_46, %c0_47] : memref<18x18x32xbf16, #tpu.memory_space<vmem>>, vector<16x16x32xbf16>
    %c2_48 = arith.constant 2 : index
    %c0_49 = arith.constant 0 : index
    %c0_50 = arith.constant 0 : index
    %56 = vector.load %arg9[%c2_48, %c0_49, %c0_50] : memref<18x18x32xbf16, #tpu.memory_space<vmem>>, vector<16x16x32xbf16>
    %c2_51 = arith.constant 2 : index
    %c1_52 = arith.constant 1 : index
    %c0_53 = arith.constant 0 : index
    %57 = vector.load %arg9[%c2_51, %c1_52, %c0_53] : memref<18x18x32xbf16, #tpu.memory_space<vmem>>, vector<16x16x32xbf16>
    %c2_54 = arith.constant 2 : index
    %c2_55 = arith.constant 2 : index
    %c0_56 = arith.constant 0 : index
    %58 = vector.load %arg9[%c2_54, %c2_55, %c0_56] : memref<18x18x32xbf16, #tpu.memory_space<vmem>>, vector<16x16x32xbf16>
    %59 = tpu.concatenate %50, %51, %52, %53, %54, %55, %56, %57, %58 in 2 : vector<16x16x32xbf16>, vector<16x16x32xbf16>, vector<16x16x32xbf16>, vector<16x16x32xbf16>, vector<16x16x32xbf16>, vector<16x16x32xbf16>, vector<16x16x32xbf16>, vector<16x16x32xbf16>, vector<16x16x32xbf16> -> vector<16x16x288xbf16>
    %60 = vector.shape_cast %59 : vector<16x16x288xbf16> to vector<256x288xbf16>
    %c0_57 = arith.constant 0 : index
    %c0_58 = arith.constant 0 : index
    %61 = vector.load %arg5[%c0_57, %c0_58] : memref<288x32xbf16, #tpu.memory_space<vmem>>, vector<288x32xbf16>
    %cst_59 = arith.constant dense<0.000000e+00> : vector<256x32xf32>
    %62 = tpu.matmul %60, %61, %cst_59 {dimension_numbers = #tpu.dot_dimension_numbers<[1], [0], [0], [1], [0, 0, 1, 1], [], []>} : vector<256x288xbf16>, vector<288x32xbf16>, vector<256x32xf32> -> vector<256x32xf32>
    %63 = vector.shape_cast %62 : vector<256x32xf32> to vector<16x16x32xf32>
    %c0_60 = arith.constant 0 : index
    %c0_61 = arith.constant 0 : index
    %c0_62 = arith.constant 0 : index
    %c0_63 = arith.constant 0 : index
    %64 = vector.load %arg7[%c0_60, %c0_61, %c0_62, %c0_63] : memref<1x16x16x32xf32, #tpu.memory_space<vmem>>, vector<1x16x16x32xf32>
    %65 = vector.shape_cast %64 : vector<1x16x16x32xf32> to vector<16x16x32xf32>
    %66 = vector.shape_cast %63 : vector<16x16x32xf32> to vector<1x16x16x32xf32>
    tpu.vector_store %arg7[%c0_60, %c0_61, %c0_62, %c0_63], %66 {strides = array<i32>} : memref<1x16x16x32xf32, #tpu.memory_space<vmem>>, vector<1x16x16x32xf32>,
    %cst_64 = arith.constant dense<0.000000e+00> : vector<32xf32>
    %67 = vector.multi_reduction <add>, %62, %cst_64 [0] : vector<256x32xf32> to vector<32xf32>
    %68 = vector.shape_cast %67 : vector<32xf32> to vector<1x32xf32>
    %c0_65 = arith.constant 0 : index
    %c0_66 = arith.constant 0 : index
    %c0_67 = arith.constant 0 : index
    %c0_68 = arith.constant 0 : index
    %69 = vector.load %arg8[%c0_65, %c0_66, %c0_67, %c0_68] : memref<1x1x2x32xf32, #tpu.memory_space<vmem>>, vector<1x1x1x32xf32>
    %70 = vector.shape_cast %69 : vector<1x1x1x32xf32> to vector<1x32xf32>
    %71 = vector.shape_cast %68 : vector<1x32xf32> to vector<1x1x1x32xf32>
    tpu.vector_store %arg8[%c0_65, %c0_66, %c0_67, %c0_68], %71 {strides = array<i32>} : memref<1x1x2x32xf32, #tpu.memory_space<vmem>>, vector<1x1x1x32xf32>,
    %72 = arith.mulf %62, %62 : vector<256x32xf32>
    %cst_69 = arith.constant dense<0.000000e+00> : vector<32xf32>
    %73 = vector.multi_reduction <add>, %72, %cst_69 [0] : vector<256x32xf32> to vector<32xf32>
    %74 = vector.shape_cast %73 : vector<32xf32> to vector<1x32xf32>
    %c0_70 = arith.constant 0 : index
    %c0_71 = arith.constant 0 : index
    %c1_72 = arith.constant 1 : index
    %c0_73 = arith.constant 0 : index
    %75 = vector.load %arg8[%c0_70, %c0_71, %c1_72, %c0_73] : memref<1x1x2x32xf32, #tpu.memory_space<vmem>>, vector<1x1x1x32xf32>
    %76 = vector.shape_cast %75 : vector<1x1x1x32xf32> to vector<1x32xf32>
    %77 = vector.shape_cast %74 : vector<1x32xf32> to vector<1x1x1x32xf32>
    tpu.vector_store %arg8[%c0_70, %c0_71, %c1_72, %c0_73], %77 {strides = array<i32>} : memref<1x1x2x32xf32, #tpu.memory_space<vmem>>, vector<1x1x1x32xf32>,
    return
  }
  func.func @transform_0(%arg0: i32, %arg1: i32) -> (i32, i32, i32, i32) {
    %c16_i32 = arith.constant 16 : i32
    %0 = arith.muli %arg1, %c16_i32 : i32
    %c1_i32 = arith.constant 1 : i32
    %1 = arith.subi %0, %c1_i32 : i32
    %c0_i32 = arith.constant 0 : i32
    %2 = arith.maxsi %1, %c0_i32 : i32
    %c0_i32_0 = arith.constant 0 : i32
    %c0_i32_1 = arith.constant 0 : i32
    %c0_i32_2 = arith.constant 0 : i32
    return %arg0, %2, %c0_i32_0, %c0_i32_1 : i32, i32, i32, i32
  }
  func.func @transform_1(%arg0: i32, %arg1: i32) -> (i32, i32, i32, i32) {
    %c0_i32 = arith.constant 0 : i32
    %c0_i32_0 = arith.constant 0 : i32
    %c0_i32_1 = arith.constant 0 : i32
    return %arg0, %arg1, %c0_i32, %c0_i32_0 : i32, i32, i32, i32
  }
  func.func @transform_2(%arg0: i32, %arg1: i32) -> (i32, i32, i32, i32) {
    %c1_i32 = arith.constant 1 : i32
    %0 = arith.addi %arg1, %c1_i32 : i32
    %c16_i32 = arith.constant 16 : i32
    %1 = arith.muli %0, %c16_i32 : i32
    %c15_i32 = arith.constant 15 : i32
    %2 = arith.minsi %1, %c15_i32 : i32
    %c0_i32 = arith.constant 0 : i32
    %c0_i32_0 = arith.constant 0 : i32
    %c0_i32_1 = arith.constant 0 : i32
    return %arg0, %2, %c0_i32, %c0_i32_0 : i32, i32, i32, i32
  }
  func.func @transform_3(%arg0: i32, %arg1: i32) -> (i32, i32) {
    %c0_i32 = arith.constant 0 : i32
    %c0_i32_0 = arith.constant 0 : i32
    %c0_i32_1 = arith.constant 0 : i32
    return %c0_i32, %c0_i32_0 : i32, i32
  }
  func.func @transform_4(%arg0: i32, %arg1: i32) -> (i32, i32) {
    %c0_i32 = arith.constant 0 : i32
    %c0_i32_0 = arith.constant 0 : i32
    %c0_i32_1 = arith.constant 0 : i32
    return %c0_i32, %c0_i32_0 : i32, i32
  }
  func.func @transform_5(%arg0: i32, %arg1: i32) -> (i32, i32, i32, i32) {
    %c0_i32 = arith.constant 0 : i32
    %c0_i32_0 = arith.constant 0 : i32
    %c0_i32_1 = arith.constant 0 : i32
    return %arg0, %arg1, %c0_i32, %c0_i32_0 : i32, i32, i32, i32
  }
  func.func @transform_6(%arg0: i32, %arg1: i32) -> (i32, i32, i32, i32) {
    %c0_i32 = arith.constant 0 : i32
    %c0_i32_0 = arith.constant 0 : i32
    %c0_i32_1 = arith.constant 0 : i32
    return %arg0, %arg1, %c0_i32, %c0_i32_0 : i32, i32, i32, i32
  }
}

module attributes {stable_mosaic.version = 11 : i64} {
  func.func @_bn_apply_kernel(%arg0: i32, %arg1: memref<128x128xf32, #tpu.memory_space<vmem>>, %arg2: memref<2x128xf32, #tpu.memory_space<vmem>>, %arg3: memref<128x128xf32, #tpu.memory_space<vmem>>) attributes {dimension_semantics = [#tpu.dimension_semantics<parallel>], iteration_bounds = array<i64: 1>, scalar_prefetch = 0 : i64, scratch_operands = 0 : i64, tpu.core_type = #tpu.core_type<tc>, window_params = [{transform_indices = @transform_0, window_bounds = array<i64: 128, 128>}, {pipeline_mode = #tpu.pipeline_mode<synchronous>, transform_indices = @transform_1, window_bounds = array<i64: 2, 128>}, {transform_indices = @transform_2, window_bounds = array<i64: 128, 128>}]} {
    %c0 = arith.constant 0 : index
    %c0_0 = arith.constant 0 : index
    %0 = vector.load %arg1[%c0, %c0_0] : memref<128x128xf32, #tpu.memory_space<vmem>>, vector<128x128xf32>
    %c0_1 = arith.constant 0 : index
    %c0_2 = arith.constant 0 : index
    %1 = vector.load %arg2[%c0_1, %c0_2] : memref<2x128xf32, #tpu.memory_space<vmem>>, vector<1x128xf32>
    %2 = vector.broadcast %1 : vector<1x128xf32> to vector<128x128xf32>
    %3 = arith.mulf %0, %2 : vector<128x128xf32>
    %c1 = arith.constant 1 : index
    %c0_3 = arith.constant 0 : index
    %4 = vector.load %arg2[%c1, %c0_3] : memref<2x128xf32, #tpu.memory_space<vmem>>, vector<1x128xf32>
    %5 = vector.broadcast %4 : vector<1x128xf32> to vector<128x128xf32>
    %6 = arith.addf %3, %5 : vector<128x128xf32>
    %cst = arith.constant 0.000000e+00 : f32
    %7 = vector.broadcast %cst : f32 to vector<128x128xf32>
    %8 = arith.maximumf %6, %7 : vector<128x128xf32>
    %c0_4 = arith.constant 0 : index
    %c0_5 = arith.constant 0 : index
    %9 = vector.load %arg3[%c0_4, %c0_5] : memref<128x128xf32, #tpu.memory_space<vmem>>, vector<128x128xf32>
    tpu.vector_store %arg3[%c0_4, %c0_5], %8 {strides = array<i32>} : memref<128x128xf32, #tpu.memory_space<vmem>>, vector<128x128xf32>,
    return
  }
  func.func @transform_0(%arg0: i32) -> (i32, i32) {
    %c0_i32 = arith.constant 0 : i32
    %c0_i32_0 = arith.constant 0 : i32
    return %arg0, %c0_i32 : i32, i32
  }
  func.func @transform_1(%arg0: i32) -> (i32, i32) {
    %c0_i32 = arith.constant 0 : i32
    %c0_i32_0 = arith.constant 0 : i32
    %c0_i32_1 = arith.constant 0 : i32
    return %c0_i32, %c0_i32_0 : i32, i32
  }
  func.func @transform_2(%arg0: i32) -> (i32, i32) {
    %c0_i32 = arith.constant 0 : i32
    %c0_i32_0 = arith.constant 0 : i32
    return %arg0, %c0_i32 : i32, i32
  }
}

</mosaic_0001>

<llo_original>
// kernel: tile.9
$region0: #{tile.9}
  %s0 = inlined_call_operand.vmem [shape: f32[2,4,32], index: 0, kind: input, shape index: {}]
  %s1 = inlined_call_operand.vmem [shape: f32[2,128], index: 1, kind: output, shape index: {}]
  $region1: #{tile.9} parent=0
    #allocation0 [shape = 'u8[4096]{0}', space=vmem, size = 0x1000, scoped, tag = 'scoped mem for output reshape']
    #allocation1 [shape = 'u8[8192]{0}', space=vmem, size = 0x2000, scoped, tag = 'scoped mem for input reshape']
    %s3 = sshllo.u32 0, 4
    %s4 = scalar_lea.vmem %s0, 4
    %v5 = vld [vmem:[%s4] sm:%s3]
    %s6 = scalar_lea.vmem [#allocation1], 8
    %7 = vst [vmem:[%s6] sm:%s3] %v5
    %v8 = vld [vmem:[%s0] sm:%s3]
    %9 = vst [vmem:[#allocation1] sm:%s3] %v8
    %s10 = smov 3
    %v11 = vld [vmem:[#allocation1] ss:$8 sm:%s10]
    %vm12 = vcmask 261120
    %13 = vst.msk [vmem:[#allocation0] sm:$0x3] %vm12, %v11
    %s14 = scalar_lea.vmem [#allocation1], 3
    %s15 = smov 3
    %v16 = vld [vmem:[%s14] ss:$8 sm:%s15]
    %17 = vrot.lane.b32.xlu0 %v16, 96
    %v18 = vpop.permute.xlu0 %17
    %vm19 = vcmask 1048320
    %20 = vst.msk [vmem:[#allocation0] sm:$0x3] %vm19, %v18
    %s21 = scalar_lea.vmem [#allocation1], 2
    %s22 = smov 3
    %v23 = vld [vmem:[%s21] ss:$8 sm:%s22]
    %24 = vrot.lane.b32.xlu0 %v23, 64
    %v25 = vpop.permute.xlu0 %24
    %vm26 = vcmask 785920
    %27 = vst.msk [vmem:[#allocation0] sm:$0x3] %vm26, %v25
    %s28 = scalar_lea.vmem [#allocation1], 1
    %s29 = smov 3
    %v30 = vld [vmem:[%s28] ss:$8 sm:%s29]
    %31 = vrot.lane.b32.xlu0 %v30, 32
    %v32 = vpop.permute.xlu0 %31
    %vm33 = vcmask 523520
    %34 = vst.msk [vmem:[#allocation0] sm:$0x3] %vm33, %v32
    %s36 = sshllo.u32 0, 2
    %v38 = vld [vmem:[#allocation0] sm:%s36]
    %s39 = sshllo.u32 0, 2
    %40 = vst [vmem:[%s1] sm:%s39] %v38

// kernel: double_conv.5
$region0: #{double_conv.5}
  #allocation0 [shape = 'u32[]', space=smem, size = 0x4, offset = 0x4, fixed_abs, tag = 'smem constant byte address 0x4 - core index']
  #allocation1 [shape = 'u32[144,128]{1,0:T(1,128)}', space=vmem, size = 0x12000, scoped, tag = 'internal scratch']
  %s0 = inlined_call_operand.vmem [shape: f32[128,128], index: 0, kind: input, shape index: {}]
  %s1 = inlined_call_operand.vmem [shape: f32[2,128], index: 1, kind: input, shape index: {}]
  %s2 = inlined_call_operand.vmem [shape: f32[128,128], index: 2, kind: output, shape index: {}]
  %s3 = sld [smem:[#allocation0]]
  $region18: #{double_conv.5} parent=0
    _
  %s5 = ssub.s32 1, %s3
  %s6 = scalar_select 0, %s5, %s3
  // Predicated region
  $region2: #{double_conv.5} parent=0 // pred_check
    _
  $region3: #{double_conv.5} parent=0 // pred_check_branch
    %8 = sbr.rel (0) target = $region5
  $region4: #{double_conv.5} parent=0 // pred_region
    _
  $region5: #{double_conv.5} parent=0 // pred_fallthru
    _
  // Predicated region
  $region6: #{double_conv.5} parent=0 // pred_check
    _
  $region7: #{double_conv.5} parent=0 // pred_check_branch
    %10 = sbr.rel (0) target = $region9
  $region8: #{double_conv.5} parent=0 // pred_region
    _
  $region9: #{double_conv.5} parent=0 // pred_fallthru
    _
  %v11 = vld [vmem:[%s0] sm:$0xff]
  %v12 = vld [vmem:[%s0 + $0x8] sm:$0xff]
  %v13 = vld [vmem:[%s0 + $0x10] sm:$0xff]
  %v14 = vld [vmem:[%s0 + $0x18] sm:$0xff]
  %v15 = vld [vmem:[%s0 + $0x20] sm:$0xff]
  %v16 = vld [vmem:[%s0 + $0x28] sm:$0xff]
  %v17 = vld [vmem:[%s0 + $0x30] sm:$0xff]
  %v18 = vld [vmem:[%s0 + $0x38] sm:$0xff]
  %v19 = vld [vmem:[%s0 + $0x40] sm:$0xff]
  %v20 = vld [vmem:[%s0 + $0x48] sm:$0xff]
  %v21 = vld [vmem:[%s0 + $0x50] sm:$0xff]
  %v22 = vld [vmem:[%s0 + $0x58] sm:$0xff]
  %v23 = vld [vmem:[%s0 + $0x60] sm:$0xff]
  %v24 = vld [vmem:[%s0 + $0x68] sm:$0xff]
  %v25 = vld [vmem:[%s0 + $0x70] sm:$0xff]
  %v26 = vld [vmem:[%s0 + $0x78] sm:$0xff]
  %v27 = vld [vmem:[%s1] sm:$0x1]
  %v28 = vlaneseq
  %v29 = vshrl.u32 %v28, 7
  %v30 = vsub.s32 0, %v29
  %v31 = vrot.slane %v27, %v30
  %v32 = vmul.f32 %v11, %v31
  %v33 = vmul.f32 %v12, %v31
  %v34 = vmul.f32 %v13, %v31
  %v35 = vmul.f32 %v14, %v31
  %v36 = vmul.f32 %v15, %v31
  %v37 = vmul.f32 %v16, %v31
  %v38 = vmul.f32 %v17, %v31
  %v39 = vmul.f32 %v18, %v31
  %v40 = vmul.f32 %v19, %v31
  %v41 = vmul.f32 %v20, %v31
  %v42 = vmul.f32 %v21, %v31
  %v43 = vmul.f32 %v22, %v31
  %v44 = vmul.f32 %v23, %v31
  %v45 = vmul.f32 %v24, %v31
  %v46 = vmul.f32 %v25, %v31
  %v47 = vmul.f32 %v26, %v31
  %v48 = vld [vmem:[%s1 + $0x1] sm:$0x1]
  %v49 = vlaneseq
  %v50 = vshrl.u32 %v49, 7
  %v51 = vsub.s32 0, %v50
  %v52 = vrot.slane %v48, %v51
  %v53 = vadd.f32 %v32, %v52
  %v54 = vadd.f32 %v33, %v52
  %v55 = vadd.f32 %v34, %v52
  %v56 = vadd.f32 %v35, %v52
  %v57 = vadd.f32 %v36, %v52
  %v58 = vadd.f32 %v37, %v52
  %v59 = vadd.f32 %v38, %v52
  %v60 = vadd.f32 %v39, %v52
  %v61 = vadd.f32 %v40, %v52
  %v62 = vadd.f32 %v41, %v52
  %v63 = vadd.f32 %v42, %v52
  %v64 = vadd.f32 %v43, %v52
  %v65 = vadd.f32 %v44, %v52
  %v66 = vadd.f32 %v45, %v52
  %v67 = vadd.f32 %v46, %v52
  %v68 = vadd.f32 %v47, %v52
  %v69 = vmax.f32 %v53, 0.0
  %v70 = vmax.f32 %v54, 0.0
  %v71 = vmax.f32 %v55, 0.0
  %v72 = vmax.f32 %v56, 0.0
  %v73 = vmax.f32 %v57, 0.0
  %v74 = vmax.f32 %v58, 0.0
  %v75 = vmax.f32 %v59, 0.0
  %v76 = vmax.f32 %v60, 0.0
  %v77 = vmax.f32 %v61, 0.0
  %v78 = vmax.f32 %v62, 0.0
  %v79 = vmax.f32 %v63, 0.0
  %v80 = vmax.f32 %v64, 0.0
  %v81 = vmax.f32 %v65, 0.0
  %v82 = vmax.f32 %v66, 0.0
  %v83 = vmax.f32 %v67, 0.0
  %v84 = vmax.f32 %v68, 0.0
  %85 = vst [vmem:[%s2] sm:$0xff] %v69
  %86 = vst [vmem:[%s2 + $0x8] sm:$0xff] %v70
  %87 = vst [vmem:[%s2 + $0x10] sm:$0xff] %v71
  %88 = vst [vmem:[%s2 + $0x18] sm:$0xff] %v72
  %89 = vst [vmem:[%s2 + $0x20] sm:$0xff] %v73
  %90 = vst [vmem:[%s2 + $0x28] sm:$0xff] %v74
  %91 = vst [vmem:[%s2 + $0x30] sm:$0xff] %v75
  %92 = vst [vmem:[%s2 + $0x38] sm:$0xff] %v76
  %93 = vst [vmem:[%s2 + $0x40] sm:$0xff] %v77
  %94 = vst [vmem:[%s2 + $0x48] sm:$0xff] %v78
  %95 = vst [vmem:[%s2 + $0x50] sm:$0xff] %v79
  %96 = vst [vmem:[%s2 + $0x58] sm:$0xff] %v80
  %97 = vst [vmem:[%s2 + $0x60] sm:$0xff] %v81
  %98 = vst [vmem:[%s2 + $0x68] sm:$0xff] %v82
  %99 = vst [vmem:[%s2 + $0x70] sm:$0xff] %v83
  %100 = vst [vmem:[%s2 + $0x78] sm:$0xff] %v84
  // Predicated region
  $region10: #{double_conv.5} parent=0 // pred_check
    _
  $region11: #{double_conv.5} parent=0 // pred_check_branch
    %102 = sbr.rel (0) target = $region13
  $region12: #{double_conv.5} parent=0 // pred_region
    _
  $region13: #{double_conv.5} parent=0 // pred_fallthru
    _
  // Predicated region
  $region14: #{double_conv.5} parent=0 // pred_check
    _
  $region15: #{double_conv.5} parent=0 // pred_check_branch
    %104 = sbr.rel (0) target = $region17
  $region16: #{double_conv.5} parent=0 // pred_region
    _
  $region17: #{double_conv.5} parent=0 // pred_fallthru
    _

// kernel: double_conv.3
$region0: #{double_conv.3}
  #allocation0 [shape = 'u32[]', space=smem, size = 0x4, offset = 0x4, fixed_abs, tag = 'smem constant byte address 0x4 - core index']
  #allocation1 [shape = 'u32[144,128]{1,0:T(1,128)}', space=vmem, size = 0x12000, scoped, tag = 'internal scratch']
  #allocation2 [shape = 'bf16[18,18,4]{2,1,0:T(8,128)(2,1)}', space=vmem, size = 0x1b000, scoped, tag = 'scratch operand']
  %s0 = inlined_call_operand.vmem [shape: bf16[2,16,16,4], index: 0, kind: input, shape index: {}, may-alias: {0,1,2}]
  %s1 = inlined_call_operand.vmem [shape: bf16[2,16,16,4], index: 1, kind: input, shape index: {}, may-alias: {0,1,2}]
  %s2 = inlined_call_operand.vmem [shape: bf16[2,16,16,4], index: 2, kind: input, shape index: {}, may-alias: {0,1,2}]
  %s3 = inlined_call_operand.vmem [shape: bf16[36,32], index: 3, kind: input, shape index: {}]
  %s4 = inlined_call_operand.vmem [shape: f32[2,4], index: 4, kind: input, shape index: {}]
  %s5 = inlined_call_operand.vmem [shape: bf16[2,16,16,32], index: 5, kind: output, shape index: {0}]
  %s6 = inlined_call_operand.vmem [shape: f32[2,1,2,32], index: 6, kind: output, shape index: {1}]
  %7 = xla_tuple %s5, %s6
  %s8 = sld [smem:[#allocation0]]
  $region61: #{double_conv.3} parent=0
    _
  %s10 = ssub.s32 1, %s8
  %s11 = scalar_select 0, %s10, %s8
  loop: start=0, step=1, limit=4
  $region2: #{double_conv.3} parent=0 // loop_pre_header
    _
  $region3: #{double_conv.3} parent=0 // loop_header
    %s13 = sphi 0, %s17
    %p14 = scmp.ge.s32.totalorder %s13, 4
    %s20 = sphi 0, %s32
    %s21 = sphi 0, %s28
    %s22 = sphi 0, %s20
    %s23 = sphi 0, %s21
    %s24 = sphi 0, %s22
    %s25 = sphi 0, %s23
    %s45 = sphi 0, %s47
    %s48 = sphi 0, %s45
    %s49 = sphi 0, %s48
    %s65 = sphi 0, %s49
    %s73 = sphi 0, %s75
    %s76 = sphi 0, %s73
    %s77 = sphi 0, %s76
    %s93 = sphi 0, %s77
    %s109 = sphi 0, %s111
    %s112 = sphi 0, %s109
    %s113 = sphi 0, %s112
    %s129 = sphi 0, %s113
    %s133 = sphi 0, %s133
    %s135 = sphi 0, %s133
    %s136 = sphi 0, %s135
    %s150 = sphi 0, %s136
    %s154 = sphi 0, %s154
    %s156 = sphi 0, %s154
    %s157 = sphi 0, %s156
    %s171 = sphi 0, %s157
    %s179 = sphi 0, %s181
    %s182 = sphi 0, %s179
    %s183 = sphi 0, %s182
    %s199 = sphi 0, %s183
    %s207 = sphi 0, %s209
    %s210 = sphi 0, %s207
    %s211 = sphi 0, %s210
    %s227 = sphi 0, %s211
  $region4: #{double_conv.3} parent=0 // loop_header_branch
    %16 = sbr.rel (%p14) target = $region8
  $region5: #{double_conv.3} parent=0 // loop_body
    %s18 = ssub.s32 %s13, 1
    %s19 = ssub.s32 %s13, 2
    %s26 = sadd.s32 1, %s21
    %p27 = scmp.ge.s32.totalorder %s26, 1
    %s28 = scalar_select %p27, 0, %s26
    %s29 = sadd.s32 1, %s20
    %s30 = scalar_select %p27, %s29, %s20
    %p31 = scmp.ge.s32.totalorder %s30, 2
    %s32 = scalar_select %p31, 0, %s30
    %s33 = smul.u32 %s21, 16
    %s34 = ssub.s32 %s33, 1
    %p35 = scmp.gt.s32.totalorder %s34, 0
    %s36 = scalar_select %p35, %s34, 0
    %s37 = smul.u32 %s28, 16
    %s38 = ssub.s32 %s37, 1
    %p39 = scmp.gt.s32.totalorder %s38, 0
    %s40 = scalar_select %p39, %s38, 0
    %s41 = ssub.s32 %s20, %s32
    %s42 = ssub.s32 %s36, %s40
    %s43 = sor.u32 %s41, %s42
    %p44 = scmp.eq.s32.totalorder %s43, 0
    %s46 = sadd.s32 %s45, 1
    %s47 = scalar_select %p44, %s45, %s46
    %p50 = pneg %p44
    %p51 = scmp.eq.s32.totalorder %s13, 1
    %p52 = por %p50, %p51
    %p53 = scmp.ne.s32.totalorder %s45, %s48
    %p54 = scmp.eq.s32.totalorder %s13, 0
    %p55 = por %p53, %p54
    %p56 = scmp.ne.s32.totalorder %s45, %s48
    %p57 = scmp.eq.s32.totalorder %s18, 1
    %p58 = por %p56, %p57
    %p59 = scmp.ne.s32.totalorder %s48, %s49
    %p60 = scmp.eq.s32.totalorder %s18, 0
    %p61 = por %p59, %p60
    %p62 = scmp.ne.s32.totalorder %s48, %s49
    %p63 = scmp.eq.s32.totalorder %s19, 1
    %p64 = por %p62, %p63
    %p66 = scmp.ne.s32.totalorder %s49, %s65
    %p67 = scmp.eq.s32.totalorder %s19, 0
    %p68 = por %p66, %p67
    %s69 = ssub.s32 %s20, %s32
    %s70 = ssub.s32 %s21, %s28
    %s71 = sor.u32 %s69, %s70
    %p72 = scmp.eq.s32.totalorder %s71, 0
    %s74 = sadd.s32 %s73, 1
    %s75 = scalar_select %p72, %s73, %s74
    %p78 = pneg %p72
    %p79 = scmp.eq.s32.totalorder %s13, 1
    %p80 = por %p78, %p79
    %p81 = scmp.ne.s32.totalorder %s73, %s76
    %p82 = scmp.eq.s32.totalorder %s13, 0
    %p83 = por %p81, %p82
    %p84 = scmp.ne.s32.totalorder %s73, %s76
    %p85 = scmp.eq.s32.totalorder %s18, 1
    %p86 = por %p84, %p85
    %p87 = scmp.ne.s32.totalorder %s76, %s77
    %p88 = scmp.eq.s32.totalorder %s18, 0
    %p89 = por %p87, %p88
    %p90 = scmp.ne.s32.totalorder %s76, %s77
    %p91 = scmp.eq.s32.totalorder %s19, 1
    %p92 = por %p90, %p91
    %p94 = scmp.ne.s32.totalorder %s77, %s93
    %p95 = scmp.eq.s32.totalorder %s19, 0
    %p96 = por %p94, %p95
    %s97 = sadd.s32 %s21, 1
    %s98 = smul.u32 %s97, 16
    %p99 = scmp.lt.s32.totalorder %s98, 15
    %s100 = scalar_select %p99, %s98, 15
    %s101 = sadd.s32 %s28, 1
    %s102 = smul.u32 %s101, 16
    %p103 = scmp.lt.s32.totalorder %s102, 15
    %s104 = scalar_select %p103, %s102, 15
    %s105 = ssub.s32 %s20, %s32
    %s106 = ssub.s32 %s100, %s104
    %s107 = sor.u32 %s105, %s106
    %p108 = scmp.eq.s32.totalorder %s107, 0
    %s110 = sadd.s32 %s109, 1
    %s111 = scalar_select %p108, %s109, %s110
    %p114 = pneg %p108
    %p115 = scmp.eq.s32.totalorder %s13, 1
    %p116 = por %p114, %p115
    %p117 = scmp.ne.s32.totalorder %s109, %s112
    %p118 = scmp.eq.s32.totalorder %s13, 0
    %p119 = por %p117, %p118
    %p120 = scmp.ne.s32.totalorder %s109, %s112
    %p121 = scmp.eq.s32.totalorder %s18, 1
    %p122 = por %p120, %p121
    %p123 = scmp.ne.s32.totalorder %s112, %s113
    %p124 = scmp.eq.s32.totalorder %s18, 0
    %p125 = por %p123, %p124
    %p126 = scmp.ne.s32.totalorder %s112, %s113
    %p127 = scmp.eq.s32.totalorder %s19, 1
    %p128 = por %p126, %p127
    %p130 = scmp.ne.s32.totalorder %s113, %s129
    %p131 = scmp.eq.s32.totalorder %s19, 0
    %p132 = por %p130, %p131
    %s134 = sadd.s32 %s133, 1
    %p137 = scmp.eq.s32.totalorder %s13, 1
    %p138 = scmp.ne.s32.totalorder %s133, %s135
    %p139 = scmp.eq.s32.totalorder %s13, 0
    %p140 = por %p138, %p139
    %p141 = scmp.ne.s32.totalorder %s133, %s135
    %p142 = scmp.eq.s32.totalorder %s18, 1
    %p143 = por %p141, %p142
    %p144 = scmp.ne.s32.totalorder %s135, %s136
    %p145 = scmp.eq.s32.totalorder %s18, 0
    %p146 = por %p144, %p145
    %p147 = scmp.ne.s32.totalorder %s135, %s136
    %p148 = scmp.eq.s32.totalorder %s19, 1
    %p149 = por %p147, %p148
    %p151 = scmp.ne.s32.totalorder %s136, %s150
    %p152 = scmp.eq.s32.totalorder %s19, 0
    %p153 = por %p151, %p152
    %s155 = sadd.s32 %s154, 1
    %p158 = scmp.eq.s32.totalorder %s13, 1
    %p159 = scmp.ne.s32.totalorder %s154, %s156
    %p160 = scmp.eq.s32.totalorder %s13, 0
    %p161 = por %p159, %p160
    %p162 = scmp.ne.s32.totalorder %s154, %s156
    %p163 = scmp.eq.s32.totalorder %s18, 1
    %p164 = por %p162, %p163
    %p165 = scmp.ne.s32.totalorder %s156, %s157
    %p166 = scmp.eq.s32.totalorder %s18, 0
    %p167 = por %p165, %p166
    %p168 = scmp.ne.s32.totalorder %s156, %s157
    %p169 = scmp.eq.s32.totalorder %s19, 1
    %p170 = por %p168, %p169
    %p172 = scmp.ne.s32.totalorder %s157, %s171
    %p173 = scmp.eq.s32.totalorder %s19, 0
    %p174 = por %p172, %p173
    %s175 = ssub.s32 %s20, %s32
    %s176 = ssub.s32 %s21, %s28
    %s177 = sor.u32 %s175, %s176
    %p178 = scmp.eq.s32.totalorder %s177, 0
    %s180 = sadd.s32 %s179, 1
    %s181 = scalar_select %p178, %s179, %s180
    %p184 = pneg %p178
    %p185 = scmp.eq.s32.totalorder %s13, 1
    %p186 = por %p184, %p185
    %p187 = scmp.ne.s32.totalorder %s179, %s182
    %p188 = scmp.eq.s32.totalorder %s13, 0
    %p189 = por %p187, %p188
    %p190 = scmp.ne.s32.totalorder %s179, %s182
    %p191 = scmp.eq.s32.totalorder %s18, 1
    %p192 = por %p190, %p191
    %p193 = scmp.ne.s32.totalorder %s182, %s183
    %p194 = scmp.eq.s32.totalorder %s18, 0
    %p195 = por %p193, %p194
    %p196 = scmp.ne.s32.totalorder %s182, %s183
    %p197 = scmp.eq.s32.totalorder %s19, 1
    %p198 = por %p196, %p197
    %p200 = scmp.ne.s32.totalorder %s183, %s199
    %p201 = scmp.eq.s32.totalorder %s19, 0
    %p202 = por %p200, %p201
    %s203 = ssub.s32 %s20, %s32
    %s204 = ssub.s32 %s21, %s28
    %s205 = sor.u32 %s203, %s204
    %p206 = scmp.eq.s32.totalorder %s205, 0
    %s208 = sadd.s32 %s207, 1
    %s209 = scalar_select %p206, %s207, %s208
    %p212 = pneg %p206
    %p213 = scmp.eq.s32.totalorder %s13, 1
    %p214 = por %p212, %p213
    %p215 = scmp.ne.s32.totalorder %s207, %s210
    %p216 = scmp.eq.s32.totalorder %s13, 0
    %p217 = por %p215, %p216
    %p218 = scmp.ne.s32.totalorder %s207, %s210
    %p219 = scmp.eq.s32.totalorder %s18, 1
    %p220 = por %p218, %p219
    %p221 = scmp.ne.s32.totalorder %s210, %s211
    %p222 = scmp.eq.s32.totalorder %s18, 0
    %p223 = por %p221, %p222
    %p224 = scmp.ne.s32.totalorder %s210, %s211
    %p225 = scmp.eq.s32.totalorder %s19, 1
    %p226 = por %p224, %p225
    %p228 = scmp.ne.s32.totalorder %s211, %s227
    %p229 = scmp.eq.s32.totalorder %s19, 0
    %p230 = por %p228, %p229
    %p231 = scmp.le.s32.totalorder 1, %s13
    %p232 = scmp.lt.s32.totalorder %s13, 3
    %p233 = pnand %p231, %p232
    %p234 = pneg %p233
    // Predicated region
    $region9: #{double_conv.3} parent=5 // pred_check
      _
    $region10: #{double_conv.3} parent=5 // pred_check_branch
      %236 = sbr.rel (%p233) target = $region12
    $region11: #{double_conv.3} parent=5 // pred_region
      %s237 = ssub.s32 %s13, 1
      // Predicated region
      $region13: #{double_conv.3} parent=11 // pred_check
        %p238 = pneg %p146
      $region14: #{double_conv.3} parent=11 // pred_check_branch
        %240 = sbr.rel (%p238) target = $region16
      $region15: #{double_conv.3} parent=11 // pred_region
        _
      $region16: #{double_conv.3} parent=11 // pred_fallthru
        _
      // Predicated region
      $region17: #{double_conv.3} parent=11 // pred_check
        %p241 = pneg %p167
      $region18: #{double_conv.3} parent=11 // pred_check_branch
        %243 = sbr.rel (%p241) target = $region20
      $region19: #{double_conv.3} parent=11 // pred_region
        _
      $region20: #{double_conv.3} parent=11 // pred_fallthru
        _
    $region12: #{double_conv.3} parent=5 // pred_fallthru
      _
    %p244 = scmp.lt.s32.totalorder %s13, 2
    // Predicated region
    $region21: #{double_conv.3} parent=5 // pred_check
      %p245 = pneg %p244
    $region22: #{double_conv.3} parent=5 // pred_check_branch
      %247 = sbr.rel (%p245) target = $region24
    $region23: #{double_conv.3} parent=5 // pred_region
      // Predicated region
      $region25: #{double_conv.3} parent=23 // pred_check
        %p248 = pneg %p55
      $region26: #{double_conv.3} parent=23 // pred_check_branch
        %250 = sbr.rel (%p248) target = $region28
      $region27: #{double_conv.3} parent=23 // pred_region
        %s251 = smul.u32 %s21, 16
        %s252 = ssub.s32 %s251, 1
        %p253 = scmp.gt.s32.totalorder %s252, 0
        %s254 = scalar_select %p253, %s252, 0
        %p255 = scmp.lt.s32.totalorder %s20, 1
        %s256 = scalar_select %p255, %s20, 1
        %p257 = scmp.lt.s32.totalorder %s254, 15
        %s258 = scalar_select %p257, %s254, 15
        %s259 = smul.addr %s258, 2
        %s260 = smul.addr %s256, 32
        %s261 = sadd.s32 %s259, %s260
        %s262 = smul.addr %s261, 4
        %s263 = scalar_lea.vmem %s0, %s262
        %s264 = smul.u32 %s21, 16
        %s265 = ssub.s32 %s264, 1
        %p266 = scmp.gt.s32.totalorder %s265, 0
        %s267 = scalar_select %p266, %s265, 0
      $region28: #{double_conv.3} parent=23 // pred_fallthru
        _
      // Predicated region
      $region29: #{double_conv.3} parent=23 // pred_check
        %p268 = pneg %p83
      $region30: #{double_conv.3} parent=23 // pred_check_branch
        %270 = sbr.rel (%p268) target = $region32
      $region31: #{double_conv.3} parent=23 // pred_region
        %s271 = smul.u32 16, %s21
        %p272 = scmp.lt.s32.totalorder %s20, 1
        %s273 = scalar_select %p272, %s20, 1
        %p274 = scmp.lt.s32.totalorder %s271, 15
        %s275 = scalar_select %p274, %s271, 15
        %s276 = smul.addr %s275, 2
        %s277 = smul.addr %s273, 32
        %s278 = sadd.s32 %s276, %s277
        %s279 = smul.addr %s278, 4
        %s280 = scalar_lea.vmem %s1, %s279
        %s281 = smul.u32 16, %s21
      $region32: #{double_conv.3} parent=23 // pred_fallthru
        _
      // Predicated region
      $region33: #{double_conv.3} parent=23 // pred_check
        %p282 = pneg %p119
      $region34: #{double_conv.3} parent=23 // pred_check_branch
        %284 = sbr.rel (%p282) target = $region36
      $region35: #{double_conv.3} parent=23 // pred_region
        %s285 = sadd.s32 %s21, 1
        %s286 = smul.u32 %s285, 16
        %p287 = scmp.lt.s32.totalorder %s286, 15
        %s288 = scalar_select %p287, %s286, 15
        %p289 = scmp.lt.s32.totalorder %s20, 1
        %s290 = scalar_select %p289, %s20, 1
        %p291 = scmp.lt.s32.totalorder %s288, 15
        %s292 = scalar_select %p291, %s288, 15
        %s293 = smul.addr %s292, 2
        %s294 = smul.addr %s290, 32
        %s295 = sadd.s32 %s293, %s294
        %s296 = smul.addr %s295, 4
        %s297 = scalar_lea.vmem %s2, %s296
        %s298 = sadd.s32 %s21, 1
        %s299 = smul.u32 %s298, 16
        %p300 = scmp.lt.s32.totalorder %s299, 15
        %s301 = scalar_select %p300, %s299, 15
      $region36: #{double_conv.3} parent=23 // pred_fallthru
        _
    $region24: #{double_conv.3} parent=5 // pred_fallthru
      _
    %p302 = scmp.le.s32.totalorder 1, %s13
    %p303 = scmp.lt.s32.totalorder %s13, 3
    %p304 = pnand %p302, %p303
    %p305 = pneg %p304
    // Predicated region
    $region37: #{double_conv.3} parent=5 // pred_check
      _
    $region38: #{double_conv.3} parent=5 // pred_check_branch
      %307 = sbr.rel (%p304) target = $region40
    $region39: #{double_conv.3} parent=5 // pred_region
      %s308 = ssub.s32 %s13, 1
      %s309 = smul.u32 %s23, 16
      %s310 = ssub.s32 %s309, 1
      %p311 = scmp.gt.s32.totalorder %s310, 0
      %s312 = scalar_select %p311, %s310, 0
      %p313 = scmp.lt.s32.totalorder %s22, 1
      %s314 = scalar_select %p313, %s22, 1
      %p315 = scmp.lt.s32.totalorder %s312, 15
      %s316 = scalar_select %p315, %s312, 15
      %s317 = smul.addr %s316, 2
      %s318 = smul.addr %s314, 32
      %s319 = sadd.s32 %s317, %s318
      %s320 = smul.addr %s319, 4
      %s321 = scalar_lea.vmem %s0, %s320
      %p322 = pneg %p61
      %p323 = pneg %p58
      %s324 = smul.u32 16, %s23
      %p325 = scmp.lt.s32.totalorder %s22, 1
      %s326 = scalar_select %p325, %s22, 1
      %p327 = scmp.lt.s32.totalorder %s324, 15
      %s328 = scalar_select %p327, %s324, 15
      %s329 = smul.addr %s328, 2
      %s330 = smul.addr %s326, 32
      %s331 = sadd.s32 %s329, %s330
      %s332 = smul.addr %s331, 4
      %s333 = scalar_lea.vmem %s1, %s332
      %p334 = pneg %p89
      %p335 = pneg %p86
      %s336 = sadd.s32 %s23, 1
      %s337 = smul.u32 %s336, 16
      %p338 = scmp.lt.s32.totalorder %s337, 15
      %s339 = scalar_select %p338, %s337, 15
      %p340 = scmp.lt.s32.totalorder %s22, 1
      %s341 = scalar_select %p340, %s22, 1
      %p342 = scmp.lt.s32.totalorder %s339, 15
      %s343 = scalar_select %p342, %s339, 15
      %s344 = smul.addr %s343, 2
      %s345 = smul.addr %s341, 32
      %s346 = sadd.s32 %s344, %s345
      %s347 = smul.addr %s346, 4
      %s348 = scalar_lea.vmem %s2, %s347
      %p349 = pneg %p125
      %p350 = pneg %p122
      %p351 = pneg %p146
      %p352 = pneg %p143
      %p353 = pneg %p167
      %p354 = pneg %p164
      %p355 = pneg %p195
      %p356 = pneg %p192
      %s357 = smul.u32 16, %s23
      %p358 = scmp.lt.s32.totalorder %s22, 1
      %s359 = scalar_select %p358, %s22, 1
      %p360 = scmp.lt.s32.totalorder %s357, 15
      %s361 = scalar_select %p360, %s357, 15
      %s362 = smul.addr %s361, 2
      %s363 = smul.addr %s359, 32
      %s364 = sadd.s32 %s362, %s363
      %s365 = smul.addr %s364, 4
      %s366 = scalar_lea.vmem %s5, %s365
      %p367 = pneg %p223
      %p368 = pneg %p220
      %p369 = scmp.lt.s32.totalorder %s22, 1
      %s370 = scalar_select %p369, %s22, 1
      %p371 = scmp.lt.s32.totalorder %s23, 0
      %s372 = scalar_select %p371, %s23, 0
      %s373 = sadd.s32 %s372, %s370
      %s374 = smul.addr %s373, 2
      %s375 = scalar_lea.vmem %s6, %s374
      %s376 = smul.u32 %s23, 16
      %s377 = ssub.s32 %s376, 1
      %p378 = scmp.gt.s32.totalorder %s377, 0
      %s379 = scalar_select %p378, %s377, 0
      %p380 = scmp.lt.s32.totalorder %s22, 1
      %s381 = scalar_select %p380, %s22, 1
      %p382 = scmp.lt.s32.totalorder %s379, 15
      %s383 = scalar_select %p382, %s379, 15
      %s384 = smul.addr %s383, 2
      %s385 = smul.addr %s381, 32
      %s386 = sadd.s32 %s384, %s385
      %s387 = smul.addr %s386, 4
      %s388 = scalar_lea.vmem %s0, %s387
      %s389 = smul.u32 %s23, 16
      %s390 = ssub.s32 %s389, 1
      %p391 = scmp.gt.s32.totalorder %s390, 0
      %s392 = scalar_select %p391, %s390, 0
      %s393 = smul.u32 16, %s23
      %p394 = scmp.lt.s32.totalorder %s22, 1
      %s395 = scalar_select %p394, %s22, 1
      %p396 = scmp.lt.s32.totalorder %s393, 15
      %s397 = scalar_select %p396, %s393, 15
      %s398 = smul.addr %s397, 2
      %s399 = smul.addr %s395, 32
      %s400 = sadd.s32 %s398, %s399
      %s401 = smul.addr %s400, 4
      %s402 = scalar_lea.vmem %s1, %s401
      %s403 = smul.u32 16, %s23
      %s404 = sadd.s32 %s23, 1
      %s405 = smul.u32 %s404, 16
      %p406 = scmp.lt.s32.totalorder %s405, 15
      %s407 = scalar_select %p406, %s405, 15
      %p408 = scmp.lt.s32.totalorder %s22, 1
      %s409 = scalar_select %p408, %s22, 1
      %p410 = scmp.lt.s32.totalorder %s407, 15
      %s411 = scalar_select %p410, %s407, 15
      %s412 = smul.addr %s411, 2
      %s413 = smul.addr %s409, 32
      %s414 = sadd.s32 %s412, %s413
      %s415 = smul.addr %s414, 4
      %s416 = scalar_lea.vmem %s2, %s415
      %s417 = sadd.s32 %s23, 1
      %s418 = smul.u32 %s417, 16
      %p419 = scmp.lt.s32.totalorder %s418, 15
      %s420 = scalar_select %p419, %s418, 15
      %s421 = smul.u32 16, %s23
      %p422 = scmp.lt.s32.totalorder %s22, 1
      %s423 = scalar_select %p422, %s22, 1
      %p424 = scmp.lt.s32.totalorder %s421, 15
      %s425 = scalar_select %p424, %s421, 15
      %s426 = smul.addr %s425, 2
      %s427 = smul.addr %s423, 32
      %s428 = sadd.s32 %s426, %s427
      %s429 = smul.addr %s428, 4
      %s430 = scalar_lea.vmem %s5, %s429
      %s431 = smul.u32 16, %s23
      %p432 = scmp.lt.s32.totalorder %s22, 1
      %s433 = scalar_select %p432, %s22, 1
      %p434 = scmp.lt.s32.totalorder %s23, 0
      %s435 = scalar_select %p434, %s23, 0
      %s436 = sadd.s32 %s435, %s433
      %s437 = smul.addr %s436, 2
      %s438 = scalar_lea.vmem %s6, %s437
      %v440 = vld [vmem:[%s402] sm:$0xf]
      %v441 = vld [vmem:[%s402 + $0x4] sm:$0xf]
      %v442 = vld [vmem:[%s402 + $0x8] sm:$0xf]
      %v443 = vld [vmem:[%s402 + $0xc] sm:$0xf]
      %v444 = vld [vmem:[%s402 + $0x10] sm:$0xf]
      %v445 = vld [vmem:[%s402 + $0x14] sm:$0xf]
      %v446 = vld [vmem:[%s402 + $0x18] sm:$0xf]
      %v447 = vld [vmem:[%s402 + $0x1c] sm:$0xf]
      %v448 = vld [vmem:[%s402 + $0x20] sm:$0xf]
      %v449 = vld [vmem:[%s402 + $0x24] sm:$0xf]
      %v450 = vld [vmem:[%s402 + $0x28] sm:$0xf]
      %v451 = vld [vmem:[%s402 + $0x2c] sm:$0xf]
      %v452 = vld [vmem:[%s402 + $0x30] sm:$0xf]
      %v453 = vld [vmem:[%s402 + $0x34] sm:$0xf]
      %v454 = vld [vmem:[%s402 + $0x38] sm:$0xf]
      %v455 = vld [vmem:[%s402 + $0x3c] sm:$0xf]
      %v456 = vld [vmem:[%s402 + $0x40] sm:$0xf]
      %v457 = vld [vmem:[%s402 + $0x44] sm:$0xf]
      %v458 = vld [vmem:[%s402 + $0x48] sm:$0xf]
      %v459 = vld [vmem:[%s402 + $0x4c] sm:$0xf]
      %v460 = vld [vmem:[%s402 + $0x50] sm:$0xf]
      %v461 = vld [vmem:[%s402 + $0x54] sm:$0xf]
      %v462 = vld [vmem:[%s402 + $0x58] sm:$0xf]
      %v463 = vld [vmem:[%s402 + $0x5c] sm:$0xf]
      %v464 = vld [vmem:[%s402 + $0x60] sm:$0xf]
      %v465 = vld [vmem:[%s402 + $0x64] sm:$0xf]
      %v466 = vld [vmem:[%s402 + $0x68] sm:$0xf]
      %v467 = vld [vmem:[%s402 + $0x6c] sm:$0xf]
      %v468 = vld [vmem:[%s402 + $0x70] sm:$0xf]
      %v469 = vld [vmem:[%s402 + $0x74] sm:$0xf]
      %v470 = vld [vmem:[%s402 + $0x78] sm:$0xf]
      %v471 = vld [vmem:[%s402 + $0x7c] sm:$0xf]
      %p472 = scmp.gt.s32.totalorder %s23, 0
      %v473 = vld [vmem:[%s388] sm:$0xf]
      %v474 = vld [vmem:[%s388 + $0x4] sm:$0xf]
      %s475 = scalar_select %p472, 1, 0
      %v476 = vstv %s475
      %vm477 = vcmp.eq.s32.totalorder %v476, 1
      %v478 = vsel %vm477, %v473, 0
      %v479 = vsel %vm477, %v474, 0
      %p480 = scmp.lt.s32.totalorder %s23, 0
      %v481 = vld [vmem:[%s416] sm:$0xf]
      %v482 = vld [vmem:[%s416 + $0x4] sm:$0xf]
      %s483 = scalar_select %p480, 1, 0
      %v484 = vstv %s483
      %vm485 = vcmp.eq.s32.totalorder %v484, 1
      %v486 = vsel %vm485, %v481, 0
      %v487 = vsel %vm485, %v482, 0
      %vm488 = vcmask 24576
      %vm489 = vsmask.f32 256
      %vm490 = vmand %vm488, %vm489
      %v491 = vld [vmem:[#allocation2] sm:$0x1]
      %v492 = vsel %vm490, 0, %v491
      %493 = vst [vmem:[#allocation2] sm:$0x1] %v492
      %v494 = vld [vmem:[#allocation2 + $0xc] sm:$0x1]
      %v495 = vsel %vm490, 0, %v494
      %496 = vst [vmem:[#allocation2 + $0xc] sm:$0x1] %v495
      %v497 = vld [vmem:[#allocation2 + $0x18] sm:$0x1]
      %v498 = vsel %vm490, 0, %v497
      %499 = vst [vmem:[#allocation2 + $0x18] sm:$0x1] %v498
      %v500 = vld [vmem:[#allocation2 + $0x24] sm:$0x1]
      %v501 = vsel %vm490, 0, %v500
      %502 = vst [vmem:[#allocation2 + $0x24] sm:$0x1] %v501
      %v503 = vld [vmem:[#allocation2 + $0x30] sm:$0x1]
      %v504 = vsel %vm490, 0, %v503
      %505 = vst [vmem:[#allocation2 + $0x30] sm:$0x1] %v504
      %v506 = vld [vmem:[#allocation2 + $0x3c] sm:$0x1]
      %v507 = vsel %vm490, 0, %v506
      %508 = vst [vmem:[#allocation2 + $0x3c] sm:$0x1] %v507
      %v509 = vld [vmem:[#allocation2 + $0x48] sm:$0x1]
      %v510 = vsel %vm490, 0, %v509
      %511 = vst [vmem:[#allocation2 + $0x48] sm:$0x1] %v510
      %v512 = vld [vmem:[#allocation2 + $0x54] sm:$0x1]
      %v513 = vsel %vm490, 0, %v512
      %514 = vst [vmem:[#allocation2 + $0x54] sm:$0x1] %v513
      %v515 = vld [vmem:[#allocation2 + $0x60] sm:$0x1]
      %v516 = vsel %vm490, 0, %v515
      %517 = vst [vmem:[#allocation2 + $0x60] sm:$0x1] %v516
      %v518 = vld [vmem:[#allocation2 + $0x6c] sm:$0x1]
      %v519 = vsel %vm490, 0, %v518
      %520 = vst [vmem:[#allocation2 + $0x6c] sm:$0x1] %v519
      %v521 = vld [vmem:[#allocation2 + $0x78] sm:$0x1]
      %v522 = vsel %vm490, 0, %v521
      %523 = vst [vmem:[#allocation2 + $0x78] sm:$0x1] %v522
      %v524 = vld [vmem:[#allocation2 + $0x84] sm:$0x1]
      %v525 = vsel %vm490, 0, %v524
      %526 = vst [vmem:[#allocation2 + $0x84] sm:$0x1] %v525
      %v527 = vld [vmem:[#allocation2 + $0x90] sm:$0x1]
      %v528 = vsel %vm490, 0, %v527
      %529 = vst [vmem:[#allocation2 + $0x90] sm:$0x1] %v528
      %v530 = vld [vmem:[#allocation2 + $0x9c] sm:$0x1]
      %v531 = vsel %vm490, 0, %v530
      %532 = vst [vmem:[#allocation2 + $0x9c] sm:$0x1] %v531
      %v533 = vld [vmem:[#allocation2 + $0xa8] sm:$0x1]
      %v534 = vsel %vm490, 0, %v533
      %535 = vst [vmem:[#allocation2 + $0xa8] sm:$0x1] %v534
      %v536 = vld [vmem:[#allocation2 + $0xb4] sm:$0x1]
      %v537 = vsel %vm490, 0, %v536
      %538 = vst [vmem:[#allocation2 + $0xb4] sm:$0x1] %v537
      %v539 = vld [vmem:[#allocation2 + $0xc0] sm:$0x1]
      %v540 = vsel %vm490, 0, %v539
      %541 = vst [vmem:[#allocation2 + $0xc0] sm:$0x1] %v540
      %v542 = vld [vmem:[#allocation2 + $0xcc] sm:$0x1]
      %v543 = vsel %vm490, 0, %v542
      %544 = vst [vmem:[#allocation2 + $0xcc] sm:$0x1] %v543
      %vm545 = vsmask.f32 7938
      %vm546 = vmand %vm488, %vm545
      %v547 = vld [vmem:[#allocation2 + $0x8] sm:$0x1]
      %v548 = vsel %vm546, 0, %v547
      %549 = vst [vmem:[#allocation2 + $0x8] sm:$0x1] %v548
      %v550 = vld [vmem:[#allocation2 + $0x14] sm:$0x1]
      %v551 = vsel %vm546, 0, %v550
      %552 = vst [vmem:[#allocation2 + $0x14] sm:$0x1] %v551
      %v553 = vld [vmem:[#allocation2 + $0x20] sm:$0x1]
      %v554 = vsel %vm546, 0, %v553
      %555 = vst [vmem:[#allocation2 + $0x20] sm:$0x1] %v554
      %v556 = vld [vmem:[#allocation2 + $0x2c] sm:$0x1]
      %v557 = vsel %vm546, 0, %v556
      %558 = vst [vmem:[#allocation2 + $0x2c] sm:$0x1] %v557
      %v559 = vld [vmem:[#allocation2 + $0x38] sm:$0x1]
      %v560 = vsel %vm546, 0, %v559
      %561 = vst [vmem:[#allocation2 + $0x38] sm:$0x1] %v560
      %v562 = vld [vmem:[#allocation2 + $0x44] sm:$0x1]
      %v563 = vsel %vm546, 0, %v562
      %564 = vst [vmem:[#allocation2 + $0x44] sm:$0x1] %v563
      %v565 = vld [vmem:[#allocation2 + $0x50] sm:$0x1]
      %v566 = vsel %vm546, 0, %v565
      %567 = vst [vmem:[#allocation2 + $0x50] sm:$0x1] %v566
      %v568 = vld [vmem:[#allocation2 + $0x5c] sm:$0x1]
      %v569 = vsel %vm546, 0, %v568
      %570 = vst [vmem:[#allocation2 + $0x5c] sm:$0x1] %v569
      %v571 = vld [vmem:[#allocation2 + $0x68] sm:$0x1]
      %v572 = vsel %vm546, 0, %v571
      %573 = vst [vmem:[#allocation2 + $0x68] sm:$0x1] %v572
      %v574 = vld [vmem:[#allocation2 + $0x74] sm:$0x1]
      %v575 = vsel %vm546, 0, %v574
      %576 = vst [vmem:[#allocation2 + $0x74] sm:$0x1] %v575
      %v577 = vld [vmem:[#allocation2 + $0x80] sm:$0x1]
      %v578 = vsel %vm546, 0, %v577
      %579 = vst [vmem:[#allocation2 + $0x80] sm:$0x1] %v578
      %v580 = vld [vmem:[#allocation2 + $0x8c] sm:$0x1]
      %v581 = vsel %vm546, 0, %v580
      %582 = vst [vmem:[#allocation2 + $0x8c] sm:$0x1] %v581
      %v583 = vld [vmem:[#allocation2 + $0x98] sm:$0x1]
      %v584 = vsel %vm546, 0, %v583
      %585 = vst [vmem:[#allocation2 + $0x98] sm:$0x1] %v584
      %v586 = vld [vmem:[#allocation2 + $0xa4] sm:$0x1]
      %v587 = vsel %vm546, 0, %v586
      %588 = vst [vmem:[#allocation2 + $0xa4] sm:$0x1] %v587
      %v589 = vld [vmem:[#allocation2 + $0xb0] sm:$0x1]
      %v590 = vsel %vm546, 0, %v589
      %591 = vst [vmem:[#allocation2 + $0xb0] sm:$0x1] %v590
      %v592 = vld [vmem:[#allocation2 + $0xbc] sm:$0x1]
      %v593 = vsel %vm546, 0, %v592
      %594 = vst [vmem:[#allocation2 + $0xbc] sm:$0x1] %v593
      %v595 = vld [vmem:[#allocation2 + $0xc8] sm:$0x1]
      %v596 = vsel %vm546, 0, %v595
      %597 = vst [vmem:[#allocation2 + $0xc8] sm:$0x1] %v596
      %v598 = vld [vmem:[#allocation2 + $0xd4] sm:$0x1]
      %v599 = vsel %vm546, 0, %v598
      %600 = vst [vmem:[#allocation2 + $0xd4] sm:$0x1] %v599
      %vm601 = vsmask.f32 4368
      %vm602 = vmor %vm489, %vm601
      %v604 = vshrl.u32 %v478, 16
      %v606 = vrot.slane %v604, 7
      %v607 = vshll.u32 %v478, 16
      %v609 = vor.u32 %v606, %v607
      %v610 = vrot.slane %v606, 4
      %v612 = vshrl.u32 %v479, 16
      %v614 = vrot.slane %v612, 7
      %v615 = vshll.u32 %v479, 16
      %v617 = vor.u32 %v614, %v615
      %v618 = vsel %vm602, %v610, %v617
      %v619 = vrot.slane %v614, 4
      %vm623 = vcmask 27648
      %vm624 = vmand %vm623, %vm545
      %v625 = vld [vmem:[#allocation2] sm:$0xf]
      %v626 = vsel %vm624, %v609, %v625
      %627 = vst [vmem:[#allocation2] sm:$0xf] %v626
      %vm628 = vcmask 27648
      %629 = vst.msk [vmem:[#allocation2 + $0x4] sm:$0xf] %vm628, %v618
      %v630 = vld [vmem:[#allocation2 + $0x8] sm:$0x1]
      %v631 = vsel %vm490, %v619, %v630
      %632 = vst [vmem:[#allocation2 + $0x8] sm:$0x1] %v631
      %v634 = vshrl.u32 %v486, 16
      %v636 = vrot.slane %v634, 7
      %v637 = vshll.u32 %v486, 16
      %v639 = vor.u32 %v636, %v637
      %v640 = vrot.slane %v636, 4
      %v642 = vshrl.u32 %v487, 16
      %v644 = vrot.slane %v642, 7
      %v645 = vshll.u32 %v487, 16
      %v647 = vor.u32 %v644, %v645
      %v648 = vsel %vm602, %v640, %v647
      %v649 = vrot.slane %v644, 4
      %s653 = scalar_lea.vmem [#allocation2], 204
      %v654 = vld [vmem:[%s653] sm:$0xf]
      %v655 = vsel %vm624, %v639, %v654
      %656 = vst [vmem:[%s653] sm:$0xf] %v655
      %657 = vst.msk [vmem:[%s653 + $0x4] sm:$0xf] %vm628, %v648
      %v658 = vld [vmem:[%s653 + $0x8] sm:$0x1]
      %v659 = vsel %vm490, %v649, %v658
      %660 = vst [vmem:[%s653 + $0x8] sm:$0x1] %v659
      %v662 = vshrl.u32 %v440, 16
      %v664 = vrot.slane %v662, 7
      %v665 = vshll.u32 %v440, 16
      %v667 = vor.u32 %v664, %v665
      %v668 = vrot.slane %v664, 4
      %v670 = vshrl.u32 %v441, 16
      %v672 = vrot.slane %v670, 7
      %v673 = vshll.u32 %v441, 16
      %v675 = vor.u32 %v672, %v673
      %v676 = vsel %vm602, %v668, %v675
      %v677 = vrot.slane %v672, 4
      %v679 = vshrl.u32 %v442, 16
      %v681 = vrot.slane %v679, 7
      %v682 = vshll.u32 %v442, 16
      %v684 = vor.u32 %v681, %v682
      %v685 = vrot.slane %v681, 4
      %v687 = vshrl.u32 %v443, 16
      %v689 = vrot.slane %v687, 7
      %v690 = vshll.u32 %v443, 16
      %v692 = vor.u32 %v689, %v690
      %v693 = vsel %vm602, %v685, %v692
      %v694 = vrot.slane %v689, 4
      %v696 = vshrl.u32 %v444, 16
      %v698 = vrot.slane %v696, 7
      %v699 = vshll.u32 %v444, 16
      %v701 = vor.u32 %v698, %v699
      %v702 = vrot.slane %v698, 4
      %v704 = vshrl.u32 %v445, 16
      %v706 = vrot.slane %v704, 7
      %v707 = vshll.u32 %v445, 16
      %v709 = vor.u32 %v706, %v707
      %v710 = vsel %vm602, %v702, %v709
      %v711 = vrot.slane %v706, 4
      %v713 = vshrl.u32 %v446, 16
      %v715 = vrot.slane %v713, 7
      %v716 = vshll.u32 %v446, 16
      %v718 = vor.u32 %v715, %v716
      %v719 = vrot.slane %v715, 4
      %v721 = vshrl.u32 %v447, 16
      %v723 = vrot.slane %v721, 7
      %v724 = vshll.u32 %v447, 16
      %v726 = vor.u32 %v723, %v724
      %v727 = vsel %vm602, %v719, %v726
      %v728 = vrot.slane %v723, 4
      %v730 = vshrl.u32 %v448, 16
      %v732 = vrot.slane %v730, 7
      %v733 = vshll.u32 %v448, 16
      %v735 = vor.u32 %v732, %v733
      %v736 = vrot.slane %v732, 4
      %v738 = vshrl.u32 %v449, 16
      %v740 = vrot.slane %v738, 7
      %v741 = vshll.u32 %v449, 16
      %v743 = vor.u32 %v740, %v741
      %v744 = vsel %vm602, %v736, %v743
      %v745 = vrot.slane %v740, 4
      %v747 = vshrl.u32 %v450, 16
      %v749 = vrot.slane %v747, 7
      %v750 = vshll.u32 %v450, 16
      %v752 = vor.u32 %v749, %v750
      %v753 = vrot.slane %v749, 4
      %v755 = vshrl.u32 %v451, 16
      %v757 = vrot.slane %v755, 7
      %v758 = vshll.u32 %v451, 16
      %v760 = vor.u32 %v757, %v758
      %v761 = vsel %vm602, %v753, %v760
      %v762 = vrot.slane %v757, 4
      %v764 = vshrl.u32 %v452, 16
      %v766 = vrot.slane %v764, 7
      %v767 = vshll.u32 %v452, 16
      %v769 = vor.u32 %v766, %v767
      %v770 = vrot.slane %v766, 4
      %v772 = vshrl.u32 %v453, 16
      %v774 = vrot.slane %v772, 7
      %v775 = vshll.u32 %v453, 16
      %v777 = vor.u32 %v774, %v775
      %v778 = vsel %vm602, %v770, %v777
      %v779 = vrot.slane %v774, 4
      %v781 = vshrl.u32 %v454, 16
      %v783 = vrot.slane %v781, 7
      %v784 = vshll.u32 %v454, 16
      %v786 = vor.u32 %v783, %v784
      %v787 = vrot.slane %v783, 4
      %v789 = vshrl.u32 %v455, 16
      %v791 = vrot.slane %v789, 7
      %v792 = vshll.u32 %v455, 16
      %v794 = vor.u32 %v791, %v792
      %v795 = vsel %vm602, %v787, %v794
      %v796 = vrot.slane %v791, 4
      %v798 = vshrl.u32 %v456, 16
      %v800 = vrot.slane %v798, 7
      %v801 = vshll.u32 %v456, 16
      %v803 = vor.u32 %v800, %v801
      %v804 = vrot.slane %v800, 4
      %v806 = vshrl.u32 %v457, 16
      %v808 = vrot.slane %v806, 7
      %v809 = vshll.u32 %v457, 16
      %v811 = vor.u32 %v808, %v809
      %v812 = vsel %vm602, %v804, %v811
      %v813 = vrot.slane %v808, 4
      %v815 = vshrl.u32 %v458, 16
      %v817 = vrot.slane %v815, 7
      %v818 = vshll.u32 %v458, 16
      %v820 = vor.u32 %v817, %v818
      %v821 = vrot.slane %v817, 4
      %v823 = vshrl.u32 %v459, 16
      %v825 = vrot.slane %v823, 7
      %v826 = vshll.u32 %v459, 16
      %v828 = vor.u32 %v825, %v826
      %v829 = vsel %vm602, %v821, %v828
      %v830 = vrot.slane %v825, 4
      %v832 = vshrl.u32 %v460, 16
      %v834 = vrot.slane %v832, 7
      %v835 = vshll.u32 %v460, 16
      %v837 = vor.u32 %v834, %v835
      %v838 = vrot.slane %v834, 4
      %v840 = vshrl.u32 %v461, 16
      %v842 = vrot.slane %v840, 7
      %v843 = vshll.u32 %v461, 16
      %v845 = vor.u32 %v842, %v843
      %v846 = vsel %vm602, %v838, %v845
      %v847 = vrot.slane %v842, 4
      %v849 = vshrl.u32 %v462, 16
      %v851 = vrot.slane %v849, 7
      %v852 = vshll.u32 %v462, 16
      %v854 = vor.u32 %v851, %v852
      %v855 = vrot.slane %v851, 4
      %v857 = vshrl.u32 %v463, 16
      %v859 = vrot.slane %v857, 7
      %v860 = vshll.u32 %v463, 16
      %v862 = vor.u32 %v859, %v860
      %v863 = vsel %vm602, %v855, %v862
      %v864 = vrot.slane %v859, 4
      %v866 = vshrl.u32 %v464, 16
      %v868 = vrot.slane %v866, 7
      %v869 = vshll.u32 %v464, 16
      %v871 = vor.u32 %v868, %v869
      %v872 = vrot.slane %v868, 4
      %v874 = vshrl.u32 %v465, 16
      %v876 = vrot.slane %v874, 7
      %v877 = vshll.u32 %v465, 16
      %v879 = vor.u32 %v876, %v877
      %v880 = vsel %vm602, %v872, %v879
      %v881 = vrot.slane %v876, 4
      %v883 = vshrl.u32 %v466, 16
      %v885 = vrot.slane %v883, 7
      %v886 = vshll.u32 %v466, 16
      %v888 = vor.u32 %v885, %v886
      %v889 = vrot.slane %v885, 4
      %v891 = vshrl.u32 %v467, 16
      %v893 = vrot.slane %v891, 7
      %v894 = vshll.u32 %v467, 16
      %v896 = vor.u32 %v893, %v894
      %v897 = vsel %vm602, %v889, %v896
      %v898 = vrot.slane %v893, 4
      %v900 = vshrl.u32 %v468, 16
      %v902 = vrot.slane %v900, 7
      %v903 = vshll.u32 %v468, 16
      %v905 = vor.u32 %v902, %v903
      %v906 = vrot.slane %v902, 4
      %v908 = vshrl.u32 %v469, 16
      %v910 = vrot.slane %v908, 7
      %v911 = vshll.u32 %v469, 16
      %v913 = vor.u32 %v910, %v911
      %v914 = vsel %vm602, %v906, %v913
      %v915 = vrot.slane %v910, 4
      %v917 = vshrl.u32 %v470, 16
      %v919 = vrot.slane %v917, 7
      %v920 = vshll.u32 %v470, 16
      %v922 = vor.u32 %v919, %v920
      %v923 = vrot.slane %v919, 4
      %v925 = vshrl.u32 %v471, 16
      %v927 = vrot.slane %v925, 7
      %v928 = vshll.u32 %v471, 16
      %v930 = vor.u32 %v927, %v928
      %v931 = vsel %vm602, %v923, %v930
      %v932 = vrot.slane %v927, 4
      %s981 = scalar_lea.vmem [#allocation2], 12
      %v982 = vld [vmem:[%s981] sm:$0xf]
      %v983 = vsel %vm624, %v667, %v982
      %984 = vst [vmem:[%s981] sm:$0xf] %v983
      %985 = vst.msk [vmem:[%s981 + $0x4] sm:$0xf] %vm628, %v676
      %v986 = vld [vmem:[%s981 + $0x8] sm:$0x1]
      %v987 = vsel %vm490, %v677, %v986
      %988 = vst [vmem:[%s981 + $0x8] sm:$0x1] %v987
      %v989 = vld [vmem:[%s981 + $0xc] sm:$0xf]
      %v990 = vsel %vm624, %v684, %v989
      %991 = vst [vmem:[%s981 + $0xc] sm:$0xf] %v990
      %992 = vst.msk [vmem:[%s981 + $0x10] sm:$0xf] %vm628, %v693
      %v993 = vld [vmem:[%s981 + $0x14] sm:$0x1]
      %v994 = vsel %vm490, %v694, %v993
      %995 = vst [vmem:[%s981 + $0x14] sm:$0x1] %v994
      %v996 = vld [vmem:[%s981 + $0x18] sm:$0xf]
      %v997 = vsel %vm624, %v701, %v996
      %998 = vst [vmem:[%s981 + $0x18] sm:$0xf] %v997
      %999 = vst.msk [vmem:[%s981 + $0x1c] sm:$0xf] %vm628, %v710
      %v1000 = vld [vmem:[%s981 + $0x20] sm:$0x1]
      %v1001 = vsel %vm490, %v711, %v1000
      %1002 = vst [vmem:[%s981 + $0x20] sm:$0x1] %v1001
      %v1003 = vld [vmem:[%s981 + $0x24] sm:$0xf]
      %v1004 = vsel %vm624, %v718, %v1003
      %1005 = vst [vmem:[%s981 + $0x24] sm:$0xf] %v1004
      %1006 = vst.msk [vmem:[%s981 + $0x28] sm:$0xf] %vm628, %v727
      %v1007 = vld [vmem:[%s981 + $0x2c] sm:$0x1]
      %v1008 = vsel %vm490, %v728, %v1007
      %1009 = vst [vmem:[%s981 + $0x2c] sm:$0x1] %v1008
      %v1010 = vld [vmem:[%s981 + $0x30] sm:$0xf]
      %v1011 = vsel %vm624, %v735, %v1010
      %1012 = vst [vmem:[%s981 + $0x30] sm:$0xf] %v1011
      %1013 = vst.msk [vmem:[%s981 + $0x34] sm:$0xf] %vm628, %v744
      %v1014 = vld [vmem:[%s981 + $0x38] sm:$0x1]
      %v1015 = vsel %vm490, %v745, %v1014
      %1016 = vst [vmem:[%s981 + $0x38] sm:$0x1] %v1015
      %v1017 = vld [vmem:[%s981 + $0x3c] sm:$0xf]
      %v1018 = vsel %vm624, %v752, %v1017
      %1019 = vst [vmem:[%s981 + $0x3c] sm:$0xf] %v1018
      %1020 = vst.msk [vmem:[%s981 + $0x40] sm:$0xf] %vm628, %v761
      %v1021 = vld [vmem:[%s981 + $0x44] sm:$0x1]
      %v1022 = vsel %vm490, %v762, %v1021
      %1023 = vst [vmem:[%s981 + $0x44] sm:$0x1] %v1022
      %v1024 = vld [vmem:[%s981 + $0x48] sm:$0xf]
      %v1025 = vsel %vm624, %v769, %v1024
      %1026 = vst [vmem:[%s981 + $0x48] sm:$0xf] %v1025
      %1027 = vst.msk [vmem:[%s981 + $0x4c] sm:$0xf] %vm628, %v778
      %v1028 = vld [vmem:[%s981 + $0x50] sm:$0x1]
      %v1029 = vsel %vm490, %v779, %v1028
      %1030 = vst [vmem:[%s981 + $0x50] sm:$0x1] %v1029
      %v1031 = vld [vmem:[%s981 + $0x54] sm:$0xf]
      %v1032 = vsel %vm624, %v786, %v1031
      %1033 = vst [vmem:[%s981 + $0x54] sm:$0xf] %v1032
      %1034 = vst.msk [vmem:[%s981 + $0x58] sm:$0xf] %vm628, %v795
      %v1035 = vld [vmem:[%s981 + $0x5c] sm:$0x1]
      %v1036 = vsel %vm490, %v796, %v1035
      %1037 = vst [vmem:[%s981 + $0x5c] sm:$0x1] %v1036
      %v1038 = vld [vmem:[%s981 + $0x60] sm:$0xf]
      %v1039 = vsel %vm624, %v803, %v1038
      %1040 = vst [vmem:[%s981 + $0x60] sm:$0xf] %v1039
      %1041 = vst.msk [vmem:[%s981 + $0x64] sm:$0xf] %vm628, %v812
      %v1042 = vld [vmem:[%s981 + $0x68] sm:$0x1]
      %v1043 = vsel %vm490, %v813, %v1042
      %1044 = vst [vmem:[%s981 + $0x68] sm:$0x1] %v1043
      %v1045 = vld [vmem:[%s981 + $0x6c] sm:$0xf]
      %v1046 = vsel %vm624, %v820, %v1045
      %1047 = vst [vmem:[%s981 + $0x6c] sm:$0xf] %v1046
      %1048 = vst.msk [vmem:[%s981 + $0x70] sm:$0xf] %vm628, %v829
      %v1049 = vld [vmem:[%s981 + $0x74] sm:$0x1]
      %v1050 = vsel %vm490, %v830, %v1049
      %1051 = vst [vmem:[%s981 + $0x74] sm:$0x1] %v1050
      %v1052 = vld [vmem:[%s981 + $0x78] sm:$0xf]
      %v1053 = vsel %vm624, %v837, %v1052
      %1054 = vst [vmem:[%s981 + $0x78] sm:$0xf] %v1053
      %1055 = vst.msk [vmem:[%s981 + $0x7c] sm:$0xf] %vm628, %v846
      %v1056 = vld [vmem:[%s981 + $0x80] sm:$0x1]
      %v1057 = vsel %vm490, %v847, %v1056
      %1058 = vst [vmem:[%s981 + $0x80] sm:$0x1] %v1057
      %v1059 = vld [vmem:[%s981 + $0x84] sm:$0xf]
      %v1060 = vsel %vm624, %v854, %v1059
      %1061 = vst [vmem:[%s981 + $0x84] sm:$0xf] %v1060
      %1062 = vst.msk [vmem:[%s981 + $0x88] sm:$0xf] %vm628, %v863
      %v1063 = vld [vmem:[%s981 + $0x8c] sm:$0x1]
      %v1064 = vsel %vm490, %v864, %v1063
      %1065 = vst [vmem:[%s981 + $0x8c] sm:$0x1] %v1064
      %v1066 = vld [vmem:[%s981 + $0x90] sm:$0xf]
      %v1067 = vsel %vm624, %v871, %v1066
      %1068 = vst [vmem:[%s981 + $0x90] sm:$0xf] %v1067
      %1069 = vst.msk [vmem:[%s981 + $0x94] sm:$0xf] %vm628, %v880
      %v1070 = vld [vmem:[%s981 + $0x98] sm:$0x1]
      %v1071 = vsel %vm490, %v881, %v1070
      %1072 = vst [vmem:[%s981 + $0x98] sm:$0x1] %v1071
      %v1073 = vld [vmem:[%s981 + $0x9c] sm:$0xf]
      %v1074 = vsel %vm624, %v888, %v1073
      %1075 = vst [vmem:[%s981 + $0x9c] sm:$0xf] %v1074
      %1076 = vst.msk [vmem:[%s981 + $0xa0] sm:$0xf] %vm628, %v897
      %v1077 = vld [vmem:[%s981 + $0xa4] sm:$0x1]
      %v1078 = vsel %vm490, %v898, %v1077
      %1079 = vst [vmem:[%s981 + $0xa4] sm:$0x1] %v1078
      %v1080 = vld [vmem:[%s981 + $0xa8] sm:$0xf]
      %v1081 = vsel %vm624, %v905, %v1080
      %1082 = vst [vmem:[%s981 + $0xa8] sm:$0xf] %v1081
      %1083 = vst.msk [vmem:[%s981 + $0xac] sm:$0xf] %vm628, %v914
      %v1084 = vld [vmem:[%s981 + $0xb0] sm:$0x1]
      %v1085 = vsel %vm490, %v915, %v1084
      %1086 = vst [vmem:[%s981 + $0xb0] sm:$0x1] %v1085
      %v1087 = vld [vmem:[%s981 + $0xb4] sm:$0xf]
      %v1088 = vsel %vm624, %v922, %v1087
      %1089 = vst [vmem:[%s981 + $0xb4] sm:$0xf] %v1088
      %1090 = vst.msk [vmem:[%s981 + $0xb8] sm:$0xf] %vm628, %v931
      %v1091 = vld [vmem:[%s981 + $0xbc] sm:$0x1]
      %v1092 = vsel %vm490, %v932, %v1091
      %1093 = vst [vmem:[%s981 + $0xbc] sm:$0x1] %v1092
      %v1094 = vld [vmem:[#allocation2] sm:$0xf]
      %v1095 = vld [vmem:[#allocation2 + $0x4] sm:$0xf]
      %v1096 = vld [vmem:[#allocation2 + $0xc] sm:$0xf]
      %v1097 = vld [vmem:[#allocation2 + $0x10] sm:$0xf]
      %v1098 = vld [vmem:[#allocation2 + $0x18] sm:$0xf]
      %v1099 = vld [vmem:[#allocation2 + $0x1c] sm:$0xf]
      %v1100 = vld [vmem:[#allocation2 + $0x24] sm:$0xf]
      %v1101 = vld [vmem:[#allocation2 + $0x28] sm:$0xf]
      %v1102 = vld [vmem:[#allocation2 + $0x30] sm:$0xf]
      %v1103 = vld [vmem:[#allocation2 + $0x34] sm:$0xf]
      %v1104 = vld [vmem:[#allocation2 + $0x3c] sm:$0xf]
      %v1105 = vld [vmem:[#allocation2 + $0x40] sm:$0xf]
      %v1106 = vld [vmem:[#allocation2 + $0x48] sm:$0xf]
      %v1107 = vld [vmem:[#allocation2 + $0x4c] sm:$0xf]
      %v1108 = vld [vmem:[#allocation2 + $0x54] sm:$0xf]
      %v1109 = vld [vmem:[#allocation2 + $0x58] sm:$0xf]
      %v1110 = vld [vmem:[#allocation2 + $0x60] sm:$0xf]
      %v1111 = vld [vmem:[#allocation2 + $0x64] sm:$0xf]
      %v1112 = vld [vmem:[#allocation2 + $0x6c] sm:$0xf]
      %v1113 = vld [vmem:[#allocation2 + $0x70] sm:$0xf]
      %v1114 = vld [vmem:[#allocation2 + $0x78] sm:$0xf]
      %v1115 = vld [vmem:[#allocation2 + $0x7c] sm:$0xf]
      %v1116 = vld [vmem:[#allocation2 + $0x84] sm:$0xf]
      %v1117 = vld [vmem:[#allocation2 + $0x88] sm:$0xf]
      %v1118 = vld [vmem:[#allocation2 + $0x90] sm:$0xf]
      %v1119 = vld [vmem:[#allocation2 + $0x94] sm:$0xf]
      %v1120 = vld [vmem:[#allocation2 + $0x9c] sm:$0xf]
      %v1121 = vld [vmem:[#allocation2 + $0xa0] sm:$0xf]
      %v1122 = vld [vmem:[#allocation2 + $0xa8] sm:$0xf]
      %v1123 = vld [vmem:[#allocation2 + $0xac] sm:$0xf]
      %v1124 = vld [vmem:[#allocation2 + $0xb4] sm:$0xf]
      %v1125 = vld [vmem:[#allocation2 + $0xb8] sm:$0xf]
      %v1126 = vld [vmem:[#allocation2 + $0x8] sm:$0x1]
      %v1127 = vld [vmem:[#allocation2 + $0x14] sm:$0x1]
      %v1128 = vld [vmem:[#allocation2 + $0x20] sm:$0x1]
      %v1129 = vld [vmem:[#allocation2 + $0x2c] sm:$0x1]
      %v1130 = vld [vmem:[#allocation2 + $0x38] sm:$0x1]
      %v1131 = vld [vmem:[#allocation2 + $0x44] sm:$0x1]
      %v1132 = vld [vmem:[#allocation2 + $0x50] sm:$0x1]
      %v1133 = vld [vmem:[#allocation2 + $0x5c] sm:$0x1]
      %v1134 = vld [vmem:[#allocation2 + $0x68] sm:$0x1]
      %v1135 = vld [vmem:[#allocation2 + $0x74] sm:$0x1]
      %v1136 = vld [vmem:[#allocation2 + $0x80] sm:$0x1]
      %v1137 = vld [vmem:[#allocation2 + $0x8c] sm:$0x1]
      %v1138 = vld [vmem:[#allocation2 + $0x98] sm:$0x1]
      %v1139 = vld [vmem:[#allocation2 + $0xa4] sm:$0x1]
      %v1140 = vld [vmem:[#allocation2 + $0xb0] sm:$0x1]
      %v1141 = vld [vmem:[#allocation2 + $0xbc] sm:$0x1]
      %v1142 = vld [vmem:[#allocation2] sm:$0xe]
      %v1143 = vld [vmem:[#allocation2 + $0xc] sm:$0xe]
      %v1144 = vld [vmem:[#allocation2 + $0x18] sm:$0xe]
      %v1145 = vld [vmem:[#allocation2 + $0x24] sm:$0xe]
      %v1146 = vld [vmem:[#allocation2 + $0x30] sm:$0xe]
      %v1147 = vld [vmem:[#allocation2 + $0x3c] sm:$0xe]
      %v1148 = vld [vmem:[#allocation2 + $0x48] sm:$0xe]
      %v1149 = vld [vmem:[#allocation2 + $0x54] sm:$0xe]
      %v1150 = vld [vmem:[#allocation2 + $0x60] sm:$0xe]
      %v1151 = vld [vmem:[#allocation2 + $0x6c] sm:$0xe]
      %v1152 = vld [vmem:[#allocation2 + $0x78] sm:$0xe]
      %v1153 = vld [vmem:[#allocation2 + $0x84] sm:$0xe]
      %v1154 = vld [vmem:[#allocation2 + $0x90] sm:$0xe]
      %v1155 = vld [vmem:[#allocation2 + $0x9c] sm:$0xe]
      %v1156 = vld [vmem:[#allocation2 + $0xa8] sm:$0xe]
      %v1157 = vld [vmem:[#allocation2 + $0xb4] sm:$0xe]
      %v1158 = vld [vmem:[%s981] sm:$0xf]
      %v1159 = vld [vmem:[%s981 + $0x4] sm:$0xf]
      %v1160 = vld [vmem:[%s981 + $0xc] sm:$0xf]
      %v1161 = vld [vmem:[%s981 + $0x10] sm:$0xf]
      %v1162 = vld [vmem:[%s981 + $0x18] sm:$0xf]
      %v1163 = vld [vmem:[%s981 + $0x1c] sm:$0xf]
      %v1164 = vld [vmem:[%s981 + $0x24] sm:$0xf]
      %v1165 = vld [vmem:[%s981 + $0x28] sm:$0xf]
      %v1166 = vld [vmem:[%s981 + $0x30] sm:$0xf]
      %v1167 = vld [vmem:[%s981 + $0x34] sm:$0xf]
      %v1168 = vld [vmem:[%s981 + $0x3c] sm:$0xf]
      %v1169 = vld [vmem:[%s981 + $0x40] sm:$0xf]
      %v1170 = vld [vmem:[%s981 + $0x48] sm:$0xf]
      %v1171 = vld [vmem:[%s981 + $0x4c] sm:$0xf]
      %v1172 = vld [vmem:[%s981 + $0x54] sm:$0xf]
      %v1173 = vld [vmem:[%s981 + $0x58] sm:$0xf]
      %v1174 = vld [vmem:[%s981 + $0x60] sm:$0xf]
      %v1175 = vld [vmem:[%s981 + $0x64] sm:$0xf]
      %v1176 = vld [vmem:[%s981 + $0x6c] sm:$0xf]
      %v1177 = vld [vmem:[%s981 + $0x70] sm:$0xf]
      %v1178 = vld [vmem:[%s981 + $0x78] sm:$0xf]
      %v1179 = vld [vmem:[%s981 + $0x7c] sm:$0xf]
      %v1180 = vld [vmem:[%s981 + $0x84] sm:$0xf]
      %v1181 = vld [vmem:[%s981 + $0x88] sm:$0xf]
      %v1182 = vld [vmem:[%s981 + $0x90] sm:$0xf]
      %v1183 = vld [vmem:[%s981 + $0x94] sm:$0xf]
      %v1184 = vld [vmem:[%s981 + $0x9c] sm:$0xf]
      %v1185 = vld [vmem:[%s981 + $0xa0] sm:$0xf]
      %v1186 = vld [vmem:[%s981 + $0xa8] sm:$0xf]
      %v1187 = vld [vmem:[%s981 + $0xac] sm:$0xf]
      %v1188 = vld [vmem:[%s981 + $0xb4] sm:$0xf]
      %v1189 = vld [vmem:[%s981 + $0xb8] sm:$0xf]
      %v1190 = vld [vmem:[%s981 + $0x8] sm:$0x1]
      %v1191 = vld [vmem:[%s981 + $0x14] sm:$0x1]
      %v1192 = vld [vmem:[%s981 + $0x20] sm:$0x1]
      %v1193 = vld [vmem:[%s981 + $0x2c] sm:$0x1]
      %v1194 = vld [vmem:[%s981 + $0x38] sm:$0x1]
      %v1195 = vld [vmem:[%s981 + $0x44] sm:$0x1]
      %v1196 = vld [vmem:[%s981 + $0x50] sm:$0x1]
      %v1197 = vld [vmem:[%s981 + $0x5c] sm:$0x1]
      %v1198 = vld [vmem:[%s981 + $0x68] sm:$0x1]
      %v1199 = vld [vmem:[%s981 + $0x74] sm:$0x1]
      %v1200 = vld [vmem:[%s981 + $0x80] sm:$0x1]
      %v1201 = vld [vmem:[%s981 + $0x8c] sm:$0x1]
      %v1202 = vld [vmem:[%s981 + $0x98] sm:$0x1]
      %v1203 = vld [vmem:[%s981 + $0xa4] sm:$0x1]
      %v1204 = vld [vmem:[%s981 + $0xb0] sm:$0x1]
      %v1205 = vld [vmem:[%s981 + $0xbc] sm:$0x1]
      %v1206 = vld [vmem:[%s981] sm:$0xe]
      %v1207 = vld [vmem:[%s981 + $0xc] sm:$0xe]
      %v1208 = vld [vmem:[%s981 + $0x18] sm:$0xe]
      %v1209 = vld [vmem:[%s981 + $0x24] sm:$0xe]
      %v1210 = vld [vmem:[%s981 + $0x30] sm:$0xe]
      %v1211 = vld [vmem:[%s981 + $0x3c] sm:$0xe]
      %v1212 = vld [vmem:[%s981 + $0x48] sm:$0xe]
      %v1213 = vld [vmem:[%s981 + $0x54] sm:$0xe]
      %v1214 = vld [vmem:[%s981 + $0x60] sm:$0xe]
      %v1215 = vld [vmem:[%s981 + $0x6c] sm:$0xe]
      %v1216 = vld [vmem:[%s981 + $0x78] sm:$0xe]
      %v1217 = vld [vmem:[%s981 + $0x84] sm:$0xe]
      %v1218 = vld [vmem:[%s981 + $0x90] sm:$0xe]
      %v1219 = vld [vmem:[%s981 + $0x9c] sm:$0xe]
      %v1220 = vld [vmem:[%s981 + $0xa8] sm:$0xe]
      %v1221 = vld [vmem:[%s981 + $0xb4] sm:$0xe]
      %s1222 = scalar_lea.vmem [#allocation2], 24
      %v1223 = vld [vmem:[%s1222] sm:$0xf]
      %v1224 = vld [vmem:[%s1222 + $0x4] sm:$0xf]
      %v1225 = vld [vmem:[%s1222 + $0xc] sm:$0xf]
      %v1226 = vld [vmem:[%s1222 + $0x10] sm:$0xf]
      %v1227 = vld [vmem:[%s1222 + $0x18] sm:$0xf]
      %v1228 = vld [vmem:[%s1222 + $0x1c] sm:$0xf]
      %v1229 = vld [vmem:[%s1222 + $0x24] sm:$0xf]
      %v1230 = vld [vmem:[%s1222 + $0x28] sm:$0xf]
      %v1231 = vld [vmem:[%s1222 + $0x30] sm:$0xf]
      %v1232 = vld [vmem:[%s1222 + $0x34] sm:$0xf]
      %v1233 = vld [vmem:[%s1222 + $0x3c] sm:$0xf]
      %v1234 = vld [vmem:[%s1222 + $0x40] sm:$0xf]
      %v1235 = vld [vmem:[%s1222 + $0x48] sm:$0xf]
      %v1236 = vld [vmem:[%s1222 + $0x4c] sm:$0xf]
      %v1237 = vld [vmem:[%s1222 + $0x54] sm:$0xf]
      %v1238 = vld [vmem:[%s1222 + $0x58] sm:$0xf]
      %v1239 = vld [vmem:[%s1222 + $0x60] sm:$0xf]
      %v1240 = vld [vmem:[%s1222 + $0x64] sm:$0xf]
      %v1241 = vld [vmem:[%s1222 + $0x6c] sm:$0xf]
      %v1242 = vld [vmem:[%s1222 + $0x70] sm:$0xf]
      %v1243 = vld [vmem:[%s1222 + $0x78] sm:$0xf]
      %v1244 = vld [vmem:[%s1222 + $0x7c] sm:$0xf]
      %v1245 = vld [vmem:[%s1222 + $0x84] sm:$0xf]
      %v1246 = vld [vmem:[%s1222 + $0x88] sm:$0xf]
      %v1247 = vld [vmem:[%s1222 + $0x90] sm:$0xf]
      %v1248 = vld [vmem:[%s1222 + $0x94] sm:$0xf]
      %v1249 = vld [vmem:[%s1222 + $0x9c] sm:$0xf]
      %v1250 = vld [vmem:[%s1222 + $0xa0] sm:$0xf]
      %v1251 = vld [vmem:[%s1222 + $0xa8] sm:$0xf]
      %v1252 = vld [vmem:[%s1222 + $0xac] sm:$0xf]
      %v1253 = vld [vmem:[%s1222 + $0xb4] sm:$0xf]
      %v1254 = vld [vmem:[%s1222 + $0xb8] sm:$0xf]
      %v1255 = vld [vmem:[%s1222 + $0x8] sm:$0x1]
      %v1256 = vld [vmem:[%s1222 + $0x14] sm:$0x1]
      %v1257 = vld [vmem:[%s1222 + $0x20] sm:$0x1]
      %v1258 = vld [vmem:[%s1222 + $0x2c] sm:$0x1]
      %v1259 = vld [vmem:[%s1222 + $0x38] sm:$0x1]
      %v1260 = vld [vmem:[%s1222 + $0x44] sm:$0x1]
      %v1261 = vld [vmem:[%s1222 + $0x50] sm:$0x1]
      %v1262 = vld [vmem:[%s1222 + $0x5c] sm:$0x1]
      %v1263 = vld [vmem:[%s1222 + $0x68] sm:$0x1]
      %v1264 = vld [vmem:[%s1222 + $0x74] sm:$0x1]
      %v1265 = vld [vmem:[%s1222 + $0x80] sm:$0x1]
      %v1266 = vld [vmem:[%s1222 + $0x8c] sm:$0x1]
      %v1267 = vld [vmem:[%s1222 + $0x98] sm:$0x1]
      %v1268 = vld [vmem:[%s1222 + $0xa4] sm:$0x1]
      %v1269 = vld [vmem:[%s1222 + $0xb0] sm:$0x1]
      %v1270 = vld [vmem:[%s1222 + $0xbc] sm:$0x1]
      %v1271 = vld [vmem:[%s1222] sm:$0xe]
      %v1272 = vld [vmem:[%s1222 + $0xc] sm:$0xe]
      %v1273 = vld [vmem:[%s1222 + $0x18] sm:$0xe]
      %v1274 = vld [vmem:[%s1222 + $0x24] sm:$0xe]
      %v1275 = vld [vmem:[%s1222 + $0x30] sm:$0xe]
      %v1276 = vld [vmem:[%s1222 + $0x3c] sm:$0xe]
      %v1277 = vld [vmem:[%s1222 + $0x48] sm:$0xe]
      %v1278 = vld [vmem:[%s1222 + $0x54] sm:$0xe]
      %v1279 = vld [vmem:[%s1222 + $0x60] sm:$0xe]
      %v1280 = vld [vmem:[%s1222 + $0x6c] sm:$0xe]
      %v1281 = vld [vmem:[%s1222 + $0x78] sm:$0xe]
      %v1282 = vld [vmem:[%s1222 + $0x84] sm:$0xe]
      %v1283 = vld [vmem:[%s1222 + $0x90] sm:$0xe]
      %v1284 = vld [vmem:[%s1222 + $0x9c] sm:$0xe]
      %v1285 = vld [vmem:[%s1222 + $0xa8] sm:$0xe]
      %v1286 = vld [vmem:[%s1222 + $0xb4] sm:$0xe]
      %v1319 = vunpack.c.l.b16 %v1094
      %v1320 = vunpack.c.l.b16 %v1095
      %v1321 = vunpack.c.l.b16 %v1096
      %v1322 = vunpack.c.l.b16 %v1097
      %v1323 = vunpack.c.l.b16 %v1098
      %v1324 = vunpack.c.l.b16 %v1099
      %v1325 = vunpack.c.l.b16 %v1100
      %v1326 = vunpack.c.l.b16 %v1101
      %v1327 = vunpack.c.l.b16 %v1102
      %v1328 = vunpack.c.l.b16 %v1103
      %v1329 = vunpack.c.l.b16 %v1104
      %v1330 = vunpack.c.l.b16 %v1105
      %v1331 = vunpack.c.l.b16 %v1106
      %v1332 = vunpack.c.l.b16 %v1107
      %v1333 = vunpack.c.l.b16 %v1108
      %v1334 = vunpack.c.l.b16 %v1109
      %v1335 = vunpack.c.l.b16 %v1110
      %v1336 = vunpack.c.l.b16 %v1111
      %v1337 = vunpack.c.l.b16 %v1112
      %v1338 = vunpack.c.l.b16 %v1113
      %v1339 = vunpack.c.l.b16 %v1114
      %v1340 = vunpack.c.l.b16 %v1115
      %v1341 = vunpack.c.l.b16 %v1116
      %v1342 = vunpack.c.l.b16 %v1117
      %v1343 = vunpack.c.l.b16 %v1118
      %v1344 = vunpack.c.l.b16 %v1119
      %v1345 = vunpack.c.l.b16 %v1120
      %v1346 = vunpack.c.l.b16 %v1121
      %v1347 = vunpack.c.l.b16 %v1122
      %v1348 = vunpack.c.l.b16 %v1123
      %v1349 = vunpack.c.l.b16 %v1124
      %v1350 = vunpack.c.l.b16 %v1125
      %v1351 = vpack.c.b16 %v1320, %v1319
      %v1352 = vpack.c.b16 %v1322, %v1321
      %v1353 = vpack.c.b16 %v1324, %v1323
      %v1354 = vpack.c.b16 %v1326, %v1325
      %v1355 = vpack.c.b16 %v1328, %v1327
      %v1356 = vpack.c.b16 %v1330, %v1329
      %v1357 = vpack.c.b16 %v1332, %v1331
      %v1358 = vpack.c.b16 %v1334, %v1333
      %v1359 = vpack.c.b16 %v1336, %v1335
      %v1360 = vpack.c.b16 %v1338, %v1337
      %v1361 = vpack.c.b16 %v1340, %v1339
      %v1362 = vpack.c.b16 %v1342, %v1341
      %v1363 = vpack.c.b16 %v1344, %v1343
      %v1364 = vpack.c.b16 %v1346, %v1345
      %v1365 = vpack.c.b16 %v1348, %v1347
      %v1366 = vpack.c.b16 %v1350, %v1349
      %v1383 = vunpack.c.l.b16 %v1126
      %v1384 = vunpack.c.l.b16 %v1127
      %v1385 = vunpack.c.l.b16 %v1128
      %v1386 = vunpack.c.l.b16 %v1129
      %v1387 = vunpack.c.l.b16 %v1130
      %v1388 = vunpack.c.l.b16 %v1131
      %v1389 = vunpack.c.l.b16 %v1132
      %v1390 = vunpack.c.l.b16 %v1133
      %v1391 = vunpack.c.l.b16 %v1134
      %v1392 = vunpack.c.l.b16 %v1135
      %v1393 = vunpack.c.l.b16 %v1136
      %v1394 = vunpack.c.l.b16 %v1137
      %v1395 = vunpack.c.l.b16 %v1138
      %v1396 = vunpack.c.l.b16 %v1139
      %v1397 = vunpack.c.l.b16 %v1140
      %v1398 = vunpack.c.l.b16 %v1141
      %v1399 = vpack.c.b16 %v1383, %v1383
      %v1400 = vpack.c.b16 %v1384, %v1384
      %v1401 = vpack.c.b16 %v1385, %v1385
      %v1402 = vpack.c.b16 %v1386, %v1386
      %v1403 = vpack.c.b16 %v1387, %v1387
      %v1404 = vpack.c.b16 %v1388, %v1388
      %v1405 = vpack.c.b16 %v1389, %v1389
      %v1406 = vpack.c.b16 %v1390, %v1390
      %v1407 = vpack.c.b16 %v1391, %v1391
      %v1408 = vpack.c.b16 %v1392, %v1392
      %v1409 = vpack.c.b16 %v1393, %v1393
      %v1410 = vpack.c.b16 %v1394, %v1394
      %v1411 = vpack.c.b16 %v1395, %v1395
      %v1412 = vpack.c.b16 %v1396, %v1396
      %v1413 = vpack.c.b16 %v1397, %v1397
      %v1414 = vpack.c.b16 %v1398, %v1398
      %vm1415 = vsmask.f32 7424
      %v1417 = vshrl.u32 %v1351, 16
      %v1419 = vshll.u32 %v1351, 16
      %v1421 = vrot.slane %v1419, 1
      %v1422 = vor.u32 %v1417, %v1421
      %v1424 = vshll.u32 %v1399, 16
      %v1426 = vrot.slane %v1424, 1
      %v1427 = vsel %vm1415, %v1422, %v1426
      %v1429 = vshrl.u32 %v1352, 16
      %v1431 = vshll.u32 %v1352, 16
      %v1433 = vrot.slane %v1431, 1
      %v1434 = vor.u32 %v1429, %v1433
      %v1436 = vshll.u32 %v1400, 16
      %v1438 = vrot.slane %v1436, 1
      %v1439 = vsel %vm1415, %v1434, %v1438
      %v1441 = vshrl.u32 %v1353, 16
      %v1443 = vshll.u32 %v1353, 16
      %v1445 = vrot.slane %v1443, 1
      %v1446 = vor.u32 %v1441, %v1445
      %v1448 = vshll.u32 %v1401, 16
      %v1450 = vrot.slane %v1448, 1
      %v1451 = vsel %vm1415, %v1446, %v1450
      %v1453 = vshrl.u32 %v1354, 16
      %v1455 = vshll.u32 %v1354, 16
      %v1457 = vrot.slane %v1455, 1
      %v1458 = vor.u32 %v1453, %v1457
      %v1460 = vshll.u32 %v1402, 16
      %v1462 = vrot.slane %v1460, 1
      %v1463 = vsel %vm1415, %v1458, %v1462
      %v1465 = vshrl.u32 %v1355, 16
      %v1467 = vshll.u32 %v1355, 16
      %v1469 = vrot.slane %v1467, 1
      %v1470 = vor.u32 %v1465, %v1469
      %v1472 = vshll.u32 %v1403, 16
      %v1474 = vrot.slane %v1472, 1
      %v1475 = vsel %vm1415, %v1470, %v1474
      %v1477 = vshrl.u32 %v1356, 16
      %v1479 = vshll.u32 %v1356, 16
      %v1481 = vrot.slane %v1479, 1
      %v1482 = vor.u32 %v1477, %v1481
      %v1484 = vshll.u32 %v1404, 16
      %v1486 = vrot.slane %v1484, 1
      %v1487 = vsel %vm1415, %v1482, %v1486
      %v1489 = vshrl.u32 %v1357, 16
      %v1491 = vshll.u32 %v1357, 16
      %v1493 = vrot.slane %v1491, 1
      %v1494 = vor.u32 %v1489, %v1493
      %v1496 = vshll.u32 %v1405, 16
      %v1498 = vrot.slane %v1496, 1
      %v1499 = vsel %vm1415, %v1494, %v1498
      %v1501 = vshrl.u32 %v1358, 16
      %v1503 = vshll.u32 %v1358, 16
      %v1505 = vrot.slane %v1503, 1
      %v1506 = vor.u32 %v1501, %v1505
      %v1508 = vshll.u32 %v1406, 16
      %v1510 = vrot.slane %v1508, 1
      %v1511 = vsel %vm1415, %v1506, %v1510
      %v1513 = vshrl.u32 %v1359, 16
      %v1515 = vshll.u32 %v1359, 16
      %v1517 = vrot.slane %v1515, 1
      %v1518 = vor.u32 %v1513, %v1517
      %v1520 = vshll.u32 %v1407, 16
      %v1522 = vrot.slane %v1520, 1
      %v1523 = vsel %vm1415, %v1518, %v1522
      %v1525 = vshrl.u32 %v1360, 16
      %v1527 = vshll.u32 %v1360, 16
      %v1529 = vrot.slane %v1527, 1
      %v1530 = vor.u32 %v1525, %v1529
      %v1532 = vshll.u32 %v1408, 16
      %v1534 = vrot.slane %v1532, 1
      %v1535 = vsel %vm1415, %v1530, %v1534
      %v1537 = vshrl.u32 %v1361, 16
      %v1539 = vshll.u32 %v1361, 16
      %v1541 = vrot.slane %v1539, 1
      %v1542 = vor.u32 %v1537, %v1541
      %v1544 = vshll.u32 %v1409, 16
      %v1546 = vrot.slane %v1544, 1
      %v1547 = vsel %vm1415, %v1542, %v1546
      %v1549 = vshrl.u32 %v1362, 16
      %v1551 = vshll.u32 %v1362, 16
      %v1553 = vrot.slane %v1551, 1
      %v1554 = vor.u32 %v1549, %v1553
      %v1556 = vshll.u32 %v1410, 16
      %v1558 = vrot.slane %v1556, 1
      %v1559 = vsel %vm1415, %v1554, %v1558
      %v1561 = vshrl.u32 %v1363, 16
      %v1563 = vshll.u32 %v1363, 16
      %v1565 = vrot.slane %v1563, 1
      %v1566 = vor.u32 %v1561, %v1565
      %v1568 = vshll.u32 %v1411, 16
      %v1570 = vrot.slane %v1568, 1
      %v1571 = vsel %vm1415, %v1566, %v1570
      %v1573 = vshrl.u32 %v1364, 16
      %v1575 = vshll.u32 %v1364, 16
      %v1577 = vrot.slane %v1575, 1
      %v1578 = vor.u32 %v1573, %v1577
      %v1580 = vshll.u32 %v1412, 16
      %v1582 = vrot.slane %v1580, 1
      %v1583 = vsel %vm1415, %v1578, %v1582
      %v1585 = vshrl.u32 %v1365, 16
      %v1587 = vshll.u32 %v1365, 16
      %v1589 = vrot.slane %v1587, 1
      %v1590 = vor.u32 %v1585, %v1589
      %v1592 = vshll.u32 %v1413, 16
      %v1594 = vrot.slane %v1592, 1
      %v1595 = vsel %vm1415, %v1590, %v1594
      %v1597 = vshrl.u32 %v1366, 16
      %v1599 = vshll.u32 %v1366, 16
      %v1601 = vrot.slane %v1599, 1
      %v1602 = vor.u32 %v1597, %v1601
      %v1604 = vshll.u32 %v1414, 16
      %v1606 = vrot.slane %v1604, 1
      %v1607 = vsel %vm1415, %v1602, %v1606
      %1608 = vrot.lane.b32.xlu0 %v1427, 4
      %v1609 = vpop.permute.xlu0 %1608
      %1610 = vrot.lane.b32.xlu0 %v1439, 4
      %v1611 = vpop.permute.xlu0 %1610
      %1612 = vrot.lane.b32.xlu0 %v1451, 4
      %v1613 = vpop.permute.xlu0 %1612
      %1614 = vrot.lane.b32.xlu0 %v1463, 4
      %v1615 = vpop.permute.xlu0 %1614
      %1616 = vrot.lane.b32.xlu0 %v1475, 4
      %v1617 = vpop.permute.xlu0 %1616
      %1618 = vrot.lane.b32.xlu0 %v1487, 4
      %v1619 = vpop.permute.xlu0 %1618
      %1620 = vrot.lane.b32.xlu0 %v1499, 4
      %v1621 = vpop.permute.xlu0 %1620
      %1622 = vrot.lane.b32.xlu0 %v1511, 4
      %v1623 = vpop.permute.xlu0 %1622
      %1624 = vrot.lane.b32.xlu0 %v1523, 4
      %v1625 = vpop.permute.xlu0 %1624
      %1626 = vrot.lane.b32.xlu0 %v1535, 4
      %v1627 = vpop.permute.xlu0 %1626
      %1628 = vrot.lane.b32.xlu0 %v1547, 4
      %v1629 = vpop.permute.xlu0 %1628
      %1630 = vrot.lane.b32.xlu0 %v1559, 4
      %v1631 = vpop.permute.xlu0 %1630
      %1632 = vrot.lane.b32.xlu0 %v1571, 4
      %v1633 = vpop.permute.xlu0 %1632
      %1634 = vrot.lane.b32.xlu0 %v1583, 4
      %v1635 = vpop.permute.xlu0 %1634
      %1636 = vrot.lane.b32.xlu0 %v1595, 4
      %v1637 = vpop.permute.xlu0 %1636
      %1638 = vrot.lane.b32.xlu0 %v1607, 4
      %v1639 = vpop.permute.xlu0 %1638
      %v1656 = vunpack.c.l.b16 %v1142
      %v1657 = vunpack.c.l.b16 %v1143
      %v1658 = vunpack.c.l.b16 %v1144
      %v1659 = vunpack.c.l.b16 %v1145
      %v1660 = vunpack.c.l.b16 %v1146
      %v1661 = vunpack.c.l.b16 %v1147
      %v1662 = vunpack.c.l.b16 %v1148
      %v1663 = vunpack.c.l.b16 %v1149
      %v1664 = vunpack.c.l.b16 %v1150
      %v1665 = vunpack.c.l.b16 %v1151
      %v1666 = vunpack.c.l.b16 %v1152
      %v1667 = vunpack.c.l.b16 %v1153
      %v1668 = vunpack.c.l.b16 %v1154
      %v1669 = vunpack.c.l.b16 %v1155
      %v1670 = vunpack.c.l.b16 %v1156
      %v1671 = vunpack.c.l.b16 %v1157
      %v1672 = vpack.c.b16 %v1320, %v1656
      %v1673 = vpack.c.b16 %v1322, %v1657
      %v1674 = vpack.c.b16 %v1324, %v1658
      %v1675 = vpack.c.b16 %v1326, %v1659
      %v1676 = vpack.c.b16 %v1328, %v1660
      %v1677 = vpack.c.b16 %v1330, %v1661
      %v1678 = vpack.c.b16 %v1332, %v1662
      %v1679 = vpack.c.b16 %v1334, %v1663
      %v1680 = vpack.c.b16 %v1336, %v1664
      %v1681 = vpack.c.b16 %v1338, %v1665
      %v1682 = vpack.c.b16 %v1340, %v1666
      %v1683 = vpack.c.b16 %v1342, %v1667
      %v1684 = vpack.c.b16 %v1344, %v1668
      %v1685 = vpack.c.b16 %v1346, %v1669
      %v1686 = vpack.c.b16 %v1348, %v1670
      %v1687 = vpack.c.b16 %v1350, %v1671
      %vm1688 = vcmask 1046528
      %v1689 = vrot.slane %v1672, 1
      %v1690 = vrot.slane %v1399, 1
      %v1691 = vsel %vm1688, %v1689, %v1690
      %v1692 = vrot.slane %v1673, 1
      %v1693 = vrot.slane %v1400, 1
      %v1694 = vsel %vm1688, %v1692, %v1693
      %v1695 = vrot.slane %v1674, 1
      %v1696 = vrot.slane %v1401, 1
      %v1697 = vsel %vm1688, %v1695, %v1696
      %v1698 = vrot.slane %v1675, 1
      %v1699 = vrot.slane %v1402, 1
      %v1700 = vsel %vm1688, %v1698, %v1699
      %v1701 = vrot.slane %v1676, 1
      %v1702 = vrot.slane %v1403, 1
      %v1703 = vsel %vm1688, %v1701, %v1702
      %v1704 = vrot.slane %v1677, 1
      %v1705 = vrot.slane %v1404, 1
      %v1706 = vsel %vm1688, %v1704, %v1705
      %v1707 = vrot.slane %v1678, 1
      %v1708 = vrot.slane %v1405, 1
      %v1709 = vsel %vm1688, %v1707, %v1708
      %v1710 = vrot.slane %v1679, 1
      %v1711 = vrot.slane %v1406, 1
      %v1712 = vsel %vm1688, %v1710, %v1711
      %v1713 = vrot.slane %v1680, 1
      %v1714 = vrot.slane %v1407, 1
      %v1715 = vsel %vm1688, %v1713, %v1714
      %v1716 = vrot.slane %v1681, 1
      %v1717 = vrot.slane %v1408, 1
      %v1718 = vsel %vm1688, %v1716, %v1717
      %v1719 = vrot.slane %v1682, 1
      %v1720 = vrot.slane %v1409, 1
      %v1721 = vsel %vm1688, %v1719, %v1720
      %v1722 = vrot.slane %v1683, 1
      %v1723 = vrot.slane %v1410, 1
      %v1724 = vsel %vm1688, %v1722, %v1723
      %v1725 = vrot.slane %v1684, 1
      %v1726 = vrot.slane %v1411, 1
      %v1727 = vsel %vm1688, %v1725, %v1726
      %v1728 = vrot.slane %v1685, 1
      %v1729 = vrot.slane %v1412, 1
      %v1730 = vsel %vm1688, %v1728, %v1729
      %v1731 = vrot.slane %v1686, 1
      %v1732 = vrot.slane %v1413, 1
      %v1733 = vsel %vm1688, %v1731, %v1732
      %v1734 = vrot.slane %v1687, 1
      %v1735 = vrot.slane %v1414, 1
      %v1736 = vsel %vm1688, %v1734, %v1735
      %1737 = vrot.lane.b32.xlu0 %v1691, 8
      %v1738 = vpop.permute.xlu0 %1737
      %1739 = vrot.lane.b32.xlu0 %v1694, 8
      %v1740 = vpop.permute.xlu0 %1739
      %1741 = vrot.lane.b32.xlu0 %v1697, 8
      %v1742 = vpop.permute.xlu0 %1741
      %1743 = vrot.lane.b32.xlu0 %v1700, 8
      %v1744 = vpop.permute.xlu0 %1743
      %1745 = vrot.lane.b32.xlu0 %v1703, 8
      %v1746 = vpop.permute.xlu0 %1745
      %1747 = vrot.lane.b32.xlu0 %v1706, 8
      %v1748 = vpop.permute.xlu0 %1747
      %1749 = vrot.lane.b32.xlu0 %v1709, 8
      %v1750 = vpop.permute.xlu0 %1749
      %1751 = vrot.lane.b32.xlu0 %v1712, 8
      %v1752 = vpop.permute.xlu0 %1751
      %1753 = vrot.lane.b32.xlu0 %v1715, 8
      %v1754 = vpop.permute.xlu0 %1753
      %1755 = vrot.lane.b32.xlu0 %v1718, 8
      %v1756 = vpop.permute.xlu0 %1755
      %1757 = vrot.lane.b32.xlu0 %v1721, 8
      %v1758 = vpop.permute.xlu0 %1757
      %1759 = vrot.lane.b32.xlu0 %v1724, 8
      %v1760 = vpop.permute.xlu0 %1759
      %1761 = vrot.lane.b32.xlu0 %v1727, 8
      %v1762 = vpop.permute.xlu0 %1761
      %1763 = vrot.lane.b32.xlu0 %v1730, 8
      %v1764 = vpop.permute.xlu0 %1763
      %1765 = vrot.lane.b32.xlu0 %v1733, 8
      %v1766 = vpop.permute.xlu0 %1765
      %1767 = vrot.lane.b32.xlu0 %v1736, 8
      %v1768 = vpop.permute.xlu0 %1767
      %v1801 = vunpack.c.l.b16 %v1158
      %v1802 = vunpack.c.l.b16 %v1159
      %v1803 = vunpack.c.l.b16 %v1160
      %v1804 = vunpack.c.l.b16 %v1161
      %v1805 = vunpack.c.l.b16 %v1162
      %v1806 = vunpack.c.l.b16 %v1163
      %v1807 = vunpack.c.l.b16 %v1164
      %v1808 = vunpack.c.l.b16 %v1165
      %v1809 = vunpack.c.l.b16 %v1166
      %v1810 = vunpack.c.l.b16 %v1167
      %v1811 = vunpack.c.l.b16 %v1168
      %v1812 = vunpack.c.l.b16 %v1169
      %v1813 = vunpack.c.l.b16 %v1170
      %v1814 = vunpack.c.l.b16 %v1171
      %v1815 = vunpack.c.l.b16 %v1172
      %v1816 = vunpack.c.l.b16 %v1173
      %v1817 = vunpack.c.l.b16 %v1174
      %v1818 = vunpack.c.l.b16 %v1175
      %v1819 = vunpack.c.l.b16 %v1176
      %v1820 = vunpack.c.l.b16 %v1177
      %v1821 = vunpack.c.l.b16 %v1178
      %v1822 = vunpack.c.l.b16 %v1179
      %v1823 = vunpack.c.l.b16 %v1180
      %v1824 = vunpack.c.l.b16 %v1181
      %v1825 = vunpack.c.l.b16 %v1182
      %v1826 = vunpack.c.l.b16 %v1183
      %v1827 = vunpack.c.l.b16 %v1184
      %v1828 = vunpack.c.l.b16 %v1185
      %v1829 = vunpack.c.l.b16 %v1186
      %v1830 = vunpack.c.l.b16 %v1187
      %v1831 = vunpack.c.l.b16 %v1188
      %v1832 = vunpack.c.l.b16 %v1189
      %v1833 = vpack.c.b16 %v1802, %v1801
      %v1834 = vpack.c.b16 %v1804, %v1803
      %v1835 = vpack.c.b16 %v1806, %v1805
      %v1836 = vpack.c.b16 %v1808, %v1807
      %v1837 = vpack.c.b16 %v1810, %v1809
      %v1838 = vpack.c.b16 %v1812, %v1811
      %v1839 = vpack.c.b16 %v1814, %v1813
      %v1840 = vpack.c.b16 %v1816, %v1815
      %v1841 = vpack.c.b16 %v1818, %v1817
      %v1842 = vpack.c.b16 %v1820, %v1819
      %v1843 = vpack.c.b16 %v1822, %v1821
      %v1844 = vpack.c.b16 %v1824, %v1823
      %v1845 = vpack.c.b16 %v1826, %v1825
      %v1846 = vpack.c.b16 %v1828, %v1827
      %v1847 = vpack.c.b16 %v1830, %v1829
      %v1848 = vpack.c.b16 %v1832, %v1831
      %1849 = vrot.lane.b32.xlu0 %v1833, 12
      %v1850 = vpop.permute.xlu0 %1849
      %1851 = vrot.lane.b32.xlu0 %v1834, 12
      %v1852 = vpop.permute.xlu0 %1851
      %1853 = vrot.lane.b32.xlu0 %v1835, 12
      %v1854 = vpop.permute.xlu0 %1853
      %1855 = vrot.lane.b32.xlu0 %v1836, 12
      %v1856 = vpop.permute.xlu0 %1855
      %1857 = vrot.lane.b32.xlu0 %v1837, 12
      %v1858 = vpop.permute.xlu0 %1857
      %1859 = vrot.lane.b32.xlu0 %v1838, 12
      %v1860 = vpop.permute.xlu0 %1859
      %1861 = vrot.lane.b32.xlu0 %v1839, 12
      %v1862 = vpop.permute.xlu0 %1861
      %1863 = vrot.lane.b32.xlu0 %v1840, 12
      %v1864 = vpop.permute.xlu0 %1863
      %1865 = vrot.lane.b32.xlu0 %v1841, 12
      %v1866 = vpop.permute.xlu0 %1865
      %1867 = vrot.lane.b32.xlu0 %v1842, 12
      %v1868 = vpop.permute.xlu0 %1867
      %1869 = vrot.lane.b32.xlu0 %v1843, 12
      %v1870 = vpop.permute.xlu0 %1869
      %1871 = vrot.lane.b32.xlu0 %v1844, 12
      %v1872 = vpop.permute.xlu0 %1871
      %1873 = vrot.lane.b32.xlu0 %v1845, 12
      %v1874 = vpop.permute.xlu0 %1873
      %1875 = vrot.lane.b32.xlu0 %v1846, 12
      %v1876 = vpop.permute.xlu0 %1875
      %1877 = vrot.lane.b32.xlu0 %v1847, 12
      %v1878 = vpop.permute.xlu0 %1877
      %1879 = vrot.lane.b32.xlu0 %v1848, 12
      %v1880 = vpop.permute.xlu0 %1879
      %v1897 = vunpack.c.l.b16 %v1190
      %v1898 = vunpack.c.l.b16 %v1191
      %v1899 = vunpack.c.l.b16 %v1192
      %v1900 = vunpack.c.l.b16 %v1193
      %v1901 = vunpack.c.l.b16 %v1194
      %v1902 = vunpack.c.l.b16 %v1195
      %v1903 = vunpack.c.l.b16 %v1196
      %v1904 = vunpack.c.l.b16 %v1197
      %v1905 = vunpack.c.l.b16 %v1198
      %v1906 = vunpack.c.l.b16 %v1199
      %v1907 = vunpack.c.l.b16 %v1200
      %v1908 = vunpack.c.l.b16 %v1201
      %v1909 = vunpack.c.l.b16 %v1202
      %v1910 = vunpack.c.l.b16 %v1203
      %v1911 = vunpack.c.l.b16 %v1204
      %v1912 = vunpack.c.l.b16 %v1205
      %v1913 = vpack.c.b16 %v1897, %v1897
      %v1914 = vpack.c.b16 %v1898, %v1898
      %v1915 = vpack.c.b16 %v1899, %v1899
      %v1916 = vpack.c.b16 %v1900, %v1900
      %v1917 = vpack.c.b16 %v1901, %v1901
      %v1918 = vpack.c.b16 %v1902, %v1902
      %v1919 = vpack.c.b16 %v1903, %v1903
      %v1920 = vpack.c.b16 %v1904, %v1904
      %v1921 = vpack.c.b16 %v1905, %v1905
      %v1922 = vpack.c.b16 %v1906, %v1906
      %v1923 = vpack.c.b16 %v1907, %v1907
      %v1924 = vpack.c.b16 %v1908, %v1908
      %v1925 = vpack.c.b16 %v1909, %v1909
      %v1926 = vpack.c.b16 %v1910, %v1910
      %v1927 = vpack.c.b16 %v1911, %v1911
      %v1928 = vpack.c.b16 %v1912, %v1912
      %v1930 = vshrl.u32 %v1833, 16
      %v1932 = vshll.u32 %v1833, 16
      %v1934 = vrot.slane %v1932, 1
      %v1935 = vor.u32 %v1930, %v1934
      %v1937 = vshll.u32 %v1913, 16
      %v1939 = vrot.slane %v1937, 1
      %v1940 = vsel %vm1415, %v1935, %v1939
      %v1942 = vshrl.u32 %v1834, 16
      %v1944 = vshll.u32 %v1834, 16
      %v1946 = vrot.slane %v1944, 1
      %v1947 = vor.u32 %v1942, %v1946
      %v1949 = vshll.u32 %v1914, 16
      %v1951 = vrot.slane %v1949, 1
      %v1952 = vsel %vm1415, %v1947, %v1951
      %v1954 = vshrl.u32 %v1835, 16
      %v1956 = vshll.u32 %v1835, 16
      %v1958 = vrot.slane %v1956, 1
      %v1959 = vor.u32 %v1954, %v1958
      %v1961 = vshll.u32 %v1915, 16
      %v1963 = vrot.slane %v1961, 1
      %v1964 = vsel %vm1415, %v1959, %v1963
      %v1966 = vshrl.u32 %v1836, 16
      %v1968 = vshll.u32 %v1836, 16
      %v1970 = vrot.slane %v1968, 1
      %v1971 = vor.u32 %v1966, %v1970
      %v1973 = vshll.u32 %v1916, 16
      %v1975 = vrot.slane %v1973, 1
      %v1976 = vsel %vm1415, %v1971, %v1975
      %v1978 = vshrl.u32 %v1837, 16
      %v1980 = vshll.u32 %v1837, 16
      %v1982 = vrot.slane %v1980, 1
      %v1983 = vor.u32 %v1978, %v1982
      %v1985 = vshll.u32 %v1917, 16
      %v1987 = vrot.slane %v1985, 1
      %v1988 = vsel %vm1415, %v1983, %v1987
      %v1990 = vshrl.u32 %v1838, 16
      %v1992 = vshll.u32 %v1838, 16
      %v1994 = vrot.slane %v1992, 1
      %v1995 = vor.u32 %v1990, %v1994
      %v1997 = vshll.u32 %v1918, 16
      %v1999 = vrot.slane %v1997, 1
      %v2000 = vsel %vm1415, %v1995, %v1999
      %v2002 = vshrl.u32 %v1839, 16
      %v2004 = vshll.u32 %v1839, 16
      %v2006 = vrot.slane %v2004, 1
      %v2007 = vor.u32 %v2002, %v2006
      %v2009 = vshll.u32 %v1919, 16
      %v2011 = vrot.slane %v2009, 1
      %v2012 = vsel %vm1415, %v2007, %v2011
      %v2014 = vshrl.u32 %v1840, 16
      %v2016 = vshll.u32 %v1840, 16
      %v2018 = vrot.slane %v2016, 1
      %v2019 = vor.u32 %v2014, %v2018
      %v2021 = vshll.u32 %v1920, 16
      %v2023 = vrot.slane %v2021, 1
      %v2024 = vsel %vm1415, %v2019, %v2023
      %v2026 = vshrl.u32 %v1841, 16
      %v2028 = vshll.u32 %v1841, 16
      %v2030 = vrot.slane %v2028, 1
      %v2031 = vor.u32 %v2026, %v2030
      %v2033 = vshll.u32 %v1921, 16
      %v2035 = vrot.slane %v2033, 1
      %v2036 = vsel %vm1415, %v2031, %v2035
      %v2038 = vshrl.u32 %v1842, 16
      %v2040 = vshll.u32 %v1842, 16
      %v2042 = vrot.slane %v2040, 1
      %v2043 = vor.u32 %v2038, %v2042
      %v2045 = vshll.u32 %v1922, 16
      %v2047 = vrot.slane %v2045, 1
      %v2048 = vsel %vm1415, %v2043, %v2047
      %v2050 = vshrl.u32 %v1843, 16
      %v2052 = vshll.u32 %v1843, 16
      %v2054 = vrot.slane %v2052, 1
      %v2055 = vor.u32 %v2050, %v2054
      %v2057 = vshll.u32 %v1923, 16
      %v2059 = vrot.slane %v2057, 1
      %v2060 = vsel %vm1415, %v2055, %v2059
      %v2062 = vshrl.u32 %v1844, 16
      %v2064 = vshll.u32 %v1844, 16
      %v2066 = vrot.slane %v2064, 1
      %v2067 = vor.u32 %v2062, %v2066
      %v2069 = vshll.u32 %v1924, 16
      %v2071 = vrot.slane %v2069, 1
      %v2072 = vsel %vm1415, %v2067, %v2071
      %v2074 = vshrl.u32 %v1845, 16
      %v2076 = vshll.u32 %v1845, 16
      %v2078 = vrot.slane %v2076, 1
      %v2079 = vor.u32 %v2074, %v2078
      %v2081 = vshll.u32 %v1925, 16
      %v2083 = vrot.slane %v2081, 1
      %v2084 = vsel %vm1415, %v2079, %v2083
      %v2086 = vshrl.u32 %v1846, 16
      %v2088 = vshll.u32 %v1846, 16
      %v2090 = vrot.slane %v2088, 1
      %v2091 = vor.u32 %v2086, %v2090
      %v2093 = vshll.u32 %v1926, 16
      %v2095 = vrot.slane %v2093, 1
      %v2096 = vsel %vm1415, %v2091, %v2095
      %v2098 = vshrl.u32 %v1847, 16
      %v2100 = vshll.u32 %v1847, 16
      %v2102 = vrot.slane %v2100, 1
      %v2103 = vor.u32 %v2098, %v2102
      %v2105 = vshll.u32 %v1927, 16
      %v2107 = vrot.slane %v2105, 1
      %v2108 = vsel %vm1415, %v2103, %v2107
      %v2110 = vshrl.u32 %v1848, 16
      %v2112 = vshll.u32 %v1848, 16
      %v2114 = vrot.slane %v2112, 1
      %v2115 = vor.u32 %v2110, %v2114
      %v2117 = vshll.u32 %v1928, 16
      %v2119 = vrot.slane %v2117, 1
      %v2120 = vsel %vm1415, %v2115, %v2119
      %2121 = vrot.lane.b32.xlu0 %v1940, 16
      %v2122 = vpop.permute.xlu0 %2121
      %2123 = vrot.lane.b32.xlu0 %v1952, 16
      %v2124 = vpop.permute.xlu0 %2123
      %2125 = vrot.lane.b32.xlu0 %v1964, 16
      %v2126 = vpop.permute.xlu0 %2125
      %2127 = vrot.lane.b32.xlu0 %v1976, 16
      %v2128 = vpop.permute.xlu0 %2127
      %2129 = vrot.lane.b32.xlu0 %v1988, 16
      %v2130 = vpop.permute.xlu0 %2129
      %2131 = vrot.lane.b32.xlu0 %v2000, 16
      %v2132 = vpop.permute.xlu0 %2131
      %2133 = vrot.lane.b32.xlu0 %v2012, 16
      %v2134 = vpop.permute.xlu0 %2133
      %2135 = vrot.lane.b32.xlu0 %v2024, 16
      %v2136 = vpop.permute.xlu0 %2135
      %2137 = vrot.lane.b32.xlu0 %v2036, 16
      %v2138 = vpop.permute.xlu0 %2137
      %2139 = vrot.lane.b32.xlu0 %v2048, 16
      %v2140 = vpop.permute.xlu0 %2139
      %2141 = vrot.lane.b32.xlu0 %v2060, 16
      %v2142 = vpop.permute.xlu0 %2141
      %2143 = vrot.lane.b32.xlu0 %v2072, 16
      %v2144 = vpop.permute.xlu0 %2143
      %2145 = vrot.lane.b32.xlu0 %v2084, 16
      %v2146 = vpop.permute.xlu0 %2145
      %2147 = vrot.lane.b32.xlu0 %v2096, 16
      %v2148 = vpop.permute.xlu0 %2147
      %2149 = vrot.lane.b32.xlu0 %v2108, 16
      %v2150 = vpop.permute.xlu0 %2149
      %2151 = vrot.lane.b32.xlu0 %v2120, 16
      %v2152 = vpop.permute.xlu0 %2151
      %v2169 = vunpack.c.l.b16 %v1206
      %v2170 = vunpack.c.l.b16 %v1207
      %v2171 = vunpack.c.l.b16 %v1208
      %v2172 = vunpack.c.l.b16 %v1209
      %v2173 = vunpack.c.l.b16 %v1210
      %v2174 = vunpack.c.l.b16 %v1211
      %v2175 = vunpack.c.l.b16 %v1212
      %v2176 = vunpack.c.l.b16 %v1213
      %v2177 = vunpack.c.l.b16 %v1214
      %v2178 = vunpack.c.l.b16 %v1215
      %v2179 = vunpack.c.l.b16 %v1216
      %v2180 = vunpack.c.l.b16 %v1217
      %v2181 = vunpack.c.l.b16 %v1218
      %v2182 = vunpack.c.l.b16 %v1219
      %v2183 = vunpack.c.l.b16 %v1220
      %v2184 = vunpack.c.l.b16 %v1221
      %v2185 = vpack.c.b16 %v1802, %v2169
      %v2186 = vpack.c.b16 %v1804, %v2170
      %v2187 = vpack.c.b16 %v1806, %v2171
      %v2188 = vpack.c.b16 %v1808, %v2172
      %v2189 = vpack.c.b16 %v1810, %v2173
      %v2190 = vpack.c.b16 %v1812, %v2174
      %v2191 = vpack.c.b16 %v1814, %v2175
      %v2192 = vpack.c.b16 %v1816, %v2176
      %v2193 = vpack.c.b16 %v1818, %v2177
      %v2194 = vpack.c.b16 %v1820, %v2178
      %v2195 = vpack.c.b16 %v1822, %v2179
      %v2196 = vpack.c.b16 %v1824, %v2180
      %v2197 = vpack.c.b16 %v1826, %v2181
      %v2198 = vpack.c.b16 %v1828, %v2182
      %v2199 = vpack.c.b16 %v1830, %v2183
      %v2200 = vpack.c.b16 %v1832, %v2184
      %v2201 = vrot.slane %v2185, 1
      %v2202 = vrot.slane %v1913, 1
      %v2203 = vsel %vm1688, %v2201, %v2202
      %v2204 = vrot.slane %v2186, 1
      %v2205 = vrot.slane %v1914, 1
      %v2206 = vsel %vm1688, %v2204, %v2205
      %v2207 = vrot.slane %v2187, 1
      %v2208 = vrot.slane %v1915, 1
      %v2209 = vsel %vm1688, %v2207, %v2208
      %v2210 = vrot.slane %v2188, 1
      %v2211 = vrot.slane %v1916, 1
      %v2212 = vsel %vm1688, %v2210, %v2211
      %v2213 = vrot.slane %v2189, 1
      %v2214 = vrot.slane %v1917, 1
      %v2215 = vsel %vm1688, %v2213, %v2214
      %v2216 = vrot.slane %v2190, 1
      %v2217 = vrot.slane %v1918, 1
      %v2218 = vsel %vm1688, %v2216, %v2217
      %v2219 = vrot.slane %v2191, 1
      %v2220 = vrot.slane %v1919, 1
      %v2221 = vsel %vm1688, %v2219, %v2220
      %v2222 = vrot.slane %v2192, 1
      %v2223 = vrot.slane %v1920, 1
      %v2224 = vsel %vm1688, %v2222, %v2223
      %v2225 = vrot.slane %v2193, 1
      %v2226 = vrot.slane %v1921, 1
      %v2227 = vsel %vm1688, %v2225, %v2226
      %v2228 = vrot.slane %v2194, 1
      %v2229 = vrot.slane %v1922, 1
      %v2230 = vsel %vm1688, %v2228, %v2229
      %v2231 = vrot.slane %v2195, 1
      %v2232 = vrot.slane %v1923, 1
      %v2233 = vsel %vm1688, %v2231, %v2232
      %v2234 = vrot.slane %v2196, 1
      %v2235 = vrot.slane %v1924, 1
      %v2236 = vsel %vm1688, %v2234, %v2235
      %v2237 = vrot.slane %v2197, 1
      %v2238 = vrot.slane %v1925, 1
      %v2239 = vsel %vm1688, %v2237, %v2238
      %v2240 = vrot.slane %v2198, 1
      %v2241 = vrot.slane %v1926, 1
      %v2242 = vsel %vm1688, %v2240, %v2241
      %v2243 = vrot.slane %v2199, 1
      %v2244 = vrot.slane %v1927, 1
      %v2245 = vsel %vm1688, %v2243, %v2244
      %v2246 = vrot.slane %v2200, 1
      %v2247 = vrot.slane %v1928, 1
      %v2248 = vsel %vm1688, %v2246, %v2247
      %2249 = vrot.lane.b32.xlu0 %v2203, 20
      %v2250 = vpop.permute.xlu0 %2249
      %2251 = vrot.lane.b32.xlu0 %v2206, 20
      %v2252 = vpop.permute.xlu0 %2251
      %2253 = vrot.lane.b32.xlu0 %v2209, 20
      %v2254 = vpop.permute.xlu0 %2253
      %2255 = vrot.lane.b32.xlu0 %v2212, 20
      %v2256 = vpop.permute.xlu0 %2255
      %2257 = vrot.lane.b32.xlu0 %v2215, 20
      %v2258 = vpop.permute.xlu0 %2257
      %2259 = vrot.lane.b32.xlu0 %v2218, 20
      %v2260 = vpop.permute.xlu0 %2259
      %2261 = vrot.lane.b32.xlu0 %v2221, 20
      %v2262 = vpop.permute.xlu0 %2261
      %2263 = vrot.lane.b32.xlu0 %v2224, 20
      %v2264 = vpop.permute.xlu0 %2263
      %2265 = vrot.lane.b32.xlu0 %v2227, 20
      %v2266 = vpop.permute.xlu0 %2265
      %2267 = vrot.lane.b32.xlu0 %v2230, 20
      %v2268 = vpop.permute.xlu0 %2267
      %2269 = vrot.lane.b32.xlu0 %v2233, 20
      %v2270 = vpop.permute.xlu0 %2269
      %2271 = vrot.lane.b32.xlu0 %v2236, 20
      %v2272 = vpop.permute.xlu0 %2271
      %2273 = vrot.lane.b32.xlu0 %v2239, 20
      %v2274 = vpop.permute.xlu0 %2273
      %2275 = vrot.lane.b32.xlu0 %v2242, 20
      %v2276 = vpop.permute.xlu0 %2275
      %2277 = vrot.lane.b32.xlu0 %v2245, 20
      %v2278 = vpop.permute.xlu0 %2277
      %2279 = vrot.lane.b32.xlu0 %v2248, 20
      %v2280 = vpop.permute.xlu0 %2279
      %v2313 = vunpack.c.l.b16 %v1223
      %v2314 = vunpack.c.l.b16 %v1224
      %v2315 = vunpack.c.l.b16 %v1225
      %v2316 = vunpack.c.l.b16 %v1226
      %v2317 = vunpack.c.l.b16 %v1227
      %v2318 = vunpack.c.l.b16 %v1228
      %v2319 = vunpack.c.l.b16 %v1229
      %v2320 = vunpack.c.l.b16 %v1230
      %v2321 = vunpack.c.l.b16 %v1231
      %v2322 = vunpack.c.l.b16 %v1232
      %v2323 = vunpack.c.l.b16 %v1233
      %v2324 = vunpack.c.l.b16 %v1234
      %v2325 = vunpack.c.l.b16 %v1235
      %v2326 = vunpack.c.l.b16 %v1236
      %v2327 = vunpack.c.l.b16 %v1237
      %v2328 = vunpack.c.l.b16 %v1238
      %v2329 = vunpack.c.l.b16 %v1239
      %v2330 = vunpack.c.l.b16 %v1240
      %v2331 = vunpack.c.l.b16 %v1241
      %v2332 = vunpack.c.l.b16 %v1242
      %v2333 = vunpack.c.l.b16 %v1243
      %v2334 = vunpack.c.l.b16 %v1244
      %v2335 = vunpack.c.l.b16 %v1245
      %v2336 = vunpack.c.l.b16 %v1246
      %v2337 = vunpack.c.l.b16 %v1247
      %v2338 = vunpack.c.l.b16 %v1248
      %v2339 = vunpack.c.l.b16 %v1249
      %v2340 = vunpack.c.l.b16 %v1250
      %v2341 = vunpack.c.l.b16 %v1251
      %v2342 = vunpack.c.l.b16 %v1252
      %v2343 = vunpack.c.l.b16 %v1253
      %v2344 = vunpack.c.l.b16 %v1254
      %v2345 = vpack.c.b16 %v2314, %v2313
      %v2346 = vpack.c.b16 %v2316, %v2315
      %v2347 = vpack.c.b16 %v2318, %v2317
      %v2348 = vpack.c.b16 %v2320, %v2319
      %v2349 = vpack.c.b16 %v2322, %v2321
      %v2350 = vpack.c.b16 %v2324, %v2323
      %v2351 = vpack.c.b16 %v2326, %v2325
      %v2352 = vpack.c.b16 %v2328, %v2327
      %v2353 = vpack.c.b16 %v2330, %v2329
      %v2354 = vpack.c.b16 %v2332, %v2331
      %v2355 = vpack.c.b16 %v2334, %v2333
      %v2356 = vpack.c.b16 %v2336, %v2335
      %v2357 = vpack.c.b16 %v2338, %v2337
      %v2358 = vpack.c.b16 %v2340, %v2339
      %v2359 = vpack.c.b16 %v2342, %v2341
      %v2360 = vpack.c.b16 %v2344, %v2343
      %2361 = vrot.lane.b32.xlu0 %v2345, 24
      %v2362 = vpop.permute.xlu0 %2361
      %2363 = vrot.lane.b32.xlu0 %v2346, 24
      %v2364 = vpop.permute.xlu0 %2363
      %2365 = vrot.lane.b32.xlu0 %v2347, 24
      %v2366 = vpop.permute.xlu0 %2365
      %2367 = vrot.lane.b32.xlu0 %v2348, 24
      %v2368 = vpop.permute.xlu0 %2367
      %2369 = vrot.lane.b32.xlu0 %v2349, 24
      %v2370 = vpop.permute.xlu0 %2369
      %2371 = vrot.lane.b32.xlu0 %v2350, 24
      %v2372 = vpop.permute.xlu0 %2371
      %2373 = vrot.lane.b32.xlu0 %v2351, 24
      %v2374 = vpop.permute.xlu0 %2373
      %2375 = vrot.lane.b32.xlu0 %v2352, 24
      %v2376 = vpop.permute.xlu0 %2375
      %2377 = vrot.lane.b32.xlu0 %v2353, 24
      %v2378 = vpop.permute.xlu0 %2377
      %2379 = vrot.lane.b32.xlu0 %v2354, 24
      %v2380 = vpop.permute.xlu0 %2379
      %2381 = vrot.lane.b32.xlu0 %v2355, 24
      %v2382 = vpop.permute.xlu0 %2381
      %2383 = vrot.lane.b32.xlu0 %v2356, 24
      %v2384 = vpop.permute.xlu0 %2383
      %2385 = vrot.lane.b32.xlu0 %v2357, 24
      %v2386 = vpop.permute.xlu0 %2385
      %2387 = vrot.lane.b32.xlu0 %v2358, 24
      %v2388 = vpop.permute.xlu0 %2387
      %2389 = vrot.lane.b32.xlu0 %v2359, 24
      %v2390 = vpop.permute.xlu0 %2389
      %2391 = vrot.lane.b32.xlu0 %v2360, 24
      %v2392 = vpop.permute.xlu0 %2391
      %v2409 = vunpack.c.l.b16 %v1255
      %v2410 = vunpack.c.l.b16 %v1256
      %v2411 = vunpack.c.l.b16 %v1257
      %v2412 = vunpack.c.l.b16 %v1258
      %v2413 = vunpack.c.l.b16 %v1259
      %v2414 = vunpack.c.l.b16 %v1260
      %v2415 = vunpack.c.l.b16 %v1261
      %v2416 = vunpack.c.l.b16 %v1262
      %v2417 = vunpack.c.l.b16 %v1263
      %v2418 = vunpack.c.l.b16 %v1264
      %v2419 = vunpack.c.l.b16 %v1265
      %v2420 = vunpack.c.l.b16 %v1266
      %v2421 = vunpack.c.l.b16 %v1267
      %v2422 = vunpack.c.l.b16 %v1268
      %v2423 = vunpack.c.l.b16 %v1269
      %v2424 = vunpack.c.l.b16 %v1270
      %v2425 = vpack.c.b16 %v2409, %v2409
      %v2426 = vpack.c.b16 %v2410, %v2410
      %v2427 = vpack.c.b16 %v2411, %v2411
      %v2428 = vpack.c.b16 %v2412, %v2412
      %v2429 = vpack.c.b16 %v2413, %v2413
      %v2430 = vpack.c.b16 %v2414, %v2414
      %v2431 = vpack.c.b16 %v2415, %v2415
      %v2432 = vpack.c.b16 %v2416, %v2416
      %v2433 = vpack.c.b16 %v2417, %v2417
      %v2434 = vpack.c.b16 %v2418, %v2418
      %v2435 = vpack.c.b16 %v2419, %v2419
      %v2436 = vpack.c.b16 %v2420, %v2420
      %v2437 = vpack.c.b16 %v2421, %v2421
      %v2438 = vpack.c.b16 %v2422, %v2422
      %v2439 = vpack.c.b16 %v2423, %v2423
      %v2440 = vpack.c.b16 %v2424, %v2424
      %v2442 = vshrl.u32 %v2345, 16
      %v2444 = vshll.u32 %v2345, 16
      %v2446 = vrot.slane %v2444, 1
      %v2447 = vor.u32 %v2442, %v2446
      %v2449 = vshll.u32 %v2425, 16
      %v2451 = vrot.slane %v2449, 1
      %v2452 = vsel %vm1415, %v2447, %v2451
      %v2454 = vshrl.u32 %v2346, 16
      %v2456 = vshll.u32 %v2346, 16
      %v2458 = vrot.slane %v2456, 1
      %v2459 = vor.u32 %v2454, %v2458
      %v2461 = vshll.u32 %v2426, 16
      %v2463 = vrot.slane %v2461, 1
      %v2464 = vsel %vm1415, %v2459, %v2463
      %v2466 = vshrl.u32 %v2347, 16
      %v2468 = vshll.u32 %v2347, 16
      %v2470 = vrot.slane %v2468, 1
      %v2471 = vor.u32 %v2466, %v2470
      %v2473 = vshll.u32 %v2427, 16
      %v2475 = vrot.slane %v2473, 1
      %v2476 = vsel %vm1415, %v2471, %v2475
      %v2478 = vshrl.u32 %v2348, 16
      %v2480 = vshll.u32 %v2348, 16
      %v2482 = vrot.slane %v2480, 1
      %v2483 = vor.u32 %v2478, %v2482
      %v2485 = vshll.u32 %v2428, 16
      %v2487 = vrot.slane %v2485, 1
      %v2488 = vsel %vm1415, %v2483, %v2487
      %v2490 = vshrl.u32 %v2349, 16
      %v2492 = vshll.u32 %v2349, 16
      %v2494 = vrot.slane %v2492, 1
      %v2495 = vor.u32 %v2490, %v2494
      %v2497 = vshll.u32 %v2429, 16
      %v2499 = vrot.slane %v2497, 1
      %v2500 = vsel %vm1415, %v2495, %v2499
      %v2502 = vshrl.u32 %v2350, 16
      %v2504 = vshll.u32 %v2350, 16
      %v2506 = vrot.slane %v2504, 1
      %v2507 = vor.u32 %v2502, %v2506
      %v2509 = vshll.u32 %v2430, 16
      %v2511 = vrot.slane %v2509, 1
      %v2512 = vsel %vm1415, %v2507, %v2511
      %v2514 = vshrl.u32 %v2351, 16
      %v2516 = vshll.u32 %v2351, 16
      %v2518 = vrot.slane %v2516, 1
      %v2519 = vor.u32 %v2514, %v2518
      %v2521 = vshll.u32 %v2431, 16
      %v2523 = vrot.slane %v2521, 1
      %v2524 = vsel %vm1415, %v2519, %v2523
      %v2526 = vshrl.u32 %v2352, 16
      %v2528 = vshll.u32 %v2352, 16
      %v2530 = vrot.slane %v2528, 1
      %v2531 = vor.u32 %v2526, %v2530
      %v2533 = vshll.u32 %v2432, 16
      %v2535 = vrot.slane %v2533, 1
      %v2536 = vsel %vm1415, %v2531, %v2535
      %v2538 = vshrl.u32 %v2353, 16
      %v2540 = vshll.u32 %v2353, 16
      %v2542 = vrot.slane %v2540, 1
      %v2543 = vor.u32 %v2538, %v2542
      %v2545 = vshll.u32 %v2433, 16
      %v2547 = vrot.slane %v2545, 1
      %v2548 = vsel %vm1415, %v2543, %v2547
      %v2550 = vshrl.u32 %v2354, 16
      %v2552 = vshll.u32 %v2354, 16
      %v2554 = vrot.slane %v2552, 1
      %v2555 = vor.u32 %v2550, %v2554
      %v2557 = vshll.u32 %v2434, 16
      %v2559 = vrot.slane %v2557, 1
      %v2560 = vsel %vm1415, %v2555, %v2559
      %v2562 = vshrl.u32 %v2355, 16
      %v2564 = vshll.u32 %v2355, 16
      %v2566 = vrot.slane %v2564, 1
      %v2567 = vor.u32 %v2562, %v2566
      %v2569 = vshll.u32 %v2435, 16
      %v2571 = vrot.slane %v2569, 1
      %v2572 = vsel %vm1415, %v2567, %v2571
      %v2574 = vshrl.u32 %v2356, 16
      %v2576 = vshll.u32 %v2356, 16
      %v2578 = vrot.slane %v2576, 1
      %v2579 = vor.u32 %v2574, %v2578
      %v2581 = vshll.u32 %v2436, 16
      %v2583 = vrot.slane %v2581, 1
      %v2584 = vsel %vm1415, %v2579, %v2583
      %v2586 = vshrl.u32 %v2357, 16
      %v2588 = vshll.u32 %v2357, 16
      %v2590 = vrot.slane %v2588, 1
      %v2591 = vor.u32 %v2586, %v2590
      %v2593 = vshll.u32 %v2437, 16
      %v2595 = vrot.slane %v2593, 1
      %v2596 = vsel %vm1415, %v2591, %v2595
      %v2598 = vshrl.u32 %v2358, 16
      %v2600 = vshll.u32 %v2358, 16
      %v2602 = vrot.slane %v2600, 1
      %v2603 = vor.u32 %v2598, %v2602
      %v2605 = vshll.u32 %v2438, 16
      %v2607 = vrot.slane %v2605, 1
      %v2608 = vsel %vm1415, %v2603, %v2607
      %v2610 = vshrl.u32 %v2359, 16
      %v2612 = vshll.u32 %v2359, 16
      %v2614 = vrot.slane %v2612, 1
      %v2615 = vor.u32 %v2610, %v2614
      %v2617 = vshll.u32 %v2439, 16
      %v2619 = vrot.slane %v2617, 1
      %v2620 = vsel %vm1415, %v2615, %v2619
      %v2622 = vshrl.u32 %v2360, 16
      %v2624 = vshll.u32 %v2360, 16
      %v2626 = vrot.slane %v2624, 1
      %v2627 = vor.u32 %v2622, %v2626
      %v2629 = vshll.u32 %v2440, 16
      %v2631 = vrot.slane %v2629, 1
      %v2632 = vsel %vm1415, %v2627, %v2631
      %2633 = vrot.lane.b32.xlu0 %v2452, 28
      %v2634 = vpop.permute.xlu0 %2633
      %2635 = vrot.lane.b32.xlu0 %v2464, 28
      %v2636 = vpop.permute.xlu0 %2635
      %2637 = vrot.lane.b32.xlu0 %v2476, 28
      %v2638 = vpop.permute.xlu0 %2637
      %2639 = vrot.lane.b32.xlu0 %v2488, 28
      %v2640 = vpop.permute.xlu0 %2639
      %2641 = vrot.lane.b32.xlu0 %v2500, 28
      %v2642 = vpop.permute.xlu0 %2641
      %2643 = vrot.lane.b32.xlu0 %v2512, 28
      %v2644 = vpop.permute.xlu0 %2643
      %2645 = vrot.lane.b32.xlu0 %v2524, 28
      %v2646 = vpop.permute.xlu0 %2645
      %2647 = vrot.lane.b32.xlu0 %v2536, 28
      %v2648 = vpop.permute.xlu0 %2647
      %2649 = vrot.lane.b32.xlu0 %v2548, 28
      %v2650 = vpop.permute.xlu0 %2649
      %2651 = vrot.lane.b32.xlu0 %v2560, 28
      %v2652 = vpop.permute.xlu0 %2651
      %2653 = vrot.lane.b32.xlu0 %v2572, 28
      %v2654 = vpop.permute.xlu0 %2653
      %2655 = vrot.lane.b32.xlu0 %v2584, 28
      %v2656 = vpop.permute.xlu0 %2655
      %2657 = vrot.lane.b32.xlu0 %v2596, 28
      %v2658 = vpop.permute.xlu0 %2657
      %2659 = vrot.lane.b32.xlu0 %v2608, 28
      %v2660 = vpop.permute.xlu0 %2659
      %2661 = vrot.lane.b32.xlu0 %v2620, 28
      %v2662 = vpop.permute.xlu0 %2661
      %2663 = vrot.lane.b32.xlu0 %v2632, 28
      %v2664 = vpop.permute.xlu0 %2663
      %v2681 = vunpack.c.l.b16 %v1271
      %v2682 = vunpack.c.l.b16 %v1272
      %v2683 = vunpack.c.l.b16 %v1273
      %v2684 = vunpack.c.l.b16 %v1274
      %v2685 = vunpack.c.l.b16 %v1275
      %v2686 = vunpack.c.l.b16 %v1276
      %v2687 = vunpack.c.l.b16 %v1277
      %v2688 = vunpack.c.l.b16 %v1278
      %v2689 = vunpack.c.l.b16 %v1279
      %v2690 = vunpack.c.l.b16 %v1280
      %v2691 = vunpack.c.l.b16 %v1281
      %v2692 = vunpack.c.l.b16 %v1282
      %v2693 = vunpack.c.l.b16 %v1283
      %v2694 = vunpack.c.l.b16 %v1284
      %v2695 = vunpack.c.l.b16 %v1285
      %v2696 = vunpack.c.l.b16 %v1286
      %v2697 = vpack.c.b16 %v2314, %v2681
      %v2698 = vpack.c.b16 %v2316, %v2682
      %v2699 = vpack.c.b16 %v2318, %v2683
      %v2700 = vpack.c.b16 %v2320, %v2684
      %v2701 = vpack.c.b16 %v2322, %v2685
      %v2702 = vpack.c.b16 %v2324, %v2686
      %v2703 = vpack.c.b16 %v2326, %v2687
      %v2704 = vpack.c.b16 %v2328, %v2688
      %v2705 = vpack.c.b16 %v2330, %v2689
      %v2706 = vpack.c.b16 %v2332, %v2690
      %v2707 = vpack.c.b16 %v2334, %v2691
      %v2708 = vpack.c.b16 %v2336, %v2692
      %v2709 = vpack.c.b16 %v2338, %v2693
      %v2710 = vpack.c.b16 %v2340, %v2694
      %v2711 = vpack.c.b16 %v2342, %v2695
      %v2712 = vpack.c.b16 %v2344, %v2696
      %v2713 = vrot.slane %v2697, 1
      %v2714 = vrot.slane %v2425, 1
      %v2715 = vsel %vm1688, %v2713, %v2714
      %v2716 = vrot.slane %v2698, 1
      %v2717 = vrot.slane %v2426, 1
      %v2718 = vsel %vm1688, %v2716, %v2717
      %v2719 = vrot.slane %v2699, 1
      %v2720 = vrot.slane %v2427, 1
      %v2721 = vsel %vm1688, %v2719, %v2720
      %v2722 = vrot.slane %v2700, 1
      %v2723 = vrot.slane %v2428, 1
      %v2724 = vsel %vm1688, %v2722, %v2723
      %v2725 = vrot.slane %v2701, 1
      %v2726 = vrot.slane %v2429, 1
      %v2727 = vsel %vm1688, %v2725, %v2726
      %v2728 = vrot.slane %v2702, 1
      %v2729 = vrot.slane %v2430, 1
      %v2730 = vsel %vm1688, %v2728, %v2729
      %v2731 = vrot.slane %v2703, 1
      %v2732 = vrot.slane %v2431, 1
      %v2733 = vsel %vm1688, %v2731, %v2732
      %v2734 = vrot.slane %v2704, 1
      %v2735 = vrot.slane %v2432, 1
      %v2736 = vsel %vm1688, %v2734, %v2735
      %v2737 = vrot.slane %v2705, 1
      %v2738 = vrot.slane %v2433, 1
      %v2739 = vsel %vm1688, %v2737, %v2738
      %v2740 = vrot.slane %v2706, 1
      %v2741 = vrot.slane %v2434, 1
      %v2742 = vsel %vm1688, %v2740, %v2741
      %v2743 = vrot.slane %v2707, 1
      %v2744 = vrot.slane %v2435, 1
      %v2745 = vsel %vm1688, %v2743, %v2744
      %v2746 = vrot.slane %v2708, 1
      %v2747 = vrot.slane %v2436, 1
      %v2748 = vsel %vm1688, %v2746, %v2747
      %v2749 = vrot.slane %v2709, 1
      %v2750 = vrot.slane %v2437, 1
      %v2751 = vsel %vm1688, %v2749, %v2750
      %v2752 = vrot.slane %v2710, 1
      %v2753 = vrot.slane %v2438, 1
      %v2754 = vsel %vm1688, %v2752, %v2753
      %v2755 = vrot.slane %v2711, 1
      %v2756 = vrot.slane %v2439, 1
      %v2757 = vsel %vm1688, %v2755, %v2756
      %v2758 = vrot.slane %v2712, 1
      %v2759 = vrot.slane %v2440, 1
      %v2760 = vsel %vm1688, %v2758, %v2759
      %2761 = vrot.lane.b32.xlu0 %v2715, 32
      %v2762 = vpop.permute.xlu0 %2761
      %2763 = vrot.lane.b32.xlu0 %v2718, 32
      %v2764 = vpop.permute.xlu0 %2763
      %2765 = vrot.lane.b32.xlu0 %v2721, 32
      %v2766 = vpop.permute.xlu0 %2765
      %2767 = vrot.lane.b32.xlu0 %v2724, 32
      %v2768 = vpop.permute.xlu0 %2767
      %2769 = vrot.lane.b32.xlu0 %v2727, 32
      %v2770 = vpop.permute.xlu0 %2769
      %2771 = vrot.lane.b32.xlu0 %v2730, 32
      %v2772 = vpop.permute.xlu0 %2771
      %2773 = vrot.lane.b32.xlu0 %v2733, 32
      %v2774 = vpop.permute.xlu0 %2773
      %2775 = vrot.lane.b32.xlu0 %v2736, 32
      %v2776 = vpop.permute.xlu0 %2775
      %2777 = vrot.lane.b32.xlu0 %v2739, 32
      %v2778 = vpop.permute.xlu0 %2777
      %2779 = vrot.lane.b32.xlu0 %v2742, 32
      %v2780 = vpop.permute.xlu0 %2779
      %2781 = vrot.lane.b32.xlu0 %v2745, 32
      %v2782 = vpop.permute.xlu0 %2781
      %2783 = vrot.lane.b32.xlu0 %v2748, 32
      %v2784 = vpop.permute.xlu0 %2783
      %2785 = vrot.lane.b32.xlu0 %v2751, 32
      %v2786 = vpop.permute.xlu0 %2785
      %2787 = vrot.lane.b32.xlu0 %v2754, 32
      %v2788 = vpop.permute.xlu0 %2787
      %2789 = vrot.lane.b32.xlu0 %v2757, 32
      %v2790 = vpop.permute.xlu0 %2789
      %2791 = vrot.lane.b32.xlu0 %v2760, 32
      %v2792 = vpop.permute.xlu0 %2791
      %vm2793 = vcmask 31744
      %v2795 = vsel %vm2793, %v1351, %v1609
      %v2797 = vsel %vm2793, %v1352, %v1611
      %v2799 = vsel %vm2793, %v1353, %v1613
      %v2801 = vsel %vm2793, %v1354, %v1615
      %v2803 = vsel %vm2793, %v1355, %v1617
      %v2805 = vsel %vm2793, %v1356, %v1619
      %v2807 = vsel %vm2793, %v1357, %v1621
      %v2809 = vsel %vm2793, %v1358, %v1623
      %v2811 = vsel %vm2793, %v1359, %v1625
      %v2813 = vsel %vm2793, %v1360, %v1627
      %v2815 = vsel %vm2793, %v1361, %v1629
      %v2817 = vsel %vm2793, %v1362, %v1631
      %v2819 = vsel %vm2793, %v1363, %v1633
      %v2821 = vsel %vm2793, %v1364, %v1635
      %v2823 = vsel %vm2793, %v1365, %v1637
      %v2825 = vsel %vm2793, %v1366, %v1639
      %vm2826 = vcmask 64512
      %v2828 = vsel %vm2826, %v2795, %v1738
      %v2830 = vsel %vm2826, %v2797, %v1740
      %v2832 = vsel %vm2826, %v2799, %v1742
      %v2834 = vsel %vm2826, %v2801, %v1744
      %v2836 = vsel %vm2826, %v2803, %v1746
      %v2838 = vsel %vm2826, %v2805, %v1748
      %v2840 = vsel %vm2826, %v2807, %v1750
      %v2842 = vsel %vm2826, %v2809, %v1752
      %v2844 = vsel %vm2826, %v2811, %v1754
      %v2846 = vsel %vm2826, %v2813, %v1756
      %v2848 = vsel %vm2826, %v2815, %v1758
      %v2850 = vsel %vm2826, %v2817, %v1760
      %v2852 = vsel %vm2826, %v2819, %v1762
      %v2854 = vsel %vm2826, %v2821, %v1764
      %v2856 = vsel %vm2826, %v2823, %v1766
      %v2858 = vsel %vm2826, %v2825, %v1768
      %vm2859 = vcmask 97280
      %v2861 = vsel %vm2859, %v2828, %v1850
      %v2863 = vsel %vm2859, %v2830, %v1852
      %v2865 = vsel %vm2859, %v2832, %v1854
      %v2867 = vsel %vm2859, %v2834, %v1856
      %v2869 = vsel %vm2859, %v2836, %v1858
      %v2871 = vsel %vm2859, %v2838, %v1860
      %v2873 = vsel %vm2859, %v2840, %v1862
      %v2875 = vsel %vm2859, %v2842, %v1864
      %v2877 = vsel %vm2859, %v2844, %v1866
      %v2879 = vsel %vm2859, %v2846, %v1868
      %v2881 = vsel %vm2859, %v2848, %v1870
      %v2883 = vsel %vm2859, %v2850, %v1872
      %v2885 = vsel %vm2859, %v2852, %v1874
      %v2887 = vsel %vm2859, %v2854, %v1876
      %v2889 = vsel %vm2859, %v2856, %v1878
      %v2891 = vsel %vm2859, %v2858, %v1880
      %vm2892 = vcmask 130048
      %v2894 = vsel %vm2892, %v2861, %v2122
      %v2896 = vsel %vm2892, %v2863, %v2124
      %v2898 = vsel %vm2892, %v2865, %v2126
      %v2900 = vsel %vm2892, %v2867, %v2128
      %v2902 = vsel %vm2892, %v2869, %v2130
      %v2904 = vsel %vm2892, %v2871, %v2132
      %v2906 = vsel %vm2892, %v2873, %v2134
      %v2908 = vsel %vm2892, %v2875, %v2136
      %v2910 = vsel %vm2892, %v2877, %v2138
      %v2912 = vsel %vm2892, %v2879, %v2140
      %v2914 = vsel %vm2892, %v2881, %v2142
      %v2916 = vsel %vm2892, %v2883, %v2144
      %v2918 = vsel %vm2892, %v2885, %v2146
      %v2920 = vsel %vm2892, %v2887, %v2148
      %v2922 = vsel %vm2892, %v2889, %v2150
      %v2924 = vsel %vm2892, %v2891, %v2152
      %vm2925 = vcmask 162816
      %v2927 = vsel %vm2925, %v2894, %v2250
      %v2929 = vsel %vm2925, %v2896, %v2252
      %v2931 = vsel %vm2925, %v2898, %v2254
      %v2933 = vsel %vm2925, %v2900, %v2256
      %v2935 = vsel %vm2925, %v2902, %v2258
      %v2937 = vsel %vm2925, %v2904, %v2260
      %v2939 = vsel %vm2925, %v2906, %v2262
      %v2941 = vsel %vm2925, %v2908, %v2264
      %v2943 = vsel %vm2925, %v2910, %v2266
      %v2945 = vsel %vm2925, %v2912, %v2268
      %v2947 = vsel %vm2925, %v2914, %v2270
      %v2949 = vsel %vm2925, %v2916, %v2272
      %v2951 = vsel %vm2925, %v2918, %v2274
      %v2953 = vsel %vm2925, %v2920, %v2276
      %v2955 = vsel %vm2925, %v2922, %v2278
      %v2957 = vsel %vm2925, %v2924, %v2280
      %vm2958 = vcmask 195584
      %v2960 = vsel %vm2958, %v2927, %v2362
      %v2962 = vsel %vm2958, %v2929, %v2364
      %v2964 = vsel %vm2958, %v2931, %v2366
      %v2966 = vsel %vm2958, %v2933, %v2368
      %v2968 = vsel %vm2958, %v2935, %v2370
      %v2970 = vsel %vm2958, %v2937, %v2372
      %v2972 = vsel %vm2958, %v2939, %v2374
      %v2974 = vsel %vm2958, %v2941, %v2376
      %v2976 = vsel %vm2958, %v2943, %v2378
      %v2978 = vsel %vm2958, %v2945, %v2380
      %v2980 = vsel %vm2958, %v2947, %v2382
      %v2982 = vsel %vm2958, %v2949, %v2384
      %v2984 = vsel %vm2958, %v2951, %v2386
      %v2986 = vsel %vm2958, %v2953, %v2388
      %v2988 = vsel %vm2958, %v2955, %v2390
      %v2990 = vsel %vm2958, %v2957, %v2392
      %vm2991 = vcmask 228352
      %v2993 = vsel %vm2991, %v2960, %v2634
      %v2995 = vsel %vm2991, %v2962, %v2636
      %v2997 = vsel %vm2991, %v2964, %v2638
      %v2999 = vsel %vm2991, %v2966, %v2640
      %v3001 = vsel %vm2991, %v2968, %v2642
      %v3003 = vsel %vm2991, %v2970, %v2644
      %v3005 = vsel %vm2991, %v2972, %v2646
      %v3007 = vsel %vm2991, %v2974, %v2648
      %v3009 = vsel %vm2991, %v2976, %v2650
      %v3011 = vsel %vm2991, %v2978, %v2652
      %v3013 = vsel %vm2991, %v2980, %v2654
      %v3015 = vsel %vm2991, %v2982, %v2656
      %v3017 = vsel %vm2991, %v2984, %v2658
      %v3019 = vsel %vm2991, %v2986, %v2660
      %v3021 = vsel %vm2991, %v2988, %v2662
      %v3023 = vsel %vm2991, %v2990, %v2664
      %vm3024 = vcmask 261120
      %v3026 = vsel %vm3024, %v2993, %v2762
      %v3028 = vsel %vm3024, %v2995, %v2764
      %v3030 = vsel %vm3024, %v2997, %v2766
      %v3032 = vsel %vm3024, %v2999, %v2768
      %v3034 = vsel %vm3024, %v3001, %v2770
      %v3036 = vsel %vm3024, %v3003, %v2772
      %v3038 = vsel %vm3024, %v3005, %v2774
      %v3040 = vsel %vm3024, %v3007, %v2776
      %v3042 = vsel %vm3024, %v3009, %v2778
      %v3044 = vsel %vm3024, %v3011, %v2780
      %v3046 = vsel %vm3024, %v3013, %v2782
      %v3048 = vsel %vm3024, %v3015, %v2784
      %v3050 = vsel %vm3024, %v3017, %v2786
      %v3052 = vsel %vm3024, %v3019, %v2788
      %v3054 = vsel %vm3024, %v3021, %v2790
      %v3056 = vsel %vm3024, %v3023, %v2792
      %v3057 = vld [vmem:[%s3] sm:$0xf]
      %v3058 = vld [vmem:[%s3 + $0x4] sm:$0xf]
      %v3059 = vld [vmem:[%s3 + $0x8] sm:$0xf]
      %v3060 = vld [vmem:[%s3 + $0xc] sm:$0xf]
      %v3061 = vld [vmem:[%s3 + $0x10] sm:$0x3]
      %v3067 = vunpack.c.l.b16 %v3057
      %v3068 = vunpack.c.l.b16 %v3058
      %v3069 = vunpack.c.l.b16 %v3059
      %v3070 = vunpack.c.l.b16 %v3060
      %v3071 = vunpack.c.l.b16 %v3061
      %v3072 = vpack.c.b16 %v3068, %v3067
      %v3073 = vpack.c.b16 %v3070, %v3069
      %v3074 = vpack.c.b16 %v3071, %v3071
      %vm3077 = vcmask 293888
      %v3078 = vsel %vm3077, %v3026, 0
      %v3080 = vsel %vm3077, %v3028, 0
      %v3082 = vsel %vm3077, %v3030, 0
      %v3084 = vsel %vm3077, %v3032, 0
      %v3086 = vsel %vm3077, %v3034, 0
      %v3088 = vsel %vm3077, %v3036, 0
      %v3090 = vsel %vm3077, %v3038, 0
      %v3092 = vsel %vm3077, %v3040, 0
      %v3094 = vsel %vm3077, %v3042, 0
      %v3096 = vsel %vm3077, %v3044, 0
      %v3098 = vsel %vm3077, %v3046, 0
      %v3100 = vsel %vm3077, %v3048, 0
      %v3102 = vsel %vm3077, %v3050, 0
      %v3104 = vsel %vm3077, %v3052, 0
      %v3106 = vsel %vm3077, %v3054, 0
      %v3108 = vsel %vm3077, %v3056, 0
      %vm3110 = vcmask 1041408
      %v3112 = vsel %vm3110, %v3074, 0
      %3114 = vmatprep.subr.bf16.mxu0 0
      %3115 = vmatpush1.bf16.msra.mxu0 %v3072
      %3116 = vmatprep.subr.bf16.mxu0 0
      %3117 = vmatpush1.bf16.msra.mxu0 %v3073
      %3118 = vmatprep.subr.bf16.mxu0 0
      %3119 = vmatpush1.bf16.msra.mxu0 %v3112
      %3120 = vmatprep.subr.bf16.mxu0 0
      %3121 = vmatpush1.bf16.msra.mxu0 0
      %3122 = vmatprep.subr.bf16.mxu0 0
      %3123 = vmatpush1.bf16.msra.mxu0 0
      %3124 = vmatprep.subr.bf16.mxu0 0
      %3125 = vmatpush1.bf16.msra.mxu0 0
      %3126 = vmatprep.subr.bf16.mxu0 0
      %3127 = vmatpush1.bf16.msra.mxu0 0
      %3128 = vmatprep.subr.bf16.mxu0 0
      %3129 = vmatpush1.bf16.msra.mxu0 0
      %3130 = vmatprep.subr.bf16.mxu0 0
      %3131 = vmatpush1.bf16.msra.mxu0 0
      %3132 = vmatprep.subr.bf16.mxu0 0
      %3133 = vmatpush1.bf16.msra.mxu0 0
      %3134 = vmatprep.subr.bf16.mxu0 0
      %3135 = vmatpush1.bf16.msra.mxu0 0
      %3136 = vmatprep.subr.bf16.mxu0 0
      %3137 = vmatpush1.bf16.msra.mxu0 0
      %3138 = vmatprep.subr.bf16.mxu0 0
      %3139 = vmatpush1.bf16.msra.mxu0 0
      %3140 = vmatprep.subr.bf16.mxu0 0
      %3141 = vmatpush1.bf16.msra.mxu0 0
      %3142 = vmatprep.subr.bf16.mxu0 0
      %3143 = vmatpush1.bf16.msra.mxu0 0
      %3144 = vmatprep.subr.bf16.mxu0 0
      %3145 = vmatpush1.bf16.msra.mxu0 0
      %3146 = vmatprep.mubr.bf16.mxu0 0
      %3147 = vmatmul.mubr.bf16.gmra.mrb[0].mxu0 %v3078
      %v3148 = vpop.f32.mrb[0].mxu0
      %v3149 = vadd.f32 0.0, %v3148
      %v3150 = vpop.f32.mrb[0].mxu0
      %v3151 = vpop.f32.mrb[0].mxu0
      %v3152 = vadd.f32 0.0, %v3151
      %v3153 = vpop.f32.mrb[0].mxu0
      %3154 = vmatprep.mubr.bf16.mxu0 0
      %3155 = vmatmul.mubr.bf16.gmra.mrb[0].mxu0 %v3080
      %v3156 = vpop.f32.mrb[0].mxu0
      %v3157 = vadd.f32 0.0, %v3156
      %v3158 = vpop.f32.mrb[0].mxu0
      %v3159 = vpop.f32.mrb[0].mxu0
      %v3160 = vadd.f32 0.0, %v3159
      %v3161 = vpop.f32.mrb[0].mxu0
      %3162 = vmatprep.mubr.bf16.mxu0 0
      %3163 = vmatmul.mubr.bf16.gmra.mrb[0].mxu0 %v3082
      %v3164 = vpop.f32.mrb[0].mxu0
      %v3165 = vadd.f32 0.0, %v3164
      %v3166 = vpop.f32.mrb[0].mxu0
      %v3167 = vpop.f32.mrb[0].mxu0
      %v3168 = vadd.f32 0.0, %v3167
      %v3169 = vpop.f32.mrb[0].mxu0
      %3170 = vmatprep.mubr.bf16.mxu0 0
      %3171 = vmatmul.mubr.bf16.gmra.mrb[0].mxu0 %v3084
      %v3172 = vpop.f32.mrb[0].mxu0
      %v3173 = vadd.f32 0.0, %v3172
      %v3174 = vpop.f32.mrb[0].mxu0
      %v3175 = vpop.f32.mrb[0].mxu0
      %v3176 = vadd.f32 0.0, %v3175
      %v3177 = vpop.f32.mrb[0].mxu0
      %3178 = vmatprep.mubr.bf16.mxu0 0
      %3179 = vmatmul.mubr.bf16.gmra.mrb[0].mxu0 %v3086
      %v3180 = vpop.f32.mrb[0].mxu0
      %v3181 = vadd.f32 0.0, %v3180
      %v3182 = vpop.f32.mrb[0].mxu0
      %v3183 = vpop.f32.mrb[0].mxu0
      %v3184 = vadd.f32 0.0, %v3183
      %v3185 = vpop.f32.mrb[0].mxu0
      %3186 = vmatprep.mubr.bf16.mxu0 0
      %3187 = vmatmul.mubr.bf16.gmra.mrb[0].mxu0 %v3088
      %v3188 = vpop.f32.mrb[0].mxu0
      %v3189 = vadd.f32 0.0, %v3188
      %v3190 = vpop.f32.mrb[0].mxu0
      %v3191 = vpop.f32.mrb[0].mxu0
      %v3192 = vadd.f32 0.0, %v3191
      %v3193 = vpop.f32.mrb[0].mxu0
      %3194 = vmatprep.mubr.bf16.mxu0 0
      %3195 = vmatmul.mubr.bf16.gmra.mrb[0].mxu0 %v3090
      %v3196 = vpop.f32.mrb[0].mxu0
      %v3197 = vadd.f32 0.0, %v3196
      %v3198 = vpop.f32.mrb[0].mxu0
      %v3199 = vpop.f32.mrb[0].mxu0
      %v3200 = vadd.f32 0.0, %v3199
      %v3201 = vpop.f32.mrb[0].mxu0
      %3202 = vmatprep.mubr.bf16.mxu0 0
      %3203 = vmatmul.mubr.bf16.gmra.mrb[0].mxu0 %v3092
      %v3204 = vpop.f32.mrb[0].mxu0
      %v3205 = vadd.f32 0.0, %v3204
      %v3206 = vpop.f32.mrb[0].mxu0
      %v3207 = vpop.f32.mrb[0].mxu0
      %v3208 = vadd.f32 0.0, %v3207
      %v3209 = vpop.f32.mrb[0].mxu0
      %3210 = vmatprep.mubr.bf16.mxu0 0
      %3211 = vmatmul.mubr.bf16.gmra.mrb[0].mxu0 %v3094
      %v3212 = vpop.f32.mrb[0].mxu0
      %v3213 = vadd.f32 0.0, %v3212
      %v3214 = vpop.f32.mrb[0].mxu0
      %v3215 = vpop.f32.mrb[0].mxu0
      %v3216 = vadd.f32 0.0, %v3215
      %v3217 = vpop.f32.mrb[0].mxu0
      %3218 = vmatprep.mubr.bf16.mxu0 0
      %3219 = vmatmul.mubr.bf16.gmra.mrb[0].mxu0 %v3096
      %v3220 = vpop.f32.mrb[0].mxu0
      %v3221 = vadd.f32 0.0, %v3220
      %v3222 = vpop.f32.mrb[0].mxu0
      %v3223 = vpop.f32.mrb[0].mxu0
      %v3224 = vadd.f32 0.0, %v3223
      %v3225 = vpop.f32.mrb[0].mxu0
      %3226 = vmatprep.mubr.bf16.mxu0 0
      %3227 = vmatmul.mubr.bf16.gmra.mrb[0].mxu0 %v3098
      %v3228 = vpop.f32.mrb[0].mxu0
      %v3229 = vadd.f32 0.0, %v3228
      %v3230 = vpop.f32.mrb[0].mxu0
      %v3231 = vpop.f32.mrb[0].mxu0
      %v3232 = vadd.f32 0.0, %v3231
      %v3233 = vpop.f32.mrb[0].mxu0
      %3234 = vmatprep.mubr.bf16.mxu0 0
      %3235 = vmatmul.mubr.bf16.gmra.mrb[0].mxu0 %v3100
      %v3236 = vpop.f32.mrb[0].mxu0
      %v3237 = vadd.f32 0.0, %v3236
      %v3238 = vpop.f32.mrb[0].mxu0
      %v3239 = vpop.f32.mrb[0].mxu0
      %v3240 = vadd.f32 0.0, %v3239
      %v3241 = vpop.f32.mrb[0].mxu0
      %3242 = vmatprep.mubr.bf16.mxu0 0
      %3243 = vmatmul.mubr.bf16.gmra.mrb[0].mxu0 %v3102
      %v3244 = vpop.f32.mrb[0].mxu0
      %v3245 = vadd.f32 0.0, %v3244
      %v3246 = vpop.f32.mrb[0].mxu0
      %v3247 = vpop.f32.mrb[0].mxu0
      %v3248 = vadd.f32 0.0, %v3247
      %v3249 = vpop.f32.mrb[0].mxu0
      %3250 = vmatprep.mubr.bf16.mxu0 0
      %3251 = vmatmul.mubr.bf16.gmra.mrb[0].mxu0 %v3104
      %v3252 = vpop.f32.mrb[0].mxu0
      %v3253 = vadd.f32 0.0, %v3252
      %v3254 = vpop.f32.mrb[0].mxu0
      %v3255 = vpop.f32.mrb[0].mxu0
      %v3256 = vadd.f32 0.0, %v3255
      %v3257 = vpop.f32.mrb[0].mxu0
      %3258 = vmatprep.mubr.bf16.mxu0 0
      %3259 = vmatmul.mubr.bf16.gmra.mrb[0].mxu0 %v3106
      %v3260 = vpop.f32.mrb[0].mxu0
      %v3261 = vadd.f32 0.0, %v3260
      %v3262 = vpop.f32.mrb[0].mxu0
      %v3263 = vpop.f32.mrb[0].mxu0
      %v3264 = vadd.f32 0.0, %v3263
      %v3265 = vpop.f32.mrb[0].mxu0
      %3266 = vmatprep.mubr.bf16.mxu0 0
      %3267 = vmatmul.mubr.bf16.gmra.mrb[0].mxu0 %v3108
      %v3268 = vpop.f32.mrb[0].mxu0
      %v3269 = vadd.f32 0.0, %v3268
      %v3270 = vpop.f32.mrb[0].mxu0
      %v3271 = vpop.f32.mrb[0].mxu0
      %v3272 = vadd.f32 0.0, %v3271
      %v3273 = vpop.f32.mrb[0].mxu0
      %3274 = vdwg.mxu0
      %v3275 = vpack.c.bf16 %v3152, %v3149
      %v3276 = vpack.c.bf16 %v3160, %v3157
      %v3277 = vpack.c.bf16 %v3168, %v3165
      %v3278 = vpack.c.bf16 %v3176, %v3173
      %v3279 = vpack.c.bf16 %v3184, %v3181
      %v3280 = vpack.c.bf16 %v3192, %v3189
      %v3281 = vpack.c.bf16 %v3200, %v3197
      %v3282 = vpack.c.bf16 %v3208, %v3205
      %v3283 = vpack.c.bf16 %v3216, %v3213
      %v3284 = vpack.c.bf16 %v3224, %v3221
      %v3285 = vpack.c.bf16 %v3232, %v3229
      %v3286 = vpack.c.bf16 %v3240, %v3237
      %v3287 = vpack.c.bf16 %v3248, %v3245
      %v3288 = vpack.c.bf16 %v3256, %v3253
      %v3289 = vpack.c.bf16 %v3264, %v3261
      %v3290 = vpack.c.bf16 %v3272, %v3269
      %v3307 = vunpack.c.l.b16 %v3275
      %v3308 = vunpack.c.h.b16 %v3275
      %v3309 = vunpack.c.l.b16 %v3276
      %v3310 = vunpack.c.h.b16 %v3276
      %v3311 = vunpack.c.l.b16 %v3277
      %v3312 = vunpack.c.h.b16 %v3277
      %v3313 = vunpack.c.l.b16 %v3278
      %v3314 = vunpack.c.h.b16 %v3278
      %v3315 = vunpack.c.l.b16 %v3279
      %v3316 = vunpack.c.h.b16 %v3279
      %v3317 = vunpack.c.l.b16 %v3280
      %v3318 = vunpack.c.h.b16 %v3280
      %v3319 = vunpack.c.l.b16 %v3281
      %v3320 = vunpack.c.h.b16 %v3281
      %v3321 = vunpack.c.l.b16 %v3282
      %v3322 = vunpack.c.h.b16 %v3282
      %v3323 = vunpack.c.l.b16 %v3283
      %v3324 = vunpack.c.h.b16 %v3283
      %v3325 = vunpack.c.l.b16 %v3284
      %v3326 = vunpack.c.h.b16 %v3284
      %v3327 = vunpack.c.l.b16 %v3285
      %v3328 = vunpack.c.h.b16 %v3285
      %v3329 = vunpack.c.l.b16 %v3286
      %v3330 = vunpack.c.h.b16 %v3286
      %v3331 = vunpack.c.l.b16 %v3287
      %v3332 = vunpack.c.h.b16 %v3287
      %v3333 = vunpack.c.l.b16 %v3288
      %v3334 = vunpack.c.h.b16 %v3288
      %v3335 = vunpack.c.l.b16 %v3289
      %v3336 = vunpack.c.h.b16 %v3289
      %v3337 = vunpack.c.l.b16 %v3290
      %v3338 = vunpack.c.h.b16 %v3290
      %v3339 = vpack.c.b16 %v3307, %v3307
      %v3340 = vpack.c.b16 %v3308, %v3308
      %v3341 = vpack.c.b16 %v3309, %v3309
      %v3342 = vpack.c.b16 %v3310, %v3310
      %v3343 = vpack.c.b16 %v3311, %v3311
      %v3344 = vpack.c.b16 %v3312, %v3312
      %v3345 = vpack.c.b16 %v3313, %v3313
      %v3346 = vpack.c.b16 %v3314, %v3314
      %v3347 = vpack.c.b16 %v3315, %v3315
      %v3348 = vpack.c.b16 %v3316, %v3316
      %v3349 = vpack.c.b16 %v3317, %v3317
      %v3350 = vpack.c.b16 %v3318, %v3318
      %v3351 = vpack.c.b16 %v3319, %v3319
      %v3352 = vpack.c.b16 %v3320, %v3320
      %v3353 = vpack.c.b16 %v3321, %v3321
      %v3354 = vpack.c.b16 %v3322, %v3322
      %v3355 = vpack.c.b16 %v3323, %v3323
      %v3356 = vpack.c.b16 %v3324, %v3324
      %v3357 = vpack.c.b16 %v3325, %v3325
      %v3358 = vpack.c.b16 %v3326, %v3326
      %v3359 = vpack.c.b16 %v3327, %v3327
      %v3360 = vpack.c.b16 %v3328, %v3328
      %v3361 = vpack.c.b16 %v3329, %v3329
      %v3362 = vpack.c.b16 %v3330, %v3330
      %v3363 = vpack.c.b16 %v3331, %v3331
      %v3364 = vpack.c.b16 %v3332, %v3332
      %v3365 = vpack.c.b16 %v3333, %v3333
      %v3366 = vpack.c.b16 %v3334, %v3334
      %v3367 = vpack.c.b16 %v3335, %v3335
      %v3368 = vpack.c.b16 %v3336, %v3336
      %v3369 = vpack.c.b16 %v3337, %v3337
      %v3370 = vpack.c.b16 %v3338, %v3338
      %vm3403 = vcmask 257024
      %3404 = vst.msk [vmem:[%s430] sm:$0xf] %vm3403, %v3339
      %3405 = vst.msk [vmem:[%s430 + $0x4] sm:$0xf] %vm3403, %v3340
      %3406 = vst.msk [vmem:[%s430 + $0x8] sm:$0xf] %vm3403, %v3341
      %3407 = vst.msk [vmem:[%s430 + $0xc] sm:$0xf] %vm3403, %v3342
      %3408 = vst.msk [vmem:[%s430 + $0x10] sm:$0xf] %vm3403, %v3343
      %3409 = vst.msk [vmem:[%s430 + $0x14] sm:$0xf] %vm3403, %v3344
      %3410 = vst.msk [vmem:[%s430 + $0x18] sm:$0xf] %vm3403, %v3345
      %3411 = vst.msk [vmem:[%s430 + $0x1c] sm:$0xf] %vm3403, %v3346
      %3412 = vst.msk [vmem:[%s430 + $0x20] sm:$0xf] %vm3403, %v3347
      %3413 = vst.msk [vmem:[%s430 + $0x24] sm:$0xf] %vm3403, %v3348
      %3414 = vst.msk [vmem:[%s430 + $0x28] sm:$0xf] %vm3403, %v3349
      %3415 = vst.msk [vmem:[%s430 + $0x2c] sm:$0xf] %vm3403, %v3350
      %3416 = vst.msk [vmem:[%s430 + $0x30] sm:$0xf] %vm3403, %v3351
      %3417 = vst.msk [vmem:[%s430 + $0x34] sm:$0xf] %vm3403, %v3352
      %3418 = vst.msk [vmem:[%s430 + $0x38] sm:$0xf] %vm3403, %v3353
      %3419 = vst.msk [vmem:[%s430 + $0x3c] sm:$0xf] %vm3403, %v3354
      %3420 = vst.msk [vmem:[%s430 + $0x40] sm:$0xf] %vm3403, %v3355
      %3421 = vst.msk [vmem:[%s430 + $0x44] sm:$0xf] %vm3403, %v3356
      %3422 = vst.msk [vmem:[%s430 + $0x48] sm:$0xf] %vm3403, %v3357
      %3423 = vst.msk [vmem:[%s430 + $0x4c] sm:$0xf] %vm3403, %v3358
      %3424 = vst.msk [vmem:[%s430 + $0x50] sm:$0xf] %vm3403, %v3359
      %3425 = vst.msk [vmem:[%s430 + $0x54] sm:$0xf] %vm3403, %v3360
      %3426 = vst.msk [vmem:[%s430 + $0x58] sm:$0xf] %vm3403, %v3361
      %3427 = vst.msk [vmem:[%s430 + $0x5c] sm:$0xf] %vm3403, %v3362
      %3428 = vst.msk [vmem:[%s430 + $0x60] sm:$0xf] %vm3403, %v3363
      %3429 = vst.msk [vmem:[%s430 + $0x64] sm:$0xf] %vm3403, %v3364
      %3430 = vst.msk [vmem:[%s430 + $0x68] sm:$0xf] %vm3403, %v3365
      %3431 = vst.msk [vmem:[%s430 + $0x6c] sm:$0xf] %vm3403, %v3366
      %3432 = vst.msk [vmem:[%s430 + $0x70] sm:$0xf] %vm3403, %v3367
      %3433 = vst.msk [vmem:[%s430 + $0x74] sm:$0xf] %vm3403, %v3368
      %3434 = vst.msk [vmem:[%s430 + $0x78] sm:$0xf] %vm3403, %v3369
      %3435 = vst.msk [vmem:[%s430 + $0x7c] sm:$0xf] %vm3403, %v3370
      %v3436 = vsel %vm3024, %v3149, 0.0
      %v3437 = vsel %vm3024, %v3152, 0.0
      %v3438 = vadd.f32 %v3436, %v3437
      %v3439 = vsel %vm3024, %v3157, 0.0
      %v3440 = vadd.f32 %v3438, %v3439
      %v3441 = vsel %vm3024, %v3160, 0.0
      %v3442 = vadd.f32 %v3440, %v3441
      %v3443 = vsel %vm3024, %v3165, 0.0
      %v3444 = vadd.f32 %v3442, %v3443
      %v3445 = vsel %vm3024, %v3168, 0.0
      %v3446 = vadd.f32 %v3444, %v3445
      %v3447 = vsel %vm3024, %v3173, 0.0
      %v3448 = vadd.f32 %v3446, %v3447
      %v3449 = vsel %vm3024, %v3176, 0.0
      %v3450 = vadd.f32 %v3448, %v3449
      %v3451 = vsel %vm3024, %v3181, 0.0
      %v3452 = vadd.f32 %v3450, %v3451
      %v3453 = vsel %vm3024, %v3184, 0.0
      %v3454 = vadd.f32 %v3452, %v3453
      %v3455 = vsel %vm3024, %v3189, 0.0
      %v3456 = vadd.f32 %v3454, %v3455
      %v3457 = vsel %vm3024, %v3192, 0.0
      %v3458 = vadd.f32 %v3456, %v3457
      %v3459 = vsel %vm3024, %v3197, 0.0
      %v3460 = vadd.f32 %v3458, %v3459
      %v3461 = vsel %vm3024, %v3200, 0.0
      %v3462 = vadd.f32 %v3460, %v3461
      %v3463 = vsel %vm3024, %v3205, 0.0
      %v3464 = vadd.f32 %v3462, %v3463
      %v3465 = vsel %vm3024, %v3208, 0.0
      %v3466 = vadd.f32 %v3464, %v3465
      %v3467 = vsel %vm3024, %v3213, 0.0
      %v3468 = vadd.f32 %v3466, %v3467
      %v3469 = vsel %vm3024, %v3216, 0.0
      %v3470 = vadd.f32 %v3468, %v3469
      %v3471 = vsel %vm3024, %v3221, 0.0
      %v3472 = vadd.f32 %v3470, %v3471
      %v3473 = vsel %vm3024, %v3224, 0.0
      %v3474 = vadd.f32 %v3472, %v3473
      %v3475 = vsel %vm3024, %v3229, 0.0
      %v3476 = vadd.f32 %v3474, %v3475
      %v3477 = vsel %vm3024, %v3232, 0.0
      %v3478 = vadd.f32 %v3476, %v3477
      %v3479 = vsel %vm3024, %v3237, 0.0
      %v3480 = vadd.f32 %v3478, %v3479
      %v3481 = vsel %vm3024, %v3240, 0.0
      %v3482 = vadd.f32 %v3480, %v3481
      %v3483 = vsel %vm3024, %v3245, 0.0
      %v3484 = vadd.f32 %v3482, %v3483
      %v3485 = vsel %vm3024, %v3248, 0.0
      %v3486 = vadd.f32 %v3484, %v3485
      %v3487 = vsel %vm3024, %v3253, 0.0
      %v3488 = vadd.f32 %v3486, %v3487
      %v3489 = vsel %vm3024, %v3256, 0.0
      %v3490 = vadd.f32 %v3488, %v3489
      %v3491 = vsel %vm3024, %v3261, 0.0
      %v3492 = vadd.f32 %v3490, %v3491
      %v3493 = vsel %vm3024, %v3264, 0.0
      %v3494 = vadd.f32 %v3492, %v3493
      %v3495 = vsel %vm3024, %v3269, 0.0
      %v3496 = vadd.f32 %v3494, %v3495
      %v3497 = vsel %vm3024, %v3272, 0.0
      %v3498 = vadd.f32 %v3496, %v3497
      %v3499 = vrot.slane %v3498, 4
      %v3500 = vadd.f32 %v3498, %v3499
      %v3501 = vrot.slane %v3500, 2
      %v3502 = vadd.f32 %v3500, %v3501
      %v3503 = vrot.slane %v3502, 1
      %v3504 = vadd.f32 %v3502, %v3503
      %vm3505 = vcmask 253952
      %3506 = vst.msk [vmem:[%s438] sm:$0x1] %vm3505, %v3504
      %v3507 = vmul.f32 %v3149, %v3149
      %v3508 = vmul.f32 %v3152, %v3152
      %v3509 = vmul.f32 %v3157, %v3157
      %v3510 = vmul.f32 %v3160, %v3160
      %v3511 = vmul.f32 %v3165, %v3165
      %v3512 = vmul.f32 %v3168, %v3168
      %v3513 = vmul.f32 %v3173, %v3173
      %v3514 = vmul.f32 %v3176, %v3176
      %v3515 = vmul.f32 %v3181, %v3181
      %v3516 = vmul.f32 %v3184, %v3184
      %v3517 = vmul.f32 %v3189, %v3189
      %v3518 = vmul.f32 %v3192, %v3192
      %v3519 = vmul.f32 %v3197, %v3197
      %v3520 = vmul.f32 %v3200, %v3200
      %v3521 = vmul.f32 %v3205, %v3205
      %v3522 = vmul.f32 %v3208, %v3208
      %v3523 = vmul.f32 %v3213, %v3213
      %v3524 = vmul.f32 %v3216, %v3216
      %v3525 = vmul.f32 %v3221, %v3221
      %v3526 = vmul.f32 %v3224, %v3224
      %v3527 = vmul.f32 %v3229, %v3229
      %v3528 = vmul.f32 %v3232, %v3232
      %v3529 = vmul.f32 %v3237, %v3237
      %v3530 = vmul.f32 %v3240, %v3240
      %v3531 = vmul.f32 %v3245, %v3245
      %v3532 = vmul.f32 %v3248, %v3248
      %v3533 = vmul.f32 %v3253, %v3253
      %v3534 = vmul.f32 %v3256, %v3256
      %v3535 = vmul.f32 %v3261, %v3261
      %v3536 = vmul.f32 %v3264, %v3264
      %v3537 = vmul.f32 %v3269, %v3269
      %v3538 = vmul.f32 %v3272, %v3272
      %v3539 = vsel %vm3024, %v3507, 0.0
      %v3540 = vsel %vm3024, %v3508, 0.0
      %v3541 = vadd.f32 %v3539, %v3540
      %v3542 = vsel %vm3024, %v3509, 0.0
      %v3543 = vadd.f32 %v3541, %v3542
      %v3544 = vsel %vm3024, %v3510, 0.0
      %v3545 = vadd.f32 %v3543, %v3544
      %v3546 = vsel %vm3024, %v3511, 0.0
      %v3547 = vadd.f32 %v3545, %v3546
      %v3548 = vsel %vm3024, %v3512, 0.0
      %v3549 = vadd.f32 %v3547, %v3548
      %v3550 = vsel %vm3024, %v3513, 0.0
      %v3551 = vadd.f32 %v3549, %v3550
      %v3552 = vsel %vm3024, %v3514, 0.0
      %v3553 = vadd.f32 %v3551, %v3552
      %v3554 = vsel %vm3024, %v3515, 0.0
      %v3555 = vadd.f32 %v3553, %v3554
      %v3556 = vsel %vm3024, %v3516, 0.0
      %v3557 = vadd.f32 %v3555, %v3556
      %v3558 = vsel %vm3024, %v3517, 0.0
      %v3559 = vadd.f32 %v3557, %v3558
      %v3560 = vsel %vm3024, %v3518, 0.0
      %v3561 = vadd.f32 %v3559, %v3560
      %v3562 = vsel %vm3024, %v3519, 0.0
      %v3563 = vadd.f32 %v3561, %v3562
      %v3564 = vsel %vm3024, %v3520, 0.0
      %v3565 = vadd.f32 %v3563, %v3564
      %v3566 = vsel %vm3024, %v3521, 0.0
      %v3567 = vadd.f32 %v3565, %v3566
      %v3568 = vsel %vm3024, %v3522, 0.0
      %v3569 = vadd.f32 %v3567, %v3568
      %v3570 = vsel %vm3024, %v3523, 0.0
      %v3571 = vadd.f32 %v3569, %v3570
      %v3572 = vsel %vm3024, %v3524, 0.0
      %v3573 = vadd.f32 %v3571, %v3572
      %v3574 = vsel %vm3024, %v3525, 0.0
      %v3575 = vadd.f32 %v3573, %v3574
      %v3576 = vsel %vm3024, %v3526, 0.0
      %v3577 = vadd.f32 %v3575, %v3576
      %v3578 = vsel %vm3024, %v3527, 0.0
      %v3579 = vadd.f32 %v3577, %v3578
      %v3580 = vsel %vm3024, %v3528, 0.0
      %v3581 = vadd.f32 %v3579, %v3580
      %v3582 = vsel %vm3024, %v3529, 0.0
      %v3583 = vadd.f32 %v3581, %v3582
      %v3584 = vsel %vm3024, %v3530, 0.0
      %v3585 = vadd.f32 %v3583, %v3584
      %v3586 = vsel %vm3024, %v3531, 0.0
      %v3587 = vadd.f32 %v3585, %v3586
      %v3588 = vsel %vm3024, %v3532, 0.0
      %v3589 = vadd.f32 %v3587, %v3588
      %v3590 = vsel %vm3024, %v3533, 0.0
      %v3591 = vadd.f32 %v3589, %v3590
      %v3592 = vsel %vm3024, %v3534, 0.0
      %v3593 = vadd.f32 %v3591, %v3592
      %v3594 = vsel %vm3024, %v3535, 0.0
      %v3595 = vadd.f32 %v3593, %v3594
      %v3596 = vsel %vm3024, %v3536, 0.0
      %v3597 = vadd.f32 %v3595, %v3596
      %v3598 = vsel %vm3024, %v3537, 0.0
      %v3599 = vadd.f32 %v3597, %v3598
      %v3600 = vsel %vm3024, %v3538, 0.0
      %v3601 = vadd.f32 %v3599, %v3600
      %v3602 = vrot.slane %v3601, 4
      %v3603 = vadd.f32 %v3601, %v3602
      %v3604 = vrot.slane %v3603, 2
      %v3605 = vadd.f32 %v3603, %v3604
      %v3606 = vrot.slane %v3605, 1
      %v3607 = vadd.f32 %v3605, %v3606
      %3608 = vst.msk [vmem:[%s438 + $0x1] sm:$0x1] %vm3505, %v3607
      %s3609 = smul.u32 16, %s23
      %p3610 = scmp.lt.s32.totalorder %s22, 1
      %s3611 = scalar_select %p3610, %s22, 1
      %p3612 = scmp.lt.s32.totalorder %s3609, 15
      %s3613 = scalar_select %p3612, %s3609, 15
      %s3614 = smul.addr %s3613, 2
      %s3615 = smul.addr %s3611, 32
      %s3616 = sadd.s32 %s3614, %s3615
      %s3617 = smul.addr %s3616, 4
      %s3618 = scalar_lea.vmem %s5, %s3617
      %p3619 = scmp.lt.s32.totalorder %s22, 1
      %s3620 = scalar_select %p3619, %s22, 1
      %p3621 = scmp.lt.s32.totalorder %s23, 0
      %s3622 = scalar_select %p3621, %s23, 0
      %s3623 = sadd.s32 %s3622, %s3620
      %s3624 = smul.addr %s3623, 2
      %s3625 = scalar_lea.vmem %s6, %s3624
      // Predicated region
      $region41: #{double_conv.3} parent=39 // pred_check
        %p3626 = pneg %p192
      $region42: #{double_conv.3} parent=39 // pred_check_branch
        %3628 = sbr.rel (%p3626) target = $region44
      $region43: #{double_conv.3} parent=39 // pred_region
        %s3629 = smul.u32 16, %s23
      $region44: #{double_conv.3} parent=39 // pred_fallthru
        _
      // Predicated region
      $region45: #{double_conv.3} parent=39 // pred_check
        %p3630 = pneg %p220
      $region46: #{double_conv.3} parent=39 // pred_check_branch
        %3632 = sbr.rel (%p3630) target = $region48
      $region47: #{double_conv.3} parent=39 // pred_region
        _
      $region48: #{double_conv.3} parent=39 // pred_fallthru
        _
    $region40: #{double_conv.3} parent=5 // pred_fallthru
      _
    %p3633 = scmp.le.s32.totalorder 2, %s13
    // Predicated region
    $region49: #{double_conv.3} parent=5 // pred_check
      %p3634 = pneg %p3633
    $region50: #{double_conv.3} parent=5 // pred_check_branch
      %3636 = sbr.rel (%p3634) target = $region52
    $region51: #{double_conv.3} parent=5 // pred_region
      %s3637 = ssub.s32 %s13, 2
      // Predicated region
      $region53: #{double_conv.3} parent=51 // pred_check
        %p3638 = pneg %p198
      $region54: #{double_conv.3} parent=51 // pred_check_branch
        %3640 = sbr.rel (%p3638) target = $region56
      $region55: #{double_conv.3} parent=51 // pred_region
        %s3641 = smul.u32 16, %s25
        %p3642 = scmp.lt.s32.totalorder %s24, 1
        %s3643 = scalar_select %p3642, %s24, 1
        %p3644 = scmp.lt.s32.totalorder %s3641, 15
        %s3645 = scalar_select %p3644, %s3641, 15
        %s3646 = smul.addr %s3645, 2
        %s3647 = smul.addr %s3643, 32
        %s3648 = sadd.s32 %s3646, %s3647
        %s3649 = smul.addr %s3648, 4
        %s3650 = scalar_lea.vmem %s5, %s3649
      $region56: #{double_conv.3} parent=51 // pred_fallthru
        _
      // Predicated region
      $region57: #{double_conv.3} parent=51 // pred_check
        %p3651 = pneg %p226
      $region58: #{double_conv.3} parent=51 // pred_check_branch
        %3653 = sbr.rel (%p3651) target = $region60
      $region59: #{double_conv.3} parent=51 // pred_region
        %p3654 = scmp.lt.s32.totalorder %s24, 1
        %s3655 = scalar_select %p3654, %s24, 1
        %p3656 = scmp.lt.s32.totalorder %s25, 0
        %s3657 = scalar_select %p3656, %s25, 0
        %s3658 = sadd.s32 %s3657, %s3655
        %s3659 = smul.addr %s3658, 2
        %s3660 = scalar_lea.vmem %s6, %s3659
      $region60: #{double_conv.3} parent=51 // pred_fallthru
        _
    $region52: #{double_conv.3} parent=5 // pred_fallthru
      _
  $region6: #{double_conv.3} parent=0 // loop_footer
    %s17 = sadd.s32 1, %s13
  $region7: #{double_conv.3} parent=0 // loop_footer_branch
    %12 = sbr.rel target = $region3
  $region8: #{double_conv.3} parent=0 // loop_exit
    _

// kernel: double_conv.4
$region0: #{double_conv.4}
  #allocation0 [shape = 'u32[]', space=smem, size = 0x4, offset = 0x4, fixed_abs, tag = 'smem constant byte address 0x4 - core index']
  #allocation1 [shape = 'u32[144,128]{1,0:T(1,128)}', space=vmem, size = 0x12000, scoped, tag = 'internal scratch']
  #allocation2 [shape = 'bf16[18,18,32]{2,1,0:T(8,128)(2,1)}', space=vmem, size = 0x1b000, scoped, tag = 'scratch operand']
  %s0 = inlined_call_operand.vmem [shape: bf16[2,16,16,32], index: 0, kind: input, shape index: {}, may-alias: {0,1,2}]
  %s1 = inlined_call_operand.vmem [shape: bf16[2,16,16,32], index: 1, kind: input, shape index: {}, may-alias: {0,1,2}]
  %s2 = inlined_call_operand.vmem [shape: bf16[2,16,16,32], index: 2, kind: input, shape index: {}, may-alias: {0,1,2}]
  %s3 = inlined_call_operand.vmem [shape: bf16[288,32], index: 3, kind: input, shape index: {}]
  %s4 = inlined_call_operand.vmem [shape: f32[2,32], index: 4, kind: input, shape index: {}]
  %s5 = inlined_call_operand.vmem [shape: f32[2,16,16,32], index: 5, kind: output, shape index: {0}]
  %s6 = inlined_call_operand.vmem [shape: f32[2,1,2,32], index: 6, kind: output, shape index: {1}]
  %7 = xla_tuple %s5, %s6
  %s8 = sld [smem:[#allocation0]]
  $region61: #{double_conv.4} parent=0
    _
  %s10 = ssub.s32 1, %s8
  %s11 = scalar_select 0, %s10, %s8
  loop: start=0, step=1, limit=4
  $region2: #{double_conv.4} parent=0 // loop_pre_header
    _
  $region3: #{double_conv.4} parent=0 // loop_header
    %s13 = sphi 0, %s17
    %p14 = scmp.ge.s32.totalorder %s13, 4
    %s20 = sphi 0, %s32
    %s21 = sphi 0, %s28
    %s22 = sphi 0, %s20
    %s23 = sphi 0, %s21
    %s24 = sphi 0, %s22
    %s25 = sphi 0, %s23
    %s45 = sphi 0, %s47
    %s48 = sphi 0, %s45
    %s49 = sphi 0, %s48
    %s65 = sphi 0, %s49
    %s73 = sphi 0, %s75
    %s76 = sphi 0, %s73
    %s77 = sphi 0, %s76
    %s93 = sphi 0, %s77
    %s109 = sphi 0, %s111
    %s112 = sphi 0, %s109
    %s113 = sphi 0, %s112
    %s129 = sphi 0, %s113
    %s133 = sphi 0, %s133
    %s135 = sphi 0, %s133
    %s136 = sphi 0, %s135
    %s150 = sphi 0, %s136
    %s154 = sphi 0, %s154
    %s156 = sphi 0, %s154
    %s157 = sphi 0, %s156
    %s171 = sphi 0, %s157
    %s179 = sphi 0, %s181
    %s182 = sphi 0, %s179
    %s183 = sphi 0, %s182
    %s199 = sphi 0, %s183
    %s207 = sphi 0, %s209
    %s210 = sphi 0, %s207
    %s211 = sphi 0, %s210
    %s227 = sphi 0, %s211
  $region4: #{double_conv.4} parent=0 // loop_header_branch
    %16 = sbr.rel (%p14) target = $region8
  $region5: #{double_conv.4} parent=0 // loop_body
    %s18 = ssub.s32 %s13, 1
    %s19 = ssub.s32 %s13, 2
    %s26 = sadd.s32 1, %s21
    %p27 = scmp.ge.s32.totalorder %s26, 1
    %s28 = scalar_select %p27, 0, %s26
    %s29 = sadd.s32 1, %s20
    %s30 = scalar_select %p27, %s29, %s20
    %p31 = scmp.ge.s32.totalorder %s30, 2
    %s32 = scalar_select %p31, 0, %s30
    %s33 = smul.u32 %s21, 16
    %s34 = ssub.s32 %s33, 1
    %p35 = scmp.gt.s32.totalorder %s34, 0
    %s36 = scalar_select %p35, %s34, 0
    %s37 = smul.u32 %s28, 16
    %s38 = ssub.s32 %s37, 1
    %p39 = scmp.gt.s32.totalorder %s38, 0
    %s40 = scalar_select %p39, %s38, 0
    %s41 = ssub.s32 %s20, %s32
    %s42 = ssub.s32 %s36, %s40
    %s43 = sor.u32 %s41, %s42
    %p44 = scmp.eq.s32.totalorder %s43, 0
    %s46 = sadd.s32 %s45, 1
    %s47 = scalar_select %p44, %s45, %s46
    %p50 = pneg %p44
    %p51 = scmp.eq.s32.totalorder %s13, 1
    %p52 = por %p50, %p51
    %p53 = scmp.ne.s32.totalorder %s45, %s48
    %p54 = scmp.eq.s32.totalorder %s13, 0
    %p55 = por %p53, %p54
    %p56 = scmp.ne.s32.totalorder %s45, %s48
    %p57 = scmp.eq.s32.totalorder %s18, 1
    %p58 = por %p56, %p57
    %p59 = scmp.ne.s32.totalorder %s48, %s49
    %p60 = scmp.eq.s32.totalorder %s18, 0
    %p61 = por %p59, %p60
    %p62 = scmp.ne.s32.totalorder %s48, %s49
    %p63 = scmp.eq.s32.totalorder %s19, 1
    %p64 = por %p62, %p63
    %p66 = scmp.ne.s32.totalorder %s49, %s65
    %p67 = scmp.eq.s32.totalorder %s19, 0
    %p68 = por %p66, %p67
    %s69 = ssub.s32 %s20, %s32
    %s70 = ssub.s32 %s21, %s28
    %s71 = sor.u32 %s69, %s70
    %p72 = scmp.eq.s32.totalorder %s71, 0
    %s74 = sadd.s32 %s73, 1
    %s75 = scalar_select %p72, %s73, %s74
    %p78 = pneg %p72
    %p79 = scmp.eq.s32.totalorder %s13, 1
    %p80 = por %p78, %p79
    %p81 = scmp.ne.s32.totalorder %s73, %s76
    %p82 = scmp.eq.s32.totalorder %s13, 0
    %p83 = por %p81, %p82
    %p84 = scmp.ne.s32.totalorder %s73, %s76
    %p85 = scmp.eq.s32.totalorder %s18, 1
    %p86 = por %p84, %p85
    %p87 = scmp.ne.s32.totalorder %s76, %s77
    %p88 = scmp.eq.s32.totalorder %s18, 0
    %p89 = por %p87, %p88
    %p90 = scmp.ne.s32.totalorder %s76, %s77
    %p91 = scmp.eq.s32.totalorder %s19, 1
    %p92 = por %p90, %p91
    %p94 = scmp.ne.s32.totalorder %s77, %s93
    %p95 = scmp.eq.s32.totalorder %s19, 0
    %p96 = por %p94, %p95
    %s97 = sadd.s32 %s21, 1
    %s98 = smul.u32 %s97, 16
    %p99 = scmp.lt.s32.totalorder %s98, 15
    %s100 = scalar_select %p99, %s98, 15
    %s101 = sadd.s32 %s28, 1
    %s102 = smul.u32 %s101, 16
    %p103 = scmp.lt.s32.totalorder %s102, 15
    %s104 = scalar_select %p103, %s102, 15
    %s105 = ssub.s32 %s20, %s32
    %s106 = ssub.s32 %s100, %s104
    %s107 = sor.u32 %s105, %s106
    %p108 = scmp.eq.s32.totalorder %s107, 0
    %s110 = sadd.s32 %s109, 1
    %s111 = scalar_select %p108, %s109, %s110
    %p114 = pneg %p108
    %p115 = scmp.eq.s32.totalorder %s13, 1
    %p116 = por %p114, %p115
    %p117 = scmp.ne.s32.totalorder %s109, %s112
    %p118 = scmp.eq.s32.totalorder %s13, 0
    %p119 = por %p117, %p118
    %p120 = scmp.ne.s32.totalorder %s109, %s112
    %p121 = scmp.eq.s32.totalorder %s18, 1
    %p122 = por %p120, %p121
    %p123 = scmp.ne.s32.totalorder %s112, %s113
    %p124 = scmp.eq.s32.totalorder %s18, 0
    %p125 = por %p123, %p124
    %p126 = scmp.ne.s32.totalorder %s112, %s113
    %p127 = scmp.eq.s32.totalorder %s19, 1
    %p128 = por %p126, %p127
    %p130 = scmp.ne.s32.totalorder %s113, %s129
    %p131 = scmp.eq.s32.totalorder %s19, 0
    %p132 = por %p130, %p131
    %s134 = sadd.s32 %s133, 1
    %p137 = scmp.eq.s32.totalorder %s13, 1
    %p138 = scmp.ne.s32.totalorder %s133, %s135
    %p139 = scmp.eq.s32.totalorder %s13, 0
    %p140 = por %p138, %p139
    %p141 = scmp.ne.s32.totalorder %s133, %s135
    %p142 = scmp.eq.s32.totalorder %s18, 1
    %p143 = por %p141, %p142
    %p144 = scmp.ne.s32.totalorder %s135, %s136
    %p145 = scmp.eq.s32.totalorder %s18, 0
    %p146 = por %p144, %p145
    %p147 = scmp.ne.s32.totalorder %s135, %s136
    %p148 = scmp.eq.s32.totalorder %s19, 1
    %p149 = por %p147, %p148
    %p151 = scmp.ne.s32.totalorder %s136, %s150
    %p152 = scmp.eq.s32.totalorder %s19, 0
    %p153 = por %p151, %p152
    %s155 = sadd.s32 %s154, 1
    %p158 = scmp.eq.s32.totalorder %s13, 1
    %p159 = scmp.ne.s32.totalorder %s154, %s156
    %p160 = scmp.eq.s32.totalorder %s13, 0
    %p161 = por %p159, %p160
    %p162 = scmp.ne.s32.totalorder %s154, %s156
    %p163 = scmp.eq.s32.totalorder %s18, 1
    %p164 = por %p162, %p163
    %p165 = scmp.ne.s32.totalorder %s156, %s157
    %p166 = scmp.eq.s32.totalorder %s18, 0
    %p167 = por %p165, %p166
    %p168 = scmp.ne.s32.totalorder %s156, %s157
    %p169 = scmp.eq.s32.totalorder %s19, 1
    %p170 = por %p168, %p169
    %p172 = scmp.ne.s32.totalorder %s157, %s171
    %p173 = scmp.eq.s32.totalorder %s19, 0
    %p174 = por %p172, %p173
    %s175 = ssub.s32 %s20, %s32
    %s176 = ssub.s32 %s21, %s28
    %s177 = sor.u32 %s175, %s176
    %p178 = scmp.eq.s32.totalorder %s177, 0
    %s180 = sadd.s32 %s179, 1
    %s181 = scalar_select %p178, %s179, %s180
    %p184 = pneg %p178
    %p185 = scmp.eq.s32.totalorder %s13, 1
    %p186 = por %p184, %p185
    %p187 = scmp.ne.s32.totalorder %s179, %s182
    %p188 = scmp.eq.s32.totalorder %s13, 0
    %p189 = por %p187, %p188
    %p190 = scmp.ne.s32.totalorder %s179, %s182
    %p191 = scmp.eq.s32.totalorder %s18, 1
    %p192 = por %p190, %p191
    %p193 = scmp.ne.s32.totalorder %s182, %s183
    %p194 = scmp.eq.s32.totalorder %s18, 0
    %p195 = por %p193, %p194
    %p196 = scmp.ne.s32.totalorder %s182, %s183
    %p197 = scmp.eq.s32.totalorder %s19, 1
    %p198 = por %p196, %p197
    %p200 = scmp.ne.s32.totalorder %s183, %s199
    %p201 = scmp.eq.s32.totalorder %s19, 0
    %p202 = por %p200, %p201
    %s203 = ssub.s32 %s20, %s32
    %s204 = ssub.s32 %s21, %s28
    %s205 = sor.u32 %s203, %s204
    %p206 = scmp.eq.s32.totalorder %s205, 0
    %s208 = sadd.s32 %s207, 1
    %s209 = scalar_select %p206, %s207, %s208
    %p212 = pneg %p206
    %p213 = scmp.eq.s32.totalorder %s13, 1
    %p214 = por %p212, %p213
    %p215 = scmp.ne.s32.totalorder %s207, %s210
    %p216 = scmp.eq.s32.totalorder %s13, 0
    %p217 = por %p215, %p216
    %p218 = scmp.ne.s32.totalorder %s207, %s210
    %p219 = scmp.eq.s32.totalorder %s18, 1
    %p220 = por %p218, %p219
    %p221 = scmp.ne.s32.totalorder %s210, %s211
    %p222 = scmp.eq.s32.totalorder %s18, 0
    %p223 = por %p221, %p222
    %p224 = scmp.ne.s32.totalorder %s210, %s211
    %p225 = scmp.eq.s32.totalorder %s19, 1
    %p226 = por %p224, %p225
    %p228 = scmp.ne.s32.totalorder %s211, %s227
    %p229 = scmp.eq.s32.totalorder %s19, 0
    %p230 = por %p228, %p229
    %p231 = scmp.le.s32.totalorder 1, %s13
    %p232 = scmp.lt.s32.totalorder %s13, 3
    %p233 = pnand %p231, %p232
    %p234 = pneg %p233
    // Predicated region
    $region9: #{double_conv.4} parent=5 // pred_check
      _
    $region10: #{double_conv.4} parent=5 // pred_check_branch
      %236 = sbr.rel (%p233) target = $region12
    $region11: #{double_conv.4} parent=5 // pred_region
      %s237 = ssub.s32 %s13, 1
      // Predicated region
      $region13: #{double_conv.4} parent=11 // pred_check
        %p238 = pneg %p146
      $region14: #{double_conv.4} parent=11 // pred_check_branch
        %240 = sbr.rel (%p238) target = $region16
      $region15: #{double_conv.4} parent=11 // pred_region
        _
      $region16: #{double_conv.4} parent=11 // pred_fallthru
        _
      // Predicated region
      $region17: #{double_conv.4} parent=11 // pred_check
        %p241 = pneg %p167
      $region18: #{double_conv.4} parent=11 // pred_check_branch
        %243 = sbr.rel (%p241) target = $region20
      $region19: #{double_conv.4} parent=11 // pred_region
        _
      $region20: #{double_conv.4} parent=11 // pred_fallthru
        _
    $region12: #{double_conv.4} parent=5 // pred_fallthru
      _
    %p244 = scmp.lt.s32.totalorder %s13, 2
    // Predicated region
    $region21: #{double_conv.4} parent=5 // pred_check
      %p245 = pneg %p244
    $region22: #{double_conv.4} parent=5 // pred_check_branch
      %247 = sbr.rel (%p245) target = $region24
    $region23: #{double_conv.4} parent=5 // pred_region
      // Predicated region
      $region25: #{double_conv.4} parent=23 // pred_check
        %p248 = pneg %p55
      $region26: #{double_conv.4} parent=23 // pred_check_branch
        %250 = sbr.rel (%p248) target = $region28
      $region27: #{double_conv.4} parent=23 // pred_region
        %s251 = smul.u32 %s21, 16
        %s252 = ssub.s32 %s251, 1
        %p253 = scmp.gt.s32.totalorder %s252, 0
        %s254 = scalar_select %p253, %s252, 0
        %p255 = scmp.lt.s32.totalorder %s20, 1
        %s256 = scalar_select %p255, %s20, 1
        %p257 = scmp.lt.s32.totalorder %s254, 15
        %s258 = scalar_select %p257, %s254, 15
        %s259 = smul.addr %s258, 2
        %s260 = smul.addr %s256, 32
        %s261 = sadd.s32 %s259, %s260
        %s262 = smul.addr %s261, 4
        %s263 = scalar_lea.vmem %s0, %s262
        %s264 = smul.u32 %s21, 16
        %s265 = ssub.s32 %s264, 1
        %p266 = scmp.gt.s32.totalorder %s265, 0
        %s267 = scalar_select %p266, %s265, 0
      $region28: #{double_conv.4} parent=23 // pred_fallthru
        _
      // Predicated region
      $region29: #{double_conv.4} parent=23 // pred_check
        %p268 = pneg %p83
      $region30: #{double_conv.4} parent=23 // pred_check_branch
        %270 = sbr.rel (%p268) target = $region32
      $region31: #{double_conv.4} parent=23 // pred_region
        %s271 = smul.u32 16, %s21
        %p272 = scmp.lt.s32.totalorder %s20, 1
        %s273 = scalar_select %p272, %s20, 1
        %p274 = scmp.lt.s32.totalorder %s271, 15
        %s275 = scalar_select %p274, %s271, 15
        %s276 = smul.addr %s275, 2
        %s277 = smul.addr %s273, 32
        %s278 = sadd.s32 %s276, %s277
        %s279 = smul.addr %s278, 4
        %s280 = scalar_lea.vmem %s1, %s279
        %s281 = smul.u32 16, %s21
      $region32: #{double_conv.4} parent=23 // pred_fallthru
        _
      // Predicated region
      $region33: #{double_conv.4} parent=23 // pred_check
        %p282 = pneg %p119
      $region34: #{double_conv.4} parent=23 // pred_check_branch
        %284 = sbr.rel (%p282) target = $region36
      $region35: #{double_conv.4} parent=23 // pred_region
        %s285 = sadd.s32 %s21, 1
        %s286 = smul.u32 %s285, 16
        %p287 = scmp.lt.s32.totalorder %s286, 15
        %s288 = scalar_select %p287, %s286, 15
        %p289 = scmp.lt.s32.totalorder %s20, 1
        %s290 = scalar_select %p289, %s20, 1
        %p291 = scmp.lt.s32.totalorder %s288, 15
        %s292 = scalar_select %p291, %s288, 15
        %s293 = smul.addr %s292, 2
        %s294 = smul.addr %s290, 32
        %s295 = sadd.s32 %s293, %s294
        %s296 = smul.addr %s295, 4
        %s297 = scalar_lea.vmem %s2, %s296
        %s298 = sadd.s32 %s21, 1
        %s299 = smul.u32 %s298, 16
        %p300 = scmp.lt.s32.totalorder %s299, 15
        %s301 = scalar_select %p300, %s299, 15
      $region36: #{double_conv.4} parent=23 // pred_fallthru
        _
    $region24: #{double_conv.4} parent=5 // pred_fallthru
      _
    %p302 = scmp.le.s32.totalorder 1, %s13
    %p303 = scmp.lt.s32.totalorder %s13, 3
    %p304 = pnand %p302, %p303
    %p305 = pneg %p304
    // Predicated region
    $region37: #{double_conv.4} parent=5 // pred_check
      _
    $region38: #{double_conv.4} parent=5 // pred_check_branch
      %307 = sbr.rel (%p304) target = $region40
    $region39: #{double_conv.4} parent=5 // pred_region
      %s308 = ssub.s32 %s13, 1
      %s309 = smul.u32 %s23, 16
      %s310 = ssub.s32 %s309, 1
      %p311 = scmp.gt.s32.totalorder %s310, 0
      %s312 = scalar_select %p311, %s310, 0
      %p313 = scmp.lt.s32.totalorder %s22, 1
      %s314 = scalar_select %p313, %s22, 1
      %p315 = scmp.lt.s32.totalorder %s312, 15
      %s316 = scalar_select %p315, %s312, 15
      %s317 = smul.addr %s316, 2
      %s318 = smul.addr %s314, 32
      %s319 = sadd.s32 %s317, %s318
      %s320 = smul.addr %s319, 4
      %s321 = scalar_lea.vmem %s0, %s320
      %p322 = pneg %p61
      %p323 = pneg %p58
      %s324 = smul.u32 16, %s23
      %p325 = scmp.lt.s32.totalorder %s22, 1
      %s326 = scalar_select %p325, %s22, 1
      %p327 = scmp.lt.s32.totalorder %s324, 15
      %s328 = scalar_select %p327, %s324, 15
      %s329 = smul.addr %s328, 2
      %s330 = smul.addr %s326, 32
      %s331 = sadd.s32 %s329, %s330
      %s332 = smul.addr %s331, 4
      %s333 = scalar_lea.vmem %s1, %s332
      %p334 = pneg %p89
      %p335 = pneg %p86
      %s336 = sadd.s32 %s23, 1
      %s337 = smul.u32 %s336, 16
      %p338 = scmp.lt.s32.totalorder %s337, 15
      %s339 = scalar_select %p338, %s337, 15
      %p340 = scmp.lt.s32.totalorder %s22, 1
      %s341 = scalar_select %p340, %s22, 1
      %p342 = scmp.lt.s32.totalorder %s339, 15
      %s343 = scalar_select %p342, %s339, 15
      %s344 = smul.addr %s343, 2
      %s345 = smul.addr %s341, 32
      %s346 = sadd.s32 %s344, %s345
      %s347 = smul.addr %s346, 4
      %s348 = scalar_lea.vmem %s2, %s347
      %p349 = pneg %p125
      %p350 = pneg %p122
      %p351 = pneg %p146
      %p352 = pneg %p143
      %p353 = pneg %p167
      %p354 = pneg %p164
      %p355 = pneg %p195
      %p356 = pneg %p192
      %s357 = smul.u32 16, %s23
      %p358 = scmp.lt.s32.totalorder %s22, 1
      %s359 = scalar_select %p358, %s22, 1
      %p360 = scmp.lt.s32.totalorder %s357, 15
      %s361 = scalar_select %p360, %s357, 15
      %s362 = smul.addr %s361, 2
      %s363 = smul.addr %s359, 32
      %s364 = sadd.s32 %s362, %s363
      %s365 = smul.addr %s364, 8
      %s366 = scalar_lea.vmem %s5, %s365
      %p367 = pneg %p223
      %p368 = pneg %p220
      %p369 = scmp.lt.s32.totalorder %s22, 1
      %s370 = scalar_select %p369, %s22, 1
      %p371 = scmp.lt.s32.totalorder %s23, 0
      %s372 = scalar_select %p371, %s23, 0
      %s373 = sadd.s32 %s372, %s370
      %s374 = smul.addr %s373, 2
      %s375 = scalar_lea.vmem %s6, %s374
      %s376 = smul.u32 %s23, 16
      %s377 = ssub.s32 %s376, 1
      %p378 = scmp.gt.s32.totalorder %s377, 0
      %s379 = scalar_select %p378, %s377, 0
      %p380 = scmp.lt.s32.totalorder %s22, 1
      %s381 = scalar_select %p380, %s22, 1
      %p382 = scmp.lt.s32.totalorder %s379, 15
      %s383 = scalar_select %p382, %s379, 15
      %s384 = smul.addr %s383, 2
      %s385 = smul.addr %s381, 32
      %s386 = sadd.s32 %s384, %s385
      %s387 = smul.addr %s386, 4
      %s388 = scalar_lea.vmem %s0, %s387
      %s389 = smul.u32 %s23, 16
      %s390 = ssub.s32 %s389, 1
      %p391 = scmp.gt.s32.totalorder %s390, 0
      %s392 = scalar_select %p391, %s390, 0
      %s393 = smul.u32 16, %s23
      %p394 = scmp.lt.s32.totalorder %s22, 1
      %s395 = scalar_select %p394, %s22, 1
      %p396 = scmp.lt.s32.totalorder %s393, 15
      %s397 = scalar_select %p396, %s393, 15
      %s398 = smul.addr %s397, 2
      %s399 = smul.addr %s395, 32
      %s400 = sadd.s32 %s398, %s399
      %s401 = smul.addr %s400, 4
      %s402 = scalar_lea.vmem %s1, %s401
      %s403 = smul.u32 16, %s23
      %s404 = sadd.s32 %s23, 1
      %s405 = smul.u32 %s404, 16
      %p406 = scmp.lt.s32.totalorder %s405, 15
      %s407 = scalar_select %p406, %s405, 15
      %p408 = scmp.lt.s32.totalorder %s22, 1
      %s409 = scalar_select %p408, %s22, 1
      %p410 = scmp.lt.s32.totalorder %s407, 15
      %s411 = scalar_select %p410, %s407, 15
      %s412 = smul.addr %s411, 2
      %s413 = smul.addr %s409, 32
      %s414 = sadd.s32 %s412, %s413
      %s415 = smul.addr %s414, 4
      %s416 = scalar_lea.vmem %s2, %s415
      %s417 = sadd.s32 %s23, 1
      %s418 = smul.u32 %s417, 16
      %p419 = scmp.lt.s32.totalorder %s418, 15
      %s420 = scalar_select %p419, %s418, 15
      %s421 = smul.u32 16, %s23
      %p422 = scmp.lt.s32.totalorder %s22, 1
      %s423 = scalar_select %p422, %s22, 1
      %p424 = scmp.lt.s32.totalorder %s421, 15
      %s425 = scalar_select %p424, %s421, 15
      %s426 = smul.addr %s425, 2
      %s427 = smul.addr %s423, 32
      %s428 = sadd.s32 %s426, %s427
      %s429 = smul.addr %s428, 8
      %s430 = scalar_lea.vmem %s5, %s429
      %s431 = smul.u32 16, %s23
      %p432 = scmp.lt.s32.totalorder %s22, 1
      %s433 = scalar_select %p432, %s22, 1
      %p434 = scmp.lt.s32.totalorder %s23, 0
      %s435 = scalar_select %p434, %s23, 0
      %s436 = sadd.s32 %s435, %s433
      %s437 = smul.addr %s436, 2
      %s438 = scalar_lea.vmem %s6, %s437
      %v440 = vld [vmem:[%s4] sm:$0x3]
      %v441 = vld [vmem:[%s402] sm:$0xf]
      %v442 = vld [vmem:[%s402 + $0x4] sm:$0xf]
      %v443 = vld [vmem:[%s402 + $0x8] sm:$0xf]
      %v444 = vld [vmem:[%s402 + $0xc] sm:$0xf]
      %v445 = vld [vmem:[%s402 + $0x10] sm:$0xf]
      %v446 = vld [vmem:[%s402 + $0x14] sm:$0xf]
      %v447 = vld [vmem:[%s402 + $0x18] sm:$0xf]
      %v448 = vld [vmem:[%s402 + $0x1c] sm:$0xf]
      %v449 = vld [vmem:[%s402 + $0x20] sm:$0xf]
      %v450 = vld [vmem:[%s402 + $0x24] sm:$0xf]
      %v451 = vld [vmem:[%s402 + $0x28] sm:$0xf]
      %v452 = vld [vmem:[%s402 + $0x2c] sm:$0xf]
      %v453 = vld [vmem:[%s402 + $0x30] sm:$0xf]
      %v454 = vld [vmem:[%s402 + $0x34] sm:$0xf]
      %v455 = vld [vmem:[%s402 + $0x38] sm:$0xf]
      %v456 = vld [vmem:[%s402 + $0x3c] sm:$0xf]
      %v457 = vld [vmem:[%s402 + $0x40] sm:$0xf]
      %v458 = vld [vmem:[%s402 + $0x44] sm:$0xf]
      %v459 = vld [vmem:[%s402 + $0x48] sm:$0xf]
      %v460 = vld [vmem:[%s402 + $0x4c] sm:$0xf]
      %v461 = vld [vmem:[%s402 + $0x50] sm:$0xf]
      %v462 = vld [vmem:[%s402 + $0x54] sm:$0xf]
      %v463 = vld [vmem:[%s402 + $0x58] sm:$0xf]
      %v464 = vld [vmem:[%s402 + $0x5c] sm:$0xf]
      %v465 = vld [vmem:[%s402 + $0x60] sm:$0xf]
      %v466 = vld [vmem:[%s402 + $0x64] sm:$0xf]
      %v467 = vld [vmem:[%s402 + $0x68] sm:$0xf]
      %v468 = vld [vmem:[%s402 + $0x6c] sm:$0xf]
      %v469 = vld [vmem:[%s402 + $0x70] sm:$0xf]
      %v470 = vld [vmem:[%s402 + $0x74] sm:$0xf]
      %v471 = vld [vmem:[%s402 + $0x78] sm:$0xf]
      %v472 = vld [vmem:[%s402 + $0x7c] sm:$0xf]
      %v473 = vunpack.c.l.bf16 %v441
      %v474 = vunpack.c.l.bf16 %v442
      %v475 = vunpack.c.l.bf16 %v443
      %v476 = vunpack.c.l.bf16 %v444
      %v477 = vunpack.c.l.bf16 %v445
      %v478 = vunpack.c.l.bf16 %v446
      %v479 = vunpack.c.l.bf16 %v447
      %v480 = vunpack.c.l.bf16 %v448
      %v481 = vunpack.c.l.bf16 %v449
      %v482 = vunpack.c.l.bf16 %v450
      %v483 = vunpack.c.l.bf16 %v451
      %v484 = vunpack.c.l.bf16 %v452
      %v485 = vunpack.c.l.bf16 %v453
      %v486 = vunpack.c.l.bf16 %v454
      %v487 = vunpack.c.l.bf16 %v455
      %v488 = vunpack.c.l.bf16 %v456
      %v489 = vunpack.c.l.bf16 %v457
      %v490 = vunpack.c.l.bf16 %v458
      %v491 = vunpack.c.l.bf16 %v459
      %v492 = vunpack.c.l.bf16 %v460
      %v493 = vunpack.c.l.bf16 %v461
      %v494 = vunpack.c.l.bf16 %v462
      %v495 = vunpack.c.l.bf16 %v463
      %v496 = vunpack.c.l.bf16 %v464
      %v497 = vunpack.c.l.bf16 %v465
      %v498 = vunpack.c.l.bf16 %v466
      %v499 = vunpack.c.l.bf16 %v467
      %v500 = vunpack.c.l.bf16 %v468
      %v501 = vunpack.c.l.bf16 %v469
      %v502 = vunpack.c.l.bf16 %v470
      %v503 = vunpack.c.l.bf16 %v471
      %v504 = vunpack.c.l.bf16 %v472
      %v505 = vlaneseq
      %v506 = vshrl.u32 %v505, 7
      %v507 = vsub.s32 0, %v506
      %v508 = vrot.slane %v440, %v507
      %v509 = vmul.f32 %v473, %v508
      %v510 = vmul.f32 %v474, %v508
      %v511 = vmul.f32 %v475, %v508
      %v512 = vmul.f32 %v476, %v508
      %v513 = vmul.f32 %v477, %v508
      %v514 = vmul.f32 %v478, %v508
      %v515 = vmul.f32 %v479, %v508
      %v516 = vmul.f32 %v480, %v508
      %v517 = vmul.f32 %v481, %v508
      %v518 = vmul.f32 %v482, %v508
      %v519 = vmul.f32 %v483, %v508
      %v520 = vmul.f32 %v484, %v508
      %v521 = vmul.f32 %v485, %v508
      %v522 = vmul.f32 %v486, %v508
      %v523 = vmul.f32 %v487, %v508
      %v524 = vmul.f32 %v488, %v508
      %v525 = vmul.f32 %v489, %v508
      %v526 = vmul.f32 %v490, %v508
      %v527 = vmul.f32 %v491, %v508
      %v528 = vmul.f32 %v492, %v508
      %v529 = vmul.f32 %v493, %v508
      %v530 = vmul.f32 %v494, %v508
      %v531 = vmul.f32 %v495, %v508
      %v532 = vmul.f32 %v496, %v508
      %v533 = vmul.f32 %v497, %v508
      %v534 = vmul.f32 %v498, %v508
      %v535 = vmul.f32 %v499, %v508
      %v536 = vmul.f32 %v500, %v508
      %v537 = vmul.f32 %v501, %v508
      %v538 = vmul.f32 %v502, %v508
      %v539 = vmul.f32 %v503, %v508
      %v540 = vmul.f32 %v504, %v508
      %v541 = vlaneseq
      %v542 = vshrl.u32 %v541, 7
      %v543 = vsub.s32 1, %v542
      %v544 = vrot.slane %v440, %v543
      %v545 = vadd.f32 %v509, %v544
      %v546 = vadd.f32 %v510, %v544
      %v547 = vadd.f32 %v511, %v544
      %v548 = vadd.f32 %v512, %v544
      %v549 = vadd.f32 %v513, %v544
      %v550 = vadd.f32 %v514, %v544
      %v551 = vadd.f32 %v515, %v544
      %v552 = vadd.f32 %v516, %v544
      %v553 = vadd.f32 %v517, %v544
      %v554 = vadd.f32 %v518, %v544
      %v555 = vadd.f32 %v519, %v544
      %v556 = vadd.f32 %v520, %v544
      %v557 = vadd.f32 %v521, %v544
      %v558 = vadd.f32 %v522, %v544
      %v559 = vadd.f32 %v523, %v544
      %v560 = vadd.f32 %v524, %v544
      %v561 = vadd.f32 %v525, %v544
      %v562 = vadd.f32 %v526, %v544
      %v563 = vadd.f32 %v527, %v544
      %v564 = vadd.f32 %v528, %v544
      %v565 = vadd.f32 %v529, %v544
      %v566 = vadd.f32 %v530, %v544
      %v567 = vadd.f32 %v531, %v544
      %v568 = vadd.f32 %v532, %v544
      %v569 = vadd.f32 %v533, %v544
      %v570 = vadd.f32 %v534, %v544
      %v571 = vadd.f32 %v535, %v544
      %v572 = vadd.f32 %v536, %v544
      %v573 = vadd.f32 %v537, %v544
      %v574 = vadd.f32 %v538, %v544
      %v575 = vadd.f32 %v539, %v544
      %v576 = vadd.f32 %v540, %v544
      %v577 = vmax.f32 %v545, 0.0
      %v578 = vmax.f32 %v546, 0.0
      %v579 = vmax.f32 %v547, 0.0
      %v580 = vmax.f32 %v548, 0.0
      %v581 = vmax.f32 %v549, 0.0
      %v582 = vmax.f32 %v550, 0.0
      %v583 = vmax.f32 %v551, 0.0
      %v584 = vmax.f32 %v552, 0.0
      %v585 = vmax.f32 %v553, 0.0
      %v586 = vmax.f32 %v554, 0.0
      %v587 = vmax.f32 %v555, 0.0
      %v588 = vmax.f32 %v556, 0.0
      %v589 = vmax.f32 %v557, 0.0
      %v590 = vmax.f32 %v558, 0.0
      %v591 = vmax.f32 %v559, 0.0
      %v592 = vmax.f32 %v560, 0.0
      %v593 = vmax.f32 %v561, 0.0
      %v594 = vmax.f32 %v562, 0.0
      %v595 = vmax.f32 %v563, 0.0
      %v596 = vmax.f32 %v564, 0.0
      %v597 = vmax.f32 %v565, 0.0
      %v598 = vmax.f32 %v566, 0.0
      %v599 = vmax.f32 %v567, 0.0
      %v600 = vmax.f32 %v568, 0.0
      %v601 = vmax.f32 %v569, 0.0
      %v602 = vmax.f32 %v570, 0.0
      %v603 = vmax.f32 %v571, 0.0
      %v604 = vmax.f32 %v572, 0.0
      %v605 = vmax.f32 %v573, 0.0
      %v606 = vmax.f32 %v574, 0.0
      %v607 = vmax.f32 %v575, 0.0
      %v608 = vmax.f32 %v576, 0.0
      %v609 = vpack.c.bf16 %v578, %v577
      %v610 = vpack.c.bf16 %v580, %v579
      %v611 = vpack.c.bf16 %v582, %v581
      %v612 = vpack.c.bf16 %v584, %v583
      %v613 = vpack.c.bf16 %v586, %v585
      %v614 = vpack.c.bf16 %v588, %v587
      %v615 = vpack.c.bf16 %v590, %v589
      %v616 = vpack.c.bf16 %v592, %v591
      %v617 = vpack.c.bf16 %v594, %v593
      %v618 = vpack.c.bf16 %v596, %v595
      %v619 = vpack.c.bf16 %v598, %v597
      %v620 = vpack.c.bf16 %v600, %v599
      %v621 = vpack.c.bf16 %v602, %v601
      %v622 = vpack.c.bf16 %v604, %v603
      %v623 = vpack.c.bf16 %v606, %v605
      %v624 = vpack.c.bf16 %v608, %v607
      %p625 = scmp.gt.s32.totalorder %s23, 0
      %v626 = vld [vmem:[%s388] sm:$0xf]
      %v627 = vld [vmem:[%s388 + $0x4] sm:$0xf]
      %v628 = vunpack.c.l.bf16 %v626
      %v629 = vunpack.c.l.bf16 %v627
      %v630 = vmul.f32 %v628, %v508
      %v631 = vmul.f32 %v629, %v508
      %v632 = vadd.f32 %v630, %v544
      %v633 = vadd.f32 %v631, %v544
      %v634 = vmax.f32 %v632, 0.0
      %v635 = vmax.f32 %v633, 0.0
      %v636 = vpack.c.bf16 %v635, %v634
      %s637 = scalar_select %p625, 1, 0
      %v638 = vstv %s637
      %vm639 = vcmp.eq.s32.totalorder %v638, 1
      %v640 = vsel %vm639, %v636, 0
      %p641 = scmp.lt.s32.totalorder %s23, 0
      %v642 = vld [vmem:[%s416] sm:$0xf]
      %v643 = vld [vmem:[%s416 + $0x4] sm:$0xf]
      %v644 = vunpack.c.l.bf16 %v642
      %v645 = vunpack.c.l.bf16 %v643
      %v646 = vmul.f32 %v644, %v508
      %v647 = vmul.f32 %v645, %v508
      %v648 = vadd.f32 %v646, %v544
      %v649 = vadd.f32 %v647, %v544
      %v650 = vmax.f32 %v648, 0.0
      %v651 = vmax.f32 %v649, 0.0
      %v652 = vpack.c.bf16 %v651, %v650
      %s653 = scalar_select %p641, 1, 0
      %v654 = vstv %s653
      %vm655 = vcmp.eq.s32.totalorder %v654, 1
      %v656 = vsel %vm655, %v652, 0
      %vm657 = vcmask 253952
      %vm658 = vsmask.f32 256
      %vm659 = vmand %vm657, %vm658
      %v660 = vld [vmem:[#allocation2] sm:$0x1]
      %v661 = vsel %vm659, 0, %v660
      %662 = vst [vmem:[#allocation2] sm:$0x1] %v661
      %v663 = vld [vmem:[#allocation2 + $0xc] sm:$0x1]
      %v664 = vsel %vm659, 0, %v663
      %665 = vst [vmem:[#allocation2 + $0xc] sm:$0x1] %v664
      %v666 = vld [vmem:[#allocation2 + $0x18] sm:$0x1]
      %v667 = vsel %vm659, 0, %v666
      %668 = vst [vmem:[#allocation2 + $0x18] sm:$0x1] %v667
      %v669 = vld [vmem:[#allocation2 + $0x24] sm:$0x1]
      %v670 = vsel %vm659, 0, %v669
      %671 = vst [vmem:[#allocation2 + $0x24] sm:$0x1] %v670
      %v672 = vld [vmem:[#allocation2 + $0x30] sm:$0x1]
      %v673 = vsel %vm659, 0, %v672
      %674 = vst [vmem:[#allocation2 + $0x30] sm:$0x1] %v673
      %v675 = vld [vmem:[#allocation2 + $0x3c] sm:$0x1]
      %v676 = vsel %vm659, 0, %v675
      %677 = vst [vmem:[#allocation2 + $0x3c] sm:$0x1] %v676
      %v678 = vld [vmem:[#allocation2 + $0x48] sm:$0x1]
      %v679 = vsel %vm659, 0, %v678
      %680 = vst [vmem:[#allocation2 + $0x48] sm:$0x1] %v679
      %v681 = vld [vmem:[#allocation2 + $0x54] sm:$0x1]
      %v682 = vsel %vm659, 0, %v681
      %683 = vst [vmem:[#allocation2 + $0x54] sm:$0x1] %v682
      %v684 = vld [vmem:[#allocation2 + $0x60] sm:$0x1]
      %v685 = vsel %vm659, 0, %v684
      %686 = vst [vmem:[#allocation2 + $0x60] sm:$0x1] %v685
      %v687 = vld [vmem:[#allocation2 + $0x6c] sm:$0x1]
      %v688 = vsel %vm659, 0, %v687
      %689 = vst [vmem:[#allocation2 + $0x6c] sm:$0x1] %v688
      %v690 = vld [vmem:[#allocation2 + $0x78] sm:$0x1]
      %v691 = vsel %vm659, 0, %v690
      %692 = vst [vmem:[#allocation2 + $0x78] sm:$0x1] %v691
      %v693 = vld [vmem:[#allocation2 + $0x84] sm:$0x1]
      %v694 = vsel %vm659, 0, %v693
      %695 = vst [vmem:[#allocation2 + $0x84] sm:$0x1] %v694
      %v696 = vld [vmem:[#allocation2 + $0x90] sm:$0x1]
      %v697 = vsel %vm659, 0, %v696
      %698 = vst [vmem:[#allocation2 + $0x90] sm:$0x1] %v697
      %v699 = vld [vmem:[#allocation2 + $0x9c] sm:$0x1]
      %v700 = vsel %vm659, 0, %v699
      %701 = vst [vmem:[#allocation2 + $0x9c] sm:$0x1] %v700
      %v702 = vld [vmem:[#allocation2 + $0xa8] sm:$0x1]
      %v703 = vsel %vm659, 0, %v702
      %704 = vst [vmem:[#allocation2 + $0xa8] sm:$0x1] %v703
      %v705 = vld [vmem:[#allocation2 + $0xb4] sm:$0x1]
      %v706 = vsel %vm659, 0, %v705
      %707 = vst [vmem:[#allocation2 + $0xb4] sm:$0x1] %v706
      %v708 = vld [vmem:[#allocation2 + $0xc0] sm:$0x1]
      %v709 = vsel %vm659, 0, %v708
      %710 = vst [vmem:[#allocation2 + $0xc0] sm:$0x1] %v709
      %v711 = vld [vmem:[#allocation2 + $0xcc] sm:$0x1]
      %v712 = vsel %vm659, 0, %v711
      %713 = vst [vmem:[#allocation2 + $0xcc] sm:$0x1] %v712
      %vm714 = vsmask.f32 7938
      %vm715 = vmand %vm657, %vm714
      %v716 = vld [vmem:[#allocation2 + $0x8] sm:$0x1]
      %v717 = vsel %vm715, 0, %v716
      %718 = vst [vmem:[#allocation2 + $0x8] sm:$0x1] %v717
      %v719 = vld [vmem:[#allocation2 + $0x14] sm:$0x1]
      %v720 = vsel %vm715, 0, %v719
      %721 = vst [vmem:[#allocation2 + $0x14] sm:$0x1] %v720
      %v722 = vld [vmem:[#allocation2 + $0x20] sm:$0x1]
      %v723 = vsel %vm715, 0, %v722
      %724 = vst [vmem:[#allocation2 + $0x20] sm:$0x1] %v723
      %v725 = vld [vmem:[#allocation2 + $0x2c] sm:$0x1]
      %v726 = vsel %vm715, 0, %v725
      %727 = vst [vmem:[#allocation2 + $0x2c] sm:$0x1] %v726
      %v728 = vld [vmem:[#allocation2 + $0x38] sm:$0x1]
      %v729 = vsel %vm715, 0, %v728
      %730 = vst [vmem:[#allocation2 + $0x38] sm:$0x1] %v729
      %v731 = vld [vmem:[#allocation2 + $0x44] sm:$0x1]
      %v732 = vsel %vm715, 0, %v731
      %733 = vst [vmem:[#allocation2 + $0x44] sm:$0x1] %v732
      %v734 = vld [vmem:[#allocation2 + $0x50] sm:$0x1]
      %v735 = vsel %vm715, 0, %v734
      %736 = vst [vmem:[#allocation2 + $0x50] sm:$0x1] %v735
      %v737 = vld [vmem:[#allocation2 + $0x5c] sm:$0x1]
      %v738 = vsel %vm715, 0, %v737
      %739 = vst [vmem:[#allocation2 + $0x5c] sm:$0x1] %v738
      %v740 = vld [vmem:[#allocation2 + $0x68] sm:$0x1]
      %v741 = vsel %vm715, 0, %v740
      %742 = vst [vmem:[#allocation2 + $0x68] sm:$0x1] %v741
      %v743 = vld [vmem:[#allocation2 + $0x74] sm:$0x1]
      %v744 = vsel %vm715, 0, %v743
      %745 = vst [vmem:[#allocation2 + $0x74] sm:$0x1] %v744
      %v746 = vld [vmem:[#allocation2 + $0x80] sm:$0x1]
      %v747 = vsel %vm715, 0, %v746
      %748 = vst [vmem:[#allocation2 + $0x80] sm:$0x1] %v747
      %v749 = vld [vmem:[#allocation2 + $0x8c] sm:$0x1]
      %v750 = vsel %vm715, 0, %v749
      %751 = vst [vmem:[#allocation2 + $0x8c] sm:$0x1] %v750
      %v752 = vld [vmem:[#allocation2 + $0x98] sm:$0x1]
      %v753 = vsel %vm715, 0, %v752
      %754 = vst [vmem:[#allocation2 + $0x98] sm:$0x1] %v753
      %v755 = vld [vmem:[#allocation2 + $0xa4] sm:$0x1]
      %v756 = vsel %vm715, 0, %v755
      %757 = vst [vmem:[#allocation2 + $0xa4] sm:$0x1] %v756
      %v758 = vld [vmem:[#allocation2 + $0xb0] sm:$0x1]
      %v759 = vsel %vm715, 0, %v758
      %760 = vst [vmem:[#allocation2 + $0xb0] sm:$0x1] %v759
      %v761 = vld [vmem:[#allocation2 + $0xbc] sm:$0x1]
      %v762 = vsel %vm715, 0, %v761
      %763 = vst [vmem:[#allocation2 + $0xbc] sm:$0x1] %v762
      %v764 = vld [vmem:[#allocation2 + $0xc8] sm:$0x1]
      %v765 = vsel %vm715, 0, %v764
      %766 = vst [vmem:[#allocation2 + $0xc8] sm:$0x1] %v765
      %v767 = vld [vmem:[#allocation2 + $0xd4] sm:$0x1]
      %v768 = vsel %vm715, 0, %v767
      %769 = vst [vmem:[#allocation2 + $0xd4] sm:$0x1] %v768
      %v771 = vunpack.c.l.b16 %v640
      %v772 = vunpack.c.h.b16 %v640
      %v773 = vpack.c.b16 %v771, %v771
      %v774 = vpack.c.b16 %v772, %v772
      %vm775 = vsmask.f32 4368
      %vm776 = vmor %vm658, %vm775
      %v778 = vshrl.u32 %v773, 16
      %v780 = vrot.slane %v778, 7
      %v781 = vshll.u32 %v773, 16
      %v783 = vor.u32 %v780, %v781
      %v784 = vrot.slane %v780, 4
      %v786 = vshrl.u32 %v774, 16
      %v788 = vrot.slane %v786, 7
      %v789 = vshll.u32 %v774, 16
      %v791 = vor.u32 %v788, %v789
      %v792 = vsel %vm776, %v784, %v791
      %v793 = vrot.slane %v788, 4
      %vm797 = vcmask 257024
      %vm798 = vmand %vm797, %vm714
      %v799 = vld [vmem:[#allocation2] sm:$0xf]
      %v800 = vsel %vm798, %v783, %v799
      %801 = vst [vmem:[#allocation2] sm:$0xf] %v800
      %vm802 = vcmask 257024
      %803 = vst.msk [vmem:[#allocation2 + $0x4] sm:$0xf] %vm802, %v792
      %v804 = vld [vmem:[#allocation2 + $0x8] sm:$0x1]
      %v805 = vsel %vm659, %v793, %v804
      %806 = vst [vmem:[#allocation2 + $0x8] sm:$0x1] %v805
      %v808 = vunpack.c.l.b16 %v656
      %v809 = vunpack.c.h.b16 %v656
      %v810 = vpack.c.b16 %v808, %v808
      %v811 = vpack.c.b16 %v809, %v809
      %v813 = vshrl.u32 %v810, 16
      %v815 = vrot.slane %v813, 7
      %v816 = vshll.u32 %v810, 16
      %v818 = vor.u32 %v815, %v816
      %v819 = vrot.slane %v815, 4
      %v821 = vshrl.u32 %v811, 16
      %v823 = vrot.slane %v821, 7
      %v824 = vshll.u32 %v811, 16
      %v826 = vor.u32 %v823, %v824
      %v827 = vsel %vm776, %v819, %v826
      %v828 = vrot.slane %v823, 4
      %s832 = scalar_lea.vmem [#allocation2], 204
      %v833 = vld [vmem:[%s832] sm:$0xf]
      %v834 = vsel %vm798, %v818, %v833
      %835 = vst [vmem:[%s832] sm:$0xf] %v834
      %836 = vst.msk [vmem:[%s832 + $0x4] sm:$0xf] %vm802, %v827
      %v837 = vld [vmem:[%s832 + $0x8] sm:$0x1]
      %v838 = vsel %vm659, %v828, %v837
      %839 = vst [vmem:[%s832 + $0x8] sm:$0x1] %v838
      %v856 = vunpack.c.l.b16 %v609
      %v857 = vunpack.c.h.b16 %v609
      %v858 = vunpack.c.l.b16 %v610
      %v859 = vunpack.c.h.b16 %v610
      %v860 = vunpack.c.l.b16 %v611
      %v861 = vunpack.c.h.b16 %v611
      %v862 = vunpack.c.l.b16 %v612
      %v863 = vunpack.c.h.b16 %v612
      %v864 = vunpack.c.l.b16 %v613
      %v865 = vunpack.c.h.b16 %v613
      %v866 = vunpack.c.l.b16 %v614
      %v867 = vunpack.c.h.b16 %v614
      %v868 = vunpack.c.l.b16 %v615
      %v869 = vunpack.c.h.b16 %v615
      %v870 = vunpack.c.l.b16 %v616
      %v871 = vunpack.c.h.b16 %v616
      %v872 = vunpack.c.l.b16 %v617
      %v873 = vunpack.c.h.b16 %v617
      %v874 = vunpack.c.l.b16 %v618
      %v875 = vunpack.c.h.b16 %v618
      %v876 = vunpack.c.l.b16 %v619
      %v877 = vunpack.c.h.b16 %v619
      %v878 = vunpack.c.l.b16 %v620
      %v879 = vunpack.c.h.b16 %v620
      %v880 = vunpack.c.l.b16 %v621
      %v881 = vunpack.c.h.b16 %v621
      %v882 = vunpack.c.l.b16 %v622
      %v883 = vunpack.c.h.b16 %v622
      %v884 = vunpack.c.l.b16 %v623
      %v885 = vunpack.c.h.b16 %v623
      %v886 = vunpack.c.l.b16 %v624
      %v887 = vunpack.c.h.b16 %v624
      %v888 = vpack.c.b16 %v856, %v856
      %v889 = vpack.c.b16 %v857, %v857
      %v890 = vpack.c.b16 %v858, %v858
      %v891 = vpack.c.b16 %v859, %v859
      %v892 = vpack.c.b16 %v860, %v860
      %v893 = vpack.c.b16 %v861, %v861
      %v894 = vpack.c.b16 %v862, %v862
      %v895 = vpack.c.b16 %v863, %v863
      %v896 = vpack.c.b16 %v864, %v864
      %v897 = vpack.c.b16 %v865, %v865
      %v898 = vpack.c.b16 %v866, %v866
      %v899 = vpack.c.b16 %v867, %v867
      %v900 = vpack.c.b16 %v868, %v868
      %v901 = vpack.c.b16 %v869, %v869
      %v902 = vpack.c.b16 %v870, %v870
      %v903 = vpack.c.b16 %v871, %v871
      %v904 = vpack.c.b16 %v872, %v872
      %v905 = vpack.c.b16 %v873, %v873
      %v906 = vpack.c.b16 %v874, %v874
      %v907 = vpack.c.b16 %v875, %v875
      %v908 = vpack.c.b16 %v876, %v876
      %v909 = vpack.c.b16 %v877, %v877
      %v910 = vpack.c.b16 %v878, %v878
      %v911 = vpack.c.b16 %v879, %v879
      %v912 = vpack.c.b16 %v880, %v880
      %v913 = vpack.c.b16 %v881, %v881
      %v914 = vpack.c.b16 %v882, %v882
      %v915 = vpack.c.b16 %v883, %v883
      %v916 = vpack.c.b16 %v884, %v884
      %v917 = vpack.c.b16 %v885, %v885
      %v918 = vpack.c.b16 %v886, %v886
      %v919 = vpack.c.b16 %v887, %v887
      %v921 = vshrl.u32 %v888, 16
      %v923 = vrot.slane %v921, 7
      %v924 = vshll.u32 %v888, 16
      %v926 = vor.u32 %v923, %v924
      %v927 = vrot.slane %v923, 4
      %v929 = vshrl.u32 %v889, 16
      %v931 = vrot.slane %v929, 7
      %v932 = vshll.u32 %v889, 16
      %v934 = vor.u32 %v931, %v932
      %v935 = vsel %vm776, %v927, %v934
      %v936 = vrot.slane %v931, 4
      %v938 = vshrl.u32 %v890, 16
      %v940 = vrot.slane %v938, 7
      %v941 = vshll.u32 %v890, 16
      %v943 = vor.u32 %v940, %v941
      %v944 = vrot.slane %v940, 4
      %v946 = vshrl.u32 %v891, 16
      %v948 = vrot.slane %v946, 7
      %v949 = vshll.u32 %v891, 16
      %v951 = vor.u32 %v948, %v949
      %v952 = vsel %vm776, %v944, %v951
      %v953 = vrot.slane %v948, 4
      %v955 = vshrl.u32 %v892, 16
      %v957 = vrot.slane %v955, 7
      %v958 = vshll.u32 %v892, 16
      %v960 = vor.u32 %v957, %v958
      %v961 = vrot.slane %v957, 4
      %v963 = vshrl.u32 %v893, 16
      %v965 = vrot.slane %v963, 7
      %v966 = vshll.u32 %v893, 16
      %v968 = vor.u32 %v965, %v966
      %v969 = vsel %vm776, %v961, %v968
      %v970 = vrot.slane %v965, 4
      %v972 = vshrl.u32 %v894, 16
      %v974 = vrot.slane %v972, 7
      %v975 = vshll.u32 %v894, 16
      %v977 = vor.u32 %v974, %v975
      %v978 = vrot.slane %v974, 4
      %v980 = vshrl.u32 %v895, 16
      %v982 = vrot.slane %v980, 7
      %v983 = vshll.u32 %v895, 16
      %v985 = vor.u32 %v982, %v983
      %v986 = vsel %vm776, %v978, %v985
      %v987 = vrot.slane %v982, 4
      %v989 = vshrl.u32 %v896, 16
      %v991 = vrot.slane %v989, 7
      %v992 = vshll.u32 %v896, 16
      %v994 = vor.u32 %v991, %v992
      %v995 = vrot.slane %v991, 4
      %v997 = vshrl.u32 %v897, 16
      %v999 = vrot.slane %v997, 7
      %v1000 = vshll.u32 %v897, 16
      %v1002 = vor.u32 %v999, %v1000
      %v1003 = vsel %vm776, %v995, %v1002
      %v1004 = vrot.slane %v999, 4
      %v1006 = vshrl.u32 %v898, 16
      %v1008 = vrot.slane %v1006, 7
      %v1009 = vshll.u32 %v898, 16
      %v1011 = vor.u32 %v1008, %v1009
      %v1012 = vrot.slane %v1008, 4
      %v1014 = vshrl.u32 %v899, 16
      %v1016 = vrot.slane %v1014, 7
      %v1017 = vshll.u32 %v899, 16
      %v1019 = vor.u32 %v1016, %v1017
      %v1020 = vsel %vm776, %v1012, %v1019
      %v1021 = vrot.slane %v1016, 4
      %v1023 = vshrl.u32 %v900, 16
      %v1025 = vrot.slane %v1023, 7
      %v1026 = vshll.u32 %v900, 16
      %v1028 = vor.u32 %v1025, %v1026
      %v1029 = vrot.slane %v1025, 4
      %v1031 = vshrl.u32 %v901, 16
      %v1033 = vrot.slane %v1031, 7
      %v1034 = vshll.u32 %v901, 16
      %v1036 = vor.u32 %v1033, %v1034
      %v1037 = vsel %vm776, %v1029, %v1036
      %v1038 = vrot.slane %v1033, 4
      %v1040 = vshrl.u32 %v902, 16
      %v1042 = vrot.slane %v1040, 7
      %v1043 = vshll.u32 %v902, 16
      %v1045 = vor.u32 %v1042, %v1043
      %v1046 = vrot.slane %v1042, 4
      %v1048 = vshrl.u32 %v903, 16
      %v1050 = vrot.slane %v1048, 7
      %v1051 = vshll.u32 %v903, 16
      %v1053 = vor.u32 %v1050, %v1051
      %v1054 = vsel %vm776, %v1046, %v1053
      %v1055 = vrot.slane %v1050, 4
      %v1057 = vshrl.u32 %v904, 16
      %v1059 = vrot.slane %v1057, 7
      %v1060 = vshll.u32 %v904, 16
      %v1062 = vor.u32 %v1059, %v1060
      %v1063 = vrot.slane %v1059, 4
      %v1065 = vshrl.u32 %v905, 16
      %v1067 = vrot.slane %v1065, 7
      %v1068 = vshll.u32 %v905, 16
      %v1070 = vor.u32 %v1067, %v1068
      %v1071 = vsel %vm776, %v1063, %v1070
      %v1072 = vrot.slane %v1067, 4
      %v1074 = vshrl.u32 %v906, 16
      %v1076 = vrot.slane %v1074, 7
      %v1077 = vshll.u32 %v906, 16
      %v1079 = vor.u32 %v1076, %v1077
      %v1080 = vrot.slane %v1076, 4
      %v1082 = vshrl.u32 %v907, 16
      %v1084 = vrot.slane %v1082, 7
      %v1085 = vshll.u32 %v907, 16
      %v1087 = vor.u32 %v1084, %v1085
      %v1088 = vsel %vm776, %v1080, %v1087
      %v1089 = vrot.slane %v1084, 4
      %v1091 = vshrl.u32 %v908, 16
      %v1093 = vrot.slane %v1091, 7
      %v1094 = vshll.u32 %v908, 16
      %v1096 = vor.u32 %v1093, %v1094
      %v1097 = vrot.slane %v1093, 4
      %v1099 = vshrl.u32 %v909, 16
      %v1101 = vrot.slane %v1099, 7
      %v1102 = vshll.u32 %v909, 16
      %v1104 = vor.u32 %v1101, %v1102
      %v1105 = vsel %vm776, %v1097, %v1104
      %v1106 = vrot.slane %v1101, 4
      %v1108 = vshrl.u32 %v910, 16
      %v1110 = vrot.slane %v1108, 7
      %v1111 = vshll.u32 %v910, 16
      %v1113 = vor.u32 %v1110, %v1111
      %v1114 = vrot.slane %v1110, 4
      %v1116 = vshrl.u32 %v911, 16
      %v1118 = vrot.slane %v1116, 7
      %v1119 = vshll.u32 %v911, 16
      %v1121 = vor.u32 %v1118, %v1119
      %v1122 = vsel %vm776, %v1114, %v1121
      %v1123 = vrot.slane %v1118, 4
      %v1125 = vshrl.u32 %v912, 16
      %v1127 = vrot.slane %v1125, 7
      %v1128 = vshll.u32 %v912, 16
      %v1130 = vor.u32 %v1127, %v1128
      %v1131 = vrot.slane %v1127, 4
      %v1133 = vshrl.u32 %v913, 16
      %v1135 = vrot.slane %v1133, 7
      %v1136 = vshll.u32 %v913, 16
      %v1138 = vor.u32 %v1135, %v1136
      %v1139 = vsel %vm776, %v1131, %v1138
      %v1140 = vrot.slane %v1135, 4
      %v1142 = vshrl.u32 %v914, 16
      %v1144 = vrot.slane %v1142, 7
      %v1145 = vshll.u32 %v914, 16
      %v1147 = vor.u32 %v1144, %v1145
      %v1148 = vrot.slane %v1144, 4
      %v1150 = vshrl.u32 %v915, 16
      %v1152 = vrot.slane %v1150, 7
      %v1153 = vshll.u32 %v915, 16
      %v1155 = vor.u32 %v1152, %v1153
      %v1156 = vsel %vm776, %v1148, %v1155
      %v1157 = vrot.slane %v1152, 4
      %v1159 = vshrl.u32 %v916, 16
      %v1161 = vrot.slane %v1159, 7
      %v1162 = vshll.u32 %v916, 16
      %v1164 = vor.u32 %v1161, %v1162
      %v1165 = vrot.slane %v1161, 4
      %v1167 = vshrl.u32 %v917, 16
      %v1169 = vrot.slane %v1167, 7
      %v1170 = vshll.u32 %v917, 16
      %v1172 = vor.u32 %v1169, %v1170
      %v1173 = vsel %vm776, %v1165, %v1172
      %v1174 = vrot.slane %v1169, 4
      %v1176 = vshrl.u32 %v918, 16
      %v1178 = vrot.slane %v1176, 7
      %v1179 = vshll.u32 %v918, 16
      %v1181 = vor.u32 %v1178, %v1179
      %v1182 = vrot.slane %v1178, 4
      %v1184 = vshrl.u32 %v919, 16
      %v1186 = vrot.slane %v1184, 7
      %v1187 = vshll.u32 %v919, 16
      %v1189 = vor.u32 %v1186, %v1187
      %v1190 = vsel %vm776, %v1182, %v1189
      %v1191 = vrot.slane %v1186, 4
      %s1240 = scalar_lea.vmem [#allocation2], 12
      %v1241 = vld [vmem:[%s1240] sm:$0xf]
      %v1242 = vsel %vm798, %v926, %v1241
      %1243 = vst [vmem:[%s1240] sm:$0xf] %v1242
      %1244 = vst.msk [vmem:[%s1240 + $0x4] sm:$0xf] %vm802, %v935
      %v1245 = vld [vmem:[%s1240 + $0x8] sm:$0x1]
      %v1246 = vsel %vm659, %v936, %v1245
      %1247 = vst [vmem:[%s1240 + $0x8] sm:$0x1] %v1246
      %v1248 = vld [vmem:[%s1240 + $0xc] sm:$0xf]
      %v1249 = vsel %vm798, %v943, %v1248
      %1250 = vst [vmem:[%s1240 + $0xc] sm:$0xf] %v1249
      %1251 = vst.msk [vmem:[%s1240 + $0x10] sm:$0xf] %vm802, %v952
      %v1252 = vld [vmem:[%s1240 + $0x14] sm:$0x1]
      %v1253 = vsel %vm659, %v953, %v1252
      %1254 = vst [vmem:[%s1240 + $0x14] sm:$0x1] %v1253
      %v1255 = vld [vmem:[%s1240 + $0x18] sm:$0xf]
      %v1256 = vsel %vm798, %v960, %v1255
      %1257 = vst [vmem:[%s1240 + $0x18] sm:$0xf] %v1256
      %1258 = vst.msk [vmem:[%s1240 + $0x1c] sm:$0xf] %vm802, %v969
      %v1259 = vld [vmem:[%s1240 + $0x20] sm:$0x1]
      %v1260 = vsel %vm659, %v970, %v1259
      %1261 = vst [vmem:[%s1240 + $0x20] sm:$0x1] %v1260
      %v1262 = vld [vmem:[%s1240 + $0x24] sm:$0xf]
      %v1263 = vsel %vm798, %v977, %v1262
      %1264 = vst [vmem:[%s1240 + $0x24] sm:$0xf] %v1263
      %1265 = vst.msk [vmem:[%s1240 + $0x28] sm:$0xf] %vm802, %v986
      %v1266 = vld [vmem:[%s1240 + $0x2c] sm:$0x1]
      %v1267 = vsel %vm659, %v987, %v1266
      %1268 = vst [vmem:[%s1240 + $0x2c] sm:$0x1] %v1267
      %v1269 = vld [vmem:[%s1240 + $0x30] sm:$0xf]
      %v1270 = vsel %vm798, %v994, %v1269
      %1271 = vst [vmem:[%s1240 + $0x30] sm:$0xf] %v1270
      %1272 = vst.msk [vmem:[%s1240 + $0x34] sm:$0xf] %vm802, %v1003
      %v1273 = vld [vmem:[%s1240 + $0x38] sm:$0x1]
      %v1274 = vsel %vm659, %v1004, %v1273
      %1275 = vst [vmem:[%s1240 + $0x38] sm:$0x1] %v1274
      %v1276 = vld [vmem:[%s1240 + $0x3c] sm:$0xf]
      %v1277 = vsel %vm798, %v1011, %v1276
      %1278 = vst [vmem:[%s1240 + $0x3c] sm:$0xf] %v1277
      %1279 = vst.msk [vmem:[%s1240 + $0x40] sm:$0xf] %vm802, %v1020
      %v1280 = vld [vmem:[%s1240 + $0x44] sm:$0x1]
      %v1281 = vsel %vm659, %v1021, %v1280
      %1282 = vst [vmem:[%s1240 + $0x44] sm:$0x1] %v1281
      %v1283 = vld [vmem:[%s1240 + $0x48] sm:$0xf]
      %v1284 = vsel %vm798, %v1028, %v1283
      %1285 = vst [vmem:[%s1240 + $0x48] sm:$0xf] %v1284
      %1286 = vst.msk [vmem:[%s1240 + $0x4c] sm:$0xf] %vm802, %v1037
      %v1287 = vld [vmem:[%s1240 + $0x50] sm:$0x1]
      %v1288 = vsel %vm659, %v1038, %v1287
      %1289 = vst [vmem:[%s1240 + $0x50] sm:$0x1] %v1288
      %v1290 = vld [vmem:[%s1240 + $0x54] sm:$0xf]
      %v1291 = vsel %vm798, %v1045, %v1290
      %1292 = vst [vmem:[%s1240 + $0x54] sm:$0xf] %v1291
      %1293 = vst.msk [vmem:[%s1240 + $0x58] sm:$0xf] %vm802, %v1054
      %v1294 = vld [vmem:[%s1240 + $0x5c] sm:$0x1]
      %v1295 = vsel %vm659, %v1055, %v1294
      %1296 = vst [vmem:[%s1240 + $0x5c] sm:$0x1] %v1295
      %v1297 = vld [vmem:[%s1240 + $0x60] sm:$0xf]
      %v1298 = vsel %vm798, %v1062, %v1297
      %1299 = vst [vmem:[%s1240 + $0x60] sm:$0xf] %v1298
      %1300 = vst.msk [vmem:[%s1240 + $0x64] sm:$0xf] %vm802, %v1071
      %v1301 = vld [vmem:[%s1240 + $0x68] sm:$0x1]
      %v1302 = vsel %vm659, %v1072, %v1301
      %1303 = vst [vmem:[%s1240 + $0x68] sm:$0x1] %v1302
      %v1304 = vld [vmem:[%s1240 + $0x6c] sm:$0xf]
      %v1305 = vsel %vm798, %v1079, %v1304
      %1306 = vst [vmem:[%s1240 + $0x6c] sm:$0xf] %v1305
      %1307 = vst.msk [vmem:[%s1240 + $0x70] sm:$0xf] %vm802, %v1088
      %v1308 = vld [vmem:[%s1240 + $0x74] sm:$0x1]
      %v1309 = vsel %vm659, %v1089, %v1308
      %1310 = vst [vmem:[%s1240 + $0x74] sm:$0x1] %v1309
      %v1311 = vld [vmem:[%s1240 + $0x78] sm:$0xf]
      %v1312 = vsel %vm798, %v1096, %v1311
      %1313 = vst [vmem:[%s1240 + $0x78] sm:$0xf] %v1312
      %1314 = vst.msk [vmem:[%s1240 + $0x7c] sm:$0xf] %vm802, %v1105
      %v1315 = vld [vmem:[%s1240 + $0x80] sm:$0x1]
      %v1316 = vsel %vm659, %v1106, %v1315
      %1317 = vst [vmem:[%s1240 + $0x80] sm:$0x1] %v1316
      %v1318 = vld [vmem:[%s1240 + $0x84] sm:$0xf]
      %v1319 = vsel %vm798, %v1113, %v1318
      %1320 = vst [vmem:[%s1240 + $0x84] sm:$0xf] %v1319
      %1321 = vst.msk [vmem:[%s1240 + $0x88] sm:$0xf] %vm802, %v1122
      %v1322 = vld [vmem:[%s1240 + $0x8c] sm:$0x1]
      %v1323 = vsel %vm659, %v1123, %v1322
      %1324 = vst [vmem:[%s1240 + $0x8c] sm:$0x1] %v1323
      %v1325 = vld [vmem:[%s1240 + $0x90] sm:$0xf]
      %v1326 = vsel %vm798, %v1130, %v1325
      %1327 = vst [vmem:[%s1240 + $0x90] sm:$0xf] %v1326
      %1328 = vst.msk [vmem:[%s1240 + $0x94] sm:$0xf] %vm802, %v1139
      %v1329 = vld [vmem:[%s1240 + $0x98] sm:$0x1]
      %v1330 = vsel %vm659, %v1140, %v1329
      %1331 = vst [vmem:[%s1240 + $0x98] sm:$0x1] %v1330
      %v1332 = vld [vmem:[%s1240 + $0x9c] sm:$0xf]
      %v1333 = vsel %vm798, %v1147, %v1332
      %1334 = vst [vmem:[%s1240 + $0x9c] sm:$0xf] %v1333
      %1335 = vst.msk [vmem:[%s1240 + $0xa0] sm:$0xf] %vm802, %v1156
      %v1336 = vld [vmem:[%s1240 + $0xa4] sm:$0x1]
      %v1337 = vsel %vm659, %v1157, %v1336
      %1338 = vst [vmem:[%s1240 + $0xa4] sm:$0x1] %v1337
      %v1339 = vld [vmem:[%s1240 + $0xa8] sm:$0xf]
      %v1340 = vsel %vm798, %v1164, %v1339
      %1341 = vst [vmem:[%s1240 + $0xa8] sm:$0xf] %v1340
      %1342 = vst.msk [vmem:[%s1240 + $0xac] sm:$0xf] %vm802, %v1173
      %v1343 = vld [vmem:[%s1240 + $0xb0] sm:$0x1]
      %v1344 = vsel %vm659, %v1174, %v1343
      %1345 = vst [vmem:[%s1240 + $0xb0] sm:$0x1] %v1344
      %v1346 = vld [vmem:[%s1240 + $0xb4] sm:$0xf]
      %v1347 = vsel %vm798, %v1181, %v1346
      %1348 = vst [vmem:[%s1240 + $0xb4] sm:$0xf] %v1347
      %1349 = vst.msk [vmem:[%s1240 + $0xb8] sm:$0xf] %vm802, %v1190
      %v1350 = vld [vmem:[%s1240 + $0xbc] sm:$0x1]
      %v1351 = vsel %vm659, %v1191, %v1350
      %1352 = vst [vmem:[%s1240 + $0xbc] sm:$0x1] %v1351
      %v1353 = vld [vmem:[#allocation2] sm:$0xf]
      %v1354 = vld [vmem:[#allocation2 + $0x4] sm:$0xf]
      %v1355 = vld [vmem:[#allocation2 + $0xc] sm:$0xf]
      %v1356 = vld [vmem:[#allocation2 + $0x10] sm:$0xf]
      %v1357 = vld [vmem:[#allocation2 + $0x18] sm:$0xf]
      %v1358 = vld [vmem:[#allocation2 + $0x1c] sm:$0xf]
      %v1359 = vld [vmem:[#allocation2 + $0x24] sm:$0xf]
      %v1360 = vld [vmem:[#allocation2 + $0x28] sm:$0xf]
      %v1361 = vld [vmem:[#allocation2 + $0x30] sm:$0xf]
      %v1362 = vld [vmem:[#allocation2 + $0x34] sm:$0xf]
      %v1363 = vld [vmem:[#allocation2 + $0x3c] sm:$0xf]
      %v1364 = vld [vmem:[#allocation2 + $0x40] sm:$0xf]
      %v1365 = vld [vmem:[#allocation2 + $0x48] sm:$0xf]
      %v1366 = vld [vmem:[#allocation2 + $0x4c] sm:$0xf]
      %v1367 = vld [vmem:[#allocation2 + $0x54] sm:$0xf]
      %v1368 = vld [vmem:[#allocation2 + $0x58] sm:$0xf]
      %v1369 = vld [vmem:[#allocation2 + $0x60] sm:$0xf]
      %v1370 = vld [vmem:[#allocation2 + $0x64] sm:$0xf]
      %v1371 = vld [vmem:[#allocation2 + $0x6c] sm:$0xf]
      %v1372 = vld [vmem:[#allocation2 + $0x70] sm:$0xf]
      %v1373 = vld [vmem:[#allocation2 + $0x78] sm:$0xf]
      %v1374 = vld [vmem:[#allocation2 + $0x7c] sm:$0xf]
      %v1375 = vld [vmem:[#allocation2 + $0x84] sm:$0xf]
      %v1376 = vld [vmem:[#allocation2 + $0x88] sm:$0xf]
      %v1377 = vld [vmem:[#allocation2 + $0x90] sm:$0xf]
      %v1378 = vld [vmem:[#allocation2 + $0x94] sm:$0xf]
      %v1379 = vld [vmem:[#allocation2 + $0x9c] sm:$0xf]
      %v1380 = vld [vmem:[#allocation2 + $0xa0] sm:$0xf]
      %v1381 = vld [vmem:[#allocation2 + $0xa8] sm:$0xf]
      %v1382 = vld [vmem:[#allocation2 + $0xac] sm:$0xf]
      %v1383 = vld [vmem:[#allocation2 + $0xb4] sm:$0xf]
      %v1384 = vld [vmem:[#allocation2 + $0xb8] sm:$0xf]
      %v1385 = vld [vmem:[#allocation2 + $0x8] sm:$0x1]
      %v1386 = vld [vmem:[#allocation2 + $0x14] sm:$0x1]
      %v1387 = vld [vmem:[#allocation2 + $0x20] sm:$0x1]
      %v1388 = vld [vmem:[#allocation2 + $0x2c] sm:$0x1]
      %v1389 = vld [vmem:[#allocation2 + $0x38] sm:$0x1]
      %v1390 = vld [vmem:[#allocation2 + $0x44] sm:$0x1]
      %v1391 = vld [vmem:[#allocation2 + $0x50] sm:$0x1]
      %v1392 = vld [vmem:[#allocation2 + $0x5c] sm:$0x1]
      %v1393 = vld [vmem:[#allocation2 + $0x68] sm:$0x1]
      %v1394 = vld [vmem:[#allocation2 + $0x74] sm:$0x1]
      %v1395 = vld [vmem:[#allocation2 + $0x80] sm:$0x1]
      %v1396 = vld [vmem:[#allocation2 + $0x8c] sm:$0x1]
      %v1397 = vld [vmem:[#allocation2 + $0x98] sm:$0x1]
      %v1398 = vld [vmem:[#allocation2 + $0xa4] sm:$0x1]
      %v1399 = vld [vmem:[#allocation2 + $0xb0] sm:$0x1]
      %v1400 = vld [vmem:[#allocation2 + $0xbc] sm:$0x1]
      %v1401 = vld [vmem:[#allocation2] sm:$0xe]
      %v1402 = vld [vmem:[#allocation2 + $0xc] sm:$0xe]
      %v1403 = vld [vmem:[#allocation2 + $0x18] sm:$0xe]
      %v1404 = vld [vmem:[#allocation2 + $0x24] sm:$0xe]
      %v1405 = vld [vmem:[#allocation2 + $0x30] sm:$0xe]
      %v1406 = vld [vmem:[#allocation2 + $0x3c] sm:$0xe]
      %v1407 = vld [vmem:[#allocation2 + $0x48] sm:$0xe]
      %v1408 = vld [vmem:[#allocation2 + $0x54] sm:$0xe]
      %v1409 = vld [vmem:[#allocation2 + $0x60] sm:$0xe]
      %v1410 = vld [vmem:[#allocation2 + $0x6c] sm:$0xe]
      %v1411 = vld [vmem:[#allocation2 + $0x78] sm:$0xe]
      %v1412 = vld [vmem:[#allocation2 + $0x84] sm:$0xe]
      %v1413 = vld [vmem:[#allocation2 + $0x90] sm:$0xe]
      %v1414 = vld [vmem:[#allocation2 + $0x9c] sm:$0xe]
      %v1415 = vld [vmem:[#allocation2 + $0xa8] sm:$0xe]
      %v1416 = vld [vmem:[#allocation2 + $0xb4] sm:$0xe]
      %v1417 = vld [vmem:[%s1240] sm:$0xf]
      %v1418 = vld [vmem:[%s1240 + $0x4] sm:$0xf]
      %v1419 = vld [vmem:[%s1240 + $0xc] sm:$0xf]
      %v1420 = vld [vmem:[%s1240 + $0x10] sm:$0xf]
      %v1421 = vld [vmem:[%s1240 + $0x18] sm:$0xf]
      %v1422 = vld [vmem:[%s1240 + $0x1c] sm:$0xf]
      %v1423 = vld [vmem:[%s1240 + $0x24] sm:$0xf]
      %v1424 = vld [vmem:[%s1240 + $0x28] sm:$0xf]
      %v1425 = vld [vmem:[%s1240 + $0x30] sm:$0xf]
      %v1426 = vld [vmem:[%s1240 + $0x34] sm:$0xf]
      %v1427 = vld [vmem:[%s1240 + $0x3c] sm:$0xf]
      %v1428 = vld [vmem:[%s1240 + $0x40] sm:$0xf]
      %v1429 = vld [vmem:[%s1240 + $0x48] sm:$0xf]
      %v1430 = vld [vmem:[%s1240 + $0x4c] sm:$0xf]
      %v1431 = vld [vmem:[%s1240 + $0x54] sm:$0xf]
      %v1432 = vld [vmem:[%s1240 + $0x58] sm:$0xf]
      %v1433 = vld [vmem:[%s1240 + $0x60] sm:$0xf]
      %v1434 = vld [vmem:[%s1240 + $0x64] sm:$0xf]
      %v1435 = vld [vmem:[%s1240 + $0x6c] sm:$0xf]
      %v1436 = vld [vmem:[%s1240 + $0x70] sm:$0xf]
      %v1437 = vld [vmem:[%s1240 + $0x78] sm:$0xf]
      %v1438 = vld [vmem:[%s1240 + $0x7c] sm:$0xf]
      %v1439 = vld [vmem:[%s1240 + $0x84] sm:$0xf]
      %v1440 = vld [vmem:[%s1240 + $0x88] sm:$0xf]
      %v1441 = vld [vmem:[%s1240 + $0x90] sm:$0xf]
      %v1442 = vld [vmem:[%s1240 + $0x94] sm:$0xf]
      %v1443 = vld [vmem:[%s1240 + $0x9c] sm:$0xf]
      %v1444 = vld [vmem:[%s1240 + $0xa0] sm:$0xf]
      %v1445 = vld [vmem:[%s1240 + $0xa8] sm:$0xf]
      %v1446 = vld [vmem:[%s1240 + $0xac] sm:$0xf]
      %v1447 = vld [vmem:[%s1240 + $0xb4] sm:$0xf]
      %v1448 = vld [vmem:[%s1240 + $0xb8] sm:$0xf]
      %v1449 = vld [vmem:[%s1240 + $0x8] sm:$0x1]
      %v1450 = vld [vmem:[%s1240 + $0x14] sm:$0x1]
      %v1451 = vld [vmem:[%s1240 + $0x20] sm:$0x1]
      %v1452 = vld [vmem:[%s1240 + $0x2c] sm:$0x1]
      %v1453 = vld [vmem:[%s1240 + $0x38] sm:$0x1]
      %v1454 = vld [vmem:[%s1240 + $0x44] sm:$0x1]
      %v1455 = vld [vmem:[%s1240 + $0x50] sm:$0x1]
      %v1456 = vld [vmem:[%s1240 + $0x5c] sm:$0x1]
      %v1457 = vld [vmem:[%s1240 + $0x68] sm:$0x1]
      %v1458 = vld [vmem:[%s1240 + $0x74] sm:$0x1]
      %v1459 = vld [vmem:[%s1240 + $0x80] sm:$0x1]
      %v1460 = vld [vmem:[%s1240 + $0x8c] sm:$0x1]
      %v1461 = vld [vmem:[%s1240 + $0x98] sm:$0x1]
      %v1462 = vld [vmem:[%s1240 + $0xa4] sm:$0x1]
      %v1463 = vld [vmem:[%s1240 + $0xb0] sm:$0x1]
      %v1464 = vld [vmem:[%s1240 + $0xbc] sm:$0x1]
      %v1465 = vld [vmem:[%s1240] sm:$0xe]
      %v1466 = vld [vmem:[%s1240 + $0xc] sm:$0xe]
      %v1467 = vld [vmem:[%s1240 + $0x18] sm:$0xe]
      %v1468 = vld [vmem:[%s1240 + $0x24] sm:$0xe]
      %v1469 = vld [vmem:[%s1240 + $0x30] sm:$0xe]
      %v1470 = vld [vmem:[%s1240 + $0x3c] sm:$0xe]
      %v1471 = vld [vmem:[%s1240 + $0x48] sm:$0xe]
      %v1472 = vld [vmem:[%s1240 + $0x54] sm:$0xe]
      %v1473 = vld [vmem:[%s1240 + $0x60] sm:$0xe]
      %v1474 = vld [vmem:[%s1240 + $0x6c] sm:$0xe]
      %v1475 = vld [vmem:[%s1240 + $0x78] sm:$0xe]
      %v1476 = vld [vmem:[%s1240 + $0x84] sm:$0xe]
      %v1477 = vld [vmem:[%s1240 + $0x90] sm:$0xe]
      %v1478 = vld [vmem:[%s1240 + $0x9c] sm:$0xe]
      %v1479 = vld [vmem:[%s1240 + $0xa8] sm:$0xe]
      %v1480 = vld [vmem:[%s1240 + $0xb4] sm:$0xe]
      %s1481 = scalar_lea.vmem [#allocation2], 24
      %v1482 = vld [vmem:[%s1481] sm:$0xf]
      %v1483 = vld [vmem:[%s1481 + $0x4] sm:$0xf]
      %v1484 = vld [vmem:[%s1481 + $0xc] sm:$0xf]
      %v1485 = vld [vmem:[%s1481 + $0x10] sm:$0xf]
      %v1486 = vld [vmem:[%s1481 + $0x18] sm:$0xf]
      %v1487 = vld [vmem:[%s1481 + $0x1c] sm:$0xf]
      %v1488 = vld [vmem:[%s1481 + $0x24] sm:$0xf]
      %v1489 = vld [vmem:[%s1481 + $0x28] sm:$0xf]
      %v1490 = vld [vmem:[%s1481 + $0x30] sm:$0xf]
      %v1491 = vld [vmem:[%s1481 + $0x34] sm:$0xf]
      %v1492 = vld [vmem:[%s1481 + $0x3c] sm:$0xf]
      %v1493 = vld [vmem:[%s1481 + $0x40] sm:$0xf]
      %v1494 = vld [vmem:[%s1481 + $0x48] sm:$0xf]
      %v1495 = vld [vmem:[%s1481 + $0x4c] sm:$0xf]
      %v1496 = vld [vmem:[%s1481 + $0x54] sm:$0xf]
      %v1497 = vld [vmem:[%s1481 + $0x58] sm:$0xf]
      %v1498 = vld [vmem:[%s1481 + $0x60] sm:$0xf]
      %v1499 = vld [vmem:[%s1481 + $0x64] sm:$0xf]
      %v1500 = vld [vmem:[%s1481 + $0x6c] sm:$0xf]
      %v1501 = vld [vmem:[%s1481 + $0x70] sm:$0xf]
      %v1502 = vld [vmem:[%s1481 + $0x78] sm:$0xf]
      %v1503 = vld [vmem:[%s1481 + $0x7c] sm:$0xf]
      %v1504 = vld [vmem:[%s1481 + $0x84] sm:$0xf]
      %v1505 = vld [vmem:[%s1481 + $0x88] sm:$0xf]
      %v1506 = vld [vmem:[%s1481 + $0x90] sm:$0xf]
      %v1507 = vld [vmem:[%s1481 + $0x94] sm:$0xf]
      %v1508 = vld [vmem:[%s1481 + $0x9c] sm:$0xf]
      %v1509 = vld [vmem:[%s1481 + $0xa0] sm:$0xf]
      %v1510 = vld [vmem:[%s1481 + $0xa8] sm:$0xf]
      %v1511 = vld [vmem:[%s1481 + $0xac] sm:$0xf]
      %v1512 = vld [vmem:[%s1481 + $0xb4] sm:$0xf]
      %v1513 = vld [vmem:[%s1481 + $0xb8] sm:$0xf]
      %v1514 = vld [vmem:[%s1481 + $0x8] sm:$0x1]
      %v1515 = vld [vmem:[%s1481 + $0x14] sm:$0x1]
      %v1516 = vld [vmem:[%s1481 + $0x20] sm:$0x1]
      %v1517 = vld [vmem:[%s1481 + $0x2c] sm:$0x1]
      %v1518 = vld [vmem:[%s1481 + $0x38] sm:$0x1]
      %v1519 = vld [vmem:[%s1481 + $0x44] sm:$0x1]
      %v1520 = vld [vmem:[%s1481 + $0x50] sm:$0x1]
      %v1521 = vld [vmem:[%s1481 + $0x5c] sm:$0x1]
      %v1522 = vld [vmem:[%s1481 + $0x68] sm:$0x1]
      %v1523 = vld [vmem:[%s1481 + $0x74] sm:$0x1]
      %v1524 = vld [vmem:[%s1481 + $0x80] sm:$0x1]
      %v1525 = vld [vmem:[%s1481 + $0x8c] sm:$0x1]
      %v1526 = vld [vmem:[%s1481 + $0x98] sm:$0x1]
      %v1527 = vld [vmem:[%s1481 + $0xa4] sm:$0x1]
      %v1528 = vld [vmem:[%s1481 + $0xb0] sm:$0x1]
      %v1529 = vld [vmem:[%s1481 + $0xbc] sm:$0x1]
      %v1530 = vld [vmem:[%s1481] sm:$0xe]
      %v1531 = vld [vmem:[%s1481 + $0xc] sm:$0xe]
      %v1532 = vld [vmem:[%s1481 + $0x18] sm:$0xe]
      %v1533 = vld [vmem:[%s1481 + $0x24] sm:$0xe]
      %v1534 = vld [vmem:[%s1481 + $0x30] sm:$0xe]
      %v1535 = vld [vmem:[%s1481 + $0x3c] sm:$0xe]
      %v1536 = vld [vmem:[%s1481 + $0x48] sm:$0xe]
      %v1537 = vld [vmem:[%s1481 + $0x54] sm:$0xe]
      %v1538 = vld [vmem:[%s1481 + $0x60] sm:$0xe]
      %v1539 = vld [vmem:[%s1481 + $0x6c] sm:$0xe]
      %v1540 = vld [vmem:[%s1481 + $0x78] sm:$0xe]
      %v1541 = vld [vmem:[%s1481 + $0x84] sm:$0xe]
      %v1542 = vld [vmem:[%s1481 + $0x90] sm:$0xe]
      %v1543 = vld [vmem:[%s1481 + $0x9c] sm:$0xe]
      %v1544 = vld [vmem:[%s1481 + $0xa8] sm:$0xe]
      %v1545 = vld [vmem:[%s1481 + $0xb4] sm:$0xe]
      %v1578 = vunpack.c.l.b16 %v1353
      %v1579 = vunpack.c.l.b16 %v1354
      %v1580 = vunpack.c.l.b16 %v1355
      %v1581 = vunpack.c.l.b16 %v1356
      %v1582 = vunpack.c.l.b16 %v1357
      %v1583 = vunpack.c.l.b16 %v1358
      %v1584 = vunpack.c.l.b16 %v1359
      %v1585 = vunpack.c.l.b16 %v1360
      %v1586 = vunpack.c.l.b16 %v1361
      %v1587 = vunpack.c.l.b16 %v1362
      %v1588 = vunpack.c.l.b16 %v1363
      %v1589 = vunpack.c.l.b16 %v1364
      %v1590 = vunpack.c.l.b16 %v1365
      %v1591 = vunpack.c.l.b16 %v1366
      %v1592 = vunpack.c.l.b16 %v1367
      %v1593 = vunpack.c.l.b16 %v1368
      %v1594 = vunpack.c.l.b16 %v1369
      %v1595 = vunpack.c.l.b16 %v1370
      %v1596 = vunpack.c.l.b16 %v1371
      %v1597 = vunpack.c.l.b16 %v1372
      %v1598 = vunpack.c.l.b16 %v1373
      %v1599 = vunpack.c.l.b16 %v1374
      %v1600 = vunpack.c.l.b16 %v1375
      %v1601 = vunpack.c.l.b16 %v1376
      %v1602 = vunpack.c.l.b16 %v1377
      %v1603 = vunpack.c.l.b16 %v1378
      %v1604 = vunpack.c.l.b16 %v1379
      %v1605 = vunpack.c.l.b16 %v1380
      %v1606 = vunpack.c.l.b16 %v1381
      %v1607 = vunpack.c.l.b16 %v1382
      %v1608 = vunpack.c.l.b16 %v1383
      %v1609 = vunpack.c.l.b16 %v1384
      %v1610 = vpack.c.b16 %v1579, %v1578
      %v1611 = vpack.c.b16 %v1581, %v1580
      %v1612 = vpack.c.b16 %v1583, %v1582
      %v1613 = vpack.c.b16 %v1585, %v1584
      %v1614 = vpack.c.b16 %v1587, %v1586
      %v1615 = vpack.c.b16 %v1589, %v1588
      %v1616 = vpack.c.b16 %v1591, %v1590
      %v1617 = vpack.c.b16 %v1593, %v1592
      %v1618 = vpack.c.b16 %v1595, %v1594
      %v1619 = vpack.c.b16 %v1597, %v1596
      %v1620 = vpack.c.b16 %v1599, %v1598
      %v1621 = vpack.c.b16 %v1601, %v1600
      %v1622 = vpack.c.b16 %v1603, %v1602
      %v1623 = vpack.c.b16 %v1605, %v1604
      %v1624 = vpack.c.b16 %v1607, %v1606
      %v1625 = vpack.c.b16 %v1609, %v1608
      %v1642 = vunpack.c.l.b16 %v1385
      %v1643 = vunpack.c.l.b16 %v1386
      %v1644 = vunpack.c.l.b16 %v1387
      %v1645 = vunpack.c.l.b16 %v1388
      %v1646 = vunpack.c.l.b16 %v1389
      %v1647 = vunpack.c.l.b16 %v1390
      %v1648 = vunpack.c.l.b16 %v1391
      %v1649 = vunpack.c.l.b16 %v1392
      %v1650 = vunpack.c.l.b16 %v1393
      %v1651 = vunpack.c.l.b16 %v1394
      %v1652 = vunpack.c.l.b16 %v1395
      %v1653 = vunpack.c.l.b16 %v1396
      %v1654 = vunpack.c.l.b16 %v1397
      %v1655 = vunpack.c.l.b16 %v1398
      %v1656 = vunpack.c.l.b16 %v1399
      %v1657 = vunpack.c.l.b16 %v1400
      %v1658 = vpack.c.b16 %v1642, %v1642
      %v1659 = vpack.c.b16 %v1643, %v1643
      %v1660 = vpack.c.b16 %v1644, %v1644
      %v1661 = vpack.c.b16 %v1645, %v1645
      %v1662 = vpack.c.b16 %v1646, %v1646
      %v1663 = vpack.c.b16 %v1647, %v1647
      %v1664 = vpack.c.b16 %v1648, %v1648
      %v1665 = vpack.c.b16 %v1649, %v1649
      %v1666 = vpack.c.b16 %v1650, %v1650
      %v1667 = vpack.c.b16 %v1651, %v1651
      %v1668 = vpack.c.b16 %v1652, %v1652
      %v1669 = vpack.c.b16 %v1653, %v1653
      %v1670 = vpack.c.b16 %v1654, %v1654
      %v1671 = vpack.c.b16 %v1655, %v1655
      %v1672 = vpack.c.b16 %v1656, %v1656
      %v1673 = vpack.c.b16 %v1657, %v1657
      %vm1674 = vsmask.f32 7424
      %v1676 = vshrl.u32 %v1610, 16
      %v1678 = vshll.u32 %v1610, 16
      %v1680 = vrot.slane %v1678, 1
      %v1681 = vor.u32 %v1676, %v1680
      %v1683 = vshll.u32 %v1658, 16
      %v1685 = vrot.slane %v1683, 1
      %v1686 = vsel %vm1674, %v1681, %v1685
      %v1688 = vshrl.u32 %v1611, 16
      %v1690 = vshll.u32 %v1611, 16
      %v1692 = vrot.slane %v1690, 1
      %v1693 = vor.u32 %v1688, %v1692
      %v1695 = vshll.u32 %v1659, 16
      %v1697 = vrot.slane %v1695, 1
      %v1698 = vsel %vm1674, %v1693, %v1697
      %v1700 = vshrl.u32 %v1612, 16
      %v1702 = vshll.u32 %v1612, 16
      %v1704 = vrot.slane %v1702, 1
      %v1705 = vor.u32 %v1700, %v1704
      %v1707 = vshll.u32 %v1660, 16
      %v1709 = vrot.slane %v1707, 1
      %v1710 = vsel %vm1674, %v1705, %v1709
      %v1712 = vshrl.u32 %v1613, 16
      %v1714 = vshll.u32 %v1613, 16
      %v1716 = vrot.slane %v1714, 1
      %v1717 = vor.u32 %v1712, %v1716
      %v1719 = vshll.u32 %v1661, 16
      %v1721 = vrot.slane %v1719, 1
      %v1722 = vsel %vm1674, %v1717, %v1721
      %v1724 = vshrl.u32 %v1614, 16
      %v1726 = vshll.u32 %v1614, 16
      %v1728 = vrot.slane %v1726, 1
      %v1729 = vor.u32 %v1724, %v1728
      %v1731 = vshll.u32 %v1662, 16
      %v1733 = vrot.slane %v1731, 1
      %v1734 = vsel %vm1674, %v1729, %v1733
      %v1736 = vshrl.u32 %v1615, 16
      %v1738 = vshll.u32 %v1615, 16
      %v1740 = vrot.slane %v1738, 1
      %v1741 = vor.u32 %v1736, %v1740
      %v1743 = vshll.u32 %v1663, 16
      %v1745 = vrot.slane %v1743, 1
      %v1746 = vsel %vm1674, %v1741, %v1745
      %v1748 = vshrl.u32 %v1616, 16
      %v1750 = vshll.u32 %v1616, 16
      %v1752 = vrot.slane %v1750, 1
      %v1753 = vor.u32 %v1748, %v1752
      %v1755 = vshll.u32 %v1664, 16
      %v1757 = vrot.slane %v1755, 1
      %v1758 = vsel %vm1674, %v1753, %v1757
      %v1760 = vshrl.u32 %v1617, 16
      %v1762 = vshll.u32 %v1617, 16
      %v1764 = vrot.slane %v1762, 1
      %v1765 = vor.u32 %v1760, %v1764
      %v1767 = vshll.u32 %v1665, 16
      %v1769 = vrot.slane %v1767, 1
      %v1770 = vsel %vm1674, %v1765, %v1769
      %v1772 = vshrl.u32 %v1618, 16
      %v1774 = vshll.u32 %v1618, 16
      %v1776 = vrot.slane %v1774, 1
      %v1777 = vor.u32 %v1772, %v1776
      %v1779 = vshll.u32 %v1666, 16
      %v1781 = vrot.slane %v1779, 1
      %v1782 = vsel %vm1674, %v1777, %v1781
      %v1784 = vshrl.u32 %v1619, 16
      %v1786 = vshll.u32 %v1619, 16
      %v1788 = vrot.slane %v1786, 1
      %v1789 = vor.u32 %v1784, %v1788
      %v1791 = vshll.u32 %v1667, 16
      %v1793 = vrot.slane %v1791, 1
      %v1794 = vsel %vm1674, %v1789, %v1793
      %v1796 = vshrl.u32 %v1620, 16
      %v1798 = vshll.u32 %v1620, 16
      %v1800 = vrot.slane %v1798, 1
      %v1801 = vor.u32 %v1796, %v1800
      %v1803 = vshll.u32 %v1668, 16
      %v1805 = vrot.slane %v1803, 1
      %v1806 = vsel %vm1674, %v1801, %v1805
      %v1808 = vshrl.u32 %v1621, 16
      %v1810 = vshll.u32 %v1621, 16
      %v1812 = vrot.slane %v1810, 1
      %v1813 = vor.u32 %v1808, %v1812
      %v1815 = vshll.u32 %v1669, 16
      %v1817 = vrot.slane %v1815, 1
      %v1818 = vsel %vm1674, %v1813, %v1817
      %v1820 = vshrl.u32 %v1622, 16
      %v1822 = vshll.u32 %v1622, 16
      %v1824 = vrot.slane %v1822, 1
      %v1825 = vor.u32 %v1820, %v1824
      %v1827 = vshll.u32 %v1670, 16
      %v1829 = vrot.slane %v1827, 1
      %v1830 = vsel %vm1674, %v1825, %v1829
      %v1832 = vshrl.u32 %v1623, 16
      %v1834 = vshll.u32 %v1623, 16
      %v1836 = vrot.slane %v1834, 1
      %v1837 = vor.u32 %v1832, %v1836
      %v1839 = vshll.u32 %v1671, 16
      %v1841 = vrot.slane %v1839, 1
      %v1842 = vsel %vm1674, %v1837, %v1841
      %v1844 = vshrl.u32 %v1624, 16
      %v1846 = vshll.u32 %v1624, 16
      %v1848 = vrot.slane %v1846, 1
      %v1849 = vor.u32 %v1844, %v1848
      %v1851 = vshll.u32 %v1672, 16
      %v1853 = vrot.slane %v1851, 1
      %v1854 = vsel %vm1674, %v1849, %v1853
      %v1856 = vshrl.u32 %v1625, 16
      %v1858 = vshll.u32 %v1625, 16
      %v1860 = vrot.slane %v1858, 1
      %v1861 = vor.u32 %v1856, %v1860
      %v1863 = vshll.u32 %v1673, 16
      %v1865 = vrot.slane %v1863, 1
      %v1866 = vsel %vm1674, %v1861, %v1865
      %1867 = vrot.lane.b32.xlu0 %v1686, 32
      %v1868 = vpop.permute.xlu0 %1867
      %1869 = vrot.lane.b32.xlu0 %v1698, 32
      %v1870 = vpop.permute.xlu0 %1869
      %1871 = vrot.lane.b32.xlu0 %v1710, 32
      %v1872 = vpop.permute.xlu0 %1871
      %1873 = vrot.lane.b32.xlu0 %v1722, 32
      %v1874 = vpop.permute.xlu0 %1873
      %1875 = vrot.lane.b32.xlu0 %v1734, 32
      %v1876 = vpop.permute.xlu0 %1875
      %1877 = vrot.lane.b32.xlu0 %v1746, 32
      %v1878 = vpop.permute.xlu0 %1877
      %1879 = vrot.lane.b32.xlu0 %v1758, 32
      %v1880 = vpop.permute.xlu0 %1879
      %1881 = vrot.lane.b32.xlu0 %v1770, 32
      %v1882 = vpop.permute.xlu0 %1881
      %1883 = vrot.lane.b32.xlu0 %v1782, 32
      %v1884 = vpop.permute.xlu0 %1883
      %1885 = vrot.lane.b32.xlu0 %v1794, 32
      %v1886 = vpop.permute.xlu0 %1885
      %1887 = vrot.lane.b32.xlu0 %v1806, 32
      %v1888 = vpop.permute.xlu0 %1887
      %1889 = vrot.lane.b32.xlu0 %v1818, 32
      %v1890 = vpop.permute.xlu0 %1889
      %1891 = vrot.lane.b32.xlu0 %v1830, 32
      %v1892 = vpop.permute.xlu0 %1891
      %1893 = vrot.lane.b32.xlu0 %v1842, 32
      %v1894 = vpop.permute.xlu0 %1893
      %1895 = vrot.lane.b32.xlu0 %v1854, 32
      %v1896 = vpop.permute.xlu0 %1895
      %1897 = vrot.lane.b32.xlu0 %v1866, 32
      %v1898 = vpop.permute.xlu0 %1897
      %v1915 = vunpack.c.l.b16 %v1401
      %v1916 = vunpack.c.l.b16 %v1402
      %v1917 = vunpack.c.l.b16 %v1403
      %v1918 = vunpack.c.l.b16 %v1404
      %v1919 = vunpack.c.l.b16 %v1405
      %v1920 = vunpack.c.l.b16 %v1406
      %v1921 = vunpack.c.l.b16 %v1407
      %v1922 = vunpack.c.l.b16 %v1408
      %v1923 = vunpack.c.l.b16 %v1409
      %v1924 = vunpack.c.l.b16 %v1410
      %v1925 = vunpack.c.l.b16 %v1411
      %v1926 = vunpack.c.l.b16 %v1412
      %v1927 = vunpack.c.l.b16 %v1413
      %v1928 = vunpack.c.l.b16 %v1414
      %v1929 = vunpack.c.l.b16 %v1415
      %v1930 = vunpack.c.l.b16 %v1416
      %v1931 = vpack.c.b16 %v1579, %v1915
      %v1932 = vpack.c.b16 %v1581, %v1916
      %v1933 = vpack.c.b16 %v1583, %v1917
      %v1934 = vpack.c.b16 %v1585, %v1918
      %v1935 = vpack.c.b16 %v1587, %v1919
      %v1936 = vpack.c.b16 %v1589, %v1920
      %v1937 = vpack.c.b16 %v1591, %v1921
      %v1938 = vpack.c.b16 %v1593, %v1922
      %v1939 = vpack.c.b16 %v1595, %v1923
      %v1940 = vpack.c.b16 %v1597, %v1924
      %v1941 = vpack.c.b16 %v1599, %v1925
      %v1942 = vpack.c.b16 %v1601, %v1926
      %v1943 = vpack.c.b16 %v1603, %v1927
      %v1944 = vpack.c.b16 %v1605, %v1928
      %v1945 = vpack.c.b16 %v1607, %v1929
      %v1946 = vpack.c.b16 %v1609, %v1930
      %vm1947 = vcmask 1046528
      %v1948 = vrot.slane %v1931, 1
      %v1949 = vrot.slane %v1658, 1
      %v1950 = vsel %vm1947, %v1948, %v1949
      %v1951 = vrot.slane %v1932, 1
      %v1952 = vrot.slane %v1659, 1
      %v1953 = vsel %vm1947, %v1951, %v1952
      %v1954 = vrot.slane %v1933, 1
      %v1955 = vrot.slane %v1660, 1
      %v1956 = vsel %vm1947, %v1954, %v1955
      %v1957 = vrot.slane %v1934, 1
      %v1958 = vrot.slane %v1661, 1
      %v1959 = vsel %vm1947, %v1957, %v1958
      %v1960 = vrot.slane %v1935, 1
      %v1961 = vrot.slane %v1662, 1
      %v1962 = vsel %vm1947, %v1960, %v1961
      %v1963 = vrot.slane %v1936, 1
      %v1964 = vrot.slane %v1663, 1
      %v1965 = vsel %vm1947, %v1963, %v1964
      %v1966 = vrot.slane %v1937, 1
      %v1967 = vrot.slane %v1664, 1
      %v1968 = vsel %vm1947, %v1966, %v1967
      %v1969 = vrot.slane %v1938, 1
      %v1970 = vrot.slane %v1665, 1
      %v1971 = vsel %vm1947, %v1969, %v1970
      %v1972 = vrot.slane %v1939, 1
      %v1973 = vrot.slane %v1666, 1
      %v1974 = vsel %vm1947, %v1972, %v1973
      %v1975 = vrot.slane %v1940, 1
      %v1976 = vrot.slane %v1667, 1
      %v1977 = vsel %vm1947, %v1975, %v1976
      %v1978 = vrot.slane %v1941, 1
      %v1979 = vrot.slane %v1668, 1
      %v1980 = vsel %vm1947, %v1978, %v1979
      %v1981 = vrot.slane %v1942, 1
      %v1982 = vrot.slane %v1669, 1
      %v1983 = vsel %vm1947, %v1981, %v1982
      %v1984 = vrot.slane %v1943, 1
      %v1985 = vrot.slane %v1670, 1
      %v1986 = vsel %vm1947, %v1984, %v1985
      %v1987 = vrot.slane %v1944, 1
      %v1988 = vrot.slane %v1671, 1
      %v1989 = vsel %vm1947, %v1987, %v1988
      %v1990 = vrot.slane %v1945, 1
      %v1991 = vrot.slane %v1672, 1
      %v1992 = vsel %vm1947, %v1990, %v1991
      %v1993 = vrot.slane %v1946, 1
      %v1994 = vrot.slane %v1673, 1
      %v1995 = vsel %vm1947, %v1993, %v1994
      %1996 = vrot.lane.b32.xlu0 %v1950, 64
      %v1997 = vpop.permute.xlu0 %1996
      %1998 = vrot.lane.b32.xlu0 %v1953, 64
      %v1999 = vpop.permute.xlu0 %1998
      %2000 = vrot.lane.b32.xlu0 %v1956, 64
      %v2001 = vpop.permute.xlu0 %2000
      %2002 = vrot.lane.b32.xlu0 %v1959, 64
      %v2003 = vpop.permute.xlu0 %2002
      %2004 = vrot.lane.b32.xlu0 %v1962, 64
      %v2005 = vpop.permute.xlu0 %2004
      %2006 = vrot.lane.b32.xlu0 %v1965, 64
      %v2007 = vpop.permute.xlu0 %2006
      %2008 = vrot.lane.b32.xlu0 %v1968, 64
      %v2009 = vpop.permute.xlu0 %2008
      %2010 = vrot.lane.b32.xlu0 %v1971, 64
      %v2011 = vpop.permute.xlu0 %2010
      %2012 = vrot.lane.b32.xlu0 %v1974, 64
      %v2013 = vpop.permute.xlu0 %2012
      %2014 = vrot.lane.b32.xlu0 %v1977, 64
      %v2015 = vpop.permute.xlu0 %2014
      %2016 = vrot.lane.b32.xlu0 %v1980, 64
      %v2017 = vpop.permute.xlu0 %2016
      %2018 = vrot.lane.b32.xlu0 %v1983, 64
      %v2019 = vpop.permute.xlu0 %2018
      %2020 = vrot.lane.b32.xlu0 %v1986, 64
      %v2021 = vpop.permute.xlu0 %2020
      %2022 = vrot.lane.b32.xlu0 %v1989, 64
      %v2023 = vpop.permute.xlu0 %2022
      %2024 = vrot.lane.b32.xlu0 %v1992, 64
      %v2025 = vpop.permute.xlu0 %2024
      %2026 = vrot.lane.b32.xlu0 %v1995, 64
      %v2027 = vpop.permute.xlu0 %2026
      %v2060 = vunpack.c.l.b16 %v1417
      %v2061 = vunpack.c.l.b16 %v1418
      %v2062 = vunpack.c.l.b16 %v1419
      %v2063 = vunpack.c.l.b16 %v1420
      %v2064 = vunpack.c.l.b16 %v1421
      %v2065 = vunpack.c.l.b16 %v1422
      %v2066 = vunpack.c.l.b16 %v1423
      %v2067 = vunpack.c.l.b16 %v1424
      %v2068 = vunpack.c.l.b16 %v1425
      %v2069 = vunpack.c.l.b16 %v1426
      %v2070 = vunpack.c.l.b16 %v1427
      %v2071 = vunpack.c.l.b16 %v1428
      %v2072 = vunpack.c.l.b16 %v1429
      %v2073 = vunpack.c.l.b16 %v1430
      %v2074 = vunpack.c.l.b16 %v1431
      %v2075 = vunpack.c.l.b16 %v1432
      %v2076 = vunpack.c.l.b16 %v1433
      %v2077 = vunpack.c.l.b16 %v1434
      %v2078 = vunpack.c.l.b16 %v1435
      %v2079 = vunpack.c.l.b16 %v1436
      %v2080 = vunpack.c.l.b16 %v1437
      %v2081 = vunpack.c.l.b16 %v1438
      %v2082 = vunpack.c.l.b16 %v1439
      %v2083 = vunpack.c.l.b16 %v1440
      %v2084 = vunpack.c.l.b16 %v1441
      %v2085 = vunpack.c.l.b16 %v1442
      %v2086 = vunpack.c.l.b16 %v1443
      %v2087 = vunpack.c.l.b16 %v1444
      %v2088 = vunpack.c.l.b16 %v1445
      %v2089 = vunpack.c.l.b16 %v1446
      %v2090 = vunpack.c.l.b16 %v1447
      %v2091 = vunpack.c.l.b16 %v1448
      %v2092 = vpack.c.b16 %v2061, %v2060
      %v2093 = vpack.c.b16 %v2063, %v2062
      %v2094 = vpack.c.b16 %v2065, %v2064
      %v2095 = vpack.c.b16 %v2067, %v2066
      %v2096 = vpack.c.b16 %v2069, %v2068
      %v2097 = vpack.c.b16 %v2071, %v2070
      %v2098 = vpack.c.b16 %v2073, %v2072
      %v2099 = vpack.c.b16 %v2075, %v2074
      %v2100 = vpack.c.b16 %v2077, %v2076
      %v2101 = vpack.c.b16 %v2079, %v2078
      %v2102 = vpack.c.b16 %v2081, %v2080
      %v2103 = vpack.c.b16 %v2083, %v2082
      %v2104 = vpack.c.b16 %v2085, %v2084
      %v2105 = vpack.c.b16 %v2087, %v2086
      %v2106 = vpack.c.b16 %v2089, %v2088
      %v2107 = vpack.c.b16 %v2091, %v2090
      %2108 = vrot.lane.b32.xlu0 %v2092, 96
      %v2109 = vpop.permute.xlu0 %2108
      %2110 = vrot.lane.b32.xlu0 %v2093, 96
      %v2111 = vpop.permute.xlu0 %2110
      %2112 = vrot.lane.b32.xlu0 %v2094, 96
      %v2113 = vpop.permute.xlu0 %2112
      %2114 = vrot.lane.b32.xlu0 %v2095, 96
      %v2115 = vpop.permute.xlu0 %2114
      %2116 = vrot.lane.b32.xlu0 %v2096, 96
      %v2117 = vpop.permute.xlu0 %2116
      %2118 = vrot.lane.b32.xlu0 %v2097, 96
      %v2119 = vpop.permute.xlu0 %2118
      %2120 = vrot.lane.b32.xlu0 %v2098, 96
      %v2121 = vpop.permute.xlu0 %2120
      %2122 = vrot.lane.b32.xlu0 %v2099, 96
      %v2123 = vpop.permute.xlu0 %2122
      %2124 = vrot.lane.b32.xlu0 %v2100, 96
      %v2125 = vpop.permute.xlu0 %2124
      %2126 = vrot.lane.b32.xlu0 %v2101, 96
      %v2127 = vpop.permute.xlu0 %2126
      %2128 = vrot.lane.b32.xlu0 %v2102, 96
      %v2129 = vpop.permute.xlu0 %2128
      %2130 = vrot.lane.b32.xlu0 %v2103, 96
      %v2131 = vpop.permute.xlu0 %2130
      %2132 = vrot.lane.b32.xlu0 %v2104, 96
      %v2133 = vpop.permute.xlu0 %2132
      %2134 = vrot.lane.b32.xlu0 %v2105, 96
      %v2135 = vpop.permute.xlu0 %2134
      %2136 = vrot.lane.b32.xlu0 %v2106, 96
      %v2137 = vpop.permute.xlu0 %2136
      %2138 = vrot.lane.b32.xlu0 %v2107, 96
      %v2139 = vpop.permute.xlu0 %2138
      %v2156 = vunpack.c.l.b16 %v1449
      %v2157 = vunpack.c.l.b16 %v1450
      %v2158 = vunpack.c.l.b16 %v1451
      %v2159 = vunpack.c.l.b16 %v1452
      %v2160 = vunpack.c.l.b16 %v1453
      %v2161 = vunpack.c.l.b16 %v1454
      %v2162 = vunpack.c.l.b16 %v1455
      %v2163 = vunpack.c.l.b16 %v1456
      %v2164 = vunpack.c.l.b16 %v1457
      %v2165 = vunpack.c.l.b16 %v1458
      %v2166 = vunpack.c.l.b16 %v1459
      %v2167 = vunpack.c.l.b16 %v1460
      %v2168 = vunpack.c.l.b16 %v1461
      %v2169 = vunpack.c.l.b16 %v1462
      %v2170 = vunpack.c.l.b16 %v1463
      %v2171 = vunpack.c.l.b16 %v1464
      %v2172 = vpack.c.b16 %v2156, %v2156
      %v2173 = vpack.c.b16 %v2157, %v2157
      %v2174 = vpack.c.b16 %v2158, %v2158
      %v2175 = vpack.c.b16 %v2159, %v2159
      %v2176 = vpack.c.b16 %v2160, %v2160
      %v2177 = vpack.c.b16 %v2161, %v2161
      %v2178 = vpack.c.b16 %v2162, %v2162
      %v2179 = vpack.c.b16 %v2163, %v2163
      %v2180 = vpack.c.b16 %v2164, %v2164
      %v2181 = vpack.c.b16 %v2165, %v2165
      %v2182 = vpack.c.b16 %v2166, %v2166
      %v2183 = vpack.c.b16 %v2167, %v2167
      %v2184 = vpack.c.b16 %v2168, %v2168
      %v2185 = vpack.c.b16 %v2169, %v2169
      %v2186 = vpack.c.b16 %v2170, %v2170
      %v2187 = vpack.c.b16 %v2171, %v2171
      %v2189 = vshrl.u32 %v2092, 16
      %v2191 = vshll.u32 %v2092, 16
      %v2193 = vrot.slane %v2191, 1
      %v2194 = vor.u32 %v2189, %v2193
      %v2196 = vshll.u32 %v2172, 16
      %v2198 = vrot.slane %v2196, 1
      %v2199 = vsel %vm1674, %v2194, %v2198
      %v2201 = vshrl.u32 %v2093, 16
      %v2203 = vshll.u32 %v2093, 16
      %v2205 = vrot.slane %v2203, 1
      %v2206 = vor.u32 %v2201, %v2205
      %v2208 = vshll.u32 %v2173, 16
      %v2210 = vrot.slane %v2208, 1
      %v2211 = vsel %vm1674, %v2206, %v2210
      %v2213 = vshrl.u32 %v2094, 16
      %v2215 = vshll.u32 %v2094, 16
      %v2217 = vrot.slane %v2215, 1
      %v2218 = vor.u32 %v2213, %v2217
      %v2220 = vshll.u32 %v2174, 16
      %v2222 = vrot.slane %v2220, 1
      %v2223 = vsel %vm1674, %v2218, %v2222
      %v2225 = vshrl.u32 %v2095, 16
      %v2227 = vshll.u32 %v2095, 16
      %v2229 = vrot.slane %v2227, 1
      %v2230 = vor.u32 %v2225, %v2229
      %v2232 = vshll.u32 %v2175, 16
      %v2234 = vrot.slane %v2232, 1
      %v2235 = vsel %vm1674, %v2230, %v2234
      %v2237 = vshrl.u32 %v2096, 16
      %v2239 = vshll.u32 %v2096, 16
      %v2241 = vrot.slane %v2239, 1
      %v2242 = vor.u32 %v2237, %v2241
      %v2244 = vshll.u32 %v2176, 16
      %v2246 = vrot.slane %v2244, 1
      %v2247 = vsel %vm1674, %v2242, %v2246
      %v2249 = vshrl.u32 %v2097, 16
      %v2251 = vshll.u32 %v2097, 16
      %v2253 = vrot.slane %v2251, 1
      %v2254 = vor.u32 %v2249, %v2253
      %v2256 = vshll.u32 %v2177, 16
      %v2258 = vrot.slane %v2256, 1
      %v2259 = vsel %vm1674, %v2254, %v2258
      %v2261 = vshrl.u32 %v2098, 16
      %v2263 = vshll.u32 %v2098, 16
      %v2265 = vrot.slane %v2263, 1
      %v2266 = vor.u32 %v2261, %v2265
      %v2268 = vshll.u32 %v2178, 16
      %v2270 = vrot.slane %v2268, 1
      %v2271 = vsel %vm1674, %v2266, %v2270
      %v2273 = vshrl.u32 %v2099, 16
      %v2275 = vshll.u32 %v2099, 16
      %v2277 = vrot.slane %v2275, 1
      %v2278 = vor.u32 %v2273, %v2277
      %v2280 = vshll.u32 %v2179, 16
      %v2282 = vrot.slane %v2280, 1
      %v2283 = vsel %vm1674, %v2278, %v2282
      %v2285 = vshrl.u32 %v2100, 16
      %v2287 = vshll.u32 %v2100, 16
      %v2289 = vrot.slane %v2287, 1
      %v2290 = vor.u32 %v2285, %v2289
      %v2292 = vshll.u32 %v2180, 16
      %v2294 = vrot.slane %v2292, 1
      %v2295 = vsel %vm1674, %v2290, %v2294
      %v2297 = vshrl.u32 %v2101, 16
      %v2299 = vshll.u32 %v2101, 16
      %v2301 = vrot.slane %v2299, 1
      %v2302 = vor.u32 %v2297, %v2301
      %v2304 = vshll.u32 %v2181, 16
      %v2306 = vrot.slane %v2304, 1
      %v2307 = vsel %vm1674, %v2302, %v2306
      %v2309 = vshrl.u32 %v2102, 16
      %v2311 = vshll.u32 %v2102, 16
      %v2313 = vrot.slane %v2311, 1
      %v2314 = vor.u32 %v2309, %v2313
      %v2316 = vshll.u32 %v2182, 16
      %v2318 = vrot.slane %v2316, 1
      %v2319 = vsel %vm1674, %v2314, %v2318
      %v2321 = vshrl.u32 %v2103, 16
      %v2323 = vshll.u32 %v2103, 16
      %v2325 = vrot.slane %v2323, 1
      %v2326 = vor.u32 %v2321, %v2325
      %v2328 = vshll.u32 %v2183, 16
      %v2330 = vrot.slane %v2328, 1
      %v2331 = vsel %vm1674, %v2326, %v2330
      %v2333 = vshrl.u32 %v2104, 16
      %v2335 = vshll.u32 %v2104, 16
      %v2337 = vrot.slane %v2335, 1
      %v2338 = vor.u32 %v2333, %v2337
      %v2340 = vshll.u32 %v2184, 16
      %v2342 = vrot.slane %v2340, 1
      %v2343 = vsel %vm1674, %v2338, %v2342
      %v2345 = vshrl.u32 %v2105, 16
      %v2347 = vshll.u32 %v2105, 16
      %v2349 = vrot.slane %v2347, 1
      %v2350 = vor.u32 %v2345, %v2349
      %v2352 = vshll.u32 %v2185, 16
      %v2354 = vrot.slane %v2352, 1
      %v2355 = vsel %vm1674, %v2350, %v2354
      %v2357 = vshrl.u32 %v2106, 16
      %v2359 = vshll.u32 %v2106, 16
      %v2361 = vrot.slane %v2359, 1
      %v2362 = vor.u32 %v2357, %v2361
      %v2364 = vshll.u32 %v2186, 16
      %v2366 = vrot.slane %v2364, 1
      %v2367 = vsel %vm1674, %v2362, %v2366
      %v2369 = vshrl.u32 %v2107, 16
      %v2371 = vshll.u32 %v2107, 16
      %v2373 = vrot.slane %v2371, 1
      %v2374 = vor.u32 %v2369, %v2373
      %v2376 = vshll.u32 %v2187, 16
      %v2378 = vrot.slane %v2376, 1
      %v2379 = vsel %vm1674, %v2374, %v2378
      %v2396 = vunpack.c.l.b16 %v1465
      %v2397 = vunpack.c.l.b16 %v1466
      %v2398 = vunpack.c.l.b16 %v1467
      %v2399 = vunpack.c.l.b16 %v1468
      %v2400 = vunpack.c.l.b16 %v1469
      %v2401 = vunpack.c.l.b16 %v1470
      %v2402 = vunpack.c.l.b16 %v1471
      %v2403 = vunpack.c.l.b16 %v1472
      %v2404 = vunpack.c.l.b16 %v1473
      %v2405 = vunpack.c.l.b16 %v1474
      %v2406 = vunpack.c.l.b16 %v1475
      %v2407 = vunpack.c.l.b16 %v1476
      %v2408 = vunpack.c.l.b16 %v1477
      %v2409 = vunpack.c.l.b16 %v1478
      %v2410 = vunpack.c.l.b16 %v1479
      %v2411 = vunpack.c.l.b16 %v1480
      %v2412 = vpack.c.b16 %v2061, %v2396
      %v2413 = vpack.c.b16 %v2063, %v2397
      %v2414 = vpack.c.b16 %v2065, %v2398
      %v2415 = vpack.c.b16 %v2067, %v2399
      %v2416 = vpack.c.b16 %v2069, %v2400
      %v2417 = vpack.c.b16 %v2071, %v2401
      %v2418 = vpack.c.b16 %v2073, %v2402
      %v2419 = vpack.c.b16 %v2075, %v2403
      %v2420 = vpack.c.b16 %v2077, %v2404
      %v2421 = vpack.c.b16 %v2079, %v2405
      %v2422 = vpack.c.b16 %v2081, %v2406
      %v2423 = vpack.c.b16 %v2083, %v2407
      %v2424 = vpack.c.b16 %v2085, %v2408
      %v2425 = vpack.c.b16 %v2087, %v2409
      %v2426 = vpack.c.b16 %v2089, %v2410
      %v2427 = vpack.c.b16 %v2091, %v2411
      %v2428 = vrot.slane %v2412, 1
      %v2429 = vrot.slane %v2172, 1
      %v2430 = vsel %vm1947, %v2428, %v2429
      %v2431 = vrot.slane %v2413, 1
      %v2432 = vrot.slane %v2173, 1
      %v2433 = vsel %vm1947, %v2431, %v2432
      %v2434 = vrot.slane %v2414, 1
      %v2435 = vrot.slane %v2174, 1
      %v2436 = vsel %vm1947, %v2434, %v2435
      %v2437 = vrot.slane %v2415, 1
      %v2438 = vrot.slane %v2175, 1
      %v2439 = vsel %vm1947, %v2437, %v2438
      %v2440 = vrot.slane %v2416, 1
      %v2441 = vrot.slane %v2176, 1
      %v2442 = vsel %vm1947, %v2440, %v2441
      %v2443 = vrot.slane %v2417, 1
      %v2444 = vrot.slane %v2177, 1
      %v2445 = vsel %vm1947, %v2443, %v2444
      %v2446 = vrot.slane %v2418, 1
      %v2447 = vrot.slane %v2178, 1
      %v2448 = vsel %vm1947, %v2446, %v2447
      %v2449 = vrot.slane %v2419, 1
      %v2450 = vrot.slane %v2179, 1
      %v2451 = vsel %vm1947, %v2449, %v2450
      %v2452 = vrot.slane %v2420, 1
      %v2453 = vrot.slane %v2180, 1
      %v2454 = vsel %vm1947, %v2452, %v2453
      %v2455 = vrot.slane %v2421, 1
      %v2456 = vrot.slane %v2181, 1
      %v2457 = vsel %vm1947, %v2455, %v2456
      %v2458 = vrot.slane %v2422, 1
      %v2459 = vrot.slane %v2182, 1
      %v2460 = vsel %vm1947, %v2458, %v2459
      %v2461 = vrot.slane %v2423, 1
      %v2462 = vrot.slane %v2183, 1
      %v2463 = vsel %vm1947, %v2461, %v2462
      %v2464 = vrot.slane %v2424, 1
      %v2465 = vrot.slane %v2184, 1
      %v2466 = vsel %vm1947, %v2464, %v2465
      %v2467 = vrot.slane %v2425, 1
      %v2468 = vrot.slane %v2185, 1
      %v2469 = vsel %vm1947, %v2467, %v2468
      %v2470 = vrot.slane %v2426, 1
      %v2471 = vrot.slane %v2186, 1
      %v2472 = vsel %vm1947, %v2470, %v2471
      %v2473 = vrot.slane %v2427, 1
      %v2474 = vrot.slane %v2187, 1
      %v2475 = vsel %vm1947, %v2473, %v2474
      %2476 = vrot.lane.b32.xlu0 %v2430, 32
      %v2477 = vpop.permute.xlu0 %2476
      %2478 = vrot.lane.b32.xlu0 %v2433, 32
      %v2479 = vpop.permute.xlu0 %2478
      %2480 = vrot.lane.b32.xlu0 %v2436, 32
      %v2481 = vpop.permute.xlu0 %2480
      %2482 = vrot.lane.b32.xlu0 %v2439, 32
      %v2483 = vpop.permute.xlu0 %2482
      %2484 = vrot.lane.b32.xlu0 %v2442, 32
      %v2485 = vpop.permute.xlu0 %2484
      %2486 = vrot.lane.b32.xlu0 %v2445, 32
      %v2487 = vpop.permute.xlu0 %2486
      %2488 = vrot.lane.b32.xlu0 %v2448, 32
      %v2489 = vpop.permute.xlu0 %2488
      %2490 = vrot.lane.b32.xlu0 %v2451, 32
      %v2491 = vpop.permute.xlu0 %2490
      %2492 = vrot.lane.b32.xlu0 %v2454, 32
      %v2493 = vpop.permute.xlu0 %2492
      %2494 = vrot.lane.b32.xlu0 %v2457, 32
      %v2495 = vpop.permute.xlu0 %2494
      %2496 = vrot.lane.b32.xlu0 %v2460, 32
      %v2497 = vpop.permute.xlu0 %2496
      %2498 = vrot.lane.b32.xlu0 %v2463, 32
      %v2499 = vpop.permute.xlu0 %2498
      %2500 = vrot.lane.b32.xlu0 %v2466, 32
      %v2501 = vpop.permute.xlu0 %2500
      %2502 = vrot.lane.b32.xlu0 %v2469, 32
      %v2503 = vpop.permute.xlu0 %2502
      %2504 = vrot.lane.b32.xlu0 %v2472, 32
      %v2505 = vpop.permute.xlu0 %2504
      %2506 = vrot.lane.b32.xlu0 %v2475, 32
      %v2507 = vpop.permute.xlu0 %2506
      %v2540 = vunpack.c.l.b16 %v1482
      %v2541 = vunpack.c.l.b16 %v1483
      %v2542 = vunpack.c.l.b16 %v1484
      %v2543 = vunpack.c.l.b16 %v1485
      %v2544 = vunpack.c.l.b16 %v1486
      %v2545 = vunpack.c.l.b16 %v1487
      %v2546 = vunpack.c.l.b16 %v1488
      %v2547 = vunpack.c.l.b16 %v1489
      %v2548 = vunpack.c.l.b16 %v1490
      %v2549 = vunpack.c.l.b16 %v1491
      %v2550 = vunpack.c.l.b16 %v1492
      %v2551 = vunpack.c.l.b16 %v1493
      %v2552 = vunpack.c.l.b16 %v1494
      %v2553 = vunpack.c.l.b16 %v1495
      %v2554 = vunpack.c.l.b16 %v1496
      %v2555 = vunpack.c.l.b16 %v1497
      %v2556 = vunpack.c.l.b16 %v1498
      %v2557 = vunpack.c.l.b16 %v1499
      %v2558 = vunpack.c.l.b16 %v1500
      %v2559 = vunpack.c.l.b16 %v1501
      %v2560 = vunpack.c.l.b16 %v1502
      %v2561 = vunpack.c.l.b16 %v1503
      %v2562 = vunpack.c.l.b16 %v1504
      %v2563 = vunpack.c.l.b16 %v1505
      %v2564 = vunpack.c.l.b16 %v1506
      %v2565 = vunpack.c.l.b16 %v1507
      %v2566 = vunpack.c.l.b16 %v1508
      %v2567 = vunpack.c.l.b16 %v1509
      %v2568 = vunpack.c.l.b16 %v1510
      %v2569 = vunpack.c.l.b16 %v1511
      %v2570 = vunpack.c.l.b16 %v1512
      %v2571 = vunpack.c.l.b16 %v1513
      %v2572 = vpack.c.b16 %v2541, %v2540
      %v2573 = vpack.c.b16 %v2543, %v2542
      %v2574 = vpack.c.b16 %v2545, %v2544
      %v2575 = vpack.c.b16 %v2547, %v2546
      %v2576 = vpack.c.b16 %v2549, %v2548
      %v2577 = vpack.c.b16 %v2551, %v2550
      %v2578 = vpack.c.b16 %v2553, %v2552
      %v2579 = vpack.c.b16 %v2555, %v2554
      %v2580 = vpack.c.b16 %v2557, %v2556
      %v2581 = vpack.c.b16 %v2559, %v2558
      %v2582 = vpack.c.b16 %v2561, %v2560
      %v2583 = vpack.c.b16 %v2563, %v2562
      %v2584 = vpack.c.b16 %v2565, %v2564
      %v2585 = vpack.c.b16 %v2567, %v2566
      %v2586 = vpack.c.b16 %v2569, %v2568
      %v2587 = vpack.c.b16 %v2571, %v2570
      %2588 = vrot.lane.b32.xlu0 %v2572, 64
      %v2589 = vpop.permute.xlu0 %2588
      %2590 = vrot.lane.b32.xlu0 %v2573, 64
      %v2591 = vpop.permute.xlu0 %2590
      %2592 = vrot.lane.b32.xlu0 %v2574, 64
      %v2593 = vpop.permute.xlu0 %2592
      %2594 = vrot.lane.b32.xlu0 %v2575, 64
      %v2595 = vpop.permute.xlu0 %2594
      %2596 = vrot.lane.b32.xlu0 %v2576, 64
      %v2597 = vpop.permute.xlu0 %2596
      %2598 = vrot.lane.b32.xlu0 %v2577, 64
      %v2599 = vpop.permute.xlu0 %2598
      %2600 = vrot.lane.b32.xlu0 %v2578, 64
      %v2601 = vpop.permute.xlu0 %2600
      %2602 = vrot.lane.b32.xlu0 %v2579, 64
      %v2603 = vpop.permute.xlu0 %2602
      %2604 = vrot.lane.b32.xlu0 %v2580, 64
      %v2605 = vpop.permute.xlu0 %2604
      %2606 = vrot.lane.b32.xlu0 %v2581, 64
      %v2607 = vpop.permute.xlu0 %2606
      %2608 = vrot.lane.b32.xlu0 %v2582, 64
      %v2609 = vpop.permute.xlu0 %2608
      %2610 = vrot.lane.b32.xlu0 %v2583, 64
      %v2611 = vpop.permute.xlu0 %2610
      %2612 = vrot.lane.b32.xlu0 %v2584, 64
      %v2613 = vpop.permute.xlu0 %2612
      %2614 = vrot.lane.b32.xlu0 %v2585, 64
      %v2615 = vpop.permute.xlu0 %2614
      %2616 = vrot.lane.b32.xlu0 %v2586, 64
      %v2617 = vpop.permute.xlu0 %2616
      %2618 = vrot.lane.b32.xlu0 %v2587, 64
      %v2619 = vpop.permute.xlu0 %2618
      %v2636 = vunpack.c.l.b16 %v1514
      %v2637 = vunpack.c.l.b16 %v1515
      %v2638 = vunpack.c.l.b16 %v1516
      %v2639 = vunpack.c.l.b16 %v1517
      %v2640 = vunpack.c.l.b16 %v1518
      %v2641 = vunpack.c.l.b16 %v1519
      %v2642 = vunpack.c.l.b16 %v1520
      %v2643 = vunpack.c.l.b16 %v1521
      %v2644 = vunpack.c.l.b16 %v1522
      %v2645 = vunpack.c.l.b16 %v1523
      %v2646 = vunpack.c.l.b16 %v1524
      %v2647 = vunpack.c.l.b16 %v1525
      %v2648 = vunpack.c.l.b16 %v1526
      %v2649 = vunpack.c.l.b16 %v1527
      %v2650 = vunpack.c.l.b16 %v1528
      %v2651 = vunpack.c.l.b16 %v1529
      %v2652 = vpack.c.b16 %v2636, %v2636
      %v2653 = vpack.c.b16 %v2637, %v2637
      %v2654 = vpack.c.b16 %v2638, %v2638
      %v2655 = vpack.c.b16 %v2639, %v2639
      %v2656 = vpack.c.b16 %v2640, %v2640
      %v2657 = vpack.c.b16 %v2641, %v2641
      %v2658 = vpack.c.b16 %v2642, %v2642
      %v2659 = vpack.c.b16 %v2643, %v2643
      %v2660 = vpack.c.b16 %v2644, %v2644
      %v2661 = vpack.c.b16 %v2645, %v2645
      %v2662 = vpack.c.b16 %v2646, %v2646
      %v2663 = vpack.c.b16 %v2647, %v2647
      %v2664 = vpack.c.b16 %v2648, %v2648
      %v2665 = vpack.c.b16 %v2649, %v2649
      %v2666 = vpack.c.b16 %v2650, %v2650
      %v2667 = vpack.c.b16 %v2651, %v2651
      %v2669 = vshrl.u32 %v2572, 16
      %v2671 = vshll.u32 %v2572, 16
      %v2673 = vrot.slane %v2671, 1
      %v2674 = vor.u32 %v2669, %v2673
      %v2676 = vshll.u32 %v2652, 16
      %v2678 = vrot.slane %v2676, 1
      %v2679 = vsel %vm1674, %v2674, %v2678
      %v2681 = vshrl.u32 %v2573, 16
      %v2683 = vshll.u32 %v2573, 16
      %v2685 = vrot.slane %v2683, 1
      %v2686 = vor.u32 %v2681, %v2685
      %v2688 = vshll.u32 %v2653, 16
      %v2690 = vrot.slane %v2688, 1
      %v2691 = vsel %vm1674, %v2686, %v2690
      %v2693 = vshrl.u32 %v2574, 16
      %v2695 = vshll.u32 %v2574, 16
      %v2697 = vrot.slane %v2695, 1
      %v2698 = vor.u32 %v2693, %v2697
      %v2700 = vshll.u32 %v2654, 16
      %v2702 = vrot.slane %v2700, 1
      %v2703 = vsel %vm1674, %v2698, %v2702
      %v2705 = vshrl.u32 %v2575, 16
      %v2707 = vshll.u32 %v2575, 16
      %v2709 = vrot.slane %v2707, 1
      %v2710 = vor.u32 %v2705, %v2709
      %v2712 = vshll.u32 %v2655, 16
      %v2714 = vrot.slane %v2712, 1
      %v2715 = vsel %vm1674, %v2710, %v2714
      %v2717 = vshrl.u32 %v2576, 16
      %v2719 = vshll.u32 %v2576, 16
      %v2721 = vrot.slane %v2719, 1
      %v2722 = vor.u32 %v2717, %v2721
      %v2724 = vshll.u32 %v2656, 16
      %v2726 = vrot.slane %v2724, 1
      %v2727 = vsel %vm1674, %v2722, %v2726
      %v2729 = vshrl.u32 %v2577, 16
      %v2731 = vshll.u32 %v2577, 16
      %v2733 = vrot.slane %v2731, 1
      %v2734 = vor.u32 %v2729, %v2733
      %v2736 = vshll.u32 %v2657, 16
      %v2738 = vrot.slane %v2736, 1
      %v2739 = vsel %vm1674, %v2734, %v2738
      %v2741 = vshrl.u32 %v2578, 16
      %v2743 = vshll.u32 %v2578, 16
      %v2745 = vrot.slane %v2743, 1
      %v2746 = vor.u32 %v2741, %v2745
      %v2748 = vshll.u32 %v2658, 16
      %v2750 = vrot.slane %v2748, 1
      %v2751 = vsel %vm1674, %v2746, %v2750
      %v2753 = vshrl.u32 %v2579, 16
      %v2755 = vshll.u32 %v2579, 16
      %v2757 = vrot.slane %v2755, 1
      %v2758 = vor.u32 %v2753, %v2757
      %v2760 = vshll.u32 %v2659, 16
      %v2762 = vrot.slane %v2760, 1
      %v2763 = vsel %vm1674, %v2758, %v2762
      %v2765 = vshrl.u32 %v2580, 16
      %v2767 = vshll.u32 %v2580, 16
      %v2769 = vrot.slane %v2767, 1
      %v2770 = vor.u32 %v2765, %v2769
      %v2772 = vshll.u32 %v2660, 16
      %v2774 = vrot.slane %v2772, 1
      %v2775 = vsel %vm1674, %v2770, %v2774
      %v2777 = vshrl.u32 %v2581, 16
      %v2779 = vshll.u32 %v2581, 16
      %v2781 = vrot.slane %v2779, 1
      %v2782 = vor.u32 %v2777, %v2781
      %v2784 = vshll.u32 %v2661, 16
      %v2786 = vrot.slane %v2784, 1
      %v2787 = vsel %vm1674, %v2782, %v2786
      %v2789 = vshrl.u32 %v2582, 16
      %v2791 = vshll.u32 %v2582, 16
      %v2793 = vrot.slane %v2791, 1
      %v2794 = vor.u32 %v2789, %v2793
      %v2796 = vshll.u32 %v2662, 16
      %v2798 = vrot.slane %v2796, 1
      %v2799 = vsel %vm1674, %v2794, %v2798
      %v2801 = vshrl.u32 %v2583, 16
      %v2803 = vshll.u32 %v2583, 16
      %v2805 = vrot.slane %v2803, 1
      %v2806 = vor.u32 %v2801, %v2805
      %v2808 = vshll.u32 %v2663, 16
      %v2810 = vrot.slane %v2808, 1
      %v2811 = vsel %vm1674, %v2806, %v2810
      %v2813 = vshrl.u32 %v2584, 16
      %v2815 = vshll.u32 %v2584, 16
      %v2817 = vrot.slane %v2815, 1
      %v2818 = vor.u32 %v2813, %v2817
      %v2820 = vshll.u32 %v2664, 16
      %v2822 = vrot.slane %v2820, 1
      %v2823 = vsel %vm1674, %v2818, %v2822
      %v2825 = vshrl.u32 %v2585, 16
      %v2827 = vshll.u32 %v2585, 16
      %v2829 = vrot.slane %v2827, 1
      %v2830 = vor.u32 %v2825, %v2829
      %v2832 = vshll.u32 %v2665, 16
      %v2834 = vrot.slane %v2832, 1
      %v2835 = vsel %vm1674, %v2830, %v2834
      %v2837 = vshrl.u32 %v2586, 16
      %v2839 = vshll.u32 %v2586, 16
      %v2841 = vrot.slane %v2839, 1
      %v2842 = vor.u32 %v2837, %v2841
      %v2844 = vshll.u32 %v2666, 16
      %v2846 = vrot.slane %v2844, 1
      %v2847 = vsel %vm1674, %v2842, %v2846
      %v2849 = vshrl.u32 %v2587, 16
      %v2851 = vshll.u32 %v2587, 16
      %v2853 = vrot.slane %v2851, 1
      %v2854 = vor.u32 %v2849, %v2853
      %v2856 = vshll.u32 %v2667, 16
      %v2858 = vrot.slane %v2856, 1
      %v2859 = vsel %vm1674, %v2854, %v2858
      %2860 = vrot.lane.b32.xlu0 %v2679, 96
      %v2861 = vpop.permute.xlu0 %2860
      %2862 = vrot.lane.b32.xlu0 %v2691, 96
      %v2863 = vpop.permute.xlu0 %2862
      %2864 = vrot.lane.b32.xlu0 %v2703, 96
      %v2865 = vpop.permute.xlu0 %2864
      %2866 = vrot.lane.b32.xlu0 %v2715, 96
      %v2867 = vpop.permute.xlu0 %2866
      %2868 = vrot.lane.b32.xlu0 %v2727, 96
      %v2869 = vpop.permute.xlu0 %2868
      %2870 = vrot.lane.b32.xlu0 %v2739, 96
      %v2871 = vpop.permute.xlu0 %2870
      %2872 = vrot.lane.b32.xlu0 %v2751, 96
      %v2873 = vpop.permute.xlu0 %2872
      %2874 = vrot.lane.b32.xlu0 %v2763, 96
      %v2875 = vpop.permute.xlu0 %2874
      %2876 = vrot.lane.b32.xlu0 %v2775, 96
      %v2877 = vpop.permute.xlu0 %2876
      %2878 = vrot.lane.b32.xlu0 %v2787, 96
      %v2879 = vpop.permute.xlu0 %2878
      %2880 = vrot.lane.b32.xlu0 %v2799, 96
      %v2881 = vpop.permute.xlu0 %2880
      %2882 = vrot.lane.b32.xlu0 %v2811, 96
      %v2883 = vpop.permute.xlu0 %2882
      %2884 = vrot.lane.b32.xlu0 %v2823, 96
      %v2885 = vpop.permute.xlu0 %2884
      %2886 = vrot.lane.b32.xlu0 %v2835, 96
      %v2887 = vpop.permute.xlu0 %2886
      %2888 = vrot.lane.b32.xlu0 %v2847, 96
      %v2889 = vpop.permute.xlu0 %2888
      %2890 = vrot.lane.b32.xlu0 %v2859, 96
      %v2891 = vpop.permute.xlu0 %2890
      %v2908 = vunpack.c.l.b16 %v1530
      %v2909 = vunpack.c.l.b16 %v1531
      %v2910 = vunpack.c.l.b16 %v1532
      %v2911 = vunpack.c.l.b16 %v1533
      %v2912 = vunpack.c.l.b16 %v1534
      %v2913 = vunpack.c.l.b16 %v1535
      %v2914 = vunpack.c.l.b16 %v1536
      %v2915 = vunpack.c.l.b16 %v1537
      %v2916 = vunpack.c.l.b16 %v1538
      %v2917 = vunpack.c.l.b16 %v1539
      %v2918 = vunpack.c.l.b16 %v1540
      %v2919 = vunpack.c.l.b16 %v1541
      %v2920 = vunpack.c.l.b16 %v1542
      %v2921 = vunpack.c.l.b16 %v1543
      %v2922 = vunpack.c.l.b16 %v1544
      %v2923 = vunpack.c.l.b16 %v1545
      %v2924 = vpack.c.b16 %v2541, %v2908
      %v2925 = vpack.c.b16 %v2543, %v2909
      %v2926 = vpack.c.b16 %v2545, %v2910
      %v2927 = vpack.c.b16 %v2547, %v2911
      %v2928 = vpack.c.b16 %v2549, %v2912
      %v2929 = vpack.c.b16 %v2551, %v2913
      %v2930 = vpack.c.b16 %v2553, %v2914
      %v2931 = vpack.c.b16 %v2555, %v2915
      %v2932 = vpack.c.b16 %v2557, %v2916
      %v2933 = vpack.c.b16 %v2559, %v2917
      %v2934 = vpack.c.b16 %v2561, %v2918
      %v2935 = vpack.c.b16 %v2563, %v2919
      %v2936 = vpack.c.b16 %v2565, %v2920
      %v2937 = vpack.c.b16 %v2567, %v2921
      %v2938 = vpack.c.b16 %v2569, %v2922
      %v2939 = vpack.c.b16 %v2571, %v2923
      %v2940 = vrot.slane %v2924, 1
      %v2941 = vrot.slane %v2652, 1
      %v2942 = vsel %vm1947, %v2940, %v2941
      %v2943 = vrot.slane %v2925, 1
      %v2944 = vrot.slane %v2653, 1
      %v2945 = vsel %vm1947, %v2943, %v2944
      %v2946 = vrot.slane %v2926, 1
      %v2947 = vrot.slane %v2654, 1
      %v2948 = vsel %vm1947, %v2946, %v2947
      %v2949 = vrot.slane %v2927, 1
      %v2950 = vrot.slane %v2655, 1
      %v2951 = vsel %vm1947, %v2949, %v2950
      %v2952 = vrot.slane %v2928, 1
      %v2953 = vrot.slane %v2656, 1
      %v2954 = vsel %vm1947, %v2952, %v2953
      %v2955 = vrot.slane %v2929, 1
      %v2956 = vrot.slane %v2657, 1
      %v2957 = vsel %vm1947, %v2955, %v2956
      %v2958 = vrot.slane %v2930, 1
      %v2959 = vrot.slane %v2658, 1
      %v2960 = vsel %vm1947, %v2958, %v2959
      %v2961 = vrot.slane %v2931, 1
      %v2962 = vrot.slane %v2659, 1
      %v2963 = vsel %vm1947, %v2961, %v2962
      %v2964 = vrot.slane %v2932, 1
      %v2965 = vrot.slane %v2660, 1
      %v2966 = vsel %vm1947, %v2964, %v2965
      %v2967 = vrot.slane %v2933, 1
      %v2968 = vrot.slane %v2661, 1
      %v2969 = vsel %vm1947, %v2967, %v2968
      %v2970 = vrot.slane %v2934, 1
      %v2971 = vrot.slane %v2662, 1
      %v2972 = vsel %vm1947, %v2970, %v2971
      %v2973 = vrot.slane %v2935, 1
      %v2974 = vrot.slane %v2663, 1
      %v2975 = vsel %vm1947, %v2973, %v2974
      %v2976 = vrot.slane %v2936, 1
      %v2977 = vrot.slane %v2664, 1
      %v2978 = vsel %vm1947, %v2976, %v2977
      %v2979 = vrot.slane %v2937, 1
      %v2980 = vrot.slane %v2665, 1
      %v2981 = vsel %vm1947, %v2979, %v2980
      %v2982 = vrot.slane %v2938, 1
      %v2983 = vrot.slane %v2666, 1
      %v2984 = vsel %vm1947, %v2982, %v2983
      %v2985 = vrot.slane %v2939, 1
      %v2986 = vrot.slane %v2667, 1
      %v2987 = vsel %vm1947, %v2985, %v2986
      %vm2988 = vcmask 261120
      %v2990 = vsel %vm2988, %v1610, %v1868
      %v2992 = vsel %vm2988, %v1611, %v1870
      %v2994 = vsel %vm2988, %v1612, %v1872
      %v2996 = vsel %vm2988, %v1613, %v1874
      %v2998 = vsel %vm2988, %v1614, %v1876
      %v3000 = vsel %vm2988, %v1615, %v1878
      %v3002 = vsel %vm2988, %v1616, %v1880
      %v3004 = vsel %vm2988, %v1617, %v1882
      %v3006 = vsel %vm2988, %v1618, %v1884
      %v3008 = vsel %vm2988, %v1619, %v1886
      %v3010 = vsel %vm2988, %v1620, %v1888
      %v3012 = vsel %vm2988, %v1621, %v1890
      %v3014 = vsel %vm2988, %v1622, %v1892
      %v3016 = vsel %vm2988, %v1623, %v1894
      %v3018 = vsel %vm2988, %v1624, %v1896
      %v3020 = vsel %vm2988, %v1625, %v1898
      %vm3021 = vcmask 523264
      %v3023 = vsel %vm3021, %v2990, %v1997
      %v3025 = vsel %vm3021, %v2992, %v1999
      %v3027 = vsel %vm3021, %v2994, %v2001
      %v3029 = vsel %vm3021, %v2996, %v2003
      %v3031 = vsel %vm3021, %v2998, %v2005
      %v3033 = vsel %vm3021, %v3000, %v2007
      %v3035 = vsel %vm3021, %v3002, %v2009
      %v3037 = vsel %vm3021, %v3004, %v2011
      %v3039 = vsel %vm3021, %v3006, %v2013
      %v3041 = vsel %vm3021, %v3008, %v2015
      %v3043 = vsel %vm3021, %v3010, %v2017
      %v3045 = vsel %vm3021, %v3012, %v2019
      %v3047 = vsel %vm3021, %v3014, %v2021
      %v3049 = vsel %vm3021, %v3016, %v2023
      %v3051 = vsel %vm3021, %v3018, %v2025
      %v3053 = vsel %vm3021, %v3020, %v2027
      %vm3054 = vcmask 785408
      %v3056 = vsel %vm3054, %v3023, %v2109
      %v3059 = vsel %vm3054, %v3025, %v2111
      %v3062 = vsel %vm3054, %v3027, %v2113
      %v3065 = vsel %vm3054, %v3029, %v2115
      %v3068 = vsel %vm3054, %v3031, %v2117
      %v3071 = vsel %vm3054, %v3033, %v2119
      %v3074 = vsel %vm3054, %v3035, %v2121
      %v3077 = vsel %vm3054, %v3037, %v2123
      %v3080 = vsel %vm3054, %v3039, %v2125
      %v3083 = vsel %vm3054, %v3041, %v2127
      %v3086 = vsel %vm3054, %v3043, %v2129
      %v3089 = vsel %vm3054, %v3045, %v2131
      %v3092 = vsel %vm3054, %v3047, %v2133
      %v3095 = vsel %vm3054, %v3049, %v2135
      %v3098 = vsel %vm3054, %v3051, %v2137
      %v3101 = vsel %vm3054, %v3053, %v2139
      %v3105 = vsel %vm2988, %v2199, %v2477
      %v3108 = vsel %vm2988, %v2211, %v2479
      %v3111 = vsel %vm2988, %v2223, %v2481
      %v3114 = vsel %vm2988, %v2235, %v2483
      %v3117 = vsel %vm2988, %v2247, %v2485
      %v3120 = vsel %vm2988, %v2259, %v2487
      %v3123 = vsel %vm2988, %v2271, %v2489
      %v3126 = vsel %vm2988, %v2283, %v2491
      %v3129 = vsel %vm2988, %v2295, %v2493
      %v3132 = vsel %vm2988, %v2307, %v2495
      %v3135 = vsel %vm2988, %v2319, %v2497
      %v3138 = vsel %vm2988, %v2331, %v2499
      %v3141 = vsel %vm2988, %v2343, %v2501
      %v3144 = vsel %vm2988, %v2355, %v2503
      %v3147 = vsel %vm2988, %v2367, %v2505
      %v3150 = vsel %vm2988, %v2379, %v2507
      %v3152 = vsel %vm3021, %v3105, %v2589
      %v3154 = vsel %vm3021, %v3108, %v2591
      %v3156 = vsel %vm3021, %v3111, %v2593
      %v3158 = vsel %vm3021, %v3114, %v2595
      %v3160 = vsel %vm3021, %v3117, %v2597
      %v3162 = vsel %vm3021, %v3120, %v2599
      %v3164 = vsel %vm3021, %v3123, %v2601
      %v3166 = vsel %vm3021, %v3126, %v2603
      %v3168 = vsel %vm3021, %v3129, %v2605
      %v3170 = vsel %vm3021, %v3132, %v2607
      %v3172 = vsel %vm3021, %v3135, %v2609
      %v3174 = vsel %vm3021, %v3138, %v2611
      %v3176 = vsel %vm3021, %v3141, %v2613
      %v3178 = vsel %vm3021, %v3144, %v2615
      %v3180 = vsel %vm3021, %v3147, %v2617
      %v3182 = vsel %vm3021, %v3150, %v2619
      %v3184 = vsel %vm3054, %v3152, %v2861
      %v3187 = vsel %vm3054, %v3154, %v2863
      %v3190 = vsel %vm3054, %v3156, %v2865
      %v3193 = vsel %vm3054, %v3158, %v2867
      %v3196 = vsel %vm3054, %v3160, %v2869
      %v3199 = vsel %vm3054, %v3162, %v2871
      %v3202 = vsel %vm3054, %v3164, %v2873
      %v3205 = vsel %vm3054, %v3166, %v2875
      %v3208 = vsel %vm3054, %v3168, %v2877
      %v3211 = vsel %vm3054, %v3170, %v2879
      %v3214 = vsel %vm3054, %v3172, %v2881
      %v3217 = vsel %vm3054, %v3174, %v2883
      %v3220 = vsel %vm3054, %v3176, %v2885
      %v3223 = vsel %vm3054, %v3178, %v2887
      %v3226 = vsel %vm3054, %v3180, %v2889
      %v3229 = vsel %vm3054, %v3182, %v2891
      %v3231 = vld [vmem:[%s3] sm:$0xf]
      %v3232 = vld [vmem:[%s3 + $0x4] sm:$0xf]
      %v3233 = vld [vmem:[%s3 + $0x8] sm:$0xf]
      %v3234 = vld [vmem:[%s3 + $0xc] sm:$0xf]
      %v3235 = vld [vmem:[%s3 + $0x10] sm:$0xf]
      %v3236 = vld [vmem:[%s3 + $0x14] sm:$0xf]
      %v3237 = vld [vmem:[%s3 + $0x18] sm:$0xf]
      %v3238 = vld [vmem:[%s3 + $0x1c] sm:$0xf]
      %v3239 = vld [vmem:[%s3 + $0x20] sm:$0xf]
      %v3240 = vld [vmem:[%s3 + $0x24] sm:$0xf]
      %v3241 = vld [vmem:[%s3 + $0x28] sm:$0xf]
      %v3242 = vld [vmem:[%s3 + $0x2c] sm:$0xf]
      %v3243 = vld [vmem:[%s3 + $0x30] sm:$0xf]
      %v3244 = vld [vmem:[%s3 + $0x34] sm:$0xf]
      %v3245 = vld [vmem:[%s3 + $0x38] sm:$0xf]
      %v3246 = vld [vmem:[%s3 + $0x3c] sm:$0xf]
      %v3247 = vld [vmem:[%s3 + $0x40] sm:$0xf]
      %v3248 = vld [vmem:[%s3 + $0x44] sm:$0xf]
      %v3249 = vld [vmem:[%s3 + $0x48] sm:$0xf]
      %v3250 = vld [vmem:[%s3 + $0x4c] sm:$0xf]
      %v3251 = vld [vmem:[%s3 + $0x50] sm:$0xf]
      %v3252 = vld [vmem:[%s3 + $0x54] sm:$0xf]
      %v3253 = vld [vmem:[%s3 + $0x58] sm:$0xf]
      %v3254 = vld [vmem:[%s3 + $0x5c] sm:$0xf]
      %v3255 = vld [vmem:[%s3 + $0x60] sm:$0xf]
      %v3256 = vld [vmem:[%s3 + $0x64] sm:$0xf]
      %v3257 = vld [vmem:[%s3 + $0x68] sm:$0xf]
      %v3258 = vld [vmem:[%s3 + $0x6c] sm:$0xf]
      %v3259 = vld [vmem:[%s3 + $0x70] sm:$0xf]
      %v3260 = vld [vmem:[%s3 + $0x74] sm:$0xf]
      %v3261 = vld [vmem:[%s3 + $0x78] sm:$0xf]
      %v3262 = vld [vmem:[%s3 + $0x7c] sm:$0xf]
      %v3263 = vld [vmem:[%s3 + $0x80] sm:$0xf]
      %v3264 = vld [vmem:[%s3 + $0x84] sm:$0xf]
      %v3265 = vld [vmem:[%s3 + $0x88] sm:$0xf]
      %v3266 = vld [vmem:[%s3 + $0x8c] sm:$0xf]
      %v3303 = vunpack.c.l.b16 %v3231
      %v3304 = vunpack.c.l.b16 %v3232
      %v3305 = vunpack.c.l.b16 %v3233
      %v3306 = vunpack.c.l.b16 %v3234
      %v3307 = vunpack.c.l.b16 %v3235
      %v3308 = vunpack.c.l.b16 %v3236
      %v3309 = vunpack.c.l.b16 %v3237
      %v3310 = vunpack.c.l.b16 %v3238
      %v3311 = vunpack.c.l.b16 %v3239
      %v3312 = vunpack.c.l.b16 %v3240
      %v3313 = vunpack.c.l.b16 %v3241
      %v3314 = vunpack.c.l.b16 %v3242
      %v3315 = vunpack.c.l.b16 %v3243
      %v3316 = vunpack.c.l.b16 %v3244
      %v3317 = vunpack.c.l.b16 %v3245
      %v3318 = vunpack.c.l.b16 %v3246
      %v3319 = vunpack.c.l.b16 %v3247
      %v3320 = vunpack.c.l.b16 %v3248
      %v3321 = vunpack.c.l.b16 %v3249
      %v3322 = vunpack.c.l.b16 %v3250
      %v3323 = vunpack.c.l.b16 %v3251
      %v3324 = vunpack.c.l.b16 %v3252
      %v3325 = vunpack.c.l.b16 %v3253
      %v3326 = vunpack.c.l.b16 %v3254
      %v3327 = vunpack.c.l.b16 %v3255
      %v3328 = vunpack.c.l.b16 %v3256
      %v3329 = vunpack.c.l.b16 %v3257
      %v3330 = vunpack.c.l.b16 %v3258
      %v3331 = vunpack.c.l.b16 %v3259
      %v3332 = vunpack.c.l.b16 %v3260
      %v3333 = vunpack.c.l.b16 %v3261
      %v3334 = vunpack.c.l.b16 %v3262
      %v3335 = vunpack.c.l.b16 %v3263
      %v3336 = vunpack.c.l.b16 %v3264
      %v3337 = vunpack.c.l.b16 %v3265
      %v3338 = vunpack.c.l.b16 %v3266
      %v3339 = vpack.c.b16 %v3304, %v3303
      %v3340 = vpack.c.b16 %v3306, %v3305
      %v3341 = vpack.c.b16 %v3308, %v3307
      %v3342 = vpack.c.b16 %v3310, %v3309
      %v3343 = vpack.c.b16 %v3312, %v3311
      %v3344 = vpack.c.b16 %v3314, %v3313
      %v3345 = vpack.c.b16 %v3316, %v3315
      %v3346 = vpack.c.b16 %v3318, %v3317
      %v3347 = vpack.c.b16 %v3320, %v3319
      %v3348 = vpack.c.b16 %v3322, %v3321
      %v3349 = vpack.c.b16 %v3324, %v3323
      %v3350 = vpack.c.b16 %v3326, %v3325
      %v3351 = vpack.c.b16 %v3328, %v3327
      %v3352 = vpack.c.b16 %v3330, %v3329
      %v3353 = vpack.c.b16 %v3332, %v3331
      %v3354 = vpack.c.b16 %v3334, %v3333
      %v3355 = vpack.c.b16 %v3336, %v3335
      %v3356 = vpack.c.b16 %v3338, %v3337
      %v3376 = vsel %vm2988, %v2942, 0
      %v3379 = vsel %vm2988, %v2945, 0
      %v3382 = vsel %vm2988, %v2948, 0
      %v3385 = vsel %vm2988, %v2951, 0
      %v3388 = vsel %vm2988, %v2954, 0
      %v3391 = vsel %vm2988, %v2957, 0
      %v3394 = vsel %vm2988, %v2960, 0
      %v3397 = vsel %vm2988, %v2963, 0
      %v3400 = vsel %vm2988, %v2966, 0
      %v3403 = vsel %vm2988, %v2969, 0
      %v3406 = vsel %vm2988, %v2972, 0
      %v3409 = vsel %vm2988, %v2975, 0
      %v3412 = vsel %vm2988, %v2978, 0
      %v3415 = vsel %vm2988, %v2981, 0
      %v3418 = vsel %vm2988, %v2984, 0
      %v3421 = vsel %vm2988, %v2987, 0
      %3423 = vmatprep.subr.bf16.mxu0 0
      %3424 = vmatpush1.bf16.msra.mxu0 %v3339
      %3425 = vmatprep.subr.bf16.mxu0 0
      %3426 = vmatpush1.bf16.msra.mxu0 %v3340
      %3427 = vmatprep.subr.bf16.mxu0 0
      %3428 = vmatpush1.bf16.msra.mxu0 %v3341
      %3429 = vmatprep.subr.bf16.mxu0 0
      %3430 = vmatpush1.bf16.msra.mxu0 %v3342
      %3431 = vmatprep.subr.bf16.mxu0 0
      %3432 = vmatpush1.bf16.msra.mxu0 %v3343
      %3433 = vmatprep.subr.bf16.mxu0 0
      %3434 = vmatpush1.bf16.msra.mxu0 %v3344
      %3435 = vmatprep.subr.bf16.mxu0 0
      %3436 = vmatpush1.bf16.msra.mxu0 %v3345
      %3437 = vmatprep.subr.bf16.mxu0 0
      %3438 = vmatpush1.bf16.msra.mxu0 %v3346
      %3439 = vmatprep.subr.bf16.mxu0 0
      %3440 = vmatpush1.bf16.msra.mxu0 %v3347
      %3441 = vmatprep.subr.bf16.mxu0 0
      %3442 = vmatpush1.bf16.msra.mxu0 %v3348
      %3443 = vmatprep.subr.bf16.mxu0 0
      %3444 = vmatpush1.bf16.msra.mxu0 %v3349
      %3445 = vmatprep.subr.bf16.mxu0 0
      %3446 = vmatpush1.bf16.msra.mxu0 %v3350
      %3447 = vmatprep.subr.bf16.mxu0 0
      %3448 = vmatpush1.bf16.msra.mxu0 %v3351
      %3449 = vmatprep.subr.bf16.mxu0 0
      %3450 = vmatpush1.bf16.msra.mxu0 %v3352
      %3451 = vmatprep.subr.bf16.mxu0 0
      %3452 = vmatpush1.bf16.msra.mxu0 %v3353
      %3453 = vmatprep.subr.bf16.mxu0 0
      %3454 = vmatpush1.bf16.msra.mxu0 %v3354
      %3455 = vmatprep.mubr.bf16.mxu0 %v3184
      %3456 = vmatmul.mubr.bf16.gmra.mrb[0].mxu0 %v3056
      %v3457 = vpop.f32.mrb[0].mxu0
      %v3458 = vadd.f32 0.0, %v3457
      %v3459 = vpop.f32.mrb[0].mxu0
      %v3460 = vpop.f32.mrb[0].mxu0
      %v3461 = vadd.f32 0.0, %v3460
      %v3462 = vpop.f32.mrb[0].mxu0
      %3463 = vmatprep.mubr.bf16.mxu0 %v3187
      %3464 = vmatmul.mubr.bf16.gmra.mrb[0].mxu0 %v3059
      %v3465 = vpop.f32.mrb[0].mxu0
      %v3466 = vadd.f32 0.0, %v3465
      %v3467 = vpop.f32.mrb[0].mxu0
      %v3468 = vpop.f32.mrb[0].mxu0
      %v3469 = vadd.f32 0.0, %v3468
      %v3470 = vpop.f32.mrb[0].mxu0
      %3471 = vmatprep.mubr.bf16.mxu0 %v3190
      %3472 = vmatmul.mubr.bf16.gmra.mrb[0].mxu0 %v3062
      %v3473 = vpop.f32.mrb[0].mxu0
      %v3474 = vadd.f32 0.0, %v3473
      %v3475 = vpop.f32.mrb[0].mxu0
      %v3476 = vpop.f32.mrb[0].mxu0
      %v3477 = vadd.f32 0.0, %v3476
      %v3478 = vpop.f32.mrb[0].mxu0
      %3479 = vmatprep.mubr.bf16.mxu0 %v3193
      %3480 = vmatmul.mubr.bf16.gmra.mrb[0].mxu0 %v3065
      %v3481 = vpop.f32.mrb[0].mxu0
      %v3482 = vadd.f32 0.0, %v3481
      %v3483 = vpop.f32.mrb[0].mxu0
      %v3484 = vpop.f32.mrb[0].mxu0
      %v3485 = vadd.f32 0.0, %v3484
      %v3486 = vpop.f32.mrb[0].mxu0
      %3487 = vmatprep.mubr.bf16.mxu0 %v3196
      %3488 = vmatmul.mubr.bf16.gmra.mrb[0].mxu0 %v3068
      %v3489 = vpop.f32.mrb[0].mxu0
      %v3490 = vadd.f32 0.0, %v3489
      %v3491 = vpop.f32.mrb[0].mxu0
      %v3492 = vpop.f32.mrb[0].mxu0
      %v3493 = vadd.f32 0.0, %v3492
      %v3494 = vpop.f32.mrb[0].mxu0
      %3495 = vmatprep.mubr.bf16.mxu0 %v3199
      %3496 = vmatmul.mubr.bf16.gmra.mrb[0].mxu0 %v3071
      %v3497 = vpop.f32.mrb[0].mxu0
      %v3498 = vadd.f32 0.0, %v3497
      %v3499 = vpop.f32.mrb[0].mxu0
      %v3500 = vpop.f32.mrb[0].mxu0
      %v3501 = vadd.f32 0.0, %v3500
      %v3502 = vpop.f32.mrb[0].mxu0
      %3503 = vmatprep.mubr.bf16.mxu0 %v3202
      %3504 = vmatmul.mubr.bf16.gmra.mrb[0].mxu0 %v3074
      %v3505 = vpop.f32.mrb[0].mxu0
      %v3506 = vadd.f32 0.0, %v3505
      %v3507 = vpop.f32.mrb[0].mxu0
      %v3508 = vpop.f32.mrb[0].mxu0
      %v3509 = vadd.f32 0.0, %v3508
      %v3510 = vpop.f32.mrb[0].mxu0
      %3511 = vmatprep.mubr.bf16.mxu0 %v3205
      %3512 = vmatmul.mubr.bf16.gmra.mrb[0].mxu0 %v3077
      %v3513 = vpop.f32.mrb[0].mxu0
      %v3514 = vadd.f32 0.0, %v3513
      %v3515 = vpop.f32.mrb[0].mxu0
      %v3516 = vpop.f32.mrb[0].mxu0
      %v3517 = vadd.f32 0.0, %v3516
      %v3518 = vpop.f32.mrb[0].mxu0
      %3519 = vmatprep.mubr.bf16.mxu0 %v3208
      %3520 = vmatmul.mubr.bf16.gmra.mrb[0].mxu0 %v3080
      %v3521 = vpop.f32.mrb[0].mxu0
      %v3522 = vadd.f32 0.0, %v3521
      %v3523 = vpop.f32.mrb[0].mxu0
      %v3524 = vpop.f32.mrb[0].mxu0
      %v3525 = vadd.f32 0.0, %v3524
      %v3526 = vpop.f32.mrb[0].mxu0
      %3527 = vmatprep.mubr.bf16.mxu0 %v3211
      %3528 = vmatmul.mubr.bf16.gmra.mrb[0].mxu0 %v3083
      %v3529 = vpop.f32.mrb[0].mxu0
      %v3530 = vadd.f32 0.0, %v3529
      %v3531 = vpop.f32.mrb[0].mxu0
      %v3532 = vpop.f32.mrb[0].mxu0
      %v3533 = vadd.f32 0.0, %v3532
      %v3534 = vpop.f32.mrb[0].mxu0
      %3535 = vmatprep.mubr.bf16.mxu0 %v3214
      %3536 = vmatmul.mubr.bf16.gmra.mrb[0].mxu0 %v3086
      %v3537 = vpop.f32.mrb[0].mxu0
      %v3538 = vadd.f32 0.0, %v3537
      %v3539 = vpop.f32.mrb[0].mxu0
      %v3540 = vpop.f32.mrb[0].mxu0
      %v3541 = vadd.f32 0.0, %v3540
      %v3542 = vpop.f32.mrb[0].mxu0
      %3543 = vmatprep.mubr.bf16.mxu0 %v3217
      %3544 = vmatmul.mubr.bf16.gmra.mrb[0].mxu0 %v3089
      %v3545 = vpop.f32.mrb[0].mxu0
      %v3546 = vadd.f32 0.0, %v3545
      %v3547 = vpop.f32.mrb[0].mxu0
      %v3548 = vpop.f32.mrb[0].mxu0
      %v3549 = vadd.f32 0.0, %v3548
      %v3550 = vpop.f32.mrb[0].mxu0
      %3551 = vmatprep.mubr.bf16.mxu0 %v3220
      %3552 = vmatmul.mubr.bf16.gmra.mrb[0].mxu0 %v3092
      %v3553 = vpop.f32.mrb[0].mxu0
      %v3554 = vadd.f32 0.0, %v3553
      %v3555 = vpop.f32.mrb[0].mxu0
      %v3556 = vpop.f32.mrb[0].mxu0
      %v3557 = vadd.f32 0.0, %v3556
      %v3558 = vpop.f32.mrb[0].mxu0
      %3559 = vmatprep.mubr.bf16.mxu0 %v3223
      %3560 = vmatmul.mubr.bf16.gmra.mrb[0].mxu0 %v3095
      %v3561 = vpop.f32.mrb[0].mxu0
      %v3562 = vadd.f32 0.0, %v3561
      %v3563 = vpop.f32.mrb[0].mxu0
      %v3564 = vpop.f32.mrb[0].mxu0
      %v3565 = vadd.f32 0.0, %v3564
      %v3566 = vpop.f32.mrb[0].mxu0
      %3567 = vmatprep.mubr.bf16.mxu0 %v3226
      %3568 = vmatmul.mubr.bf16.gmra.mrb[0].mxu0 %v3098
      %v3569 = vpop.f32.mrb[0].mxu0
      %v3570 = vadd.f32 0.0, %v3569
      %v3571 = vpop.f32.mrb[0].mxu0
      %v3572 = vpop.f32.mrb[0].mxu0
      %v3573 = vadd.f32 0.0, %v3572
      %v3574 = vpop.f32.mrb[0].mxu0
      %3575 = vmatprep.mubr.bf16.mxu0 %v3229
      %3576 = vmatmul.mubr.bf16.gmra.mrb[0].mxu0 %v3101
      %v3577 = vpop.f32.mrb[0].mxu0
      %v3578 = vadd.f32 0.0, %v3577
      %v3579 = vpop.f32.mrb[0].mxu0
      %v3580 = vpop.f32.mrb[0].mxu0
      %v3581 = vadd.f32 0.0, %v3580
      %v3582 = vpop.f32.mrb[0].mxu0
      %3583 = vdwg.mxu0
      %3584 = vmatprep.subr.bf16.mxu0 0
      %3585 = vmatpush1.bf16.msra.mxu0 %v3355
      %3586 = vmatprep.subr.bf16.mxu0 0
      %3587 = vmatpush1.bf16.msra.mxu0 %v3356
      %3588 = vmatprep.subr.bf16.mxu0 0
      %3589 = vmatpush1.bf16.msra.mxu0 0
      %3590 = vmatprep.subr.bf16.mxu0 0
      %3591 = vmatpush1.bf16.msra.mxu0 0
      %3592 = vmatprep.subr.bf16.mxu0 0
      %3593 = vmatpush1.bf16.msra.mxu0 0
      %3594 = vmatprep.subr.bf16.mxu0 0
      %3595 = vmatpush1.bf16.msra.mxu0 0
      %3596 = vmatprep.subr.bf16.mxu0 0
      %3597 = vmatpush1.bf16.msra.mxu0 0
      %3598 = vmatprep.subr.bf16.mxu0 0
      %3599 = vmatpush1.bf16.msra.mxu0 0
      %3600 = vmatprep.subr.bf16.mxu0 0
      %3601 = vmatpush1.bf16.msra.mxu0 0
      %3602 = vmatprep.subr.bf16.mxu0 0
      %3603 = vmatpush1.bf16.msra.mxu0 0
      %3604 = vmatprep.subr.bf16.mxu0 0
      %3605 = vmatpush1.bf16.msra.mxu0 0
      %3606 = vmatprep.subr.bf16.mxu0 0
      %3607 = vmatpush1.bf16.msra.mxu0 0
      %3608 = vmatprep.subr.bf16.mxu0 0
      %3609 = vmatpush1.bf16.msra.mxu0 0
      %3610 = vmatprep.subr.bf16.mxu0 0
      %3611 = vmatpush1.bf16.msra.mxu0 0
      %3612 = vmatprep.subr.bf16.mxu0 0
      %3613 = vmatpush1.bf16.msra.mxu0 0
      %3614 = vmatprep.subr.bf16.mxu0 0
      %3615 = vmatpush1.bf16.msra.mxu0 0
      %3616 = vmatprep.mubr.bf16.mxu0 0
      %3617 = vmatmul.mubr.bf16.gmra.mrb[0].mxu0 %v3376
      %v3618 = vpop.f32.mrb[0].mxu0
      %v3619 = vadd.f32 %v3458, %v3618
      %v3620 = vpop.f32.mrb[0].mxu0
      %v3621 = vpop.f32.mrb[0].mxu0
      %v3622 = vadd.f32 %v3461, %v3621
      %v3623 = vpop.f32.mrb[0].mxu0
      %3624 = vmatprep.mubr.bf16.mxu0 0
      %3625 = vmatmul.mubr.bf16.gmra.mrb[0].mxu0 %v3379
      %v3626 = vpop.f32.mrb[0].mxu0
      %v3627 = vadd.f32 %v3466, %v3626
      %v3628 = vpop.f32.mrb[0].mxu0
      %v3629 = vpop.f32.mrb[0].mxu0
      %v3630 = vadd.f32 %v3469, %v3629
      %v3631 = vpop.f32.mrb[0].mxu0
      %3632 = vmatprep.mubr.bf16.mxu0 0
      %3633 = vmatmul.mubr.bf16.gmra.mrb[0].mxu0 %v3382
      %v3634 = vpop.f32.mrb[0].mxu0
      %v3635 = vadd.f32 %v3474, %v3634
      %v3636 = vpop.f32.mrb[0].mxu0
      %v3637 = vpop.f32.mrb[0].mxu0
      %v3638 = vadd.f32 %v3477, %v3637
      %v3639 = vpop.f32.mrb[0].mxu0
      %3640 = vmatprep.mubr.bf16.mxu0 0
      %3641 = vmatmul.mubr.bf16.gmra.mrb[0].mxu0 %v3385
      %v3642 = vpop.f32.mrb[0].mxu0
      %v3643 = vadd.f32 %v3482, %v3642
      %v3644 = vpop.f32.mrb[0].mxu0
      %v3645 = vpop.f32.mrb[0].mxu0
      %v3646 = vadd.f32 %v3485, %v3645
      %v3647 = vpop.f32.mrb[0].mxu0
      %3648 = vmatprep.mubr.bf16.mxu0 0
      %3649 = vmatmul.mubr.bf16.gmra.mrb[0].mxu0 %v3388
      %v3650 = vpop.f32.mrb[0].mxu0
      %v3651 = vadd.f32 %v3490, %v3650
      %v3652 = vpop.f32.mrb[0].mxu0
      %v3653 = vpop.f32.mrb[0].mxu0
      %v3654 = vadd.f32 %v3493, %v3653
      %v3655 = vpop.f32.mrb[0].mxu0
      %3656 = vmatprep.mubr.bf16.mxu0 0
      %3657 = vmatmul.mubr.bf16.gmra.mrb[0].mxu0 %v3391
      %v3658 = vpop.f32.mrb[0].mxu0
      %v3659 = vadd.f32 %v3498, %v3658
      %v3660 = vpop.f32.mrb[0].mxu0
      %v3661 = vpop.f32.mrb[0].mxu0
      %v3662 = vadd.f32 %v3501, %v3661
      %v3663 = vpop.f32.mrb[0].mxu0
      %3664 = vmatprep.mubr.bf16.mxu0 0
      %3665 = vmatmul.mubr.bf16.gmra.mrb[0].mxu0 %v3394
      %v3666 = vpop.f32.mrb[0].mxu0
      %v3667 = vadd.f32 %v3506, %v3666
      %v3668 = vpop.f32.mrb[0].mxu0
      %v3669 = vpop.f32.mrb[0].mxu0
      %v3670 = vadd.f32 %v3509, %v3669
      %v3671 = vpop.f32.mrb[0].mxu0
      %3672 = vmatprep.mubr.bf16.mxu0 0
      %3673 = vmatmul.mubr.bf16.gmra.mrb[0].mxu0 %v3397
      %v3674 = vpop.f32.mrb[0].mxu0
      %v3675 = vadd.f32 %v3514, %v3674
      %v3676 = vpop.f32.mrb[0].mxu0
      %v3677 = vpop.f32.mrb[0].mxu0
      %v3678 = vadd.f32 %v3517, %v3677
      %v3679 = vpop.f32.mrb[0].mxu0
      %3680 = vmatprep.mubr.bf16.mxu0 0
      %3681 = vmatmul.mubr.bf16.gmra.mrb[0].mxu0 %v3400
      %v3682 = vpop.f32.mrb[0].mxu0
      %v3683 = vadd.f32 %v3522, %v3682
      %v3684 = vpop.f32.mrb[0].mxu0
      %v3685 = vpop.f32.mrb[0].mxu0
      %v3686 = vadd.f32 %v3525, %v3685
      %v3687 = vpop.f32.mrb[0].mxu0
      %3688 = vmatprep.mubr.bf16.mxu0 0
      %3689 = vmatmul.mubr.bf16.gmra.mrb[0].mxu0 %v3403
      %v3690 = vpop.f32.mrb[0].mxu0
      %v3691 = vadd.f32 %v3530, %v3690
      %v3692 = vpop.f32.mrb[0].mxu0
      %v3693 = vpop.f32.mrb[0].mxu0
      %v3694 = vadd.f32 %v3533, %v3693
      %v3695 = vpop.f32.mrb[0].mxu0
      %3696 = vmatprep.mubr.bf16.mxu0 0
      %3697 = vmatmul.mubr.bf16.gmra.mrb[0].mxu0 %v3406
      %v3698 = vpop.f32.mrb[0].mxu0
      %v3699 = vadd.f32 %v3538, %v3698
      %v3700 = vpop.f32.mrb[0].mxu0
      %v3701 = vpop.f32.mrb[0].mxu0
      %v3702 = vadd.f32 %v3541, %v3701
      %v3703 = vpop.f32.mrb[0].mxu0
      %3704 = vmatprep.mubr.bf16.mxu0 0
      %3705 = vmatmul.mubr.bf16.gmra.mrb[0].mxu0 %v3409
      %v3706 = vpop.f32.mrb[0].mxu0
      %v3707 = vadd.f32 %v3546, %v3706
      %v3708 = vpop.f32.mrb[0].mxu0
      %v3709 = vpop.f32.mrb[0].mxu0
      %v3710 = vadd.f32 %v3549, %v3709
      %v3711 = vpop.f32.mrb[0].mxu0
      %3712 = vmatprep.mubr.bf16.mxu0 0
      %3713 = vmatmul.mubr.bf16.gmra.mrb[0].mxu0 %v3412
      %v3714 = vpop.f32.mrb[0].mxu0
      %v3715 = vadd.f32 %v3554, %v3714
      %v3716 = vpop.f32.mrb[0].mxu0
      %v3717 = vpop.f32.mrb[0].mxu0
      %v3718 = vadd.f32 %v3557, %v3717
      %v3719 = vpop.f32.mrb[0].mxu0
      %3720 = vmatprep.mubr.bf16.mxu0 0
      %3721 = vmatmul.mubr.bf16.gmra.mrb[0].mxu0 %v3415
      %v3722 = vpop.f32.mrb[0].mxu0
      %v3723 = vadd.f32 %v3562, %v3722
      %v3724 = vpop.f32.mrb[0].mxu0
      %v3725 = vpop.f32.mrb[0].mxu0
      %v3726 = vadd.f32 %v3565, %v3725
      %v3727 = vpop.f32.mrb[0].mxu0
      %3728 = vmatprep.mubr.bf16.mxu0 0
      %3729 = vmatmul.mubr.bf16.gmra.mrb[0].mxu0 %v3418
      %v3730 = vpop.f32.mrb[0].mxu0
      %v3731 = vadd.f32 %v3570, %v3730
      %v3732 = vpop.f32.mrb[0].mxu0
      %v3733 = vpop.f32.mrb[0].mxu0
      %v3734 = vadd.f32 %v3573, %v3733
      %v3735 = vpop.f32.mrb[0].mxu0
      %3736 = vmatprep.mubr.bf16.mxu0 0
      %3737 = vmatmul.mubr.bf16.gmra.mrb[0].mxu0 %v3421
      %v3738 = vpop.f32.mrb[0].mxu0
      %v3739 = vadd.f32 %v3578, %v3738
      %v3740 = vpop.f32.mrb[0].mxu0
      %v3741 = vpop.f32.mrb[0].mxu0
      %v3742 = vadd.f32 %v3581, %v3741
      %v3743 = vpop.f32.mrb[0].mxu0
      %3744 = vdwg.mxu0
      %3745 = vst.msk [vmem:[%s430] sm:$0xff] %vm2988, %v3619
      %3746 = vst.msk [vmem:[%s430 + $0x8] sm:$0xff] %vm2988, %v3622
      %3747 = vst.msk [vmem:[%s430 + $0x10] sm:$0xff] %vm2988, %v3627
      %3748 = vst.msk [vmem:[%s430 + $0x18] sm:$0xff] %vm2988, %v3630
      %3749 = vst.msk [vmem:[%s430 + $0x20] sm:$0xff] %vm2988, %v3635
      %3750 = vst.msk [vmem:[%s430 + $0x28] sm:$0xff] %vm2988, %v3638
      %3751 = vst.msk [vmem:[%s430 + $0x30] sm:$0xff] %vm2988, %v3643
      %3752 = vst.msk [vmem:[%s430 + $0x38] sm:$0xff] %vm2988, %v3646
      %3753 = vst.msk [vmem:[%s430 + $0x40] sm:$0xff] %vm2988, %v3651
      %3754 = vst.msk [vmem:[%s430 + $0x48] sm:$0xff] %vm2988, %v3654
      %3755 = vst.msk [vmem:[%s430 + $0x50] sm:$0xff] %vm2988, %v3659
      %3756 = vst.msk [vmem:[%s430 + $0x58] sm:$0xff] %vm2988, %v3662
      %3757 = vst.msk [vmem:[%s430 + $0x60] sm:$0xff] %vm2988, %v3667
      %3758 = vst.msk [vmem:[%s430 + $0x68] sm:$0xff] %vm2988, %v3670
      %3759 = vst.msk [vmem:[%s430 + $0x70] sm:$0xff] %vm2988, %v3675
      %3760 = vst.msk [vmem:[%s430 + $0x78] sm:$0xff] %vm2988, %v3678
      %3761 = vst.msk [vmem:[%s430 + $0x80] sm:$0xff] %vm2988, %v3683
      %3762 = vst.msk [vmem:[%s430 + $0x88] sm:$0xff] %vm2988, %v3686
      %3763 = vst.msk [vmem:[%s430 + $0x90] sm:$0xff] %vm2988, %v3691
      %3764 = vst.msk [vmem:[%s430 + $0x98] sm:$0xff] %vm2988, %v3694
      %3765 = vst.msk [vmem:[%s430 + $0xa0] sm:$0xff] %vm2988, %v3699
      %3766 = vst.msk [vmem:[%s430 + $0xa8] sm:$0xff] %vm2988, %v3702
      %3767 = vst.msk [vmem:[%s430 + $0xb0] sm:$0xff] %vm2988, %v3707
      %3768 = vst.msk [vmem:[%s430 + $0xb8] sm:$0xff] %vm2988, %v3710
      %3769 = vst.msk [vmem:[%s430 + $0xc0] sm:$0xff] %vm2988, %v3715
      %3770 = vst.msk [vmem:[%s430 + $0xc8] sm:$0xff] %vm2988, %v3718
      %3771 = vst.msk [vmem:[%s430 + $0xd0] sm:$0xff] %vm2988, %v3723
      %3772 = vst.msk [vmem:[%s430 + $0xd8] sm:$0xff] %vm2988, %v3726
      %3773 = vst.msk [vmem:[%s430 + $0xe0] sm:$0xff] %vm2988, %v3731
      %3774 = vst.msk [vmem:[%s430 + $0xe8] sm:$0xff] %vm2988, %v3734
      %3775 = vst.msk [vmem:[%s430 + $0xf0] sm:$0xff] %vm2988, %v3739
      %3776 = vst.msk [vmem:[%s430 + $0xf8] sm:$0xff] %vm2988, %v3742
      %v3777 = vsel %vm2988, %v3619, 0.0
      %v3778 = vsel %vm2988, %v3622, 0.0
      %v3779 = vadd.f32 %v3777, %v3778
      %v3780 = vsel %vm2988, %v3627, 0.0
      %v3781 = vadd.f32 %v3779, %v3780
      %v3782 = vsel %vm2988, %v3630, 0.0
      %v3783 = vadd.f32 %v3781, %v3782
      %v3784 = vsel %vm2988, %v3635, 0.0
      %v3785 = vadd.f32 %v3783, %v3784
      %v3786 = vsel %vm2988, %v3638, 0.0
      %v3787 = vadd.f32 %v3785, %v3786
      %v3788 = vsel %vm2988, %v3643, 0.0
      %v3789 = vadd.f32 %v3787, %v3788
      %v3790 = vsel %vm2988, %v3646, 0.0
      %v3791 = vadd.f32 %v3789, %v3790
      %v3792 = vsel %vm2988, %v3651, 0.0
      %v3793 = vadd.f32 %v3791, %v3792
      %v3794 = vsel %vm2988, %v3654, 0.0
      %v3795 = vadd.f32 %v3793, %v3794
      %v3796 = vsel %vm2988, %v3659, 0.0
      %v3797 = vadd.f32 %v3795, %v3796
      %v3798 = vsel %vm2988, %v3662, 0.0
      %v3799 = vadd.f32 %v3797, %v3798
      %v3800 = vsel %vm2988, %v3667, 0.0
      %v3801 = vadd.f32 %v3799, %v3800
      %v3802 = vsel %vm2988, %v3670, 0.0
      %v3803 = vadd.f32 %v3801, %v3802
      %v3804 = vsel %vm2988, %v3675, 0.0
      %v3805 = vadd.f32 %v3803, %v3804
      %v3806 = vsel %vm2988, %v3678, 0.0
      %v3807 = vadd.f32 %v3805, %v3806
      %v3808 = vsel %vm2988, %v3683, 0.0
      %v3809 = vadd.f32 %v3807, %v3808
      %v3810 = vsel %vm2988, %v3686, 0.0
      %v3811 = vadd.f32 %v3809, %v3810
      %v3812 = vsel %vm2988, %v3691, 0.0
      %v3813 = vadd.f32 %v3811, %v3812
      %v3814 = vsel %vm2988, %v3694, 0.0
      %v3815 = vadd.f32 %v3813, %v3814
      %v3816 = vsel %vm2988, %v3699, 0.0
      %v3817 = vadd.f32 %v3815, %v3816
      %v3818 = vsel %vm2988, %v3702, 0.0
      %v3819 = vadd.f32 %v3817, %v3818
      %v3820 = vsel %vm2988, %v3707, 0.0
      %v3821 = vadd.f32 %v3819, %v3820
      %v3822 = vsel %vm2988, %v3710, 0.0
      %v3823 = vadd.f32 %v3821, %v3822
      %v3824 = vsel %vm2988, %v3715, 0.0
      %v3825 = vadd.f32 %v3823, %v3824
      %v3826 = vsel %vm2988, %v3718, 0.0
      %v3827 = vadd.f32 %v3825, %v3826
      %v3828 = vsel %vm2988, %v3723, 0.0
      %v3829 = vadd.f32 %v3827, %v3828
      %v3830 = vsel %vm2988, %v3726, 0.0
      %v3831 = vadd.f32 %v3829, %v3830
      %v3832 = vsel %vm2988, %v3731, 0.0
      %v3833 = vadd.f32 %v3831, %v3832
      %v3834 = vsel %vm2988, %v3734, 0.0
      %v3835 = vadd.f32 %v3833, %v3834
      %v3836 = vsel %vm2988, %v3739, 0.0
      %v3837 = vadd.f32 %v3835, %v3836
      %v3838 = vsel %vm2988, %v3742, 0.0
      %v3839 = vadd.f32 %v3837, %v3838
      %v3840 = vrot.slane %v3839, 4
      %v3841 = vadd.f32 %v3839, %v3840
      %v3842 = vrot.slane %v3841, 2
      %v3843 = vadd.f32 %v3841, %v3842
      %v3844 = vrot.slane %v3843, 1
      %v3845 = vadd.f32 %v3843, %v3844
      %vm3846 = vcmask 253952
      %3847 = vst.msk [vmem:[%s438] sm:$0x1] %vm3846, %v3845
      %v3848 = vmul.f32 %v3619, %v3619
      %v3849 = vmul.f32 %v3622, %v3622
      %v3850 = vmul.f32 %v3627, %v3627
      %v3851 = vmul.f32 %v3630, %v3630
      %v3852 = vmul.f32 %v3635, %v3635
      %v3853 = vmul.f32 %v3638, %v3638
      %v3854 = vmul.f32 %v3643, %v3643
      %v3855 = vmul.f32 %v3646, %v3646
      %v3856 = vmul.f32 %v3651, %v3651
      %v3857 = vmul.f32 %v3654, %v3654
      %v3858 = vmul.f32 %v3659, %v3659
      %v3859 = vmul.f32 %v3662, %v3662
      %v3860 = vmul.f32 %v3667, %v3667
      %v3861 = vmul.f32 %v3670, %v3670
      %v3862 = vmul.f32 %v3675, %v3675
      %v3863 = vmul.f32 %v3678, %v3678
      %v3864 = vmul.f32 %v3683, %v3683
      %v3865 = vmul.f32 %v3686, %v3686
      %v3866 = vmul.f32 %v3691, %v3691
      %v3867 = vmul.f32 %v3694, %v3694
      %v3868 = vmul.f32 %v3699, %v3699
      %v3869 = vmul.f32 %v3702, %v3702
      %v3870 = vmul.f32 %v3707, %v3707
      %v3871 = vmul.f32 %v3710, %v3710
      %v3872 = vmul.f32 %v3715, %v3715
      %v3873 = vmul.f32 %v3718, %v3718
      %v3874 = vmul.f32 %v3723, %v3723
      %v3875 = vmul.f32 %v3726, %v3726
      %v3876 = vmul.f32 %v3731, %v3731
      %v3877 = vmul.f32 %v3734, %v3734
      %v3878 = vmul.f32 %v3739, %v3739
      %v3879 = vmul.f32 %v3742, %v3742
      %v3880 = vsel %vm2988, %v3848, 0.0
      %v3881 = vsel %vm2988, %v3849, 0.0
      %v3882 = vadd.f32 %v3880, %v3881
      %v3883 = vsel %vm2988, %v3850, 0.0
      %v3884 = vadd.f32 %v3882, %v3883
      %v3885 = vsel %vm2988, %v3851, 0.0
      %v3886 = vadd.f32 %v3884, %v3885
      %v3887 = vsel %vm2988, %v3852, 0.0
      %v3888 = vadd.f32 %v3886, %v3887
      %v3889 = vsel %vm2988, %v3853, 0.0
      %v3890 = vadd.f32 %v3888, %v3889
      %v3891 = vsel %vm2988, %v3854, 0.0
      %v3892 = vadd.f32 %v3890, %v3891
      %v3893 = vsel %vm2988, %v3855, 0.0
      %v3894 = vadd.f32 %v3892, %v3893
      %v3895 = vsel %vm2988, %v3856, 0.0
      %v3896 = vadd.f32 %v3894, %v3895
      %v3897 = vsel %vm2988, %v3857, 0.0
      %v3898 = vadd.f32 %v3896, %v3897
      %v3899 = vsel %vm2988, %v3858, 0.0
      %v3900 = vadd.f32 %v3898, %v3899
      %v3901 = vsel %vm2988, %v3859, 0.0
      %v3902 = vadd.f32 %v3900, %v3901
      %v3903 = vsel %vm2988, %v3860, 0.0
      %v3904 = vadd.f32 %v3902, %v3903
      %v3905 = vsel %vm2988, %v3861, 0.0
      %v3906 = vadd.f32 %v3904, %v3905
      %v3907 = vsel %vm2988, %v3862, 0.0
      %v3908 = vadd.f32 %v3906, %v3907
      %v3909 = vsel %vm2988, %v3863, 0.0
      %v3910 = vadd.f32 %v3908, %v3909
      %v3911 = vsel %vm2988, %v3864, 0.0
      %v3912 = vadd.f32 %v3910, %v3911
      %v3913 = vsel %vm2988, %v3865, 0.0
      %v3914 = vadd.f32 %v3912, %v3913
      %v3915 = vsel %vm2988, %v3866, 0.0
      %v3916 = vadd.f32 %v3914, %v3915
      %v3917 = vsel %vm2988, %v3867, 0.0
      %v3918 = vadd.f32 %v3916, %v3917
      %v3919 = vsel %vm2988, %v3868, 0.0
      %v3920 = vadd.f32 %v3918, %v3919
      %v3921 = vsel %vm2988, %v3869, 0.0
      %v3922 = vadd.f32 %v3920, %v3921
      %v3923 = vsel %vm2988, %v3870, 0.0
      %v3924 = vadd.f32 %v3922, %v3923
      %v3925 = vsel %vm2988, %v3871, 0.0
      %v3926 = vadd.f32 %v3924, %v3925
      %v3927 = vsel %vm2988, %v3872, 0.0
      %v3928 = vadd.f32 %v3926, %v3927
      %v3929 = vsel %vm2988, %v3873, 0.0
      %v3930 = vadd.f32 %v3928, %v3929
      %v3931 = vsel %vm2988, %v3874, 0.0
      %v3932 = vadd.f32 %v3930, %v3931
      %v3933 = vsel %vm2988, %v3875, 0.0
      %v3934 = vadd.f32 %v3932, %v3933
      %v3935 = vsel %vm2988, %v3876, 0.0
      %v3936 = vadd.f32 %v3934, %v3935
      %v3937 = vsel %vm2988, %v3877, 0.0
      %v3938 = vadd.f32 %v3936, %v3937
      %v3939 = vsel %vm2988, %v3878, 0.0
      %v3940 = vadd.f32 %v3938, %v3939
      %v3941 = vsel %vm2988, %v3879, 0.0
      %v3942 = vadd.f32 %v3940, %v3941
      %v3943 = vrot.slane %v3942, 4
      %v3944 = vadd.f32 %v3942, %v3943
      %v3945 = vrot.slane %v3944, 2
      %v3946 = vadd.f32 %v3944, %v3945
      %v3947 = vrot.slane %v3946, 1
      %v3948 = vadd.f32 %v3946, %v3947
      %3949 = vst.msk [vmem:[%s438 + $0x1] sm:$0x1] %vm3846, %v3948
      %s3950 = smul.u32 16, %s23
      %p3951 = scmp.lt.s32.totalorder %s22, 1
      %s3952 = scalar_select %p3951, %s22, 1
      %p3953 = scmp.lt.s32.totalorder %s3950, 15
      %s3954 = scalar_select %p3953, %s3950, 15
      %s3955 = smul.addr %s3954, 2
      %s3956 = smul.addr %s3952, 32
      %s3957 = sadd.s32 %s3955, %s3956
      %s3958 = smul.addr %s3957, 8
      %s3959 = scalar_lea.vmem %s5, %s3958
      %p3960 = scmp.lt.s32.totalorder %s22, 1
      %s3961 = scalar_select %p3960, %s22, 1
      %p3962 = scmp.lt.s32.totalorder %s23, 0
      %s3963 = scalar_select %p3962, %s23, 0
      %s3964 = sadd.s32 %s3963, %s3961
      %s3965 = smul.addr %s3964, 2
      %s3966 = scalar_lea.vmem %s6, %s3965
      // Predicated region
      $region41: #{double_conv.4} parent=39 // pred_check
        %p3967 = pneg %p192
      $region42: #{double_conv.4} parent=39 // pred_check_branch
        %3969 = sbr.rel (%p3967) target = $region44
      $region43: #{double_conv.4} parent=39 // pred_region
        %s3970 = smul.u32 16, %s23
      $region44: #{double_conv.4} parent=39 // pred_fallthru
        _
      // Predicated region
      $region45: #{double_conv.4} parent=39 // pred_check
        %p3971 = pneg %p220
      $region46: #{double_conv.4} parent=39 // pred_check_branch
        %3973 = sbr.rel (%p3971) target = $region48
      $region47: #{double_conv.4} parent=39 // pred_region
        _
      $region48: #{double_conv.4} parent=39 // pred_fallthru
        _
    $region40: #{double_conv.4} parent=5 // pred_fallthru
      _
    %p3974 = scmp.le.s32.totalorder 2, %s13
    // Predicated region
    $region49: #{double_conv.4} parent=5 // pred_check
      %p3975 = pneg %p3974
    $region50: #{double_conv.4} parent=5 // pred_check_branch
      %3977 = sbr.rel (%p3975) target = $region52
    $region51: #{double_conv.4} parent=5 // pred_region
      %s3978 = ssub.s32 %s13, 2
      // Predicated region
      $region53: #{double_conv.4} parent=51 // pred_check
        %p3979 = pneg %p198
      $region54: #{double_conv.4} parent=51 // pred_check_branch
        %3981 = sbr.rel (%p3979) target = $region56
      $region55: #{double_conv.4} parent=51 // pred_region
        %s3982 = smul.u32 16, %s25
        %p3983 = scmp.lt.s32.totalorder %s24, 1
        %s3984 = scalar_select %p3983, %s24, 1
        %p3985 = scmp.lt.s32.totalorder %s3982, 15
        %s3986 = scalar_select %p3985, %s3982, 15
        %s3987 = smul.addr %s3986, 2
        %s3988 = smul.addr %s3984, 32
        %s3989 = sadd.s32 %s3987, %s3988
        %s3990 = smul.addr %s3989, 8
        %s3991 = scalar_lea.vmem %s5, %s3990
      $region56: #{double_conv.4} parent=51 // pred_fallthru
        _
      // Predicated region
      $region57: #{double_conv.4} parent=51 // pred_check
        %p3992 = pneg %p226
      $region58: #{double_conv.4} parent=51 // pred_check_branch
        %3994 = sbr.rel (%p3992) target = $region60
      $region59: #{double_conv.4} parent=51 // pred_region
        %p3995 = scmp.lt.s32.totalorder %s24, 1
        %s3996 = scalar_select %p3995, %s24, 1
        %p3997 = scmp.lt.s32.totalorder %s25, 0
        %s3998 = scalar_select %p3997, %s25, 0
        %s3999 = sadd.s32 %s3998, %s3996
        %s4000 = smul.addr %s3999, 2
        %s4001 = scalar_lea.vmem %s6, %s4000
      $region60: #{double_conv.4} parent=51 // pred_fallthru
        _
    $region52: #{double_conv.4} parent=5 // pred_fallthru
      _
  $region6: #{double_conv.4} parent=0 // loop_footer
    %s17 = sadd.s32 1, %s13
  $region7: #{double_conv.4} parent=0 // loop_footer_branch
    %12 = sbr.rel target = $region3
  $region8: #{double_conv.4} parent=0 // loop_exit
    _

</llo_original>
